<compile_context>
chip_gen: v6e
topology: v6e:2x2x1
jax: 0.10.0
libtpu: 0.0.40
codegen_flags: <defaults>
</compile_context>

<pallas_src>
import functools

import jax
import jax.numpy as jnp
from jax import lax
from jax.experimental import pallas as pl
from jax.experimental.pallas import tpu as pltpu

SOS_token = 1

VOCAB = 64           # logical vocab size
HIDDEN = 32          # logical hidden size
SEQ = 8
MAX_LENGTH = 6

VPAD = 128           # vocab padded to full lane width
HPAD = 128           # hidden padded to full lane width (all 3 gates packed inside 128 lanes)
OUT_PAD = 128        # token/score outputs padded to full lane width
NEG = -1e30          # bias value masking padded vocab columns
G = HIDDEN           # per-gate width inside the packed 128-lane tile

_VMEM = pl.BlockSpec(memory_space=pltpu.MemorySpace.VMEM)
_SMEM = pl.BlockSpec(memory_space=pltpu.MemorySpace.SMEM)


def _gru_step(gi, h, wh_ref, bh_ref, hmask):
    """One GRU step with gates packed [r|z|n] at lanes [0:G),[G:2G),[2G:3G).

    gi: (1, HPAD) f32 = x @ Wi + bi (packed).  h: (1, HPAD) f32, valid lanes [0:G).
    wh_ref: (HPAD, HPAD) bf16.  bh_ref: (1, HPAD) f32.  hmask: (1, HPAD) f32 lane mask.
    """
    gh = jnp.dot(h.astype(jnp.bfloat16), wh_ref[...],
                 preferred_element_type=jnp.float32) + bh_ref[...]
    sig = jax.nn.sigmoid(gi + gh)                      # r @ [0:G), z @ [G:2G)
    r_n = pltpu.roll(sig, 2 * G, 1)                    # r aligned to the n slot [2G:3G)
    n = jnp.tanh(gi + r_n * gh)                        # n @ [2G:3G)
    z0 = pltpu.roll(sig, HPAD - G, 1)                  # z aligned to [0:G)
    n0 = pltpu.roll(n, HPAD - 2 * G, 1)                # n aligned to [0:G)
    return ((1.0 - z0) * n0 + z0 * h) * hmask


def greedy_kernel(ids_ref,                                   # (S,) int32 token ids (SMEM)
                  emb_ref,                                   # (VPAD, HPAD) f32 embedding table
                  wif_ref, whf_ref, bif_ref, bhf_ref,        # encoder fwd GRU (packed gates)
                  wib_ref, whb_ref, bib_ref, bhb_ref,        # encoder bwd GRU
                  wdi_ref, wdh_ref, bdi_ref, bdh_ref,        # decoder GRU
                  wc_ref, bc_ref,                            # concat linear (2*HPAD,HPAD),(1,HPAD)
                  wo_ref, bo_ref,                            # vocab projection (HPAD,VPAD),(1,VPAD)
                  tok_ref, score_ref,                        # (1, OUT_PAD) int32 / f32 outputs
                  xseq_ref, fwd_ref, bwd_ref, eproj_ref,     # VMEM scratch
                  *, max_len):
    S = xseq_ref.shape[0]
    VP = wo_ref.shape[1]
    HP = emb_ref.shape[1]

    lane = lax.broadcasted_iota(jnp.int32, (1, HP), 1)
    hmask = (lane < G).astype(jnp.float32)                   # valid hidden lanes [0:G)
    vlane = lax.broadcasted_iota(jnp.int32, (1, VP), 1)
    outlane = lax.broadcasted_iota(jnp.int32, (1, tok_ref.shape[1]), 1)

    # ---- gather input embeddings straight into a VMEM scratch (no lane-concat relayout) ----
    for i in range(S):
        xseq_ref[pl.ds(i, 1), :] = emb_ref[pl.ds(ids_ref[i], 1), :]
    xs = xseq_ref[...].astype(jnp.bfloat16)                  # (S, HP)

    # ---- hoisted input projections for both encoder directions (one MXU pass each) ----
    xf = jnp.dot(xs, wif_ref[...], preferred_element_type=jnp.float32) + bif_ref[...]
    xb = jnp.dot(xs, wib_ref[...], preferred_element_type=jnp.float32) + bib_ref[...]

    # ---- interleaved fwd/bwd encoder recurrences (independent chains overlap) ----
    hf = jnp.zeros((1, HP), jnp.float32)
    hb = jnp.zeros((1, HP), jnp.float32)
    for i in range(S):
        j = S - 1 - i
        hf = _gru_step(xf[i:i + 1, :], hf, whf_ref, bhf_ref, hmask)
        hb = _gru_step(xb[j:j + 1, :], hb, whb_ref, bhb_ref, hmask)
        fwd_ref[pl.ds(i, 1), :] = hf
        bwd_ref[pl.ds(j, 1), :] = hb

    enc = fwd_ref[...] + bwd_ref[...]                        # encoder_outputs (S, HP)
    enc_t = jnp.transpose(enc)                               # hoisted out of the decode loop
    dec_h = hf                                               # encoder_hidden[:n_layers] (fwd dir)

    # ---- decoder: fold embedding lookup + GRU input projection into one bf16 table ----
    eproj_ref[...] = (jnp.dot(emb_ref[...].astype(jnp.bfloat16), wdi_ref[...],
                              preferred_element_type=jnp.float32)
                      + bdi_ref[...]).astype(jnp.bfloat16)

    onehot_sos = (vlane == SOS_token).astype(jnp.bfloat16)
    x_gi = jnp.dot(onehot_sos, eproj_ref[...], preferred_element_type=jnp.float32)

    tok_acc = jnp.zeros((1, tok_ref.shape[1]), jnp.int32)
    score_acc = jnp.zeros((1, tok_ref.shape[1]), jnp.float32)

    for t in range(max_len):
        # GRU cell (rnn_output == new hidden, 1 layer)
        dec_h = _gru_step(x_gi, dec_h, wdh_ref, bdh_ref, hmask)
        rnn = dec_h

        # Luong "dot" attention over encoder outputs (encT precomputed above)
        e = jnp.dot(rnn, enc_t, preferred_element_type=jnp.float32)          # (1, S)
        e = e - jnp.max(e, axis=1, keepdims=True)
        pe = jnp.exp(e)
        attn = pe * pl.reciprocal(jnp.sum(pe, axis=1, keepdims=True), approx=False)
        ctx = jnp.dot(attn, enc, preferred_element_type=jnp.float32)         # (1, HP)

        # tanh(concat([rnn, ctx]) @ Wc + bc) -- single fused matmul
        cat_in = jnp.concatenate([rnn, ctx], axis=1).astype(jnp.bfloat16)    # (1, 2*HP)
        cat_out = jnp.tanh(jnp.dot(cat_in, wc_ref[...],
                                   preferred_element_type=jnp.float32) + bc_ref[...])

        # vocab projection (padded vocab columns carry -1e30 bias)
        logits = jnp.dot(cat_out.astype(jnp.bfloat16), wo_ref[...],
                         preferred_element_type=jnp.float32) + bo_ref[...]   # (1, VP)

        # greedy step: token = first argmax; score = max softmax prob == 1/sum(exp(l - max))
        m = jnp.max(logits, axis=1, keepdims=True)
        denom = jnp.sum(jnp.exp(logits - m), axis=1, keepdims=True)
        score = pl.reciprocal(denom, approx=False)
        idx = jnp.min(jnp.where(logits >= m, vlane, VP), axis=1, keepdims=True)   # (1,1) i32

        tok_acc = jnp.where(outlane == t, idx, tok_acc)
        score_acc = jnp.where(outlane == t, score, score_acc)

        # next-step input: one-hot @ (emb @ Wi_dec + bi) -- one 128x128 tile; independent of the
        # next step's h @ Wh until the gate add, so it overlaps with it.
        onehot = (vlane == idx).astype(jnp.bfloat16)
        x_gi = jnp.dot(onehot, eproj_ref[...], preferred_element_type=jnp.float32)

    # single lane-dense, unmasked writeback of all decode steps
    tok_ref[...] = tok_acc
    score_ref[...] = score_acc


def init_params(key, vocab=VOCAB, hidden=HIDDEN):
    ks = jax.random.split(key, 20)
    s = 0.1

    def g(k, shape):
        return (s * jax.random.normal(k, shape)).astype(jnp.float32)

    def pack_gru_w(w3):
        # (3, hidden, hidden) -> (HPAD, HPAD) bf16; gate k lives at lanes [k*hidden,(k+1)*hidden)
        out = jnp.zeros((HPAD, HPAD), jnp.float32)
        for k in range(3):
            out = out.at[:hidden, k * hidden:(k + 1) * hidden].set(w3[k])
        return out.astype(jnp.bfloat16)

    def pack_gru_b(b3):
        out = jnp.zeros((1, HPAD), jnp.float32)
        for k in range(3):
            out = out.at[:, k * hidden:(k + 1) * hidden].set(b3[k])
        return out

    # embedding stays f32 so the in-kernel dynamic row gather is sublane-aligned
    emb = jnp.zeros((VPAD, HPAD), jnp.float32).at[:vocab, :hidden].set(
        g(ks[0], (vocab, hidden)))

    p = {
        "embedding": emb,
        # encoder forward / backward directions
        "enc_wi_f": pack_gru_w(g(ks[1], (3, hidden, hidden))),
        "enc_wh_f": pack_gru_w(g(ks[2], (3, hidden, hidden))),
        "enc_bi_f": pack_gru_b(g(ks[3], (3, 1, hidden))),
        "enc_bh_f": pack_gru_b(g(ks[4], (3, 1, hidden))),
        "enc_wi_b": pack_gru_w(g(ks[5], (3, hidden, hidden))),
        "enc_wh_b": pack_gru_w(g(ks[6], (3, hidden, hidden))),
        "enc_bi_b": pack_gru_b(g(ks[7], (3, 1, hidden))),
        "enc_bh_b": pack_gru_b(g(ks[8], (3, 1, hidden))),
        # decoder GRU
        "dec_wi": pack_gru_w(g(ks[9], (3, hidden, hidden))),
        "dec_wh": pack_gru_w(g(ks[10], (3, hidden, hidden))),
        "dec_bi": pack_gru_b(g(ks[11], (3, 1, hidden))),
        "dec_bh": pack_gru_b(g(ks[12], (3, 1, hidden))),
    }
    # concat linear (2H -> H), fused: rows [0:H] take rnn, rows [HPAD:HPAD+H] take context
    wc = jnp.zeros((2 * HPAD, HPAD), jnp.float32)
    wc = wc.at[:hidden, :hidden].set(g(ks[13], (hidden, hidden)))
    wc = wc.at[HPAD:HPAD + hidden, :hidden].set(g(ks[14], (hidden, hidden)))
    p["wc"] = wc.astype(jnp.bfloat16)
    p["bc"] = jnp.zeros((1, HPAD), jnp.float32).at[:, :hidden].set(g(ks[15], (1, hidden)))
    # output projection H -> V; padded vocab columns get -1e30 bias (masked out of softmax/argmax)
    p["wo"] = jnp.zeros((HPAD, VPAD), jnp.float32).at[:hidden, :vocab].set(
        g(ks[16], (hidden, vocab))).astype(jnp.bfloat16)
    p["bo"] = jnp.full((1, VPAD), NEG, jnp.float32).at[:, :vocab].set(g(ks[17], (1, vocab)))
    return p


def greedy_search_decode(params, input_seq, input_length, max_length):
    """JAX/Pallas equivalent of GreedySearchDecoder.forward.

    input_seq: (S,) int32 token ids (batch = 1).
    input_length: unused (no padding in this synthetic setup).
    Returns (all_tokens (max_length,) int32, all_scores (max_length,) float32).
    """
    del input_length  # TODO(synk): pack_padded_sequence-style masking.
    S = input_seq.shape[0]

    tok2d, sc2d = pl.pallas_call(
        functools.partial(greedy_kernel, max_len=int(max_length)),
        out_shape=(jax.ShapeDtypeStruct((1, OUT_PAD), jnp.int32),
                   jax.ShapeDtypeStruct((1, OUT_PAD), jnp.float32)),
        in_specs=[_SMEM] + [_VMEM] * 17,
        out_specs=(_VMEM, _VMEM),
        scratch_shapes=[pltpu.VMEM((S, HPAD), jnp.float32),        # gathered input embeddings
                        pltpu.VMEM((S, HPAD), jnp.float32),        # fwd encoder states
                        pltpu.VMEM((S, HPAD), jnp.float32),        # bwd encoder states
                        pltpu.VMEM((VPAD, HPAD), jnp.bfloat16)],   # emb @ Wi_dec + bi table
    )(input_seq.astype(jnp.int32),
      params["embedding"],
      params["enc_wi_f"], params["enc_wh_f"], params["enc_bi_f"], params["enc_bh_f"],
      params["enc_wi_b"], params["enc_wh_b"], params["enc_bi_b"], params["enc_bh_b"],
      params["dec_wi"], params["dec_wh"], params["dec_bi"], params["dec_bh"],
      params["wc"], params["bc"], params["wo"], params["bo"])

    return tok2d[0, :max_length], sc2d[0, :max_length]


if __name__ == "__main__":
    key = jax.random.PRNGKey(0)
    k_param, k_seq = jax.random.split(key)

    params = init_params(k_param)
    input_seq = jax.random.randint(k_seq, (SEQ,), 2, VOCAB, dtype=jnp.int32)
    input_length = jnp.array([SEQ], dtype=jnp.int32)

    all_tokens, all_scores = greedy_search_decode(params, input_seq, input_length,
                                                  MAX_LENGTH)
    jax.block_until_ready((all_tokens, all_scores))

    assert all_tokens.shape == (MAX_LENGTH,) and all_tokens.dtype == jnp.int32
    assert all_scores.shape == (MAX_LENGTH,) and all_scores.dtype == jnp.float32
    # padded vocab columns must never be selected; scores are valid softmax maxima
    assert bool(jnp.all((all_tokens >= 0) & (all_tokens < VOCAB)))
    assert bool(jnp.all(jnp.isfinite(all_scores))
                and jnp.all(all_scores > 0.0) and jnp.all(all_scores <= 1.0 + 1e-5))
    print("KERNEL_OK")
</pallas_src>

<mosaic_0001>
module attributes {stable_mosaic.version = 11 : i64} {
  func.func @greedy_kernel(%arg0: memref<8xi32, #tpu.memory_space<smem>>, %arg1: memref<128x128xf32, #tpu.memory_space<vmem>>, %arg2: memref<128x128xbf16, #tpu.memory_space<vmem>>, %arg3: memref<128x128xbf16, #tpu.memory_space<vmem>>, %arg4: memref<1x128xf32, #tpu.memory_space<vmem>>, %arg5: memref<1x128xf32, #tpu.memory_space<vmem>>, %arg6: memref<128x128xbf16, #tpu.memory_space<vmem>>, %arg7: memref<128x128xbf16, #tpu.memory_space<vmem>>, %arg8: memref<1x128xf32, #tpu.memory_space<vmem>>, %arg9: memref<1x128xf32, #tpu.memory_space<vmem>>, %arg10: memref<128x128xbf16, #tpu.memory_space<vmem>>, %arg11: memref<128x128xbf16, #tpu.memory_space<vmem>>, %arg12: memref<1x128xf32, #tpu.memory_space<vmem>>, %arg13: memref<1x128xf32, #tpu.memory_space<vmem>>, %arg14: memref<256x128xbf16, #tpu.memory_space<vmem>>, %arg15: memref<1x128xf32, #tpu.memory_space<vmem>>, %arg16: memref<128x128xbf16, #tpu.memory_space<vmem>>, %arg17: memref<1x128xf32, #tpu.memory_space<vmem>>, %arg18: memref<1x128xi32, #tpu.memory_space<vmem>>, %arg19: memref<1x128xf32, #tpu.memory_space<vmem>>, %arg20: memref<8x128xf32, #tpu.memory_space<vmem>>, %arg21: memref<8x128xf32, #tpu.memory_space<vmem>>, %arg22: memref<8x128xf32, #tpu.memory_space<vmem>>, %arg23: memref<128x128xbf16, #tpu.memory_space<vmem>>) attributes {dimension_semantics = [], scalar_prefetch = 0 : i64, scratch_operands = 4 : i64, tpu.core_type = #tpu.core_type<tc>} {
    %0 = tpu.iota {dimensions = array<i32: 1>} : vector<1x128xi32>
    %c32_i32 = arith.constant 32 : i32
    %1 = vector.broadcast %c32_i32 : i32 to vector<1x128xi32>
    %2 = arith.cmpi slt, %0, %1 : vector<1x128xi32>
    %3 = arith.extui %2 : vector<1x128xi1> to vector<1x128xi32>
    %4 = arith.sitofp %3 : vector<1x128xi32> to vector<1x128xf32>
    %5 = tpu.iota {dimensions = array<i32: 1>} : vector<1x128xi32>
    %6 = tpu.iota {dimensions = array<i32: 1>} : vector<1x128xi32>
    %c0 = arith.constant 0 : index
    %7 = memref.load %arg0[%c0] : memref<8xi32, #tpu.memory_space<smem>>
    %8 = arith.index_cast %7 : i32 to index
    %c0_0 = arith.constant 0 : index
    %9 = vector.load %arg1[%8, %c0_0] : memref<128x128xf32, #tpu.memory_space<vmem>>, vector<1x128xf32>
    %c0_1 = arith.constant 0 : index
    %c0_2 = arith.constant 0 : index
    %10 = vector.load %arg20[%c0_1, %c0_2] : memref<8x128xf32, #tpu.memory_space<vmem>>, vector<1x128xf32>
    tpu.vector_store %arg20[%c0_1, %c0_2], %9 {strides = array<i32>} : memref<8x128xf32, #tpu.memory_space<vmem>>, vector<1x128xf32>,
    %c1 = arith.constant 1 : index
    %11 = memref.load %arg0[%c1] : memref<8xi32, #tpu.memory_space<smem>>
    %12 = arith.index_cast %11 : i32 to index
    %c0_3 = arith.constant 0 : index
    %13 = vector.load %arg1[%12, %c0_3] : memref<128x128xf32, #tpu.memory_space<vmem>>, vector<1x128xf32>
    %c1_4 = arith.constant 1 : index
    %c0_5 = arith.constant 0 : index
    %14 = vector.load %arg20[%c1_4, %c0_5] : memref<8x128xf32, #tpu.memory_space<vmem>>, vector<1x128xf32>
    tpu.vector_store %arg20[%c1_4, %c0_5], %13 {strides = array<i32>} : memref<8x128xf32, #tpu.memory_space<vmem>>, vector<1x128xf32>,
    %c2 = arith.constant 2 : index
    %15 = memref.load %arg0[%c2] : memref<8xi32, #tpu.memory_space<smem>>
    %16 = arith.index_cast %15 : i32 to index
    %c0_6 = arith.constant 0 : index
    %17 = vector.load %arg1[%16, %c0_6] : memref<128x128xf32, #tpu.memory_space<vmem>>, vector<1x128xf32>
    %c2_7 = arith.constant 2 : index
    %c0_8 = arith.constant 0 : index
    %18 = vector.load %arg20[%c2_7, %c0_8] : memref<8x128xf32, #tpu.memory_space<vmem>>, vector<1x128xf32>
    tpu.vector_store %arg20[%c2_7, %c0_8], %17 {strides = array<i32>} : memref<8x128xf32, #tpu.memory_space<vmem>>, vector<1x128xf32>,
    %c3 = arith.constant 3 : index
    %19 = memref.load %arg0[%c3] : memref<8xi32, #tpu.memory_space<smem>>
    %20 = arith.index_cast %19 : i32 to index
    %c0_9 = arith.constant 0 : index
    %21 = vector.load %arg1[%20, %c0_9] : memref<128x128xf32, #tpu.memory_space<vmem>>, vector<1x128xf32>
    %c3_10 = arith.constant 3 : index
    %c0_11 = arith.constant 0 : index
    %22 = vector.load %arg20[%c3_10, %c0_11] : memref<8x128xf32, #tpu.memory_space<vmem>>, vector<1x128xf32>
    tpu.vector_store %arg20[%c3_10, %c0_11], %21 {strides = array<i32>} : memref<8x128xf32, #tpu.memory_space<vmem>>, vector<1x128xf32>,
    %c4 = arith.constant 4 : index
    %23 = memref.load %arg0[%c4] : memref<8xi32, #tpu.memory_space<smem>>
    %24 = arith.index_cast %23 : i32 to index
    %c0_12 = arith.constant 0 : index
    %25 = vector.load %arg1[%24, %c0_12] : memref<128x128xf32, #tpu.memory_space<vmem>>, vector<1x128xf32>
    %c4_13 = arith.constant 4 : index
    %c0_14 = arith.constant 0 : index
    %26 = vector.load %arg20[%c4_13, %c0_14] : memref<8x128xf32, #tpu.memory_space<vmem>>, vector<1x128xf32>
    tpu.vector_store %arg20[%c4_13, %c0_14], %25 {strides = array<i32>} : memref<8x128xf32, #tpu.memory_space<vmem>>, vector<1x128xf32>,
    %c5 = arith.constant 5 : index
    %27 = memref.load %arg0[%c5] : memref<8xi32, #tpu.memory_space<smem>>
    %28 = arith.index_cast %27 : i32 to index
    %c0_15 = arith.constant 0 : index
    %29 = vector.load %arg1[%28, %c0_15] : memref<128x128xf32, #tpu.memory_space<vmem>>, vector<1x128xf32>
    %c5_16 = arith.constant 5 : index
    %c0_17 = arith.constant 0 : index
    %30 = vector.load %arg20[%c5_16, %c0_17] : memref<8x128xf32, #tpu.memory_space<vmem>>, vector<1x128xf32>
    tpu.vector_store %arg20[%c5_16, %c0_17], %29 {strides = array<i32>} : memref<8x128xf32, #tpu.memory_space<vmem>>, vector<1x128xf32>,
    %c6 = arith.constant 6 : index
    %31 = memref.load %arg0[%c6] : memref<8xi32, #tpu.memory_space<smem>>
    %32 = arith.index_cast %31 : i32 to index
    %c0_18 = arith.constant 0 : index
    %33 = vector.load %arg1[%32, %c0_18] : memref<128x128xf32, #tpu.memory_space<vmem>>, vector<1x128xf32>
    %c6_19 = arith.constant 6 : index
    %c0_20 = arith.constant 0 : index
    %34 = vector.load %arg20[%c6_19, %c0_20] : memref<8x128xf32, #tpu.memory_space<vmem>>, vector<1x128xf32>
    tpu.vector_store %arg20[%c6_19, %c0_20], %33 {strides = array<i32>} : memref<8x128xf32, #tpu.memory_space<vmem>>, vector<1x128xf32>,
    %c7 = arith.constant 7 : index
    %35 = memref.load %arg0[%c7] : memref<8xi32, #tpu.memory_space<smem>>
    %36 = arith.index_cast %35 : i32 to index
    %c0_21 = arith.constant 0 : index
    %37 = vector.load %arg1[%36, %c0_21] : memref<128x128xf32, #tpu.memory_space<vmem>>, vector<1x128xf32>
    %c7_22 = arith.constant 7 : index
    %c0_23 = arith.constant 0 : index
    %38 = vector.load %arg20[%c7_22, %c0_23] : memref<8x128xf32, #tpu.memory_space<vmem>>, vector<1x128xf32>
    tpu.vector_store %arg20[%c7_22, %c0_23], %37 {strides = array<i32>} : memref<8x128xf32, #tpu.memory_space<vmem>>, vector<1x128xf32>,
    %c0_24 = arith.constant 0 : index
    %c0_25 = arith.constant 0 : index
    %39 = vector.load %arg20[%c0_24, %c0_25] : memref<8x128xf32, #tpu.memory_space<vmem>>, vector<8x128xf32>
    %40 = arith.truncf %39 : vector<8x128xf32> to vector<8x128xbf16>
    %c0_26 = arith.constant 0 : index
    %c0_27 = arith.constant 0 : index
    %41 = vector.load %arg2[%c0_26, %c0_27] : memref<128x128xbf16, #tpu.memory_space<vmem>>, vector<128x128xbf16>
    %cst = arith.constant dense<0.000000e+00> : vector<8x128xf32>
    %42 = tpu.matmul %40, %41, %cst {dimension_numbers = #tpu.dot_dimension_numbers<[1], [0], [0], [1], [0, 0, 1, 1], [], []>} : vector<8x128xbf16>, vector<128x128xbf16>, vector<8x128xf32> -> vector<8x128xf32>
    %c0_28 = arith.constant 0 : index
    %c0_29 = arith.constant 0 : index
    %43 = vector.load %arg4[%c0_28, %c0_29] : memref<1x128xf32, #tpu.memory_space<vmem>>, vector<1x128xf32>
    %44 = vector.broadcast %43 : vector<1x128xf32> to vector<8x128xf32>
    %45 = arith.addf %42, %44 : vector<8x128xf32>
    %c0_30 = arith.constant 0 : index
    %c0_31 = arith.constant 0 : index
    %46 = vector.load %arg6[%c0_30, %c0_31] : memref<128x128xbf16, #tpu.memory_space<vmem>>, vector<128x128xbf16>
    %cst_32 = arith.constant dense<0.000000e+00> : vector<8x128xf32>
    %47 = tpu.matmul %40, %46, %cst_32 {dimension_numbers = #tpu.dot_dimension_numbers<[1], [0], [0], [1], [0, 0, 1, 1], [], []>} : vector<8x128xbf16>, vector<128x128xbf16>, vector<8x128xf32> -> vector<8x128xf32>
    %c0_33 = arith.constant 0 : index
    %c0_34 = arith.constant 0 : index
    %48 = vector.load %arg8[%c0_33, %c0_34] : memref<1x128xf32, #tpu.memory_space<vmem>>, vector<1x128xf32>
    %49 = vector.broadcast %48 : vector<1x128xf32> to vector<8x128xf32>
    %50 = arith.addf %47, %49 : vector<8x128xf32>
    %cst_35 = arith.constant 0.000000e+00 : f32
    %51 = vector.broadcast %cst_35 : f32 to vector<1x128xf32>
    %cst_36 = arith.constant 0.000000e+00 : f32
    %52 = vector.broadcast %cst_36 : f32 to vector<1x128xf32>
    %53 = vector.extract_strided_slice %45 {offsets = [0, 0], sizes = [1, 128], strides = [1, 1]} : vector<8x128xf32> to vector<1x128xf32>
    %54 = arith.truncf %51 : vector<1x128xf32> to vector<1x128xbf16>
    %c0_37 = arith.constant 0 : index
    %c0_38 = arith.constant 0 : index
    %55 = vector.load %arg3[%c0_37, %c0_38] : memref<128x128xbf16, #tpu.memory_space<vmem>>, vector<128x128xbf16>
    %cst_39 = arith.constant dense<0.000000e+00> : vector<1x128xf32>
    %56 = tpu.matmul %54, %55, %cst_39 {dimension_numbers = #tpu.dot_dimension_numbers<[1], [0], [0], [1], [0, 0, 1, 1], [], []>} : vector<1x128xbf16>, vector<128x128xbf16>, vector<1x128xf32> -> vector<1x128xf32>
    %c0_40 = arith.constant 0 : index
    %c0_41 = arith.constant 0 : index
    %57 = vector.load %arg5[%c0_40, %c0_41] : memref<1x128xf32, #tpu.memory_space<vmem>>, vector<1x128xf32>
    %58 = arith.addf %56, %57 : vector<1x128xf32>
    %59 = arith.addf %53, %58 : vector<1x128xf32>
    %60 = arith.negf %59 : vector<1x128xf32>
    %61 = math.exp %60 : vector<1x128xf32>
    %cst_42 = arith.constant 1.000000e+00 : f32
    %62 = vector.broadcast %cst_42 : f32 to vector<1x128xf32>
    %63 = arith.addf %62, %61 : vector<1x128xf32>
    %64 = arith.divf %62, %63 : vector<1x128xf32>
    %c64_i32 = arith.constant 64 : i32
    %65 = tpu.dynamic_rotate %64 by %c64_i32 dim 1 : vector<1x128xf32>, i32 -> vector<1x128xf32>
    %66 = arith.mulf %65, %58 : vector<1x128xf32>
    %67 = arith.addf %53, %66 : vector<1x128xf32>
    %68 = math.tanh %67 : vector<1x128xf32>
    %c96_i32 = arith.constant 96 : i32
    %69 = tpu.dynamic_rotate %64 by %c96_i32 dim 1 : vector<1x128xf32>, i32 -> vector<1x128xf32>
    %c64_i32_43 = arith.constant 64 : i32
    %70 = tpu.dynamic_rotate %68 by %c64_i32_43 dim 1 : vector<1x128xf32>, i32 -> vector<1x128xf32>
    %cst_44 = arith.constant 1.000000e+00 : f32
    %71 = vector.broadcast %cst_44 : f32 to vector<1x128xf32>
    %72 = arith.subf %71, %69 : vector<1x128xf32>
    %73 = arith.mulf %72, %70 : vector<1x128xf32>
    %74 = arith.mulf %69, %51 : vector<1x128xf32>
    %75 = arith.addf %73, %74 : vector<1x128xf32>
    %76 = arith.mulf %75, %4 : vector<1x128xf32>
    %77 = vector.extract_strided_slice %50 {offsets = [7, 0], sizes = [1, 128], strides = [1, 1]} : vector<8x128xf32> to vector<1x128xf32>
    %78 = arith.truncf %52 : vector<1x128xf32> to vector<1x128xbf16>
    %c0_45 = arith.constant 0 : index
    %c0_46 = arith.constant 0 : index
    %79 = vector.load %arg7[%c0_45, %c0_46] : memref<128x128xbf16, #tpu.memory_space<vmem>>, vector<128x128xbf16>
    %cst_47 = arith.constant dense<0.000000e+00> : vector<1x128xf32>
    %80 = tpu.matmul %78, %79, %cst_47 {dimension_numbers = #tpu.dot_dimension_numbers<[1], [0], [0], [1], [0, 0, 1, 1], [], []>} : vector<1x128xbf16>, vector<128x128xbf16>, vector<1x128xf32> -> vector<1x128xf32>
    %c0_48 = arith.constant 0 : index
    %c0_49 = arith.constant 0 : index
    %81 = vector.load %arg9[%c0_48, %c0_49] : memref<1x128xf32, #tpu.memory_space<vmem>>, vector<1x128xf32>
    %82 = arith.addf %80, %81 : vector<1x128xf32>
    %83 = arith.addf %77, %82 : vector<1x128xf32>
    %84 = arith.negf %83 : vector<1x128xf32>
    %85 = math.exp %84 : vector<1x128xf32>
    %cst_50 = arith.constant 1.000000e+00 : f32
    %86 = vector.broadcast %cst_50 : f32 to vector<1x128xf32>
    %87 = arith.addf %86, %85 : vector<1x128xf32>
    %88 = arith.divf %86, %87 : vector<1x128xf32>
    %c64_i32_51 = arith.constant 64 : i32
    %89 = tpu.dynamic_rotate %88 by %c64_i32_51 dim 1 : vector<1x128xf32>, i32 -> vector<1x128xf32>
    %90 = arith.mulf %89, %82 : vector<1x128xf32>
    %91 = arith.addf %77, %90 : vector<1x128xf32>
    %92 = math.tanh %91 : vector<1x128xf32>
    %c96_i32_52 = arith.constant 96 : i32
    %93 = tpu.dynamic_rotate %88 by %c96_i32_52 dim 1 : vector<1x128xf32>, i32 -> vector<1x128xf32>
    %c64_i32_53 = arith.constant 64 : i32
    %94 = tpu.dynamic_rotate %92 by %c64_i32_53 dim 1 : vector<1x128xf32>, i32 -> vector<1x128xf32>
    %cst_54 = arith.constant 1.000000e+00 : f32
    %95 = vector.broadcast %cst_54 : f32 to vector<1x128xf32>
    %96 = arith.subf %95, %93 : vector<1x128xf32>
    %97 = arith.mulf %96, %94 : vector<1x128xf32>
    %98 = arith.mulf %93, %52 : vector<1x128xf32>
    %99 = arith.addf %97, %98 : vector<1x128xf32>
    %100 = arith.mulf %99, %4 : vector<1x128xf32>
    %c0_55 = arith.constant 0 : index
    %c0_56 = arith.constant 0 : index
    %101 = vector.load %arg21[%c0_55, %c0_56] : memref<8x128xf32, #tpu.memory_space<vmem>>, vector<1x128xf32>
    tpu.vector_store %arg21[%c0_55, %c0_56], %76 {strides = array<i32>} : memref<8x128xf32, #tpu.memory_space<vmem>>, vector<1x128xf32>,
    %c7_57 = arith.constant 7 : index
    %c0_58 = arith.constant 0 : index
    %102 = vector.load %arg22[%c7_57, %c0_58] : memref<8x128xf32, #tpu.memory_space<vmem>>, vector<1x128xf32>
    tpu.vector_store %arg22[%c7_57, %c0_58], %100 {strides = array<i32>} : memref<8x128xf32, #tpu.memory_space<vmem>>, vector<1x128xf32>,
    %103 = vector.extract_strided_slice %45 {offsets = [1, 0], sizes = [1, 128], strides = [1, 1]} : vector<8x128xf32> to vector<1x128xf32>
    %104 = arith.truncf %76 : vector<1x128xf32> to vector<1x128xbf16>
    %c0_59 = arith.constant 0 : index
    %c0_60 = arith.constant 0 : index
    %105 = vector.load %arg3[%c0_59, %c0_60] : memref<128x128xbf16, #tpu.memory_space<vmem>>, vector<128x128xbf16>
    %cst_61 = arith.constant dense<0.000000e+00> : vector<1x128xf32>
    %106 = tpu.matmul %104, %105, %cst_61 {dimension_numbers = #tpu.dot_dimension_numbers<[1], [0], [0], [1], [0, 0, 1, 1], [], []>} : vector<1x128xbf16>, vector<128x128xbf16>, vector<1x128xf32> -> vector<1x128xf32>
    %c0_62 = arith.constant 0 : index
    %c0_63 = arith.constant 0 : index
    %107 = vector.load %arg5[%c0_62, %c0_63] : memref<1x128xf32, #tpu.memory_space<vmem>>, vector<1x128xf32>
    %108 = arith.addf %106, %107 : vector<1x128xf32>
    %109 = arith.addf %103, %108 : vector<1x128xf32>
    %110 = arith.negf %109 : vector<1x128xf32>
    %111 = math.exp %110 : vector<1x128xf32>
    %cst_64 = arith.constant 1.000000e+00 : f32
    %112 = vector.broadcast %cst_64 : f32 to vector<1x128xf32>
    %113 = arith.addf %112, %111 : vector<1x128xf32>
    %114 = arith.divf %112, %113 : vector<1x128xf32>
    %c64_i32_65 = arith.constant 64 : i32
    %115 = tpu.dynamic_rotate %114 by %c64_i32_65 dim 1 : vector<1x128xf32>, i32 -> vector<1x128xf32>
    %116 = arith.mulf %115, %108 : vector<1x128xf32>
    %117 = arith.addf %103, %116 : vector<1x128xf32>
    %118 = math.tanh %117 : vector<1x128xf32>
    %c96_i32_66 = arith.constant 96 : i32
    %119 = tpu.dynamic_rotate %114 by %c96_i32_66 dim 1 : vector<1x128xf32>, i32 -> vector<1x128xf32>
    %c64_i32_67 = arith.constant 64 : i32
    %120 = tpu.dynamic_rotate %118 by %c64_i32_67 dim 1 : vector<1x128xf32>, i32 -> vector<1x128xf32>
    %cst_68 = arith.constant 1.000000e+00 : f32
    %121 = vector.broadcast %cst_68 : f32 to vector<1x128xf32>
    %122 = arith.subf %121, %119 : vector<1x128xf32>
    %123 = arith.mulf %122, %120 : vector<1x128xf32>
    %124 = arith.mulf %119, %76 : vector<1x128xf32>
    %125 = arith.addf %123, %124 : vector<1x128xf32>
    %126 = arith.mulf %125, %4 : vector<1x128xf32>
    %127 = vector.extract_strided_slice %50 {offsets = [6, 0], sizes = [1, 128], strides = [1, 1]} : vector<8x128xf32> to vector<1x128xf32>
    %128 = arith.truncf %100 : vector<1x128xf32> to vector<1x128xbf16>
    %c0_69 = arith.constant 0 : index
    %c0_70 = arith.constant 0 : index
    %129 = vector.load %arg7[%c0_69, %c0_70] : memref<128x128xbf16, #tpu.memory_space<vmem>>, vector<128x128xbf16>
    %cst_71 = arith.constant dense<0.000000e+00> : vector<1x128xf32>
    %130 = tpu.matmul %128, %129, %cst_71 {dimension_numbers = #tpu.dot_dimension_numbers<[1], [0], [0], [1], [0, 0, 1, 1], [], []>} : vector<1x128xbf16>, vector<128x128xbf16>, vector<1x128xf32> -> vector<1x128xf32>
    %c0_72 = arith.constant 0 : index
    %c0_73 = arith.constant 0 : index
    %131 = vector.load %arg9[%c0_72, %c0_73] : memref<1x128xf32, #tpu.memory_space<vmem>>, vector<1x128xf32>
    %132 = arith.addf %130, %131 : vector<1x128xf32>
    %133 = arith.addf %127, %132 : vector<1x128xf32>
    %134 = arith.negf %133 : vector<1x128xf32>
    %135 = math.exp %134 : vector<1x128xf32>
    %cst_74 = arith.constant 1.000000e+00 : f32
    %136 = vector.broadcast %cst_74 : f32 to vector<1x128xf32>
    %137 = arith.addf %136, %135 : vector<1x128xf32>
    %138 = arith.divf %136, %137 : vector<1x128xf32>
    %c64_i32_75 = arith.constant 64 : i32
    %139 = tpu.dynamic_rotate %138 by %c64_i32_75 dim 1 : vector<1x128xf32>, i32 -> vector<1x128xf32>
    %140 = arith.mulf %139, %132 : vector<1x128xf32>
    %141 = arith.addf %127, %140 : vector<1x128xf32>
    %142 = math.tanh %141 : vector<1x128xf32>
    %c96_i32_76 = arith.constant 96 : i32
    %143 = tpu.dynamic_rotate %138 by %c96_i32_76 dim 1 : vector<1x128xf32>, i32 -> vector<1x128xf32>
    %c64_i32_77 = arith.constant 64 : i32
    %144 = tpu.dynamic_rotate %142 by %c64_i32_77 dim 1 : vector<1x128xf32>, i32 -> vector<1x128xf32>
    %cst_78 = arith.constant 1.000000e+00 : f32
    %145 = vector.broadcast %cst_78 : f32 to vector<1x128xf32>
    %146 = arith.subf %145, %143 : vector<1x128xf32>
    %147 = arith.mulf %146, %144 : vector<1x128xf32>
    %148 = arith.mulf %143, %100 : vector<1x128xf32>
    %149 = arith.addf %147, %148 : vector<1x128xf32>
    %150 = arith.mulf %149, %4 : vector<1x128xf32>
    %c1_79 = arith.constant 1 : index
    %c0_80 = arith.constant 0 : index
    %151 = vector.load %arg21[%c1_79, %c0_80] : memref<8x128xf32, #tpu.memory_space<vmem>>, vector<1x128xf32>
    tpu.vector_store %arg21[%c1_79, %c0_80], %126 {strides = array<i32>} : memref<8x128xf32, #tpu.memory_space<vmem>>, vector<1x128xf32>,
    %c6_81 = arith.constant 6 : index
    %c0_82 = arith.constant 0 : index
    %152 = vector.load %arg22[%c6_81, %c0_82] : memref<8x128xf32, #tpu.memory_space<vmem>>, vector<1x128xf32>
    tpu.vector_store %arg22[%c6_81, %c0_82], %150 {strides = array<i32>} : memref<8x128xf32, #tpu.memory_space<vmem>>, vector<1x128xf32>,
    %153 = vector.extract_strided_slice %45 {offsets = [2, 0], sizes = [1, 128], strides = [1, 1]} : vector<8x128xf32> to vector<1x128xf32>
    %154 = arith.truncf %126 : vector<1x128xf32> to vector<1x128xbf16>
    %c0_83 = arith.constant 0 : index
    %c0_84 = arith.constant 0 : index
    %155 = vector.load %arg3[%c0_83, %c0_84] : memref<128x128xbf16, #tpu.memory_space<vmem>>, vector<128x128xbf16>
    %cst_85 = arith.constant dense<0.000000e+00> : vector<1x128xf32>
    %156 = tpu.matmul %154, %155, %cst_85 {dimension_numbers = #tpu.dot_dimension_numbers<[1], [0], [0], [1], [0, 0, 1, 1], [], []>} : vector<1x128xbf16>, vector<128x128xbf16>, vector<1x128xf32> -> vector<1x128xf32>
    %c0_86 = arith.constant 0 : index
    %c0_87 = arith.constant 0 : index
    %157 = vector.load %arg5[%c0_86, %c0_87] : memref<1x128xf32, #tpu.memory_space<vmem>>, vector<1x128xf32>
    %158 = arith.addf %156, %157 : vector<1x128xf32>
    %159 = arith.addf %153, %158 : vector<1x128xf32>
    %160 = arith.negf %159 : vector<1x128xf32>
    %161 = math.exp %160 : vector<1x128xf32>
    %cst_88 = arith.constant 1.000000e+00 : f32
    %162 = vector.broadcast %cst_88 : f32 to vector<1x128xf32>
    %163 = arith.addf %162, %161 : vector<1x128xf32>
    %164 = arith.divf %162, %163 : vector<1x128xf32>
    %c64_i32_89 = arith.constant 64 : i32
    %165 = tpu.dynamic_rotate %164 by %c64_i32_89 dim 1 : vector<1x128xf32>, i32 -> vector<1x128xf32>
    %166 = arith.mulf %165, %158 : vector<1x128xf32>
    %167 = arith.addf %153, %166 : vector<1x128xf32>
    %168 = math.tanh %167 : vector<1x128xf32>
    %c96_i32_90 = arith.constant 96 : i32
    %169 = tpu.dynamic_rotate %164 by %c96_i32_90 dim 1 : vector<1x128xf32>, i32 -> vector<1x128xf32>
    %c64_i32_91 = arith.constant 64 : i32
    %170 = tpu.dynamic_rotate %168 by %c64_i32_91 dim 1 : vector<1x128xf32>, i32 -> vector<1x128xf32>
    %cst_92 = arith.constant 1.000000e+00 : f32
    %171 = vector.broadcast %cst_92 : f32 to vector<1x128xf32>
    %172 = arith.subf %171, %169 : vector<1x128xf32>
    %173 = arith.mulf %172, %170 : vector<1x128xf32>
    %174 = arith.mulf %169, %126 : vector<1x128xf32>
    %175 = arith.addf %173, %174 : vector<1x128xf32>
    %176 = arith.mulf %175, %4 : vector<1x128xf32>
    %177 = vector.extract_strided_slice %50 {offsets = [5, 0], sizes = [1, 128], strides = [1, 1]} : vector<8x128xf32> to vector<1x128xf32>
    %178 = arith.truncf %150 : vector<1x128xf32> to vector<1x128xbf16>
    %c0_93 = arith.constant 0 : index
    %c0_94 = arith.constant 0 : index
    %179 = vector.load %arg7[%c0_93, %c0_94] : memref<128x128xbf16, #tpu.memory_space<vmem>>, vector<128x128xbf16>
    %cst_95 = arith.constant dense<0.000000e+00> : vector<1x128xf32>
    %180 = tpu.matmul %178, %179, %cst_95 {dimension_numbers = #tpu.dot_dimension_numbers<[1], [0], [0], [1], [0, 0, 1, 1], [], []>} : vector<1x128xbf16>, vector<128x128xbf16>, vector<1x128xf32> -> vector<1x128xf32>
    %c0_96 = arith.constant 0 : index
    %c0_97 = arith.constant 0 : index
    %181 = vector.load %arg9[%c0_96, %c0_97] : memref<1x128xf32, #tpu.memory_space<vmem>>, vector<1x128xf32>
    %182 = arith.addf %180, %181 : vector<1x128xf32>
    %183 = arith.addf %177, %182 : vector<1x128xf32>
    %184 = arith.negf %183 : vector<1x128xf32>
    %185 = math.exp %184 : vector<1x128xf32>
    %cst_98 = arith.constant 1.000000e+00 : f32
    %186 = vector.broadcast %cst_98 : f32 to vector<1x128xf32>
    %187 = arith.addf %186, %185 : vector<1x128xf32>
    %188 = arith.divf %186, %187 : vector<1x128xf32>
    %c64_i32_99 = arith.constant 64 : i32
    %189 = tpu.dynamic_rotate %188 by %c64_i32_99 dim 1 : vector<1x128xf32>, i32 -> vector<1x128xf32>
    %190 = arith.mulf %189, %182 : vector<1x128xf32>
    %191 = arith.addf %177, %190 : vector<1x128xf32>
    %192 = math.tanh %191 : vector<1x128xf32>
    %c96_i32_100 = arith.constant 96 : i32
    %193 = tpu.dynamic_rotate %188 by %c96_i32_100 dim 1 : vector<1x128xf32>, i32 -> vector<1x128xf32>
    %c64_i32_101 = arith.constant 64 : i32
    %194 = tpu.dynamic_rotate %192 by %c64_i32_101 dim 1 : vector<1x128xf32>, i32 -> vector<1x128xf32>
    %cst_102 = arith.constant 1.000000e+00 : f32
    %195 = vector.broadcast %cst_102 : f32 to vector<1x128xf32>
    %196 = arith.subf %195, %193 : vector<1x128xf32>
    %197 = arith.mulf %196, %194 : vector<1x128xf32>
    %198 = arith.mulf %193, %150 : vector<1x128xf32>
    %199 = arith.addf %197, %198 : vector<1x128xf32>
    %200 = arith.mulf %199, %4 : vector<1x128xf32>
    %c2_103 = arith.constant 2 : index
    %c0_104 = arith.constant 0 : index
    %201 = vector.load %arg21[%c2_103, %c0_104] : memref<8x128xf32, #tpu.memory_space<vmem>>, vector<1x128xf32>
    tpu.vector_store %arg21[%c2_103, %c0_104], %176 {strides = array<i32>} : memref<8x128xf32, #tpu.memory_space<vmem>>, vector<1x128xf32>,
    %c5_105 = arith.constant 5 : index
    %c0_106 = arith.constant 0 : index
    %202 = vector.load %arg22[%c5_105, %c0_106] : memref<8x128xf32, #tpu.memory_space<vmem>>, vector<1x128xf32>
    tpu.vector_store %arg22[%c5_105, %c0_106], %200 {strides = array<i32>} : memref<8x128xf32, #tpu.memory_space<vmem>>, vector<1x128xf32>,
    %203 = vector.extract_strided_slice %45 {offsets = [3, 0], sizes = [1, 128], strides = [1, 1]} : vector<8x128xf32> to vector<1x128xf32>
    %204 = arith.truncf %176 : vector<1x128xf32> to vector<1x128xbf16>
    %c0_107 = arith.constant 0 : index
    %c0_108 = arith.constant 0 : index
    %205 = vector.load %arg3[%c0_107, %c0_108] : memref<128x128xbf16, #tpu.memory_space<vmem>>, vector<128x128xbf16>
    %cst_109 = arith.constant dense<0.000000e+00> : vector<1x128xf32>
    %206 = tpu.matmul %204, %205, %cst_109 {dimension_numbers = #tpu.dot_dimension_numbers<[1], [0], [0], [1], [0, 0, 1, 1], [], []>} : vector<1x128xbf16>, vector<128x128xbf16>, vector<1x128xf32> -> vector<1x128xf32>
    %c0_110 = arith.constant 0 : index
    %c0_111 = arith.constant 0 : index
    %207 = vector.load %arg5[%c0_110, %c0_111] : memref<1x128xf32, #tpu.memory_space<vmem>>, vector<1x128xf32>
    %208 = arith.addf %206, %207 : vector<1x128xf32>
    %209 = arith.addf %203, %208 : vector<1x128xf32>
    %210 = arith.negf %209 : vector<1x128xf32>
    %211 = math.exp %210 : vector<1x128xf32>
    %cst_112 = arith.constant 1.000000e+00 : f32
    %212 = vector.broadcast %cst_112 : f32 to vector<1x128xf32>
    %213 = arith.addf %212, %211 : vector<1x128xf32>
    %214 = arith.divf %212, %213 : vector<1x128xf32>
    %c64_i32_113 = arith.constant 64 : i32
    %215 = tpu.dynamic_rotate %214 by %c64_i32_113 dim 1 : vector<1x128xf32>, i32 -> vector<1x128xf32>
    %216 = arith.mulf %215, %208 : vector<1x128xf32>
    %217 = arith.addf %203, %216 : vector<1x128xf32>
    %218 = math.tanh %217 : vector<1x128xf32>
    %c96_i32_114 = arith.constant 96 : i32
    %219 = tpu.dynamic_rotate %214 by %c96_i32_114 dim 1 : vector<1x128xf32>, i32 -> vector<1x128xf32>
    %c64_i32_115 = arith.constant 64 : i32
    %220 = tpu.dynamic_rotate %218 by %c64_i32_115 dim 1 : vector<1x128xf32>, i32 -> vector<1x128xf32>
    %cst_116 = arith.constant 1.000000e+00 : f32
    %221 = vector.broadcast %cst_116 : f32 to vector<1x128xf32>
    %222 = arith.subf %221, %219 : vector<1x128xf32>
    %223 = arith.mulf %222, %220 : vector<1x128xf32>
    %224 = arith.mulf %219, %176 : vector<1x128xf32>
    %225 = arith.addf %223, %224 : vector<1x128xf32>
    %226 = arith.mulf %225, %4 : vector<1x128xf32>
    %227 = vector.extract_strided_slice %50 {offsets = [4, 0], sizes = [1, 128], strides = [1, 1]} : vector<8x128xf32> to vector<1x128xf32>
    %228 = arith.truncf %200 : vector<1x128xf32> to vector<1x128xbf16>
    %c0_117 = arith.constant 0 : index
    %c0_118 = arith.constant 0 : index
    %229 = vector.load %arg7[%c0_117, %c0_118] : memref<128x128xbf16, #tpu.memory_space<vmem>>, vector<128x128xbf16>
    %cst_119 = arith.constant dense<0.000000e+00> : vector<1x128xf32>
    %230 = tpu.matmul %228, %229, %cst_119 {dimension_numbers = #tpu.dot_dimension_numbers<[1], [0], [0], [1], [0, 0, 1, 1], [], []>} : vector<1x128xbf16>, vector<128x128xbf16>, vector<1x128xf32> -> vector<1x128xf32>
    %c0_120 = arith.constant 0 : index
    %c0_121 = arith.constant 0 : index
    %231 = vector.load %arg9[%c0_120, %c0_121] : memref<1x128xf32, #tpu.memory_space<vmem>>, vector<1x128xf32>
    %232 = arith.addf %230, %231 : vector<1x128xf32>
    %233 = arith.addf %227, %232 : vector<1x128xf32>
    %234 = arith.negf %233 : vector<1x128xf32>
    %235 = math.exp %234 : vector<1x128xf32>
    %cst_122 = arith.constant 1.000000e+00 : f32
    %236 = vector.broadcast %cst_122 : f32 to vector<1x128xf32>
    %237 = arith.addf %236, %235 : vector<1x128xf32>
    %238 = arith.divf %236, %237 : vector<1x128xf32>
    %c64_i32_123 = arith.constant 64 : i32
    %239 = tpu.dynamic_rotate %238 by %c64_i32_123 dim 1 : vector<1x128xf32>, i32 -> vector<1x128xf32>
    %240 = arith.mulf %239, %232 : vector<1x128xf32>
    %241 = arith.addf %227, %240 : vector<1x128xf32>
    %242 = math.tanh %241 : vector<1x128xf32>
    %c96_i32_124 = arith.constant 96 : i32
    %243 = tpu.dynamic_rotate %238 by %c96_i32_124 dim 1 : vector<1x128xf32>, i32 -> vector<1x128xf32>
    %c64_i32_125 = arith.constant 64 : i32
    %244 = tpu.dynamic_rotate %242 by %c64_i32_125 dim 1 : vector<1x128xf32>, i32 -> vector<1x128xf32>
    %cst_126 = arith.constant 1.000000e+00 : f32
    %245 = vector.broadcast %cst_126 : f32 to vector<1x128xf32>
    %246 = arith.subf %245, %243 : vector<1x128xf32>
    %247 = arith.mulf %246, %244 : vector<1x128xf32>
    %248 = arith.mulf %243, %200 : vector<1x128xf32>
    %249 = arith.addf %247, %248 : vector<1x128xf32>
    %250 = arith.mulf %249, %4 : vector<1x128xf32>
    %c3_127 = arith.constant 3 : index
    %c0_128 = arith.constant 0 : index
    %251 = vector.load %arg21[%c3_127, %c0_128] : memref<8x128xf32, #tpu.memory_space<vmem>>, vector<1x128xf32>
    tpu.vector_store %arg21[%c3_127, %c0_128], %226 {strides = array<i32>} : memref<8x128xf32, #tpu.memory_space<vmem>>, vector<1x128xf32>,
    %c4_129 = arith.constant 4 : index
    %c0_130 = arith.constant 0 : index
    %252 = vector.load %arg22[%c4_129, %c0_130] : memref<8x128xf32, #tpu.memory_space<vmem>>, vector<1x128xf32>
    tpu.vector_store %arg22[%c4_129, %c0_130], %250 {strides = array<i32>} : memref<8x128xf32, #tpu.memory_space<vmem>>, vector<1x128xf32>,
    %253 = vector.extract_strided_slice %45 {offsets = [4, 0], sizes = [1, 128], strides = [1, 1]} : vector<8x128xf32> to vector<1x128xf32>
    %254 = arith.truncf %226 : vector<1x128xf32> to vector<1x128xbf16>
    %c0_131 = arith.constant 0 : index
    %c0_132 = arith.constant 0 : index
    %255 = vector.load %arg3[%c0_131, %c0_132] : memref<128x128xbf16, #tpu.memory_space<vmem>>, vector<128x128xbf16>
    %cst_133 = arith.constant dense<0.000000e+00> : vector<1x128xf32>
    %256 = tpu.matmul %254, %255, %cst_133 {dimension_numbers = #tpu.dot_dimension_numbers<[1], [0], [0], [1], [0, 0, 1, 1], [], []>} : vector<1x128xbf16>, vector<128x128xbf16>, vector<1x128xf32> -> vector<1x128xf32>
    %c0_134 = arith.constant 0 : index
    %c0_135 = arith.constant 0 : index
    %257 = vector.load %arg5[%c0_134, %c0_135] : memref<1x128xf32, #tpu.memory_space<vmem>>, vector<1x128xf32>
    %258 = arith.addf %256, %257 : vector<1x128xf32>
    %259 = arith.addf %253, %258 : vector<1x128xf32>
    %260 = arith.negf %259 : vector<1x128xf32>
    %261 = math.exp %260 : vector<1x128xf32>
    %cst_136 = arith.constant 1.000000e+00 : f32
    %262 = vector.broadcast %cst_136 : f32 to vector<1x128xf32>
    %263 = arith.addf %262, %261 : vector<1x128xf32>
    %264 = arith.divf %262, %263 : vector<1x128xf32>
    %c64_i32_137 = arith.constant 64 : i32
    %265 = tpu.dynamic_rotate %264 by %c64_i32_137 dim 1 : vector<1x128xf32>, i32 -> vector<1x128xf32>
    %266 = arith.mulf %265, %258 : vector<1x128xf32>
    %267 = arith.addf %253, %266 : vector<1x128xf32>
    %268 = math.tanh %267 : vector<1x128xf32>
    %c96_i32_138 = arith.constant 96 : i32
    %269 = tpu.dynamic_rotate %264 by %c96_i32_138 dim 1 : vector<1x128xf32>, i32 -> vector<1x128xf32>
    %c64_i32_139 = arith.constant 64 : i32
    %270 = tpu.dynamic_rotate %268 by %c64_i32_139 dim 1 : vector<1x128xf32>, i32 -> vector<1x128xf32>
    %cst_140 = arith.constant 1.000000e+00 : f32
    %271 = vector.broadcast %cst_140 : f32 to vector<1x128xf32>
    %272 = arith.subf %271, %269 : vector<1x128xf32>
    %273 = arith.mulf %272, %270 : vector<1x128xf32>
    %274 = arith.mulf %269, %226 : vector<1x128xf32>
    %275 = arith.addf %273, %274 : vector<1x128xf32>
    %276 = arith.mulf %275, %4 : vector<1x128xf32>
    %277 = vector.extract_strided_slice %50 {offsets = [3, 0], sizes = [1, 128], strides = [1, 1]} : vector<8x128xf32> to vector<1x128xf32>
    %278 = arith.truncf %250 : vector<1x128xf32> to vector<1x128xbf16>
    %c0_141 = arith.constant 0 : index
    %c0_142 = arith.constant 0 : index
    %279 = vector.load %arg7[%c0_141, %c0_142] : memref<128x128xbf16, #tpu.memory_space<vmem>>, vector<128x128xbf16>
    %cst_143 = arith.constant dense<0.000000e+00> : vector<1x128xf32>
    %280 = tpu.matmul %278, %279, %cst_143 {dimension_numbers = #tpu.dot_dimension_numbers<[1], [0], [0], [1], [0, 0, 1, 1], [], []>} : vector<1x128xbf16>, vector<128x128xbf16>, vector<1x128xf32> -> vector<1x128xf32>
    %c0_144 = arith.constant 0 : index
    %c0_145 = arith.constant 0 : index
    %281 = vector.load %arg9[%c0_144, %c0_145] : memref<1x128xf32, #tpu.memory_space<vmem>>, vector<1x128xf32>
    %282 = arith.addf %280, %281 : vector<1x128xf32>
    %283 = arith.addf %277, %282 : vector<1x128xf32>
    %284 = arith.negf %283 : vector<1x128xf32>
    %285 = math.exp %284 : vector<1x128xf32>
    %cst_146 = arith.constant 1.000000e+00 : f32
    %286 = vector.broadcast %cst_146 : f32 to vector<1x128xf32>
    %287 = arith.addf %286, %285 : vector<1x128xf32>
    %288 = arith.divf %286, %287 : vector<1x128xf32>
    %c64_i32_147 = arith.constant 64 : i32
    %289 = tpu.dynamic_rotate %288 by %c64_i32_147 dim 1 : vector<1x128xf32>, i32 -> vector<1x128xf32>
    %290 = arith.mulf %289, %282 : vector<1x128xf32>
    %291 = arith.addf %277, %290 : vector<1x128xf32>
    %292 = math.tanh %291 : vector<1x128xf32>
    %c96_i32_148 = arith.constant 96 : i32
    %293 = tpu.dynamic_rotate %288 by %c96_i32_148 dim 1 : vector<1x128xf32>, i32 -> vector<1x128xf32>
    %c64_i32_149 = arith.constant 64 : i32
    %294 = tpu.dynamic_rotate %292 by %c64_i32_149 dim 1 : vector<1x128xf32>, i32 -> vector<1x128xf32>
    %cst_150 = arith.constant 1.000000e+00 : f32
    %295 = vector.broadcast %cst_150 : f32 to vector<1x128xf32>
    %296 = arith.subf %295, %293 : vector<1x128xf32>
    %297 = arith.mulf %296, %294 : vector<1x128xf32>
    %298 = arith.mulf %293, %250 : vector<1x128xf32>
    %299 = arith.addf %297, %298 : vector<1x128xf32>
    %300 = arith.mulf %299, %4 : vector<1x128xf32>
    %c4_151 = arith.constant 4 : index
    %c0_152 = arith.constant 0 : index
    %301 = vector.load %arg21[%c4_151, %c0_152] : memref<8x128xf32, #tpu.memory_space<vmem>>, vector<1x128xf32>
    tpu.vector_store %arg21[%c4_151, %c0_152], %276 {strides = array<i32>} : memref<8x128xf32, #tpu.memory_space<vmem>>, vector<1x128xf32>,
    %c3_153 = arith.constant 3 : index
    %c0_154 = arith.constant 0 : index
    %302 = vector.load %arg22[%c3_153, %c0_154] : memref<8x128xf32, #tpu.memory_space<vmem>>, vector<1x128xf32>
    tpu.vector_store %arg22[%c3_153, %c0_154], %300 {strides = array<i32>} : memref<8x128xf32, #tpu.memory_space<vmem>>, vector<1x128xf32>,
    %303 = vector.extract_strided_slice %45 {offsets = [5, 0], sizes = [1, 128], strides = [1, 1]} : vector<8x128xf32> to vector<1x128xf32>
    %304 = arith.truncf %276 : vector<1x128xf32> to vector<1x128xbf16>
    %c0_155 = arith.constant 0 : index
    %c0_156 = arith.constant 0 : index
    %305 = vector.load %arg3[%c0_155, %c0_156] : memref<128x128xbf16, #tpu.memory_space<vmem>>, vector<128x128xbf16>
    %cst_157 = arith.constant dense<0.000000e+00> : vector<1x128xf32>
    %306 = tpu.matmul %304, %305, %cst_157 {dimension_numbers = #tpu.dot_dimension_numbers<[1], [0], [0], [1], [0, 0, 1, 1], [], []>} : vector<1x128xbf16>, vector<128x128xbf16>, vector<1x128xf32> -> vector<1x128xf32>
    %c0_158 = arith.constant 0 : index
    %c0_159 = arith.constant 0 : index
    %307 = vector.load %arg5[%c0_158, %c0_159] : memref<1x128xf32, #tpu.memory_space<vmem>>, vector<1x128xf32>
    %308 = arith.addf %306, %307 : vector<1x128xf32>
    %309 = arith.addf %303, %308 : vector<1x128xf32>
    %310 = arith.negf %309 : vector<1x128xf32>
    %311 = math.exp %310 : vector<1x128xf32>
    %cst_160 = arith.constant 1.000000e+00 : f32
    %312 = vector.broadcast %cst_160 : f32 to vector<1x128xf32>
    %313 = arith.addf %312, %311 : vector<1x128xf32>
    %314 = arith.divf %312, %313 : vector<1x128xf32>
    %c64_i32_161 = arith.constant 64 : i32
    %315 = tpu.dynamic_rotate %314 by %c64_i32_161 dim 1 : vector<1x128xf32>, i32 -> vector<1x128xf32>
    %316 = arith.mulf %315, %308 : vector<1x128xf32>
    %317 = arith.addf %303, %316 : vector<1x128xf32>
    %318 = math.tanh %317 : vector<1x128xf32>
    %c96_i32_162 = arith.constant 96 : i32
    %319 = tpu.dynamic_rotate %314 by %c96_i32_162 dim 1 : vector<1x128xf32>, i32 -> vector<1x128xf32>
    %c64_i32_163 = arith.constant 64 : i32
    %320 = tpu.dynamic_rotate %318 by %c64_i32_163 dim 1 : vector<1x128xf32>, i32 -> vector<1x128xf32>
    %cst_164 = arith.constant 1.000000e+00 : f32
    %321 = vector.broadcast %cst_164 : f32 to vector<1x128xf32>
    %322 = arith.subf %321, %319 : vector<1x128xf32>
    %323 = arith.mulf %322, %320 : vector<1x128xf32>
    %324 = arith.mulf %319, %276 : vector<1x128xf32>
    %325 = arith.addf %323, %324 : vector<1x128xf32>
    %326 = arith.mulf %325, %4 : vector<1x128xf32>
    %327 = vector.extract_strided_slice %50 {offsets = [2, 0], sizes = [1, 128], strides = [1, 1]} : vector<8x128xf32> to vector<1x128xf32>
    %328 = arith.truncf %300 : vector<1x128xf32> to vector<1x128xbf16>
    %c0_165 = arith.constant 0 : index
    %c0_166 = arith.constant 0 : index
    %329 = vector.load %arg7[%c0_165, %c0_166] : memref<128x128xbf16, #tpu.memory_space<vmem>>, vector<128x128xbf16>
    %cst_167 = arith.constant dense<0.000000e+00> : vector<1x128xf32>
    %330 = tpu.matmul %328, %329, %cst_167 {dimension_numbers = #tpu.dot_dimension_numbers<[1], [0], [0], [1], [0, 0, 1, 1], [], []>} : vector<1x128xbf16>, vector<128x128xbf16>, vector<1x128xf32> -> vector<1x128xf32>
    %c0_168 = arith.constant 0 : index
    %c0_169 = arith.constant 0 : index
    %331 = vector.load %arg9[%c0_168, %c0_169] : memref<1x128xf32, #tpu.memory_space<vmem>>, vector<1x128xf32>
    %332 = arith.addf %330, %331 : vector<1x128xf32>
    %333 = arith.addf %327, %332 : vector<1x128xf32>
    %334 = arith.negf %333 : vector<1x128xf32>
    %335 = math.exp %334 : vector<1x128xf32>
    %cst_170 = arith.constant 1.000000e+00 : f32
    %336 = vector.broadcast %cst_170 : f32 to vector<1x128xf32>
    %337 = arith.addf %336, %335 : vector<1x128xf32>
    %338 = arith.divf %336, %337 : vector<1x128xf32>
    %c64_i32_171 = arith.constant 64 : i32
    %339 = tpu.dynamic_rotate %338 by %c64_i32_171 dim 1 : vector<1x128xf32>, i32 -> vector<1x128xf32>
    %340 = arith.mulf %339, %332 : vector<1x128xf32>
    %341 = arith.addf %327, %340 : vector<1x128xf32>
    %342 = math.tanh %341 : vector<1x128xf32>
    %c96_i32_172 = arith.constant 96 : i32
    %343 = tpu.dynamic_rotate %338 by %c96_i32_172 dim 1 : vector<1x128xf32>, i32 -> vector<1x128xf32>
    %c64_i32_173 = arith.constant 64 : i32
    %344 = tpu.dynamic_rotate %342 by %c64_i32_173 dim 1 : vector<1x128xf32>, i32 -> vector<1x128xf32>
    %cst_174 = arith.constant 1.000000e+00 : f32
    %345 = vector.broadcast %cst_174 : f32 to vector<1x128xf32>
    %346 = arith.subf %345, %343 : vector<1x128xf32>
    %347 = arith.mulf %346, %344 : vector<1x128xf32>
    %348 = arith.mulf %343, %300 : vector<1x128xf32>
    %349 = arith.addf %347, %348 : vector<1x128xf32>
    %350 = arith.mulf %349, %4 : vector<1x128xf32>
    %c5_175 = arith.constant 5 : index
    %c0_176 = arith.constant 0 : index
    %351 = vector.load %arg21[%c5_175, %c0_176] : memref<8x128xf32, #tpu.memory_space<vmem>>, vector<1x128xf32>
    tpu.vector_store %arg21[%c5_175, %c0_176], %326 {strides = array<i32>} : memref<8x128xf32, #tpu.memory_space<vmem>>, vector<1x128xf32>,
    %c2_177 = arith.constant 2 : index
    %c0_178 = arith.constant 0 : index
    %352 = vector.load %arg22[%c2_177, %c0_178] : memref<8x128xf32, #tpu.memory_space<vmem>>, vector<1x128xf32>
    tpu.vector_store %arg22[%c2_177, %c0_178], %350 {strides = array<i32>} : memref<8x128xf32, #tpu.memory_space<vmem>>, vector<1x128xf32>,
    %353 = vector.extract_strided_slice %45 {offsets = [6, 0], sizes = [1, 128], strides = [1, 1]} : vector<8x128xf32> to vector<1x128xf32>
    %354 = arith.truncf %326 : vector<1x128xf32> to vector<1x128xbf16>
    %c0_179 = arith.constant 0 : index
    %c0_180 = arith.constant 0 : index
    %355 = vector.load %arg3[%c0_179, %c0_180] : memref<128x128xbf16, #tpu.memory_space<vmem>>, vector<128x128xbf16>
    %cst_181 = arith.constant dense<0.000000e+00> : vector<1x128xf32>
    %356 = tpu.matmul %354, %355, %cst_181 {dimension_numbers = #tpu.dot_dimension_numbers<[1], [0], [0], [1], [0, 0, 1, 1], [], []>} : vector<1x128xbf16>, vector<128x128xbf16>, vector<1x128xf32> -> vector<1x128xf32>
    %c0_182 = arith.constant 0 : index
    %c0_183 = arith.constant 0 : index
    %357 = vector.load %arg5[%c0_182, %c0_183] : memref<1x128xf32, #tpu.memory_space<vmem>>, vector<1x128xf32>
    %358 = arith.addf %356, %357 : vector<1x128xf32>
    %359 = arith.addf %353, %358 : vector<1x128xf32>
    %360 = arith.negf %359 : vector<1x128xf32>
    %361 = math.exp %360 : vector<1x128xf32>
    %cst_184 = arith.constant 1.000000e+00 : f32
    %362 = vector.broadcast %cst_184 : f32 to vector<1x128xf32>
    %363 = arith.addf %362, %361 : vector<1x128xf32>
    %364 = arith.divf %362, %363 : vector<1x128xf32>
    %c64_i32_185 = arith.constant 64 : i32
    %365 = tpu.dynamic_rotate %364 by %c64_i32_185 dim 1 : vector<1x128xf32>, i32 -> vector<1x128xf32>
    %366 = arith.mulf %365, %358 : vector<1x128xf32>
    %367 = arith.addf %353, %366 : vector<1x128xf32>
    %368 = math.tanh %367 : vector<1x128xf32>
    %c96_i32_186 = arith.constant 96 : i32
    %369 = tpu.dynamic_rotate %364 by %c96_i32_186 dim 1 : vector<1x128xf32>, i32 -> vector<1x128xf32>
    %c64_i32_187 = arith.constant 64 : i32
    %370 = tpu.dynamic_rotate %368 by %c64_i32_187 dim 1 : vector<1x128xf32>, i32 -> vector<1x128xf32>
    %cst_188 = arith.constant 1.000000e+00 : f32
    %371 = vector.broadcast %cst_188 : f32 to vector<1x128xf32>
    %372 = arith.subf %371, %369 : vector<1x128xf32>
    %373 = arith.mulf %372, %370 : vector<1x128xf32>
    %374 = arith.mulf %369, %326 : vector<1x128xf32>
    %375 = arith.addf %373, %374 : vector<1x128xf32>
    %376 = arith.mulf %375, %4 : vector<1x128xf32>
    %377 = vector.extract_strided_slice %50 {offsets = [1, 0], sizes = [1, 128], strides = [1, 1]} : vector<8x128xf32> to vector<1x128xf32>
    %378 = arith.truncf %350 : vector<1x128xf32> to vector<1x128xbf16>
    %c0_189 = arith.constant 0 : index
    %c0_190 = arith.constant 0 : index
    %379 = vector.load %arg7[%c0_189, %c0_190] : memref<128x128xbf16, #tpu.memory_space<vmem>>, vector<128x128xbf16>
    %cst_191 = arith.constant dense<0.000000e+00> : vector<1x128xf32>
    %380 = tpu.matmul %378, %379, %cst_191 {dimension_numbers = #tpu.dot_dimension_numbers<[1], [0], [0], [1], [0, 0, 1, 1], [], []>} : vector<1x128xbf16>, vector<128x128xbf16>, vector<1x128xf32> -> vector<1x128xf32>
    %c0_192 = arith.constant 0 : index
    %c0_193 = arith.constant 0 : index
    %381 = vector.load %arg9[%c0_192, %c0_193] : memref<1x128xf32, #tpu.memory_space<vmem>>, vector<1x128xf32>
    %382 = arith.addf %380, %381 : vector<1x128xf32>
    %383 = arith.addf %377, %382 : vector<1x128xf32>
    %384 = arith.negf %383 : vector<1x128xf32>
    %385 = math.exp %384 : vector<1x128xf32>
    %cst_194 = arith.constant 1.000000e+00 : f32
    %386 = vector.broadcast %cst_194 : f32 to vector<1x128xf32>
    %387 = arith.addf %386, %385 : vector<1x128xf32>
    %388 = arith.divf %386, %387 : vector<1x128xf32>
    %c64_i32_195 = arith.constant 64 : i32
    %389 = tpu.dynamic_rotate %388 by %c64_i32_195 dim 1 : vector<1x128xf32>, i32 -> vector<1x128xf32>
    %390 = arith.mulf %389, %382 : vector<1x128xf32>
    %391 = arith.addf %377, %390 : vector<1x128xf32>
    %392 = math.tanh %391 : vector<1x128xf32>
    %c96_i32_196 = arith.constant 96 : i32
    %393 = tpu.dynamic_rotate %388 by %c96_i32_196 dim 1 : vector<1x128xf32>, i32 -> vector<1x128xf32>
    %c64_i32_197 = arith.constant 64 : i32
    %394 = tpu.dynamic_rotate %392 by %c64_i32_197 dim 1 : vector<1x128xf32>, i32 -> vector<1x128xf32>
    %cst_198 = arith.constant 1.000000e+00 : f32
    %395 = vector.broadcast %cst_198 : f32 to vector<1x128xf32>
    %396 = arith.subf %395, %393 : vector<1x128xf32>
    %397 = arith.mulf %396, %394 : vector<1x128xf32>
    %398 = arith.mulf %393, %350 : vector<1x128xf32>
    %399 = arith.addf %397, %398 : vector<1x128xf32>
    %400 = arith.mulf %399, %4 : vector<1x128xf32>
    %c6_199 = arith.constant 6 : index
    %c0_200 = arith.constant 0 : index
    %401 = vector.load %arg21[%c6_199, %c0_200] : memref<8x128xf32, #tpu.memory_space<vmem>>, vector<1x128xf32>
    tpu.vector_store %arg21[%c6_199, %c0_200], %376 {strides = array<i32>} : memref<8x128xf32, #tpu.memory_space<vmem>>, vector<1x128xf32>,
    %c1_201 = arith.constant 1 : index
    %c0_202 = arith.constant 0 : index
    %402 = vector.load %arg22[%c1_201, %c0_202] : memref<8x128xf32, #tpu.memory_space<vmem>>, vector<1x128xf32>
    tpu.vector_store %arg22[%c1_201, %c0_202], %400 {strides = array<i32>} : memref<8x128xf32, #tpu.memory_space<vmem>>, vector<1x128xf32>,
    %403 = vector.extract_strided_slice %45 {offsets = [7, 0], sizes = [1, 128], strides = [1, 1]} : vector<8x128xf32> to vector<1x128xf32>
    %404 = arith.truncf %376 : vector<1x128xf32> to vector<1x128xbf16>
    %c0_203 = arith.constant 0 : index
    %c0_204 = arith.constant 0 : index
    %405 = vector.load %arg3[%c0_203, %c0_204] : memref<128x128xbf16, #tpu.memory_space<vmem>>, vector<128x128xbf16>
    %cst_205 = arith.constant dense<0.000000e+00> : vector<1x128xf32>
    %406 = tpu.matmul %404, %405, %cst_205 {dimension_numbers = #tpu.dot_dimension_numbers<[1], [0], [0], [1], [0, 0, 1, 1], [], []>} : vector<1x128xbf16>, vector<128x128xbf16>, vector<1x128xf32> -> vector<1x128xf32>
    %c0_206 = arith.constant 0 : index
    %c0_207 = arith.constant 0 : index
    %407 = vector.load %arg5[%c0_206, %c0_207] : memref<1x128xf32, #tpu.memory_space<vmem>>, vector<1x128xf32>
    %408 = arith.addf %406, %407 : vector<1x128xf32>
    %409 = arith.addf %403, %408 : vector<1x128xf32>
    %410 = arith.negf %409 : vector<1x128xf32>
    %411 = math.exp %410 : vector<1x128xf32>
    %cst_208 = arith.constant 1.000000e+00 : f32
    %412 = vector.broadcast %cst_208 : f32 to vector<1x128xf32>
    %413 = arith.addf %412, %411 : vector<1x128xf32>
    %414 = arith.divf %412, %413 : vector<1x128xf32>
    %c64_i32_209 = arith.constant 64 : i32
    %415 = tpu.dynamic_rotate %414 by %c64_i32_209 dim 1 : vector<1x128xf32>, i32 -> vector<1x128xf32>
    %416 = arith.mulf %415, %408 : vector<1x128xf32>
    %417 = arith.addf %403, %416 : vector<1x128xf32>
    %418 = math.tanh %417 : vector<1x128xf32>
    %c96_i32_210 = arith.constant 96 : i32
    %419 = tpu.dynamic_rotate %414 by %c96_i32_210 dim 1 : vector<1x128xf32>, i32 -> vector<1x128xf32>
    %c64_i32_211 = arith.constant 64 : i32
    %420 = tpu.dynamic_rotate %418 by %c64_i32_211 dim 1 : vector<1x128xf32>, i32 -> vector<1x128xf32>
    %cst_212 = arith.constant 1.000000e+00 : f32
    %421 = vector.broadcast %cst_212 : f32 to vector<1x128xf32>
    %422 = arith.subf %421, %419 : vector<1x128xf32>
    %423 = arith.mulf %422, %420 : vector<1x128xf32>
    %424 = arith.mulf %419, %376 : vector<1x128xf32>
    %425 = arith.addf %423, %424 : vector<1x128xf32>
    %426 = arith.mulf %425, %4 : vector<1x128xf32>
    %427 = vector.extract_strided_slice %50 {offsets = [0, 0], sizes = [1, 128], strides = [1, 1]} : vector<8x128xf32> to vector<1x128xf32>
    %428 = arith.truncf %400 : vector<1x128xf32> to vector<1x128xbf16>
    %c0_213 = arith.constant 0 : index
    %c0_214 = arith.constant 0 : index
    %429 = vector.load %arg7[%c0_213, %c0_214] : memref<128x128xbf16, #tpu.memory_space<vmem>>, vector<128x128xbf16>
    %cst_215 = arith.constant dense<0.000000e+00> : vector<1x128xf32>
    %430 = tpu.matmul %428, %429, %cst_215 {dimension_numbers = #tpu.dot_dimension_numbers<[1], [0], [0], [1], [0, 0, 1, 1], [], []>} : vector<1x128xbf16>, vector<128x128xbf16>, vector<1x128xf32> -> vector<1x128xf32>
    %c0_216 = arith.constant 0 : index
    %c0_217 = arith.constant 0 : index
    %431 = vector.load %arg9[%c0_216, %c0_217] : memref<1x128xf32, #tpu.memory_space<vmem>>, vector<1x128xf32>
    %432 = arith.addf %430, %431 : vector<1x128xf32>
    %433 = arith.addf %427, %432 : vector<1x128xf32>
    %434 = arith.negf %433 : vector<1x128xf32>
    %435 = math.exp %434 : vector<1x128xf32>
    %cst_218 = arith.constant 1.000000e+00 : f32
    %436 = vector.broadcast %cst_218 : f32 to vector<1x128xf32>
    %437 = arith.addf %436, %435 : vector<1x128xf32>
    %438 = arith.divf %436, %437 : vector<1x128xf32>
    %c64_i32_219 = arith.constant 64 : i32
    %439 = tpu.dynamic_rotate %438 by %c64_i32_219 dim 1 : vector<1x128xf32>, i32 -> vector<1x128xf32>
    %440 = arith.mulf %439, %432 : vector<1x128xf32>
    %441 = arith.addf %427, %440 : vector<1x128xf32>
    %442 = math.tanh %441 : vector<1x128xf32>
    %c96_i32_220 = arith.constant 96 : i32
    %443 = tpu.dynamic_rotate %438 by %c96_i32_220 dim 1 : vector<1x128xf32>, i32 -> vector<1x128xf32>
    %c64_i32_221 = arith.constant 64 : i32
    %444 = tpu.dynamic_rotate %442 by %c64_i32_221 dim 1 : vector<1x128xf32>, i32 -> vector<1x128xf32>
    %cst_222 = arith.constant 1.000000e+00 : f32
    %445 = vector.broadcast %cst_222 : f32 to vector<1x128xf32>
    %446 = arith.subf %445, %443 : vector<1x128xf32>
    %447 = arith.mulf %446, %444 : vector<1x128xf32>
    %448 = arith.mulf %443, %400 : vector<1x128xf32>
    %449 = arith.addf %447, %448 : vector<1x128xf32>
    %450 = arith.mulf %449, %4 : vector<1x128xf32>
    %c7_223 = arith.constant 7 : index
    %c0_224 = arith.constant 0 : index
    %451 = vector.load %arg21[%c7_223, %c0_224] : memref<8x128xf32, #tpu.memory_space<vmem>>, vector<1x128xf32>
    tpu.vector_store %arg21[%c7_223, %c0_224], %426 {strides = array<i32>} : memref<8x128xf32, #tpu.memory_space<vmem>>, vector<1x128xf32>,
    %c0_225 = arith.constant 0 : index
    %c0_226 = arith.constant 0 : index
    %452 = vector.load %arg22[%c0_225, %c0_226] : memref<8x128xf32, #tpu.memory_space<vmem>>, vector<1x128xf32>
    tpu.vector_store %arg22[%c0_225, %c0_226], %450 {strides = array<i32>} : memref<8x128xf32, #tpu.memory_space<vmem>>, vector<1x128xf32>,
    %c0_227 = arith.constant 0 : index
    %c0_228 = arith.constant 0 : index
    %453 = vector.load %arg21[%c0_227, %c0_228] : memref<8x128xf32, #tpu.memory_space<vmem>>, vector<8x128xf32>
    %c0_229 = arith.constant 0 : index
    %c0_230 = arith.constant 0 : index
    %454 = vector.load %arg22[%c0_229, %c0_230] : memref<8x128xf32, #tpu.memory_space<vmem>>, vector<8x128xf32>
    %455 = arith.addf %453, %454 : vector<8x128xf32>
    %456 = tpu.transpose %455, [1, 0] : vector<8x128xf32> -> vector<128x8xf32>
    %c0_231 = arith.constant 0 : index
    %c0_232 = arith.constant 0 : index
    %457 = vector.load %arg1[%c0_231, %c0_232] : memref<128x128xf32, #tpu.memory_space<vmem>>, vector<128x128xf32>
    %458 = arith.truncf %457 : vector<128x128xf32> to vector<128x128xbf16>
    %c0_233 = arith.constant 0 : index
    %c0_234 = arith.constant 0 : index
    %459 = vector.load %arg10[%c0_233, %c0_234] : memref<128x128xbf16, #tpu.memory_space<vmem>>, vector<128x128xbf16>
    %cst_235 = arith.constant dense<0.000000e+00> : vector<128x128xf32>
    %460 = tpu.matmul %458, %459, %cst_235 {dimension_numbers = #tpu.dot_dimension_numbers<[1], [0], [0], [1], [0, 0, 1, 1], [], []>} : vector<128x128xbf16>, vector<128x128xbf16>, vector<128x128xf32> -> vector<128x128xf32>
    %c0_236 = arith.constant 0 : index
    %c0_237 = arith.constant 0 : index
    %461 = vector.load %arg12[%c0_236, %c0_237] : memref<1x128xf32, #tpu.memory_space<vmem>>, vector<1x128xf32>
    %462 = vector.broadcast %461 : vector<1x128xf32> to vector<128x128xf32>
    %463 = arith.addf %460, %462 : vector<128x128xf32>
    %464 = arith.truncf %463 : vector<128x128xf32> to vector<128x128xbf16>
    %c0_238 = arith.constant 0 : index
    %c0_239 = arith.constant 0 : index
    %465 = vector.load %arg23[%c0_238, %c0_239] : memref<128x128xbf16, #tpu.memory_space<vmem>>, vector<128x128xbf16>
    tpu.vector_store %arg23[%c0_238, %c0_239], %464 {strides = array<i32>} : memref<128x128xbf16, #tpu.memory_space<vmem>>, vector<128x128xbf16>,
    %c1_i32 = arith.constant 1 : i32
    %466 = vector.broadcast %c1_i32 : i32 to vector<1x128xi32>
    %467 = arith.cmpi eq, %5, %466 : vector<1x128xi32>
    %468 = arith.extui %467 : vector<1x128xi1> to vector<1x128xi32>
    %469 = arith.sitofp %468 : vector<1x128xi32> to vector<1x128xf32>
    %470 = arith.truncf %469 : vector<1x128xf32> to vector<1x128xbf16>
    %c0_240 = arith.constant 0 : index
    %c0_241 = arith.constant 0 : index
    %471 = vector.load %arg23[%c0_240, %c0_241] : memref<128x128xbf16, #tpu.memory_space<vmem>>, vector<128x128xbf16>
    %cst_242 = arith.constant dense<0.000000e+00> : vector<1x128xf32>
    %472 = tpu.matmul %470, %471, %cst_242 {dimension_numbers = #tpu.dot_dimension_numbers<[1], [0], [0], [1], [0, 0, 1, 1], [], []>} : vector<1x128xbf16>, vector<128x128xbf16>, vector<1x128xf32> -> vector<1x128xf32>
    %c0_i32 = arith.constant 0 : i32
    %473 = vector.broadcast %c0_i32 : i32 to vector<1x128xi32>
    %cst_243 = arith.constant 0.000000e+00 : f32
    %474 = vector.broadcast %cst_243 : f32 to vector<1x128xf32>
    %475 = arith.truncf %426 : vector<1x128xf32> to vector<1x128xbf16>
    %c0_244 = arith.constant 0 : index
    %c0_245 = arith.constant 0 : index
    %476 = vector.load %arg11[%c0_244, %c0_245] : memref<128x128xbf16, #tpu.memory_space<vmem>>, vector<128x128xbf16>
    %cst_246 = arith.constant dense<0.000000e+00> : vector<1x128xf32>
    %477 = tpu.matmul %475, %476, %cst_246 {dimension_numbers = #tpu.dot_dimension_numbers<[1], [0], [0], [1], [0, 0, 1, 1], [], []>} : vector<1x128xbf16>, vector<128x128xbf16>, vector<1x128xf32> -> vector<1x128xf32>
    %c0_247 = arith.constant 0 : index
    %c0_248 = arith.constant 0 : index
    %478 = vector.load %arg13[%c0_247, %c0_248] : memref<1x128xf32, #tpu.memory_space<vmem>>, vector<1x128xf32>
    %479 = arith.addf %477, %478 : vector<1x128xf32>
    %480 = arith.addf %472, %479 : vector<1x128xf32>
    %481 = arith.negf %480 : vector<1x128xf32>
    %482 = math.exp %481 : vector<1x128xf32>
    %cst_249 = arith.constant 1.000000e+00 : f32
    %483 = vector.broadcast %cst_249 : f32 to vector<1x128xf32>
    %484 = arith.addf %483, %482 : vector<1x128xf32>
    %485 = arith.divf %483, %484 : vector<1x128xf32>
    %c64_i32_250 = arith.constant 64 : i32
    %486 = tpu.dynamic_rotate %485 by %c64_i32_250 dim 1 : vector<1x128xf32>, i32 -> vector<1x128xf32>
    %487 = arith.mulf %486, %479 : vector<1x128xf32>
    %488 = arith.addf %472, %487 : vector<1x128xf32>
    %489 = math.tanh %488 : vector<1x128xf32>
    %c96_i32_251 = arith.constant 96 : i32
    %490 = tpu.dynamic_rotate %485 by %c96_i32_251 dim 1 : vector<1x128xf32>, i32 -> vector<1x128xf32>
    %c64_i32_252 = arith.constant 64 : i32
    %491 = tpu.dynamic_rotate %489 by %c64_i32_252 dim 1 : vector<1x128xf32>, i32 -> vector<1x128xf32>
    %cst_253 = arith.constant 1.000000e+00 : f32
    %492 = vector.broadcast %cst_253 : f32 to vector<1x128xf32>
    %493 = arith.subf %492, %490 : vector<1x128xf32>
    %494 = arith.mulf %493, %491 : vector<1x128xf32>
    %495 = arith.mulf %490, %426 : vector<1x128xf32>
    %496 = arith.addf %494, %495 : vector<1x128xf32>
    %497 = arith.mulf %496, %4 : vector<1x128xf32>
    %cst_254 = arith.constant dense<0.000000e+00> : vector<1x8xf32>
    %498 = tpu.matmul %497, %456, %cst_254 {dimension_numbers = #tpu.dot_dimension_numbers<[1], [0], [0], [1], [0, 0, 1, 1], [], []>} : vector<1x128xf32>, vector<128x8xf32>, vector<1x8xf32> -> vector<1x8xf32>
    %cst_255 = arith.constant dense<0xFF800000> : vector<1xf32>
    %499 = vector.multi_reduction <maximumf>, %498, %cst_255 [1] : vector<1x8xf32> to vector<1xf32>
    %500 = vector.shape_cast %499 : vector<1xf32> to vector<1x1xf32>
    %501 = vector.broadcast %500 : vector<1x1xf32> to vector<1x8xf32>
    %502 = arith.subf %498, %501 : vector<1x8xf32>
    %503 = math.exp %502 : vector<1x8xf32>
    %cst_256 = arith.constant dense<0.000000e+00> : vector<1xf32>
    %504 = vector.multi_reduction <add>, %503, %cst_256 [1] : vector<1x8xf32> to vector<1xf32>
    %505 = vector.shape_cast %504 : vector<1xf32> to vector<1x1xf32>
    %506 = tpu.reciprocal %505 : vector<1x1xf32> -> vector<1x1xf32>
    %507 = vector.broadcast %506 : vector<1x1xf32> to vector<1x8xf32>
    %508 = arith.mulf %503, %507 : vector<1x8xf32>
    %cst_257 = arith.constant dense<0.000000e+00> : vector<1x128xf32>
    %509 = tpu.matmul %508, %455, %cst_257 {dimension_numbers = #tpu.dot_dimension_numbers<[1], [0], [0], [1], [0, 0, 1, 1], [], []>} : vector<1x8xf32>, vector<8x128xf32>, vector<1x128xf32> -> vector<1x128xf32>
    %510 = tpu.concatenate %497, %509 in 1 : vector<1x128xf32>, vector<1x128xf32> -> vector<1x256xf32>
    %511 = arith.truncf %510 : vector<1x256xf32> to vector<1x256xbf16>
    %c0_258 = arith.constant 0 : index
    %c0_259 = arith.constant 0 : index
    %512 = vector.load %arg14[%c0_258, %c0_259] : memref<256x128xbf16, #tpu.memory_space<vmem>>, vector<256x128xbf16>
    %cst_260 = arith.constant dense<0.000000e+00> : vector<1x128xf32>
    %513 = tpu.matmul %511, %512, %cst_260 {dimension_numbers = #tpu.dot_dimension_numbers<[1], [0], [0], [1], [0, 0, 1, 1], [], []>} : vector<1x256xbf16>, vector<256x128xbf16>, vector<1x128xf32> -> vector<1x128xf32>
    %c0_261 = arith.constant 0 : index
    %c0_262 = arith.constant 0 : index
    %514 = vector.load %arg15[%c0_261, %c0_262] : memref<1x128xf32, #tpu.memory_space<vmem>>, vector<1x128xf32>
    %515 = arith.addf %513, %514 : vector<1x128xf32>
    %516 = math.tanh %515 : vector<1x128xf32>
    %517 = arith.truncf %516 : vector<1x128xf32> to vector<1x128xbf16>
    %c0_263 = arith.constant 0 : index
    %c0_264 = arith.constant 0 : index
    %518 = vector.load %arg16[%c0_263, %c0_264] : memref<128x128xbf16, #tpu.memory_space<vmem>>, vector<128x128xbf16>
    %cst_265 = arith.constant dense<0.000000e+00> : vector<1x128xf32>
    %519 = tpu.matmul %517, %518, %cst_265 {dimension_numbers = #tpu.dot_dimension_numbers<[1], [0], [0], [1], [0, 0, 1, 1], [], []>} : vector<1x128xbf16>, vector<128x128xbf16>, vector<1x128xf32> -> vector<1x128xf32>
    %c0_266 = arith.constant 0 : index
    %c0_267 = arith.constant 0 : index
    %520 = vector.load %arg17[%c0_266, %c0_267] : memref<1x128xf32, #tpu.memory_space<vmem>>, vector<1x128xf32>
    %521 = arith.addf %519, %520 : vector<1x128xf32>
    %cst_268 = arith.constant dense<0xFF800000> : vector<1xf32>
    %522 = vector.multi_reduction <maximumf>, %521, %cst_268 [1] : vector<1x128xf32> to vector<1xf32>
    %523 = vector.shape_cast %522 : vector<1xf32> to vector<1x1xf32>
    %524 = vector.broadcast %523 : vector<1x1xf32> to vector<1x128xf32>
    %525 = arith.subf %521, %524 : vector<1x128xf32>
    %526 = math.exp %525 : vector<1x128xf32>
    %cst_269 = arith.constant dense<0.000000e+00> : vector<1xf32>
    %527 = vector.multi_reduction <add>, %526, %cst_269 [1] : vector<1x128xf32> to vector<1xf32>
    %528 = vector.shape_cast %527 : vector<1xf32> to vector<1x1xf32>
    %529 = tpu.reciprocal %528 : vector<1x1xf32> -> vector<1x1xf32>
    %530 = vector.broadcast %523 : vector<1x1xf32> to vector<1x128xf32>
    %531 = arith.cmpf oge, %521, %530 : vector<1x128xf32>
    %c128_i32 = arith.constant 128 : i32
    %532 = vector.broadcast %c128_i32 : i32 to vector<1x128xi32>
    %533 = arith.select %531, %5, %532 : vector<1x128xi1>, vector<1x128xi32>
    %cst_270 = arith.constant dense<2147483647> : vector<1xi32>
    %534 = vector.multi_reduction <minsi>, %533, %cst_270 [1] : vector<1x128xi32> to vector<1xi32>
    %535 = vector.shape_cast %534 : vector<1xi32> to vector<1x1xi32>
    %c0_i32_271 = arith.constant 0 : i32
    %536 = vector.broadcast %c0_i32_271 : i32 to vector<1x128xi32>
    %537 = arith.cmpi eq, %6, %536 : vector<1x128xi32>
    %538 = vector.shape_cast %535 : vector<1x1xi32> to vector<1x1xi32>
    %539 = vector.broadcast %538 : vector<1x1xi32> to vector<1x128xi32>
    %540 = arith.select %537, %539, %473 : vector<1x128xi1>, vector<1x128xi32>
    %c0_i32_272 = arith.constant 0 : i32
    %541 = vector.broadcast %c0_i32_272 : i32 to vector<1x128xi32>
    %542 = arith.cmpi eq, %6, %541 : vector<1x128xi32>
    %543 = vector.shape_cast %529 : vector<1x1xf32> to vector<1x1xf32>
    %544 = vector.broadcast %543 : vector<1x1xf32> to vector<1x128xf32>
    %545 = arith.select %542, %544, %474 : vector<1x128xi1>, vector<1x128xf32>
    %546 = vector.broadcast %535 : vector<1x1xi32> to vector<1x128xi32>
    %547 = arith.cmpi eq, %5, %546 : vector<1x128xi32>
    %548 = arith.extui %547 : vector<1x128xi1> to vector<1x128xi32>
    %549 = arith.sitofp %548 : vector<1x128xi32> to vector<1x128xf32>
    %550 = arith.truncf %549 : vector<1x128xf32> to vector<1x128xbf16>
    %c0_273 = arith.constant 0 : index
    %c0_274 = arith.constant 0 : index
    %551 = vector.load %arg23[%c0_273, %c0_274] : memref<128x128xbf16, #tpu.memory_space<vmem>>, vector<128x128xbf16>
    %cst_275 = arith.constant dense<0.000000e+00> : vector<1x128xf32>
    %552 = tpu.matmul %550, %551, %cst_275 {dimension_numbers = #tpu.dot_dimension_numbers<[1], [0], [0], [1], [0, 0, 1, 1], [], []>} : vector<1x128xbf16>, vector<128x128xbf16>, vector<1x128xf32> -> vector<1x128xf32>
    %553 = arith.truncf %497 : vector<1x128xf32> to vector<1x128xbf16>
    %c0_276 = arith.constant 0 : index
    %c0_277 = arith.constant 0 : index
    %554 = vector.load %arg11[%c0_276, %c0_277] : memref<128x128xbf16, #tpu.memory_space<vmem>>, vector<128x128xbf16>
    %cst_278 = arith.constant dense<0.000000e+00> : vector<1x128xf32>
    %555 = tpu.matmul %553, %554, %cst_278 {dimension_numbers = #tpu.dot_dimension_numbers<[1], [0], [0], [1], [0, 0, 1, 1], [], []>} : vector<1x128xbf16>, vector<128x128xbf16>, vector<1x128xf32> -> vector<1x128xf32>
    %c0_279 = arith.constant 0 : index
    %c0_280 = arith.constant 0 : index
    %556 = vector.load %arg13[%c0_279, %c0_280] : memref<1x128xf32, #tpu.memory_space<vmem>>, vector<1x128xf32>
    %557 = arith.addf %555, %556 : vector<1x128xf32>
    %558 = arith.addf %552, %557 : vector<1x128xf32>
    %559 = arith.negf %558 : vector<1x128xf32>
    %560 = math.exp %559 : vector<1x128xf32>
    %cst_281 = arith.constant 1.000000e+00 : f32
    %561 = vector.broadcast %cst_281 : f32 to vector<1x128xf32>
    %562 = arith.addf %561, %560 : vector<1x128xf32>
    %563 = arith.divf %561, %562 : vector<1x128xf32>
    %c64_i32_282 = arith.constant 64 : i32
    %564 = tpu.dynamic_rotate %563 by %c64_i32_282 dim 1 : vector<1x128xf32>, i32 -> vector<1x128xf32>
    %565 = arith.mulf %564, %557 : vector<1x128xf32>
    %566 = arith.addf %552, %565 : vector<1x128xf32>
    %567 = math.tanh %566 : vector<1x128xf32>
    %c96_i32_283 = arith.constant 96 : i32
    %568 = tpu.dynamic_rotate %563 by %c96_i32_283 dim 1 : vector<1x128xf32>, i32 -> vector<1x128xf32>
    %c64_i32_284 = arith.constant 64 : i32
    %569 = tpu.dynamic_rotate %567 by %c64_i32_284 dim 1 : vector<1x128xf32>, i32 -> vector<1x128xf32>
    %cst_285 = arith.constant 1.000000e+00 : f32
    %570 = vector.broadcast %cst_285 : f32 to vector<1x128xf32>
    %571 = arith.subf %570, %568 : vector<1x128xf32>
    %572 = arith.mulf %571, %569 : vector<1x128xf32>
    %573 = arith.mulf %568, %497 : vector<1x128xf32>
    %574 = arith.addf %572, %573 : vector<1x128xf32>
    %575 = arith.mulf %574, %4 : vector<1x128xf32>
    %cst_286 = arith.constant dense<0.000000e+00> : vector<1x8xf32>
    %576 = tpu.matmul %575, %456, %cst_286 {dimension_numbers = #tpu.dot_dimension_numbers<[1], [0], [0], [1], [0, 0, 1, 1], [], []>} : vector<1x128xf32>, vector<128x8xf32>, vector<1x8xf32> -> vector<1x8xf32>
    %cst_287 = arith.constant dense<0xFF800000> : vector<1xf32>
    %577 = vector.multi_reduction <maximumf>, %576, %cst_287 [1] : vector<1x8xf32> to vector<1xf32>
    %578 = vector.shape_cast %577 : vector<1xf32> to vector<1x1xf32>
    %579 = vector.broadcast %578 : vector<1x1xf32> to vector<1x8xf32>
    %580 = arith.subf %576, %579 : vector<1x8xf32>
    %581 = math.exp %580 : vector<1x8xf32>
    %cst_288 = arith.constant dense<0.000000e+00> : vector<1xf32>
    %582 = vector.multi_reduction <add>, %581, %cst_288 [1] : vector<1x8xf32> to vector<1xf32>
    %583 = vector.shape_cast %582 : vector<1xf32> to vector<1x1xf32>
    %584 = tpu.reciprocal %583 : vector<1x1xf32> -> vector<1x1xf32>
    %585 = vector.broadcast %584 : vector<1x1xf32> to vector<1x8xf32>
    %586 = arith.mulf %581, %585 : vector<1x8xf32>
    %cst_289 = arith.constant dense<0.000000e+00> : vector<1x128xf32>
    %587 = tpu.matmul %586, %455, %cst_289 {dimension_numbers = #tpu.dot_dimension_numbers<[1], [0], [0], [1], [0, 0, 1, 1], [], []>} : vector<1x8xf32>, vector<8x128xf32>, vector<1x128xf32> -> vector<1x128xf32>
    %588 = tpu.concatenate %575, %587 in 1 : vector<1x128xf32>, vector<1x128xf32> -> vector<1x256xf32>
    %589 = arith.truncf %588 : vector<1x256xf32> to vector<1x256xbf16>
    %c0_290 = arith.constant 0 : index
    %c0_291 = arith.constant 0 : index
    %590 = vector.load %arg14[%c0_290, %c0_291] : memref<256x128xbf16, #tpu.memory_space<vmem>>, vector<256x128xbf16>
    %cst_292 = arith.constant dense<0.000000e+00> : vector<1x128xf32>
    %591 = tpu.matmul %589, %590, %cst_292 {dimension_numbers = #tpu.dot_dimension_numbers<[1], [0], [0], [1], [0, 0, 1, 1], [], []>} : vector<1x256xbf16>, vector<256x128xbf16>, vector<1x128xf32> -> vector<1x128xf32>
    %c0_293 = arith.constant 0 : index
    %c0_294 = arith.constant 0 : index
    %592 = vector.load %arg15[%c0_293, %c0_294] : memref<1x128xf32, #tpu.memory_space<vmem>>, vector<1x128xf32>
    %593 = arith.addf %591, %592 : vector<1x128xf32>
    %594 = math.tanh %593 : vector<1x128xf32>
    %595 = arith.truncf %594 : vector<1x128xf32> to vector<1x128xbf16>
    %c0_295 = arith.constant 0 : index
    %c0_296 = arith.constant 0 : index
    %596 = vector.load %arg16[%c0_295, %c0_296] : memref<128x128xbf16, #tpu.memory_space<vmem>>, vector<128x128xbf16>
    %cst_297 = arith.constant dense<0.000000e+00> : vector<1x128xf32>
    %597 = tpu.matmul %595, %596, %cst_297 {dimension_numbers = #tpu.dot_dimension_numbers<[1], [0], [0], [1], [0, 0, 1, 1], [], []>} : vector<1x128xbf16>, vector<128x128xbf16>, vector<1x128xf32> -> vector<1x128xf32>
    %c0_298 = arith.constant 0 : index
    %c0_299 = arith.constant 0 : index
    %598 = vector.load %arg17[%c0_298, %c0_299] : memref<1x128xf32, #tpu.memory_space<vmem>>, vector<1x128xf32>
    %599 = arith.addf %597, %598 : vector<1x128xf32>
    %cst_300 = arith.constant dense<0xFF800000> : vector<1xf32>
    %600 = vector.multi_reduction <maximumf>, %599, %cst_300 [1] : vector<1x128xf32> to vector<1xf32>
    %601 = vector.shape_cast %600 : vector<1xf32> to vector<1x1xf32>
    %602 = vector.broadcast %601 : vector<1x1xf32> to vector<1x128xf32>
    %603 = arith.subf %599, %602 : vector<1x128xf32>
    %604 = math.exp %603 : vector<1x128xf32>
    %cst_301 = arith.constant dense<0.000000e+00> : vector<1xf32>
    %605 = vector.multi_reduction <add>, %604, %cst_301 [1] : vector<1x128xf32> to vector<1xf32>
    %606 = vector.shape_cast %605 : vector<1xf32> to vector<1x1xf32>
    %607 = tpu.reciprocal %606 : vector<1x1xf32> -> vector<1x1xf32>
    %608 = vector.broadcast %601 : vector<1x1xf32> to vector<1x128xf32>
    %609 = arith.cmpf oge, %599, %608 : vector<1x128xf32>
    %c128_i32_302 = arith.constant 128 : i32
    %610 = vector.broadcast %c128_i32_302 : i32 to vector<1x128xi32>
    %611 = arith.select %609, %5, %610 : vector<1x128xi1>, vector<1x128xi32>
    %cst_303 = arith.constant dense<2147483647> : vector<1xi32>
    %612 = vector.multi_reduction <minsi>, %611, %cst_303 [1] : vector<1x128xi32> to vector<1xi32>
    %613 = vector.shape_cast %612 : vector<1xi32> to vector<1x1xi32>
    %c1_i32_304 = arith.constant 1 : i32
    %614 = vector.broadcast %c1_i32_304 : i32 to vector<1x128xi32>
    %615 = arith.cmpi eq, %6, %614 : vector<1x128xi32>
    %616 = vector.shape_cast %613 : vector<1x1xi32> to vector<1x1xi32>
    %617 = vector.broadcast %616 : vector<1x1xi32> to vector<1x128xi32>
    %618 = arith.select %615, %617, %540 : vector<1x128xi1>, vector<1x128xi32>
    %c1_i32_305 = arith.constant 1 : i32
    %619 = vector.broadcast %c1_i32_305 : i32 to vector<1x128xi32>
    %620 = arith.cmpi eq, %6, %619 : vector<1x128xi32>
    %621 = vector.shape_cast %607 : vector<1x1xf32> to vector<1x1xf32>
    %622 = vector.broadcast %621 : vector<1x1xf32> to vector<1x128xf32>
    %623 = arith.select %620, %622, %545 : vector<1x128xi1>, vector<1x128xf32>
    %624 = vector.broadcast %613 : vector<1x1xi32> to vector<1x128xi32>
    %625 = arith.cmpi eq, %5, %624 : vector<1x128xi32>
    %626 = arith.extui %625 : vector<1x128xi1> to vector<1x128xi32>
    %627 = arith.sitofp %626 : vector<1x128xi32> to vector<1x128xf32>
    %628 = arith.truncf %627 : vector<1x128xf32> to vector<1x128xbf16>
    %c0_306 = arith.constant 0 : index
    %c0_307 = arith.constant 0 : index
    %629 = vector.load %arg23[%c0_306, %c0_307] : memref<128x128xbf16, #tpu.memory_space<vmem>>, vector<128x128xbf16>
    %cst_308 = arith.constant dense<0.000000e+00> : vector<1x128xf32>
    %630 = tpu.matmul %628, %629, %cst_308 {dimension_numbers = #tpu.dot_dimension_numbers<[1], [0], [0], [1], [0, 0, 1, 1], [], []>} : vector<1x128xbf16>, vector<128x128xbf16>, vector<1x128xf32> -> vector<1x128xf32>
    %631 = arith.truncf %575 : vector<1x128xf32> to vector<1x128xbf16>
    %c0_309 = arith.constant 0 : index
    %c0_310 = arith.constant 0 : index
    %632 = vector.load %arg11[%c0_309, %c0_310] : memref<128x128xbf16, #tpu.memory_space<vmem>>, vector<128x128xbf16>
    %cst_311 = arith.constant dense<0.000000e+00> : vector<1x128xf32>
    %633 = tpu.matmul %631, %632, %cst_311 {dimension_numbers = #tpu.dot_dimension_numbers<[1], [0], [0], [1], [0, 0, 1, 1], [], []>} : vector<1x128xbf16>, vector<128x128xbf16>, vector<1x128xf32> -> vector<1x128xf32>
    %c0_312 = arith.constant 0 : index
    %c0_313 = arith.constant 0 : index
    %634 = vector.load %arg13[%c0_312, %c0_313] : memref<1x128xf32, #tpu.memory_space<vmem>>, vector<1x128xf32>
    %635 = arith.addf %633, %634 : vector<1x128xf32>
    %636 = arith.addf %630, %635 : vector<1x128xf32>
    %637 = arith.negf %636 : vector<1x128xf32>
    %638 = math.exp %637 : vector<1x128xf32>
    %cst_314 = arith.constant 1.000000e+00 : f32
    %639 = vector.broadcast %cst_314 : f32 to vector<1x128xf32>
    %640 = arith.addf %639, %638 : vector<1x128xf32>
    %641 = arith.divf %639, %640 : vector<1x128xf32>
    %c64_i32_315 = arith.constant 64 : i32
    %642 = tpu.dynamic_rotate %641 by %c64_i32_315 dim 1 : vector<1x128xf32>, i32 -> vector<1x128xf32>
    %643 = arith.mulf %642, %635 : vector<1x128xf32>
    %644 = arith.addf %630, %643 : vector<1x128xf32>
    %645 = math.tanh %644 : vector<1x128xf32>
    %c96_i32_316 = arith.constant 96 : i32
    %646 = tpu.dynamic_rotate %641 by %c96_i32_316 dim 1 : vector<1x128xf32>, i32 -> vector<1x128xf32>
    %c64_i32_317 = arith.constant 64 : i32
    %647 = tpu.dynamic_rotate %645 by %c64_i32_317 dim 1 : vector<1x128xf32>, i32 -> vector<1x128xf32>
    %cst_318 = arith.constant 1.000000e+00 : f32
    %648 = vector.broadcast %cst_318 : f32 to vector<1x128xf32>
    %649 = arith.subf %648, %646 : vector<1x128xf32>
    %650 = arith.mulf %649, %647 : vector<1x128xf32>
    %651 = arith.mulf %646, %575 : vector<1x128xf32>
    %652 = arith.addf %650, %651 : vector<1x128xf32>
    %653 = arith.mulf %652, %4 : vector<1x128xf32>
    %cst_319 = arith.constant dense<0.000000e+00> : vector<1x8xf32>
    %654 = tpu.matmul %653, %456, %cst_319 {dimension_numbers = #tpu.dot_dimension_numbers<[1], [0], [0], [1], [0, 0, 1, 1], [], []>} : vector<1x128xf32>, vector<128x8xf32>, vector<1x8xf32> -> vector<1x8xf32>
    %cst_320 = arith.constant dense<0xFF800000> : vector<1xf32>
    %655 = vector.multi_reduction <maximumf>, %654, %cst_320 [1] : vector<1x8xf32> to vector<1xf32>
    %656 = vector.shape_cast %655 : vector<1xf32> to vector<1x1xf32>
    %657 = vector.broadcast %656 : vector<1x1xf32> to vector<1x8xf32>
    %658 = arith.subf %654, %657 : vector<1x8xf32>
    %659 = math.exp %658 : vector<1x8xf32>
    %cst_321 = arith.constant dense<0.000000e+00> : vector<1xf32>
    %660 = vector.multi_reduction <add>, %659, %cst_321 [1] : vector<1x8xf32> to vector<1xf32>
    %661 = vector.shape_cast %660 : vector<1xf32> to vector<1x1xf32>
    %662 = tpu.reciprocal %661 : vector<1x1xf32> -> vector<1x1xf32>
    %663 = vector.broadcast %662 : vector<1x1xf32> to vector<1x8xf32>
    %664 = arith.mulf %659, %663 : vector<1x8xf32>
    %cst_322 = arith.constant dense<0.000000e+00> : vector<1x128xf32>
    %665 = tpu.matmul %664, %455, %cst_322 {dimension_numbers = #tpu.dot_dimension_numbers<[1], [0], [0], [1], [0, 0, 1, 1], [], []>} : vector<1x8xf32>, vector<8x128xf32>, vector<1x128xf32> -> vector<1x128xf32>
    %666 = tpu.concatenate %653, %665 in 1 : vector<1x128xf32>, vector<1x128xf32> -> vector<1x256xf32>
    %667 = arith.truncf %666 : vector<1x256xf32> to vector<1x256xbf16>
    %c0_323 = arith.constant 0 : index
    %c0_324 = arith.constant 0 : index
    %668 = vector.load %arg14[%c0_323, %c0_324] : memref<256x128xbf16, #tpu.memory_space<vmem>>, vector<256x128xbf16>
    %cst_325 = arith.constant dense<0.000000e+00> : vector<1x128xf32>
    %669 = tpu.matmul %667, %668, %cst_325 {dimension_numbers = #tpu.dot_dimension_numbers<[1], [0], [0], [1], [0, 0, 1, 1], [], []>} : vector<1x256xbf16>, vector<256x128xbf16>, vector<1x128xf32> -> vector<1x128xf32>
    %c0_326 = arith.constant 0 : index
    %c0_327 = arith.constant 0 : index
    %670 = vector.load %arg15[%c0_326, %c0_327] : memref<1x128xf32, #tpu.memory_space<vmem>>, vector<1x128xf32>
    %671 = arith.addf %669, %670 : vector<1x128xf32>
    %672 = math.tanh %671 : vector<1x128xf32>
    %673 = arith.truncf %672 : vector<1x128xf32> to vector<1x128xbf16>
    %c0_328 = arith.constant 0 : index
    %c0_329 = arith.constant 0 : index
    %674 = vector.load %arg16[%c0_328, %c0_329] : memref<128x128xbf16, #tpu.memory_space<vmem>>, vector<128x128xbf16>
    %cst_330 = arith.constant dense<0.000000e+00> : vector<1x128xf32>
    %675 = tpu.matmul %673, %674, %cst_330 {dimension_numbers = #tpu.dot_dimension_numbers<[1], [0], [0], [1], [0, 0, 1, 1], [], []>} : vector<1x128xbf16>, vector<128x128xbf16>, vector<1x128xf32> -> vector<1x128xf32>
    %c0_331 = arith.constant 0 : index
    %c0_332 = arith.constant 0 : index
    %676 = vector.load %arg17[%c0_331, %c0_332] : memref<1x128xf32, #tpu.memory_space<vmem>>, vector<1x128xf32>
    %677 = arith.addf %675, %676 : vector<1x128xf32>
    %cst_333 = arith.constant dense<0xFF800000> : vector<1xf32>
    %678 = vector.multi_reduction <maximumf>, %677, %cst_333 [1] : vector<1x128xf32> to vector<1xf32>
    %679 = vector.shape_cast %678 : vector<1xf32> to vector<1x1xf32>
    %680 = vector.broadcast %679 : vector<1x1xf32> to vector<1x128xf32>
    %681 = arith.subf %677, %680 : vector<1x128xf32>
    %682 = math.exp %681 : vector<1x128xf32>
    %cst_334 = arith.constant dense<0.000000e+00> : vector<1xf32>
    %683 = vector.multi_reduction <add>, %682, %cst_334 [1] : vector<1x128xf32> to vector<1xf32>
    %684 = vector.shape_cast %683 : vector<1xf32> to vector<1x1xf32>
    %685 = tpu.reciprocal %684 : vector<1x1xf32> -> vector<1x1xf32>
    %686 = vector.broadcast %679 : vector<1x1xf32> to vector<1x128xf32>
    %687 = arith.cmpf oge, %677, %686 : vector<1x128xf32>
    %c128_i32_335 = arith.constant 128 : i32
    %688 = vector.broadcast %c128_i32_335 : i32 to vector<1x128xi32>
    %689 = arith.select %687, %5, %688 : vector<1x128xi1>, vector<1x128xi32>
    %cst_336 = arith.constant dense<2147483647> : vector<1xi32>
    %690 = vector.multi_reduction <minsi>, %689, %cst_336 [1] : vector<1x128xi32> to vector<1xi32>
    %691 = vector.shape_cast %690 : vector<1xi32> to vector<1x1xi32>
    %c2_i32 = arith.constant 2 : i32
    %692 = vector.broadcast %c2_i32 : i32 to vector<1x128xi32>
    %693 = arith.cmpi eq, %6, %692 : vector<1x128xi32>
    %694 = vector.shape_cast %691 : vector<1x1xi32> to vector<1x1xi32>
    %695 = vector.broadcast %694 : vector<1x1xi32> to vector<1x128xi32>
    %696 = arith.select %693, %695, %618 : vector<1x128xi1>, vector<1x128xi32>
    %c2_i32_337 = arith.constant 2 : i32
    %697 = vector.broadcast %c2_i32_337 : i32 to vector<1x128xi32>
    %698 = arith.cmpi eq, %6, %697 : vector<1x128xi32>
    %699 = vector.shape_cast %685 : vector<1x1xf32> to vector<1x1xf32>
    %700 = vector.broadcast %699 : vector<1x1xf32> to vector<1x128xf32>
    %701 = arith.select %698, %700, %623 : vector<1x128xi1>, vector<1x128xf32>
    %702 = vector.broadcast %691 : vector<1x1xi32> to vector<1x128xi32>
    %703 = arith.cmpi eq, %5, %702 : vector<1x128xi32>
    %704 = arith.extui %703 : vector<1x128xi1> to vector<1x128xi32>
    %705 = arith.sitofp %704 : vector<1x128xi32> to vector<1x128xf32>
    %706 = arith.truncf %705 : vector<1x128xf32> to vector<1x128xbf16>
    %c0_338 = arith.constant 0 : index
    %c0_339 = arith.constant 0 : index
    %707 = vector.load %arg23[%c0_338, %c0_339] : memref<128x128xbf16, #tpu.memory_space<vmem>>, vector<128x128xbf16>
    %cst_340 = arith.constant dense<0.000000e+00> : vector<1x128xf32>
    %708 = tpu.matmul %706, %707, %cst_340 {dimension_numbers = #tpu.dot_dimension_numbers<[1], [0], [0], [1], [0, 0, 1, 1], [], []>} : vector<1x128xbf16>, vector<128x128xbf16>, vector<1x128xf32> -> vector<1x128xf32>
    %709 = arith.truncf %653 : vector<1x128xf32> to vector<1x128xbf16>
    %c0_341 = arith.constant 0 : index
    %c0_342 = arith.constant 0 : index
    %710 = vector.load %arg11[%c0_341, %c0_342] : memref<128x128xbf16, #tpu.memory_space<vmem>>, vector<128x128xbf16>
    %cst_343 = arith.constant dense<0.000000e+00> : vector<1x128xf32>
    %711 = tpu.matmul %709, %710, %cst_343 {dimension_numbers = #tpu.dot_dimension_numbers<[1], [0], [0], [1], [0, 0, 1, 1], [], []>} : vector<1x128xbf16>, vector<128x128xbf16>, vector<1x128xf32> -> vector<1x128xf32>
    %c0_344 = arith.constant 0 : index
    %c0_345 = arith.constant 0 : index
    %712 = vector.load %arg13[%c0_344, %c0_345] : memref<1x128xf32, #tpu.memory_space<vmem>>, vector<1x128xf32>
    %713 = arith.addf %711, %712 : vector<1x128xf32>
    %714 = arith.addf %708, %713 : vector<1x128xf32>
    %715 = arith.negf %714 : vector<1x128xf32>
    %716 = math.exp %715 : vector<1x128xf32>
    %cst_346 = arith.constant 1.000000e+00 : f32
    %717 = vector.broadcast %cst_346 : f32 to vector<1x128xf32>
    %718 = arith.addf %717, %716 : vector<1x128xf32>
    %719 = arith.divf %717, %718 : vector<1x128xf32>
    %c64_i32_347 = arith.constant 64 : i32
    %720 = tpu.dynamic_rotate %719 by %c64_i32_347 dim 1 : vector<1x128xf32>, i32 -> vector<1x128xf32>
    %721 = arith.mulf %720, %713 : vector<1x128xf32>
    %722 = arith.addf %708, %721 : vector<1x128xf32>
    %723 = math.tanh %722 : vector<1x128xf32>
    %c96_i32_348 = arith.constant 96 : i32
    %724 = tpu.dynamic_rotate %719 by %c96_i32_348 dim 1 : vector<1x128xf32>, i32 -> vector<1x128xf32>
    %c64_i32_349 = arith.constant 64 : i32
    %725 = tpu.dynamic_rotate %723 by %c64_i32_349 dim 1 : vector<1x128xf32>, i32 -> vector<1x128xf32>
    %cst_350 = arith.constant 1.000000e+00 : f32
    %726 = vector.broadcast %cst_350 : f32 to vector<1x128xf32>
    %727 = arith.subf %726, %724 : vector<1x128xf32>
    %728 = arith.mulf %727, %725 : vector<1x128xf32>
    %729 = arith.mulf %724, %653 : vector<1x128xf32>
    %730 = arith.addf %728, %729 : vector<1x128xf32>
    %731 = arith.mulf %730, %4 : vector<1x128xf32>
    %cst_351 = arith.constant dense<0.000000e+00> : vector<1x8xf32>
    %732 = tpu.matmul %731, %456, %cst_351 {dimension_numbers = #tpu.dot_dimension_numbers<[1], [0], [0], [1], [0, 0, 1, 1], [], []>} : vector<1x128xf32>, vector<128x8xf32>, vector<1x8xf32> -> vector<1x8xf32>
    %cst_352 = arith.constant dense<0xFF800000> : vector<1xf32>
    %733 = vector.multi_reduction <maximumf>, %732, %cst_352 [1] : vector<1x8xf32> to vector<1xf32>
    %734 = vector.shape_cast %733 : vector<1xf32> to vector<1x1xf32>
    %735 = vector.broadcast %734 : vector<1x1xf32> to vector<1x8xf32>
    %736 = arith.subf %732, %735 : vector<1x8xf32>
    %737 = math.exp %736 : vector<1x8xf32>
    %cst_353 = arith.constant dense<0.000000e+00> : vector<1xf32>
    %738 = vector.multi_reduction <add>, %737, %cst_353 [1] : vector<1x8xf32> to vector<1xf32>
    %739 = vector.shape_cast %738 : vector<1xf32> to vector<1x1xf32>
    %740 = tpu.reciprocal %739 : vector<1x1xf32> -> vector<1x1xf32>
    %741 = vector.broadcast %740 : vector<1x1xf32> to vector<1x8xf32>
    %742 = arith.mulf %737, %741 : vector<1x8xf32>
    %cst_354 = arith.constant dense<0.000000e+00> : vector<1x128xf32>
    %743 = tpu.matmul %742, %455, %cst_354 {dimension_numbers = #tpu.dot_dimension_numbers<[1], [0], [0], [1], [0, 0, 1, 1], [], []>} : vector<1x8xf32>, vector<8x128xf32>, vector<1x128xf32> -> vector<1x128xf32>
    %744 = tpu.concatenate %731, %743 in 1 : vector<1x128xf32>, vector<1x128xf32> -> vector<1x256xf32>
    %745 = arith.truncf %744 : vector<1x256xf32> to vector<1x256xbf16>
    %c0_355 = arith.constant 0 : index
    %c0_356 = arith.constant 0 : index
    %746 = vector.load %arg14[%c0_355, %c0_356] : memref<256x128xbf16, #tpu.memory_space<vmem>>, vector<256x128xbf16>
    %cst_357 = arith.constant dense<0.000000e+00> : vector<1x128xf32>
    %747 = tpu.matmul %745, %746, %cst_357 {dimension_numbers = #tpu.dot_dimension_numbers<[1], [0], [0], [1], [0, 0, 1, 1], [], []>} : vector<1x256xbf16>, vector<256x128xbf16>, vector<1x128xf32> -> vector<1x128xf32>
    %c0_358 = arith.constant 0 : index
    %c0_359 = arith.constant 0 : index
    %748 = vector.load %arg15[%c0_358, %c0_359] : memref<1x128xf32, #tpu.memory_space<vmem>>, vector<1x128xf32>
    %749 = arith.addf %747, %748 : vector<1x128xf32>
    %750 = math.tanh %749 : vector<1x128xf32>
    %751 = arith.truncf %750 : vector<1x128xf32> to vector<1x128xbf16>
    %c0_360 = arith.constant 0 : index
    %c0_361 = arith.constant 0 : index
    %752 = vector.load %arg16[%c0_360, %c0_361] : memref<128x128xbf16, #tpu.memory_space<vmem>>, vector<128x128xbf16>
    %cst_362 = arith.constant dense<0.000000e+00> : vector<1x128xf32>
    %753 = tpu.matmul %751, %752, %cst_362 {dimension_numbers = #tpu.dot_dimension_numbers<[1], [0], [0], [1], [0, 0, 1, 1], [], []>} : vector<1x128xbf16>, vector<128x128xbf16>, vector<1x128xf32> -> vector<1x128xf32>
    %c0_363 = arith.constant 0 : index
    %c0_364 = arith.constant 0 : index
    %754 = vector.load %arg17[%c0_363, %c0_364] : memref<1x128xf32, #tpu.memory_space<vmem>>, vector<1x128xf32>
    %755 = arith.addf %753, %754 : vector<1x128xf32>
    %cst_365 = arith.constant dense<0xFF800000> : vector<1xf32>
    %756 = vector.multi_reduction <maximumf>, %755, %cst_365 [1] : vector<1x128xf32> to vector<1xf32>
    %757 = vector.shape_cast %756 : vector<1xf32> to vector<1x1xf32>
    %758 = vector.broadcast %757 : vector<1x1xf32> to vector<1x128xf32>
    %759 = arith.subf %755, %758 : vector<1x128xf32>
    %760 = math.exp %759 : vector<1x128xf32>
    %cst_366 = arith.constant dense<0.000000e+00> : vector<1xf32>
    %761 = vector.multi_reduction <add>, %760, %cst_366 [1] : vector<1x128xf32> to vector<1xf32>
    %762 = vector.shape_cast %761 : vector<1xf32> to vector<1x1xf32>
    %763 = tpu.reciprocal %762 : vector<1x1xf32> -> vector<1x1xf32>
    %764 = vector.broadcast %757 : vector<1x1xf32> to vector<1x128xf32>
    %765 = arith.cmpf oge, %755, %764 : vector<1x128xf32>
    %c128_i32_367 = arith.constant 128 : i32
    %766 = vector.broadcast %c128_i32_367 : i32 to vector<1x128xi32>
    %767 = arith.select %765, %5, %766 : vector<1x128xi1>, vector<1x128xi32>
    %cst_368 = arith.constant dense<2147483647> : vector<1xi32>
    %768 = vector.multi_reduction <minsi>, %767, %cst_368 [1] : vector<1x128xi32> to vector<1xi32>
    %769 = vector.shape_cast %768 : vector<1xi32> to vector<1x1xi32>
    %c3_i32 = arith.constant 3 : i32
    %770 = vector.broadcast %c3_i32 : i32 to vector<1x128xi32>
    %771 = arith.cmpi eq, %6, %770 : vector<1x128xi32>
    %772 = vector.shape_cast %769 : vector<1x1xi32> to vector<1x1xi32>
    %773 = vector.broadcast %772 : vector<1x1xi32> to vector<1x128xi32>
    %774 = arith.select %771, %773, %696 : vector<1x128xi1>, vector<1x128xi32>
    %c3_i32_369 = arith.constant 3 : i32
    %775 = vector.broadcast %c3_i32_369 : i32 to vector<1x128xi32>
    %776 = arith.cmpi eq, %6, %775 : vector<1x128xi32>
    %777 = vector.shape_cast %763 : vector<1x1xf32> to vector<1x1xf32>
    %778 = vector.broadcast %777 : vector<1x1xf32> to vector<1x128xf32>
    %779 = arith.select %776, %778, %701 : vector<1x128xi1>, vector<1x128xf32>
    %780 = vector.broadcast %769 : vector<1x1xi32> to vector<1x128xi32>
    %781 = arith.cmpi eq, %5, %780 : vector<1x128xi32>
    %782 = arith.extui %781 : vector<1x128xi1> to vector<1x128xi32>
    %783 = arith.sitofp %782 : vector<1x128xi32> to vector<1x128xf32>
    %784 = arith.truncf %783 : vector<1x128xf32> to vector<1x128xbf16>
    %c0_370 = arith.constant 0 : index
    %c0_371 = arith.constant 0 : index
    %785 = vector.load %arg23[%c0_370, %c0_371] : memref<128x128xbf16, #tpu.memory_space<vmem>>, vector<128x128xbf16>
    %cst_372 = arith.constant dense<0.000000e+00> : vector<1x128xf32>
    %786 = tpu.matmul %784, %785, %cst_372 {dimension_numbers = #tpu.dot_dimension_numbers<[1], [0], [0], [1], [0, 0, 1, 1], [], []>} : vector<1x128xbf16>, vector<128x128xbf16>, vector<1x128xf32> -> vector<1x128xf32>
    %787 = arith.truncf %731 : vector<1x128xf32> to vector<1x128xbf16>
    %c0_373 = arith.constant 0 : index
    %c0_374 = arith.constant 0 : index
    %788 = vector.load %arg11[%c0_373, %c0_374] : memref<128x128xbf16, #tpu.memory_space<vmem>>, vector<128x128xbf16>
    %cst_375 = arith.constant dense<0.000000e+00> : vector<1x128xf32>
    %789 = tpu.matmul %787, %788, %cst_375 {dimension_numbers = #tpu.dot_dimension_numbers<[1], [0], [0], [1], [0, 0, 1, 1], [], []>} : vector<1x128xbf16>, vector<128x128xbf16>, vector<1x128xf32> -> vector<1x128xf32>
    %c0_376 = arith.constant 0 : index
    %c0_377 = arith.constant 0 : index
    %790 = vector.load %arg13[%c0_376, %c0_377] : memref<1x128xf32, #tpu.memory_space<vmem>>, vector<1x128xf32>
    %791 = arith.addf %789, %790 : vector<1x128xf32>
    %792 = arith.addf %786, %791 : vector<1x128xf32>
    %793 = arith.negf %792 : vector<1x128xf32>
    %794 = math.exp %793 : vector<1x128xf32>
    %cst_378 = arith.constant 1.000000e+00 : f32
    %795 = vector.broadcast %cst_378 : f32 to vector<1x128xf32>
    %796 = arith.addf %795, %794 : vector<1x128xf32>
    %797 = arith.divf %795, %796 : vector<1x128xf32>
    %c64_i32_379 = arith.constant 64 : i32
    %798 = tpu.dynamic_rotate %797 by %c64_i32_379 dim 1 : vector<1x128xf32>, i32 -> vector<1x128xf32>
    %799 = arith.mulf %798, %791 : vector<1x128xf32>
    %800 = arith.addf %786, %799 : vector<1x128xf32>
    %801 = math.tanh %800 : vector<1x128xf32>
    %c96_i32_380 = arith.constant 96 : i32
    %802 = tpu.dynamic_rotate %797 by %c96_i32_380 dim 1 : vector<1x128xf32>, i32 -> vector<1x128xf32>
    %c64_i32_381 = arith.constant 64 : i32
    %803 = tpu.dynamic_rotate %801 by %c64_i32_381 dim 1 : vector<1x128xf32>, i32 -> vector<1x128xf32>
    %cst_382 = arith.constant 1.000000e+00 : f32
    %804 = vector.broadcast %cst_382 : f32 to vector<1x128xf32>
    %805 = arith.subf %804, %802 : vector<1x128xf32>
    %806 = arith.mulf %805, %803 : vector<1x128xf32>
    %807 = arith.mulf %802, %731 : vector<1x128xf32>
    %808 = arith.addf %806, %807 : vector<1x128xf32>
    %809 = arith.mulf %808, %4 : vector<1x128xf32>
    %cst_383 = arith.constant dense<0.000000e+00> : vector<1x8xf32>
    %810 = tpu.matmul %809, %456, %cst_383 {dimension_numbers = #tpu.dot_dimension_numbers<[1], [0], [0], [1], [0, 0, 1, 1], [], []>} : vector<1x128xf32>, vector<128x8xf32>, vector<1x8xf32> -> vector<1x8xf32>
    %cst_384 = arith.constant dense<0xFF800000> : vector<1xf32>
    %811 = vector.multi_reduction <maximumf>, %810, %cst_384 [1] : vector<1x8xf32> to vector<1xf32>
    %812 = vector.shape_cast %811 : vector<1xf32> to vector<1x1xf32>
    %813 = vector.broadcast %812 : vector<1x1xf32> to vector<1x8xf32>
    %814 = arith.subf %810, %813 : vector<1x8xf32>
    %815 = math.exp %814 : vector<1x8xf32>
    %cst_385 = arith.constant dense<0.000000e+00> : vector<1xf32>
    %816 = vector.multi_reduction <add>, %815, %cst_385 [1] : vector<1x8xf32> to vector<1xf32>
    %817 = vector.shape_cast %816 : vector<1xf32> to vector<1x1xf32>
    %818 = tpu.reciprocal %817 : vector<1x1xf32> -> vector<1x1xf32>
    %819 = vector.broadcast %818 : vector<1x1xf32> to vector<1x8xf32>
    %820 = arith.mulf %815, %819 : vector<1x8xf32>
    %cst_386 = arith.constant dense<0.000000e+00> : vector<1x128xf32>
    %821 = tpu.matmul %820, %455, %cst_386 {dimension_numbers = #tpu.dot_dimension_numbers<[1], [0], [0], [1], [0, 0, 1, 1], [], []>} : vector<1x8xf32>, vector<8x128xf32>, vector<1x128xf32> -> vector<1x128xf32>
    %822 = tpu.concatenate %809, %821 in 1 : vector<1x128xf32>, vector<1x128xf32> -> vector<1x256xf32>
    %823 = arith.truncf %822 : vector<1x256xf32> to vector<1x256xbf16>
    %c0_387 = arith.constant 0 : index
    %c0_388 = arith.constant 0 : index
    %824 = vector.load %arg14[%c0_387, %c0_388] : memref<256x128xbf16, #tpu.memory_space<vmem>>, vector<256x128xbf16>
    %cst_389 = arith.constant dense<0.000000e+00> : vector<1x128xf32>
    %825 = tpu.matmul %823, %824, %cst_389 {dimension_numbers = #tpu.dot_dimension_numbers<[1], [0], [0], [1], [0, 0, 1, 1], [], []>} : vector<1x256xbf16>, vector<256x128xbf16>, vector<1x128xf32> -> vector<1x128xf32>
    %c0_390 = arith.constant 0 : index
    %c0_391 = arith.constant 0 : index
    %826 = vector.load %arg15[%c0_390, %c0_391] : memref<1x128xf32, #tpu.memory_space<vmem>>, vector<1x128xf32>
    %827 = arith.addf %825, %826 : vector<1x128xf32>
    %828 = math.tanh %827 : vector<1x128xf32>
    %829 = arith.truncf %828 : vector<1x128xf32> to vector<1x128xbf16>
    %c0_392 = arith.constant 0 : index
    %c0_393 = arith.constant 0 : index
    %830 = vector.load %arg16[%c0_392, %c0_393] : memref<128x128xbf16, #tpu.memory_space<vmem>>, vector<128x128xbf16>
    %cst_394 = arith.constant dense<0.000000e+00> : vector<1x128xf32>
    %831 = tpu.matmul %829, %830, %cst_394 {dimension_numbers = #tpu.dot_dimension_numbers<[1], [0], [0], [1], [0, 0, 1, 1], [], []>} : vector<1x128xbf16>, vector<128x128xbf16>, vector<1x128xf32> -> vector<1x128xf32>
    %c0_395 = arith.constant 0 : index
    %c0_396 = arith.constant 0 : index
    %832 = vector.load %arg17[%c0_395, %c0_396] : memref<1x128xf32, #tpu.memory_space<vmem>>, vector<1x128xf32>
    %833 = arith.addf %831, %832 : vector<1x128xf32>
    %cst_397 = arith.constant dense<0xFF800000> : vector<1xf32>
    %834 = vector.multi_reduction <maximumf>, %833, %cst_397 [1] : vector<1x128xf32> to vector<1xf32>
    %835 = vector.shape_cast %834 : vector<1xf32> to vector<1x1xf32>
    %836 = vector.broadcast %835 : vector<1x1xf32> to vector<1x128xf32>
    %837 = arith.subf %833, %836 : vector<1x128xf32>
    %838 = math.exp %837 : vector<1x128xf32>
    %cst_398 = arith.constant dense<0.000000e+00> : vector<1xf32>
    %839 = vector.multi_reduction <add>, %838, %cst_398 [1] : vector<1x128xf32> to vector<1xf32>
    %840 = vector.shape_cast %839 : vector<1xf32> to vector<1x1xf32>
    %841 = tpu.reciprocal %840 : vector<1x1xf32> -> vector<1x1xf32>
    %842 = vector.broadcast %835 : vector<1x1xf32> to vector<1x128xf32>
    %843 = arith.cmpf oge, %833, %842 : vector<1x128xf32>
    %c128_i32_399 = arith.constant 128 : i32
    %844 = vector.broadcast %c128_i32_399 : i32 to vector<1x128xi32>
    %845 = arith.select %843, %5, %844 : vector<1x128xi1>, vector<1x128xi32>
    %cst_400 = arith.constant dense<2147483647> : vector<1xi32>
    %846 = vector.multi_reduction <minsi>, %845, %cst_400 [1] : vector<1x128xi32> to vector<1xi32>
    %847 = vector.shape_cast %846 : vector<1xi32> to vector<1x1xi32>
    %c4_i32 = arith.constant 4 : i32
    %848 = vector.broadcast %c4_i32 : i32 to vector<1x128xi32>
    %849 = arith.cmpi eq, %6, %848 : vector<1x128xi32>
    %850 = vector.shape_cast %847 : vector<1x1xi32> to vector<1x1xi32>
    %851 = vector.broadcast %850 : vector<1x1xi32> to vector<1x128xi32>
    %852 = arith.select %849, %851, %774 : vector<1x128xi1>, vector<1x128xi32>
    %c4_i32_401 = arith.constant 4 : i32
    %853 = vector.broadcast %c4_i32_401 : i32 to vector<1x128xi32>
    %854 = arith.cmpi eq, %6, %853 : vector<1x128xi32>
    %855 = vector.shape_cast %841 : vector<1x1xf32> to vector<1x1xf32>
    %856 = vector.broadcast %855 : vector<1x1xf32> to vector<1x128xf32>
    %857 = arith.select %854, %856, %779 : vector<1x128xi1>, vector<1x128xf32>
    %858 = vector.broadcast %847 : vector<1x1xi32> to vector<1x128xi32>
    %859 = arith.cmpi eq, %5, %858 : vector<1x128xi32>
    %860 = arith.extui %859 : vector<1x128xi1> to vector<1x128xi32>
    %861 = arith.sitofp %860 : vector<1x128xi32> to vector<1x128xf32>
    %862 = arith.truncf %861 : vector<1x128xf32> to vector<1x128xbf16>
    %c0_402 = arith.constant 0 : index
    %c0_403 = arith.constant 0 : index
    %863 = vector.load %arg23[%c0_402, %c0_403] : memref<128x128xbf16, #tpu.memory_space<vmem>>, vector<128x128xbf16>
    %cst_404 = arith.constant dense<0.000000e+00> : vector<1x128xf32>
    %864 = tpu.matmul %862, %863, %cst_404 {dimension_numbers = #tpu.dot_dimension_numbers<[1], [0], [0], [1], [0, 0, 1, 1], [], []>} : vector<1x128xbf16>, vector<128x128xbf16>, vector<1x128xf32> -> vector<1x128xf32>
    %865 = arith.truncf %809 : vector<1x128xf32> to vector<1x128xbf16>
    %c0_405 = arith.constant 0 : index
    %c0_406 = arith.constant 0 : index
    %866 = vector.load %arg11[%c0_405, %c0_406] : memref<128x128xbf16, #tpu.memory_space<vmem>>, vector<128x128xbf16>
    %cst_407 = arith.constant dense<0.000000e+00> : vector<1x128xf32>
    %867 = tpu.matmul %865, %866, %cst_407 {dimension_numbers = #tpu.dot_dimension_numbers<[1], [0], [0], [1], [0, 0, 1, 1], [], []>} : vector<1x128xbf16>, vector<128x128xbf16>, vector<1x128xf32> -> vector<1x128xf32>
    %c0_408 = arith.constant 0 : index
    %c0_409 = arith.constant 0 : index
    %868 = vector.load %arg13[%c0_408, %c0_409] : memref<1x128xf32, #tpu.memory_space<vmem>>, vector<1x128xf32>
    %869 = arith.addf %867, %868 : vector<1x128xf32>
    %870 = arith.addf %864, %869 : vector<1x128xf32>
    %871 = arith.negf %870 : vector<1x128xf32>
    %872 = math.exp %871 : vector<1x128xf32>
    %cst_410 = arith.constant 1.000000e+00 : f32
    %873 = vector.broadcast %cst_410 : f32 to vector<1x128xf32>
    %874 = arith.addf %873, %872 : vector<1x128xf32>
    %875 = arith.divf %873, %874 : vector<1x128xf32>
    %c64_i32_411 = arith.constant 64 : i32
    %876 = tpu.dynamic_rotate %875 by %c64_i32_411 dim 1 : vector<1x128xf32>, i32 -> vector<1x128xf32>
    %877 = arith.mulf %876, %869 : vector<1x128xf32>
    %878 = arith.addf %864, %877 : vector<1x128xf32>
    %879 = math.tanh %878 : vector<1x128xf32>
    %c96_i32_412 = arith.constant 96 : i32
    %880 = tpu.dynamic_rotate %875 by %c96_i32_412 dim 1 : vector<1x128xf32>, i32 -> vector<1x128xf32>
    %c64_i32_413 = arith.constant 64 : i32
    %881 = tpu.dynamic_rotate %879 by %c64_i32_413 dim 1 : vector<1x128xf32>, i32 -> vector<1x128xf32>
    %cst_414 = arith.constant 1.000000e+00 : f32
    %882 = vector.broadcast %cst_414 : f32 to vector<1x128xf32>
    %883 = arith.subf %882, %880 : vector<1x128xf32>
    %884 = arith.mulf %883, %881 : vector<1x128xf32>
    %885 = arith.mulf %880, %809 : vector<1x128xf32>
    %886 = arith.addf %884, %885 : vector<1x128xf32>
    %887 = arith.mulf %886, %4 : vector<1x128xf32>
    %cst_415 = arith.constant dense<0.000000e+00> : vector<1x8xf32>
    %888 = tpu.matmul %887, %456, %cst_415 {dimension_numbers = #tpu.dot_dimension_numbers<[1], [0], [0], [1], [0, 0, 1, 1], [], []>} : vector<1x128xf32>, vector<128x8xf32>, vector<1x8xf32> -> vector<1x8xf32>
    %cst_416 = arith.constant dense<0xFF800000> : vector<1xf32>
    %889 = vector.multi_reduction <maximumf>, %888, %cst_416 [1] : vector<1x8xf32> to vector<1xf32>
    %890 = vector.shape_cast %889 : vector<1xf32> to vector<1x1xf32>
    %891 = vector.broadcast %890 : vector<1x1xf32> to vector<1x8xf32>
    %892 = arith.subf %888, %891 : vector<1x8xf32>
    %893 = math.exp %892 : vector<1x8xf32>
    %cst_417 = arith.constant dense<0.000000e+00> : vector<1xf32>
    %894 = vector.multi_reduction <add>, %893, %cst_417 [1] : vector<1x8xf32> to vector<1xf32>
    %895 = vector.shape_cast %894 : vector<1xf32> to vector<1x1xf32>
    %896 = tpu.reciprocal %895 : vector<1x1xf32> -> vector<1x1xf32>
    %897 = vector.broadcast %896 : vector<1x1xf32> to vector<1x8xf32>
    %898 = arith.mulf %893, %897 : vector<1x8xf32>
    %cst_418 = arith.constant dense<0.000000e+00> : vector<1x128xf32>
    %899 = tpu.matmul %898, %455, %cst_418 {dimension_numbers = #tpu.dot_dimension_numbers<[1], [0], [0], [1], [0, 0, 1, 1], [], []>} : vector<1x8xf32>, vector<8x128xf32>, vector<1x128xf32> -> vector<1x128xf32>
    %900 = tpu.concatenate %887, %899 in 1 : vector<1x128xf32>, vector<1x128xf32> -> vector<1x256xf32>
    %901 = arith.truncf %900 : vector<1x256xf32> to vector<1x256xbf16>
    %c0_419 = arith.constant 0 : index
    %c0_420 = arith.constant 0 : index
    %902 = vector.load %arg14[%c0_419, %c0_420] : memref<256x128xbf16, #tpu.memory_space<vmem>>, vector<256x128xbf16>
    %cst_421 = arith.constant dense<0.000000e+00> : vector<1x128xf32>
    %903 = tpu.matmul %901, %902, %cst_421 {dimension_numbers = #tpu.dot_dimension_numbers<[1], [0], [0], [1], [0, 0, 1, 1], [], []>} : vector<1x256xbf16>, vector<256x128xbf16>, vector<1x128xf32> -> vector<1x128xf32>
    %c0_422 = arith.constant 0 : index
    %c0_423 = arith.constant 0 : index
    %904 = vector.load %arg15[%c0_422, %c0_423] : memref<1x128xf32, #tpu.memory_space<vmem>>, vector<1x128xf32>
    %905 = arith.addf %903, %904 : vector<1x128xf32>
    %906 = math.tanh %905 : vector<1x128xf32>
    %907 = arith.truncf %906 : vector<1x128xf32> to vector<1x128xbf16>
    %c0_424 = arith.constant 0 : index
    %c0_425 = arith.constant 0 : index
    %908 = vector.load %arg16[%c0_424, %c0_425] : memref<128x128xbf16, #tpu.memory_space<vmem>>, vector<128x128xbf16>
    %cst_426 = arith.constant dense<0.000000e+00> : vector<1x128xf32>
    %909 = tpu.matmul %907, %908, %cst_426 {dimension_numbers = #tpu.dot_dimension_numbers<[1], [0], [0], [1], [0, 0, 1, 1], [], []>} : vector<1x128xbf16>, vector<128x128xbf16>, vector<1x128xf32> -> vector<1x128xf32>
    %c0_427 = arith.constant 0 : index
    %c0_428 = arith.constant 0 : index
    %910 = vector.load %arg17[%c0_427, %c0_428] : memref<1x128xf32, #tpu.memory_space<vmem>>, vector<1x128xf32>
    %911 = arith.addf %909, %910 : vector<1x128xf32>
    %cst_429 = arith.constant dense<0xFF800000> : vector<1xf32>
    %912 = vector.multi_reduction <maximumf>, %911, %cst_429 [1] : vector<1x128xf32> to vector<1xf32>
    %913 = vector.shape_cast %912 : vector<1xf32> to vector<1x1xf32>
    %914 = vector.broadcast %913 : vector<1x1xf32> to vector<1x128xf32>
    %915 = arith.subf %911, %914 : vector<1x128xf32>
    %916 = math.exp %915 : vector<1x128xf32>
    %cst_430 = arith.constant dense<0.000000e+00> : vector<1xf32>
    %917 = vector.multi_reduction <add>, %916, %cst_430 [1] : vector<1x128xf32> to vector<1xf32>
    %918 = vector.shape_cast %917 : vector<1xf32> to vector<1x1xf32>
    %919 = tpu.reciprocal %918 : vector<1x1xf32> -> vector<1x1xf32>
    %920 = vector.broadcast %913 : vector<1x1xf32> to vector<1x128xf32>
    %921 = arith.cmpf oge, %911, %920 : vector<1x128xf32>
    %c128_i32_431 = arith.constant 128 : i32
    %922 = vector.broadcast %c128_i32_431 : i32 to vector<1x128xi32>
    %923 = arith.select %921, %5, %922 : vector<1x128xi1>, vector<1x128xi32>
    %cst_432 = arith.constant dense<2147483647> : vector<1xi32>
    %924 = vector.multi_reduction <minsi>, %923, %cst_432 [1] : vector<1x128xi32> to vector<1xi32>
    %925 = vector.shape_cast %924 : vector<1xi32> to vector<1x1xi32>
    %c5_i32 = arith.constant 5 : i32
    %926 = vector.broadcast %c5_i32 : i32 to vector<1x128xi32>
    %927 = arith.cmpi eq, %6, %926 : vector<1x128xi32>
    %928 = vector.shape_cast %925 : vector<1x1xi32> to vector<1x1xi32>
    %929 = vector.broadcast %928 : vector<1x1xi32> to vector<1x128xi32>
    %930 = arith.select %927, %929, %852 : vector<1x128xi1>, vector<1x128xi32>
    %c5_i32_433 = arith.constant 5 : i32
    %931 = vector.broadcast %c5_i32_433 : i32 to vector<1x128xi32>
    %932 = arith.cmpi eq, %6, %931 : vector<1x128xi32>
    %933 = vector.shape_cast %919 : vector<1x1xf32> to vector<1x1xf32>
    %934 = vector.broadcast %933 : vector<1x1xf32> to vector<1x128xf32>
    %935 = arith.select %932, %934, %857 : vector<1x128xi1>, vector<1x128xf32>
    %c0_434 = arith.constant 0 : index
    %c0_435 = arith.constant 0 : index
    %936 = vector.load %arg18[%c0_434, %c0_435] : memref<1x128xi32, #tpu.memory_space<vmem>>, vector<1x128xi32>
    tpu.vector_store %arg18[%c0_434, %c0_435], %930 {strides = array<i32>} : memref<1x128xi32, #tpu.memory_space<vmem>>, vector<1x128xi32>,
    %c0_436 = arith.constant 0 : index
    %c0_437 = arith.constant 0 : index
    %937 = vector.load %arg19[%c0_436, %c0_437] : memref<1x128xf32, #tpu.memory_space<vmem>>, vector<1x128xf32>
    tpu.vector_store %arg19[%c0_436, %c0_437], %935 {strides = array<i32>} : memref<1x128xf32, #tpu.memory_space<vmem>>, vector<1x128xf32>,
    return
  }
}

</mosaic_0001>

<llo_original>
// kernel: tpu_custom_call.1
$region0: #{tpu_custom_call.1}
  #allocation0 [shape = 'u32[]', space=smem, size = 0x4, offset = 0x4, fixed_abs, tag = 'smem constant byte address 0x4 - core index']
  #allocation1 [shape = 'u32[144,128]{1,0:T(1,128)}', space=vmem, size = 0x12000, scoped, tag = 'internal scratch']
  #allocation2 [shape = 'f32[8,128]{1,0:T(8,128)}', space=vmem, size = 0x1000, scoped, tag = 'scratch operand']
  #allocation3 [shape = 'f32[8,128]{1,0:T(8,128)}', space=vmem, size = 0x1000, scoped, tag = 'scratch operand']
  #allocation4 [shape = 'f32[8,128]{1,0:T(8,128)}', space=vmem, size = 0x1000, scoped, tag = 'scratch operand']
  #allocation5 [shape = 'bf16[128,128]{1,0:T(8,128)(2,1)}', space=vmem, size = 0x8000, scoped, tag = 'scratch operand']
  %s0 = inlined_call_operand.hbm [shape: s32[8], index: 0, kind: input, shape index: {}]
  %s1 = inlined_call_operand.hbm [shape: f32[128,128], index: 1, kind: input, shape index: {}]
  %s2 = inlined_call_operand.hbm [shape: bf16[128,128], index: 2, kind: input, shape index: {}]
  %s3 = inlined_call_operand.hbm [shape: bf16[128,128], index: 3, kind: input, shape index: {}]
  %s4 = inlined_call_operand.vmem [shape: f32[1,128], index: 4, kind: input, shape index: {}]
  %s5 = inlined_call_operand.vmem [shape: f32[1,128], index: 5, kind: input, shape index: {}]
  %s6 = inlined_call_operand.hbm [shape: bf16[128,128], index: 6, kind: input, shape index: {}]
  %s7 = inlined_call_operand.hbm [shape: bf16[128,128], index: 7, kind: input, shape index: {}]
  %s8 = inlined_call_operand.vmem [shape: f32[1,128], index: 8, kind: input, shape index: {}]
  %s9 = inlined_call_operand.vmem [shape: f32[1,128], index: 9, kind: input, shape index: {}]
  %s10 = inlined_call_operand.hbm [shape: bf16[128,128], index: 10, kind: input, shape index: {}]
  %s11 = inlined_call_operand.hbm [shape: bf16[128,128], index: 11, kind: input, shape index: {}]
  %s12 = inlined_call_operand.vmem [shape: f32[1,128], index: 12, kind: input, shape index: {}]
  %s13 = inlined_call_operand.vmem [shape: f32[1,128], index: 13, kind: input, shape index: {}]
  %s14 = inlined_call_operand.hbm [shape: bf16[256,128], index: 14, kind: input, shape index: {}]
  %s15 = inlined_call_operand.vmem [shape: f32[1,128], index: 15, kind: input, shape index: {}]
  %s16 = inlined_call_operand.hbm [shape: bf16[128,128], index: 16, kind: input, shape index: {}]
  %s17 = inlined_call_operand.vmem [shape: f32[1,128], index: 17, kind: input, shape index: {}]
  %s18 = inlined_call_operand.hbm [shape: s32[1,128], index: 18, kind: output, shape index: {0}]
  %s19 = inlined_call_operand.hbm [shape: f32[1,128], index: 19, kind: output, shape index: {1}]
  %20 = xla_tuple %s18, %s19
  %s21 = sld [smem:[#allocation0]]
  $region130: #{tpu_custom_call.1} parent=0
    _
  %s23 = ssub.s32 1, %s21
  %s24 = scalar_select 0, %s23, %s21
  $region1: #{tpu_custom_call.1} parent=0
    #allocation6 [shape = 'u8[512]{0}', space=smem, size = 0x200, scoped, tag = 'input window, operand 0, single buffered']
    #allocation7 [shape = 's32[1]{0}', space=sflag, size = 0x4, scoped, tag = 'scoped memory for tpu_custom_call.1']
    #allocation8 [shape = 's32[1]{0}', space=sflag, size = 0x4, scoped, tag = 'scoped memory for tpu_custom_call.1']
    #allocation9 [shape = 's32[1]{0}', space=sflag, size = 0x4, scoped, tag = 'scoped memory for tpu_custom_call.1']
    #allocation10 [shape = 'u8[65536]{0}', space=vmem, size = 0x10000, scoped, tag = 'input window, operand 1, single buffered']
    #allocation11 [shape = 'u8[32768]{0}', space=vmem, size = 0x8000, scoped, tag = 'input window, operand 2, single buffered']
    #allocation12 [shape = 's32[1]{0}', space=sflag, size = 0x4, scoped, tag = 'scoped memory for tpu_custom_call.1']
    #allocation13 [shape = 'u8[32768]{0}', space=vmem, size = 0x8000, scoped, tag = 'input window, operand 3, single buffered']
    #allocation14 [shape = 'u8[32768]{0}', space=vmem, size = 0x8000, scoped, tag = 'input window, operand 6, single buffered']
    #allocation15 [shape = 's32[1]{0}', space=sflag, size = 0x4, scoped, tag = 'scoped memory for tpu_custom_call.1']
    #allocation16 [shape = 'u8[32768]{0}', space=vmem, size = 0x8000, scoped, tag = 'input window, operand 7, single buffered']
    #allocation17 [shape = 'u8[32768]{0}', space=vmem, size = 0x8000, scoped, tag = 'input window, operand 10, single buffered']
    #allocation18 [shape = 's32[1]{0}', space=sflag, size = 0x4, scoped, tag = 'scoped memory for tpu_custom_call.1']
    #allocation19 [shape = 'u8[32768]{0}', space=vmem, size = 0x8000, scoped, tag = 'input window, operand 11, single buffered']
    #allocation20 [shape = 'u8[65536]{0}', space=vmem, size = 0x10000, scoped, tag = 'input window, operand 14, single buffered']
    #allocation21 [shape = 's32[1]{0}', space=sflag, size = 0x4, scoped, tag = 'scoped memory for tpu_custom_call.1']
    #allocation22 [shape = 'u8[32768]{0}', space=vmem, size = 0x8000, scoped, tag = 'input window, operand 16, single buffered']
    #allocation23 [shape = 'u8[512]{0}', space=vmem, size = 0x400, scoped, tag = 'output window, operand 0, single buffered']
    #allocation24 [shape = 'u8[512]{0}', space=vmem, size = 0x400, scoped, tag = 'output window, operand 1, single buffered']
    #allocation25 [shape = 's32[1]{0}', space=sflag, size = 0x4, scoped, tag = 'scoped memory for tpu_custom_call.1']
    %25 = vsyncpa [#allocation9], 0
    %26 = vsyncpa [#allocation7], 0
    %27 = vsyncpa [#allocation12], 0
    %28 = vsyncpa [#allocation15], 0
    %29 = vsyncpa [#allocation18], 0
    %30 = vsyncpa [#allocation21], 0
    %31 = vsyncpa [#allocation8], 0
    %32 = vsyncpa [#allocation25], 0
    // Predicated region
    $region2: #{tpu_custom_call.1} parent=1 // pred_check
      _
    $region3: #{tpu_custom_call.1} parent=1 // pred_check_branch
      %34 = sbr.rel (0) target = $region5
    $region4: #{tpu_custom_call.1} parent=1 // pred_region
      %s36 = ssub.s32 16, 16
      %37 = vsyncadd [#allocation9], %s36
      %40 = dma.hbm_to_smem %s0, 16, [#allocation6], [#allocation9]
    $region5: #{tpu_custom_call.1} parent=1 // pred_fallthru
      _
    // Predicated region
    $region6: #{tpu_custom_call.1} parent=1 // pred_check
      _
    $region7: #{tpu_custom_call.1} parent=1 // pred_check_branch
      %42 = sbr.rel (0) target = $region9
    $region8: #{tpu_custom_call.1} parent=1 // pred_region
      %s44 = ssub.s32 2048, 2048
      %45 = vsyncadd [#allocation7], %s44
      %s46 = sshll.u32 [#allocation10], 4
      %s47 = int_to_ptr.vmem [resolvable:$true] %s46
      %52 = dma.hbm_to_vmem [thread:$0]  %s1, 2048, %s47, [#allocation7], 128, 128, 8
    $region9: #{tpu_custom_call.1} parent=1 // pred_fallthru
      _
    // Predicated region
    $region10: #{tpu_custom_call.1} parent=1 // pred_check
      _
    $region11: #{tpu_custom_call.1} parent=1 // pred_check_branch
      %54 = sbr.rel (0) target = $region13
    $region12: #{tpu_custom_call.1} parent=1 // pred_region
      %s56 = ssub.s32 1024, 1024
      %57 = vsyncadd [#allocation12], %s56
      %s58 = sshll.u32 [#allocation11], 4
      %s59 = int_to_ptr.vmem [resolvable:$true] %s58
      %64 = dma.hbm_to_vmem [thread:$0]  %s2, 1024, %s59, [#allocation12], 64, 64, 4
    $region13: #{tpu_custom_call.1} parent=1 // pred_fallthru
      _
    // Predicated region
    $region14: #{tpu_custom_call.1} parent=1 // pred_check
      _
    $region15: #{tpu_custom_call.1} parent=1 // pred_check_branch
      %66 = sbr.rel (0) target = $region17
    $region16: #{tpu_custom_call.1} parent=1 // pred_region
      %s68 = ssub.s32 1024, 1024
      %69 = vsyncadd [#allocation12], %s68
      %s70 = sshll.u32 [#allocation13], 4
      %s71 = int_to_ptr.vmem [resolvable:$true] %s70
      %76 = dma.hbm_to_vmem [thread:$0]  %s3, 1024, %s71, [#allocation12], 64, 64, 4
    $region17: #{tpu_custom_call.1} parent=1 // pred_fallthru
      _
    // Predicated region
    $region18: #{tpu_custom_call.1} parent=1 // pred_check
      _
    $region19: #{tpu_custom_call.1} parent=1 // pred_check_branch
      %78 = sbr.rel (0) target = $region21
    $region20: #{tpu_custom_call.1} parent=1 // pred_region
      _
    $region21: #{tpu_custom_call.1} parent=1 // pred_fallthru
      _
    // Predicated region
    $region22: #{tpu_custom_call.1} parent=1 // pred_check
      _
    $region23: #{tpu_custom_call.1} parent=1 // pred_check_branch
      %80 = sbr.rel (0) target = $region25
    $region24: #{tpu_custom_call.1} parent=1 // pred_region
      _
    $region25: #{tpu_custom_call.1} parent=1 // pred_fallthru
      _
    // Predicated region
    $region26: #{tpu_custom_call.1} parent=1 // pred_check
      _
    $region27: #{tpu_custom_call.1} parent=1 // pred_check_branch
      %82 = sbr.rel (0) target = $region29
    $region28: #{tpu_custom_call.1} parent=1 // pred_region
      %s84 = ssub.s32 1024, 1024
      %85 = vsyncadd [#allocation15], %s84
      %s86 = sshll.u32 [#allocation14], 4
      %s87 = int_to_ptr.vmem [resolvable:$true] %s86
      %92 = dma.hbm_to_vmem [thread:$0]  %s6, 1024, %s87, [#allocation15], 64, 64, 4
    $region29: #{tpu_custom_call.1} parent=1 // pred_fallthru
      _
    // Predicated region
    $region30: #{tpu_custom_call.1} parent=1 // pred_check
      _
    $region31: #{tpu_custom_call.1} parent=1 // pred_check_branch
      %94 = sbr.rel (0) target = $region33
    $region32: #{tpu_custom_call.1} parent=1 // pred_region
      %s96 = ssub.s32 1024, 1024
      %97 = vsyncadd [#allocation15], %s96
      %s98 = sshll.u32 [#allocation16], 4
      %s99 = int_to_ptr.vmem [resolvable:$true] %s98
      %104 = dma.hbm_to_vmem [thread:$0]  %s7, 1024, %s99, [#allocation15], 64, 64, 4
    $region33: #{tpu_custom_call.1} parent=1 // pred_fallthru
      _
    // Predicated region
    $region34: #{tpu_custom_call.1} parent=1 // pred_check
      _
    $region35: #{tpu_custom_call.1} parent=1 // pred_check_branch
      %106 = sbr.rel (0) target = $region37
    $region36: #{tpu_custom_call.1} parent=1 // pred_region
      _
    $region37: #{tpu_custom_call.1} parent=1 // pred_fallthru
      _
    // Predicated region
    $region38: #{tpu_custom_call.1} parent=1 // pred_check
      _
    $region39: #{tpu_custom_call.1} parent=1 // pred_check_branch
      %108 = sbr.rel (0) target = $region41
    $region40: #{tpu_custom_call.1} parent=1 // pred_region
      _
    $region41: #{tpu_custom_call.1} parent=1 // pred_fallthru
      _
    // Predicated region
    $region42: #{tpu_custom_call.1} parent=1 // pred_check
      _
    $region43: #{tpu_custom_call.1} parent=1 // pred_check_branch
      %110 = sbr.rel (0) target = $region45
    $region44: #{tpu_custom_call.1} parent=1 // pred_region
      %s112 = ssub.s32 1024, 1024
      %113 = vsyncadd [#allocation18], %s112
      %s114 = sshll.u32 [#allocation17], 4
      %s115 = int_to_ptr.vmem [resolvable:$true] %s114
      %120 = dma.hbm_to_vmem [thread:$0]  %s10, 1024, %s115, [#allocation18], 64, 64, 4
    $region45: #{tpu_custom_call.1} parent=1 // pred_fallthru
      _
    // Predicated region
    $region46: #{tpu_custom_call.1} parent=1 // pred_check
      _
    $region47: #{tpu_custom_call.1} parent=1 // pred_check_branch
      %122 = sbr.rel (0) target = $region49
    $region48: #{tpu_custom_call.1} parent=1 // pred_region
      %s124 = ssub.s32 1024, 1024
      %125 = vsyncadd [#allocation18], %s124
      %s126 = sshll.u32 [#allocation19], 4
      %s127 = int_to_ptr.vmem [resolvable:$true] %s126
      %132 = dma.hbm_to_vmem [thread:$0]  %s11, 1024, %s127, [#allocation18], 64, 64, 4
    $region49: #{tpu_custom_call.1} parent=1 // pred_fallthru
      _
    // Predicated region
    $region50: #{tpu_custom_call.1} parent=1 // pred_check
      _
    $region51: #{tpu_custom_call.1} parent=1 // pred_check_branch
      %134 = sbr.rel (0) target = $region53
    $region52: #{tpu_custom_call.1} parent=1 // pred_region
      _
    $region53: #{tpu_custom_call.1} parent=1 // pred_fallthru
      _
    // Predicated region
    $region54: #{tpu_custom_call.1} parent=1 // pred_check
      _
    $region55: #{tpu_custom_call.1} parent=1 // pred_check_branch
      %136 = sbr.rel (0) target = $region57
    $region56: #{tpu_custom_call.1} parent=1 // pred_region
      _
    $region57: #{tpu_custom_call.1} parent=1 // pred_fallthru
      _
    // Predicated region
    $region58: #{tpu_custom_call.1} parent=1 // pred_check
      _
    $region59: #{tpu_custom_call.1} parent=1 // pred_check_branch
      %138 = sbr.rel (0) target = $region61
    $region60: #{tpu_custom_call.1} parent=1 // pred_region
      %s140 = ssub.s32 2048, 2048
      %141 = vsyncadd [#allocation21], %s140
      %s142 = sshll.u32 [#allocation20], 4
      %s143 = int_to_ptr.vmem [resolvable:$true] %s142
      %148 = dma.hbm_to_vmem [thread:$0]  %s14, 2048, %s143, [#allocation21], 64, 64, 4
    $region61: #{tpu_custom_call.1} parent=1 // pred_fallthru
      _
    // Predicated region
    $region62: #{tpu_custom_call.1} parent=1 // pred_check
      _
    $region63: #{tpu_custom_call.1} parent=1 // pred_check_branch
      %150 = sbr.rel (0) target = $region65
    $region64: #{tpu_custom_call.1} parent=1 // pred_region
      _
    $region65: #{tpu_custom_call.1} parent=1 // pred_fallthru
      _
    // Predicated region
    $region66: #{tpu_custom_call.1} parent=1 // pred_check
      _
    $region67: #{tpu_custom_call.1} parent=1 // pred_check_branch
      %152 = sbr.rel (0) target = $region69
    $region68: #{tpu_custom_call.1} parent=1 // pred_region
      %s154 = ssub.s32 1024, 1024
      %155 = vsyncadd [#allocation21], %s154
      %s156 = sshll.u32 [#allocation22], 4
      %s157 = int_to_ptr.vmem [resolvable:$true] %s156
      %162 = dma.hbm_to_vmem [thread:$0]  %s16, 1024, %s157, [#allocation21], 64, 64, 4
    $region69: #{tpu_custom_call.1} parent=1 // pred_fallthru
      _
    // Predicated region
    $region70: #{tpu_custom_call.1} parent=1 // pred_check
      _
    $region71: #{tpu_custom_call.1} parent=1 // pred_check_branch
      %164 = sbr.rel (0) target = $region73
    $region72: #{tpu_custom_call.1} parent=1 // pred_region
      _
    $region73: #{tpu_custom_call.1} parent=1 // pred_fallthru
      _
    // Predicated region
    $region74: #{tpu_custom_call.1} parent=1 // pred_check
      _
    $region75: #{tpu_custom_call.1} parent=1 // pred_check_branch
      %166 = sbr.rel (0) target = $region77
    $region76: #{tpu_custom_call.1} parent=1 // pred_region
      %167 = dma.done [#allocation9], 16
    $region77: #{tpu_custom_call.1} parent=1 // pred_fallthru
      _
    // Predicated region
    $region78: #{tpu_custom_call.1} parent=1 // pred_check
      _
    $region79: #{tpu_custom_call.1} parent=1 // pred_check_branch
      %169 = sbr.rel (0) target = $region81
    $region80: #{tpu_custom_call.1} parent=1 // pred_region
      %170 = dma.done [#allocation7], 2048
    $region81: #{tpu_custom_call.1} parent=1 // pred_fallthru
      _
    // Predicated region
    $region82: #{tpu_custom_call.1} parent=1 // pred_check
      _
    $region83: #{tpu_custom_call.1} parent=1 // pred_check_branch
      %172 = sbr.rel (0) target = $region85
    $region84: #{tpu_custom_call.1} parent=1 // pred_region
      %173 = dma.done [#allocation12], 1024
    $region85: #{tpu_custom_call.1} parent=1 // pred_fallthru
      _
    // Predicated region
    $region86: #{tpu_custom_call.1} parent=1 // pred_check
      _
    $region87: #{tpu_custom_call.1} parent=1 // pred_check_branch
      %175 = sbr.rel (0) target = $region89
    $region88: #{tpu_custom_call.1} parent=1 // pred_region
      %176 = dma.done [#allocation12], 1024
    $region89: #{tpu_custom_call.1} parent=1 // pred_fallthru
      _
    // Predicated region
    $region90: #{tpu_custom_call.1} parent=1 // pred_check
      _
    $region91: #{tpu_custom_call.1} parent=1 // pred_check_branch
      %178 = sbr.rel (0) target = $region93
    $region92: #{tpu_custom_call.1} parent=1 // pred_region
      %179 = dma.done [#allocation15], 1024
    $region93: #{tpu_custom_call.1} parent=1 // pred_fallthru
      _
    // Predicated region
    $region94: #{tpu_custom_call.1} parent=1 // pred_check
      _
    $region95: #{tpu_custom_call.1} parent=1 // pred_check_branch
      %181 = sbr.rel (0) target = $region97
    $region96: #{tpu_custom_call.1} parent=1 // pred_region
      %182 = dma.done [#allocation15], 1024
    $region97: #{tpu_custom_call.1} parent=1 // pred_fallthru
      _
    // Predicated region
    $region98: #{tpu_custom_call.1} parent=1 // pred_check
      _
    $region99: #{tpu_custom_call.1} parent=1 // pred_check_branch
      %184 = sbr.rel (0) target = $region101
    $region100: #{tpu_custom_call.1} parent=1 // pred_region
      %185 = dma.done [#allocation18], 1024
    $region101: #{tpu_custom_call.1} parent=1 // pred_fallthru
      _
    // Predicated region
    $region102: #{tpu_custom_call.1} parent=1 // pred_check
      _
    $region103: #{tpu_custom_call.1} parent=1 // pred_check_branch
      %187 = sbr.rel (0) target = $region105
    $region104: #{tpu_custom_call.1} parent=1 // pred_region
      %188 = dma.done [#allocation18], 1024
    $region105: #{tpu_custom_call.1} parent=1 // pred_fallthru
      _
    // Predicated region
    $region106: #{tpu_custom_call.1} parent=1 // pred_check
      _
    $region107: #{tpu_custom_call.1} parent=1 // pred_check_branch
      %190 = sbr.rel (0) target = $region109
    $region108: #{tpu_custom_call.1} parent=1 // pred_region
      %191 = dma.done [#allocation21], 2048
    $region109: #{tpu_custom_call.1} parent=1 // pred_fallthru
      _
    // Predicated region
    $region110: #{tpu_custom_call.1} parent=1 // pred_check
      _
    $region111: #{tpu_custom_call.1} parent=1 // pred_check_branch
      %193 = sbr.rel (0) target = $region113
    $region112: #{tpu_custom_call.1} parent=1 // pred_region
      %194 = dma.done [#allocation21], 1024
    $region113: #{tpu_custom_call.1} parent=1 // pred_fallthru
      _
    %195 = sfence
    %v197 = vlaneseq
    %v198 = vand.u32 %v197, 127
    %vm199 = vcmp.lt.s32.totalorder %v198, 32
    %v200 = vsel %vm199, 1, 0
    %v201 = vcvt.s32.f32 %v200
    %s202 = sld [smem:[#allocation6]]
    %s203 = scalar_lea.vmem [#allocation10], %s202
    %v204 = vld [vmem:[%s203] sm:$0x1]
    %205 = vst [vmem:[#allocation2] sm:$0x1] %v204
    %s206 = sld [smem:[#allocation6 + $0x1]]
    %s207 = scalar_lea.vmem [#allocation10], %s206
    %v208 = vld [vmem:[%s207] sm:$0x1]
    %209 = vst [vmem:[#allocation2 + $0x1] sm:$0x1] %v208
    %s210 = sld [smem:[#allocation6 + $0x2]]
    %s211 = scalar_lea.vmem [#allocation10], %s210
    %v212 = vld [vmem:[%s211] sm:$0x1]
    %213 = vst [vmem:[#allocation2 + $0x2] sm:$0x1] %v212
    %s214 = sld [smem:[#allocation6 + $0x3]]
    %s215 = scalar_lea.vmem [#allocation10], %s214
    %v216 = vld [vmem:[%s215] sm:$0x1]
    %217 = vst [vmem:[#allocation2 + $0x3] sm:$0x1] %v216
    %s218 = sld [smem:[#allocation6 + $0x4]]
    %s219 = scalar_lea.vmem [#allocation10], %s218
    %v220 = vld [vmem:[%s219] sm:$0x1]
    %221 = vst [vmem:[#allocation2 + $0x4] sm:$0x1] %v220
    %s222 = sld [smem:[#allocation6 + $0x5]]
    %s223 = scalar_lea.vmem [#allocation10], %s222
    %v224 = vld [vmem:[%s223] sm:$0x1]
    %225 = vst [vmem:[#allocation2 + $0x5] sm:$0x1] %v224
    %s226 = sld [smem:[#allocation6 + $0x6]]
    %s227 = scalar_lea.vmem [#allocation10], %s226
    %v228 = vld [vmem:[%s227] sm:$0x1]
    %229 = vst [vmem:[#allocation2 + $0x6] sm:$0x1] %v228
    %s230 = sld [smem:[#allocation6 + $0x7]]
    %s231 = scalar_lea.vmem [#allocation10], %s230
    %v232 = vld [vmem:[%s231] sm:$0x1]
    %233 = vst [vmem:[#allocation2 + $0x7] sm:$0x1] %v232
    %v234 = vld [vmem:[#allocation2] sm:$0xff]
    %v235 = vpack.c.bf16 %v234, %v234
    %v236 = vld [vmem:[#allocation11] sm:$0xf]
    %v237 = vld [vmem:[#allocation11 + $0x4] sm:$0xf]
    %v238 = vld [vmem:[#allocation11 + $0x8] sm:$0xf]
    %v239 = vld [vmem:[#allocation11 + $0xc] sm:$0xf]
    %v240 = vld [vmem:[#allocation11 + $0x10] sm:$0xf]
    %v241 = vld [vmem:[#allocation11 + $0x14] sm:$0xf]
    %v242 = vld [vmem:[#allocation11 + $0x18] sm:$0xf]
    %v243 = vld [vmem:[#allocation11 + $0x1c] sm:$0xf]
    %v244 = vld [vmem:[#allocation11 + $0x20] sm:$0xf]
    %v245 = vld [vmem:[#allocation11 + $0x24] sm:$0xf]
    %v246 = vld [vmem:[#allocation11 + $0x28] sm:$0xf]
    %v247 = vld [vmem:[#allocation11 + $0x2c] sm:$0xf]
    %v248 = vld [vmem:[#allocation11 + $0x30] sm:$0xf]
    %v249 = vld [vmem:[#allocation11 + $0x34] sm:$0xf]
    %v250 = vld [vmem:[#allocation11 + $0x38] sm:$0xf]
    %v251 = vld [vmem:[#allocation11 + $0x3c] sm:$0xf]
    %v252 = vld [vmem:[%s4] sm:$0x1]
    %v254 = vlaneseq
    %v255 = vshrl.u32 %v254, 7
    %v256 = vsub.s32 0, %v255
    %v257 = vrot.slane %v252, %v256
    %v275 = vunpack.c.l.b16 %v236
    %v276 = vunpack.c.l.b16 %v237
    %v277 = vunpack.c.l.b16 %v238
    %v278 = vunpack.c.l.b16 %v239
    %v279 = vunpack.c.l.b16 %v240
    %v280 = vunpack.c.l.b16 %v241
    %v281 = vunpack.c.l.b16 %v242
    %v282 = vunpack.c.l.b16 %v243
    %v283 = vunpack.c.l.b16 %v244
    %v284 = vunpack.c.l.b16 %v245
    %v285 = vunpack.c.l.b16 %v246
    %v286 = vunpack.c.l.b16 %v247
    %v287 = vunpack.c.l.b16 %v248
    %v288 = vunpack.c.l.b16 %v249
    %v289 = vunpack.c.l.b16 %v250
    %v290 = vunpack.c.l.b16 %v251
    %v291 = vpack.c.b16 %v276, %v275
    %v292 = vpack.c.b16 %v278, %v277
    %v293 = vpack.c.b16 %v280, %v279
    %v294 = vpack.c.b16 %v282, %v281
    %v295 = vpack.c.b16 %v284, %v283
    %v296 = vpack.c.b16 %v286, %v285
    %v297 = vpack.c.b16 %v288, %v287
    %v298 = vpack.c.b16 %v290, %v289
    %307 = vmatprep.subr.bf16.mxu0 0
    %308 = vmatpush1.bf16.msra.mxu0 %v298
    %309 = vmatprep.subr.bf16.mxu0 0
    %310 = vmatpush1.bf16.msra.mxu0 %v297
    %311 = vmatprep.subr.bf16.mxu0 0
    %312 = vmatpush1.bf16.msra.mxu0 %v296
    %313 = vmatprep.subr.bf16.mxu0 0
    %314 = vmatpush1.bf16.msra.mxu0 %v295
    %315 = vmatprep.subr.bf16.mxu0 0
    %316 = vmatpush1.bf16.msra.mxu0 %v294
    %317 = vmatprep.subr.bf16.mxu0 0
    %318 = vmatpush1.bf16.msra.mxu0 %v293
    %319 = vmatprep.subr.bf16.mxu0 0
    %320 = vmatpush1.bf16.msra.mxu0 %v292
    %321 = vmatprep.subr.bf16.mxu0 0
    %322 = vmatpush1.bf16.msra.mxu0 %v291
    %323 = vmatprep.subr.bf16.mxu0 0
    %324 = vmatpush2.bf16.msra.mxu0 0
    %325 = vmatprep.subr.bf16.mxu0 0
    %326 = vmatpush2.bf16.msra.mxu0 0
    %327 = vmatprep.subr.bf16.mxu0 0
    %328 = vmatpush2.bf16.msra.mxu0 0
    %329 = vmatprep.subr.bf16.mxu0 0
    %330 = vmatpush2.bf16.msra.mxu0 0
    %331 = vmatprep.subr.bf16.mxu0 0
    %332 = vmatpush2.bf16.msra.mxu0 0
    %333 = vmatprep.subr.bf16.mxu0 0
    %334 = vmatpush2.bf16.msra.mxu0 0
    %335 = vmatprep.subr.bf16.mxu0 0
    %336 = vmatpush2.bf16.msra.mxu0 0
    %337 = vmatprep.subr.bf16.mxu0 0
    %338 = vmatpush2.bf16.msra.mxu0 0
    %339 = vmatprep.mubr.bf16.mxu0 0
    %340 = vmatmul.mubr.bf16.gmra.mxu0 %v235
    %v341 = vpop.f32.mrf.mxu0
    %v342 = vadd.f32 %v257, %v341
    %v343 = vpop.f32.mrf.mxu0
    %v344 = vpop.f32.mrf.mxu0
    %v345 = vpop.f32.mrf.mxu0
    %346 = vdwg.mxu0
    %v347 = vld [vmem:[#allocation14] sm:$0xf]
    %v348 = vld [vmem:[#allocation14 + $0x4] sm:$0xf]
    %v349 = vld [vmem:[#allocation14 + $0x8] sm:$0xf]
    %v350 = vld [vmem:[#allocation14 + $0xc] sm:$0xf]
    %v351 = vld [vmem:[#allocation14 + $0x10] sm:$0xf]
    %v352 = vld [vmem:[#allocation14 + $0x14] sm:$0xf]
    %v353 = vld [vmem:[#allocation14 + $0x18] sm:$0xf]
    %v354 = vld [vmem:[#allocation14 + $0x1c] sm:$0xf]
    %v355 = vld [vmem:[#allocation14 + $0x20] sm:$0xf]
    %v356 = vld [vmem:[#allocation14 + $0x24] sm:$0xf]
    %v357 = vld [vmem:[#allocation14 + $0x28] sm:$0xf]
    %v358 = vld [vmem:[#allocation14 + $0x2c] sm:$0xf]
    %v359 = vld [vmem:[#allocation14 + $0x30] sm:$0xf]
    %v360 = vld [vmem:[#allocation14 + $0x34] sm:$0xf]
    %v361 = vld [vmem:[#allocation14 + $0x38] sm:$0xf]
    %v362 = vld [vmem:[#allocation14 + $0x3c] sm:$0xf]
    %v363 = vld [vmem:[%s8] sm:$0x1]
    %v365 = vlaneseq
    %v366 = vshrl.u32 %v365, 7
    %v367 = vsub.s32 0, %v366
    %v368 = vrot.slane %v363, %v367
    %v386 = vunpack.c.l.b16 %v347
    %v387 = vunpack.c.l.b16 %v348
    %v388 = vunpack.c.l.b16 %v349
    %v389 = vunpack.c.l.b16 %v350
    %v390 = vunpack.c.l.b16 %v351
    %v391 = vunpack.c.l.b16 %v352
    %v392 = vunpack.c.l.b16 %v353
    %v393 = vunpack.c.l.b16 %v354
    %v394 = vunpack.c.l.b16 %v355
    %v395 = vunpack.c.l.b16 %v356
    %v396 = vunpack.c.l.b16 %v357
    %v397 = vunpack.c.l.b16 %v358
    %v398 = vunpack.c.l.b16 %v359
    %v399 = vunpack.c.l.b16 %v360
    %v400 = vunpack.c.l.b16 %v361
    %v401 = vunpack.c.l.b16 %v362
    %v402 = vpack.c.b16 %v387, %v386
    %v403 = vpack.c.b16 %v389, %v388
    %v404 = vpack.c.b16 %v391, %v390
    %v405 = vpack.c.b16 %v393, %v392
    %v406 = vpack.c.b16 %v395, %v394
    %v407 = vpack.c.b16 %v397, %v396
    %v408 = vpack.c.b16 %v399, %v398
    %v409 = vpack.c.b16 %v401, %v400
    %418 = vmatprep.subr.bf16.mxu0 0
    %419 = vmatpush1.bf16.msra.mxu0 %v409
    %420 = vmatprep.subr.bf16.mxu0 0
    %421 = vmatpush1.bf16.msra.mxu0 %v408
    %422 = vmatprep.subr.bf16.mxu0 0
    %423 = vmatpush1.bf16.msra.mxu0 %v407
    %424 = vmatprep.subr.bf16.mxu0 0
    %425 = vmatpush1.bf16.msra.mxu0 %v406
    %426 = vmatprep.subr.bf16.mxu0 0
    %427 = vmatpush1.bf16.msra.mxu0 %v405
    %428 = vmatprep.subr.bf16.mxu0 0
    %429 = vmatpush1.bf16.msra.mxu0 %v404
    %430 = vmatprep.subr.bf16.mxu0 0
    %431 = vmatpush1.bf16.msra.mxu0 %v403
    %432 = vmatprep.subr.bf16.mxu0 0
    %433 = vmatpush1.bf16.msra.mxu0 %v402
    %434 = vmatprep.subr.bf16.mxu0 0
    %435 = vmatpush2.bf16.msra.mxu0 0
    %436 = vmatprep.subr.bf16.mxu0 0
    %437 = vmatpush2.bf16.msra.mxu0 0
    %438 = vmatprep.subr.bf16.mxu0 0
    %439 = vmatpush2.bf16.msra.mxu0 0
    %440 = vmatprep.subr.bf16.mxu0 0
    %441 = vmatpush2.bf16.msra.mxu0 0
    %442 = vmatprep.subr.bf16.mxu0 0
    %443 = vmatpush2.bf16.msra.mxu0 0
    %444 = vmatprep.subr.bf16.mxu0 0
    %445 = vmatpush2.bf16.msra.mxu0 0
    %446 = vmatprep.subr.bf16.mxu0 0
    %447 = vmatpush2.bf16.msra.mxu0 0
    %448 = vmatprep.subr.bf16.mxu0 0
    %449 = vmatpush2.bf16.msra.mxu0 0
    %450 = vmatprep.mubr.bf16.mxu0 0
    %451 = vmatmul.mubr.bf16.gmra.mxu0 %v235
    %v452 = vpop.f32.mrf.mxu0
    %v453 = vadd.f32 %v368, %v452
    %v454 = vpop.f32.mrf.mxu0
    %v455 = vpop.f32.mrf.mxu0
    %v456 = vpop.f32.mrf.mxu0
    %457 = vdwg.mxu0
    %v458 = vld [vmem:[#allocation13] sm:$0xf]
    %v459 = vld [vmem:[#allocation13 + $0x4] sm:$0xf]
    %v460 = vld [vmem:[#allocation13 + $0x8] sm:$0xf]
    %v461 = vld [vmem:[#allocation13 + $0xc] sm:$0xf]
    %v462 = vld [vmem:[#allocation13 + $0x10] sm:$0xf]
    %v463 = vld [vmem:[#allocation13 + $0x14] sm:$0xf]
    %v464 = vld [vmem:[#allocation13 + $0x18] sm:$0xf]
    %v465 = vld [vmem:[#allocation13 + $0x1c] sm:$0xf]
    %v466 = vld [vmem:[#allocation13 + $0x20] sm:$0xf]
    %v467 = vld [vmem:[#allocation13 + $0x24] sm:$0xf]
    %v468 = vld [vmem:[#allocation13 + $0x28] sm:$0xf]
    %v469 = vld [vmem:[#allocation13 + $0x2c] sm:$0xf]
    %v470 = vld [vmem:[#allocation13 + $0x30] sm:$0xf]
    %v471 = vld [vmem:[#allocation13 + $0x34] sm:$0xf]
    %v472 = vld [vmem:[#allocation13 + $0x38] sm:$0xf]
    %v473 = vld [vmem:[#allocation13 + $0x3c] sm:$0xf]
    %v474 = vld [vmem:[%s5] sm:$0x1]
    %v491 = vunpack.c.l.b16 %v458
    %v492 = vunpack.c.l.b16 %v459
    %v493 = vunpack.c.l.b16 %v460
    %v494 = vunpack.c.l.b16 %v461
    %v495 = vunpack.c.l.b16 %v462
    %v496 = vunpack.c.l.b16 %v463
    %v497 = vunpack.c.l.b16 %v464
    %v498 = vunpack.c.l.b16 %v465
    %v499 = vunpack.c.l.b16 %v466
    %v500 = vunpack.c.l.b16 %v467
    %v501 = vunpack.c.l.b16 %v468
    %v502 = vunpack.c.l.b16 %v469
    %v503 = vunpack.c.l.b16 %v470
    %v504 = vunpack.c.l.b16 %v471
    %v505 = vunpack.c.l.b16 %v472
    %v506 = vunpack.c.l.b16 %v473
    %v507 = vpack.c.b16 %v492, %v491
    %v508 = vpack.c.b16 %v494, %v493
    %v509 = vpack.c.b16 %v496, %v495
    %v510 = vpack.c.b16 %v498, %v497
    %v511 = vpack.c.b16 %v500, %v499
    %v512 = vpack.c.b16 %v502, %v501
    %v513 = vpack.c.b16 %v504, %v503
    %v514 = vpack.c.b16 %v506, %v505
    %523 = vmatprep.subr.bf16.mxu0 0
    %524 = vmatpush1.bf16.msra.mxu0 %v514
    %525 = vmatprep.subr.bf16.mxu0 0
    %526 = vmatpush1.bf16.msra.mxu0 %v513
    %527 = vmatprep.subr.bf16.mxu0 0
    %528 = vmatpush1.bf16.msra.mxu0 %v512
    %529 = vmatprep.subr.bf16.mxu0 0
    %530 = vmatpush1.bf16.msra.mxu0 %v511
    %531 = vmatprep.subr.bf16.mxu0 0
    %532 = vmatpush1.bf16.msra.mxu0 %v510
    %533 = vmatprep.subr.bf16.mxu0 0
    %534 = vmatpush1.bf16.msra.mxu0 %v509
    %535 = vmatprep.subr.bf16.mxu0 0
    %536 = vmatpush1.bf16.msra.mxu0 %v508
    %537 = vmatprep.subr.bf16.mxu0 0
    %538 = vmatpush1.bf16.msra.mxu0 %v507
    %539 = vmatprep.subr.bf16.mxu0 0
    %540 = vmatpush2.bf16.msra.mxu0 0
    %541 = vmatprep.subr.bf16.mxu0 0
    %542 = vmatpush2.bf16.msra.mxu0 0
    %543 = vmatprep.subr.bf16.mxu0 0
    %544 = vmatpush2.bf16.msra.mxu0 0
    %545 = vmatprep.subr.bf16.mxu0 0
    %546 = vmatpush2.bf16.msra.mxu0 0
    %547 = vmatprep.subr.bf16.mxu0 0
    %548 = vmatpush2.bf16.msra.mxu0 0
    %549 = vmatprep.subr.bf16.mxu0 0
    %550 = vmatpush2.bf16.msra.mxu0 0
    %551 = vmatprep.subr.bf16.mxu0 0
    %552 = vmatpush2.bf16.msra.mxu0 0
    %553 = vmatprep.subr.bf16.mxu0 0
    %554 = vmatpush2.bf16.msra.mxu0 0
    %555 = vmatprep.mubr.bf16.mxu0 0
    %556 = vmatmul.mubr.bf16.gmra.mxu0 0
    %v557 = vpop.f32.mrf.mxu0
    %v558 = vadd.f32 %v474, %v557
    %v559 = vpop.f32.mrf.mxu0
    %v560 = vpop.f32.mrf.mxu0
    %v561 = vpop.f32.mrf.mxu0
    %562 = vdwg.mxu0
    %v563 = vadd.f32 %v342, %v558
    %v564 = vxor.u32 %v563, 2147483648
    %v565 = vmul.f32 %v564, 1.442695
    %v566 = vpow.pop %v565
    %v567 = vadd.f32 %v566, 1.0
    %v568 = vrcp.pop %v567
    %v569 = vmul.f32 1.0, %v568
    %570 = vrot.lane.b32.xlu0 %v569, 64
    %v571 = vpop.permute.xlu0 %570
    %v572 = vmul.f32 %v571, %v558
    %v573 = vadd.f32 %v342, %v572
    %v574 = vtanh.pop %v573
    %575 = vrot.lane.b32.xlu0 %v569, 96
    %v576 = vpop.permute.xlu0 %575
    %577 = vrot.lane.b32.xlu0 %v574, 64
    %v578 = vpop.permute.xlu0 %577
    %v579 = vsub.f32 1.0, %v576
    %v580 = vmul.f32 %v579, %v578
    %v581 = vmul.f32 %v576, 0.0
    %v582 = vadd.f32 %v580, %v581
    %v583 = vmul.f32 %v582, %v201
    %v584 = vld [vmem:[#allocation16] sm:$0xf]
    %v585 = vld [vmem:[#allocation16 + $0x4] sm:$0xf]
    %v586 = vld [vmem:[#allocation16 + $0x8] sm:$0xf]
    %v587 = vld [vmem:[#allocation16 + $0xc] sm:$0xf]
    %v588 = vld [vmem:[#allocation16 + $0x10] sm:$0xf]
    %v589 = vld [vmem:[#allocation16 + $0x14] sm:$0xf]
    %v590 = vld [vmem:[#allocation16 + $0x18] sm:$0xf]
    %v591 = vld [vmem:[#allocation16 + $0x1c] sm:$0xf]
    %v592 = vld [vmem:[#allocation16 + $0x20] sm:$0xf]
    %v593 = vld [vmem:[#allocation16 + $0x24] sm:$0xf]
    %v594 = vld [vmem:[#allocation16 + $0x28] sm:$0xf]
    %v595 = vld [vmem:[#allocation16 + $0x2c] sm:$0xf]
    %v596 = vld [vmem:[#allocation16 + $0x30] sm:$0xf]
    %v597 = vld [vmem:[#allocation16 + $0x34] sm:$0xf]
    %v598 = vld [vmem:[#allocation16 + $0x38] sm:$0xf]
    %v599 = vld [vmem:[#allocation16 + $0x3c] sm:$0xf]
    %v600 = vld [vmem:[%s9] sm:$0x1]
    %v617 = vunpack.c.l.b16 %v584
    %v618 = vunpack.c.l.b16 %v585
    %v619 = vunpack.c.l.b16 %v586
    %v620 = vunpack.c.l.b16 %v587
    %v621 = vunpack.c.l.b16 %v588
    %v622 = vunpack.c.l.b16 %v589
    %v623 = vunpack.c.l.b16 %v590
    %v624 = vunpack.c.l.b16 %v591
    %v625 = vunpack.c.l.b16 %v592
    %v626 = vunpack.c.l.b16 %v593
    %v627 = vunpack.c.l.b16 %v594
    %v628 = vunpack.c.l.b16 %v595
    %v629 = vunpack.c.l.b16 %v596
    %v630 = vunpack.c.l.b16 %v597
    %v631 = vunpack.c.l.b16 %v598
    %v632 = vunpack.c.l.b16 %v599
    %v633 = vpack.c.b16 %v618, %v617
    %v634 = vpack.c.b16 %v620, %v619
    %v635 = vpack.c.b16 %v622, %v621
    %v636 = vpack.c.b16 %v624, %v623
    %v637 = vpack.c.b16 %v626, %v625
    %v638 = vpack.c.b16 %v628, %v627
    %v639 = vpack.c.b16 %v630, %v629
    %v640 = vpack.c.b16 %v632, %v631
    %649 = vmatprep.subr.bf16.mxu0 0
    %650 = vmatpush1.bf16.msra.mxu0 %v640
    %651 = vmatprep.subr.bf16.mxu0 0
    %652 = vmatpush1.bf16.msra.mxu0 %v639
    %653 = vmatprep.subr.bf16.mxu0 0
    %654 = vmatpush1.bf16.msra.mxu0 %v638
    %655 = vmatprep.subr.bf16.mxu0 0
    %656 = vmatpush1.bf16.msra.mxu0 %v637
    %657 = vmatprep.subr.bf16.mxu0 0
    %658 = vmatpush1.bf16.msra.mxu0 %v636
    %659 = vmatprep.subr.bf16.mxu0 0
    %660 = vmatpush1.bf16.msra.mxu0 %v635
    %661 = vmatprep.subr.bf16.mxu0 0
    %662 = vmatpush1.bf16.msra.mxu0 %v634
    %663 = vmatprep.subr.bf16.mxu0 0
    %664 = vmatpush1.bf16.msra.mxu0 %v633
    %665 = vmatprep.subr.bf16.mxu0 0
    %666 = vmatpush2.bf16.msra.mxu0 0
    %667 = vmatprep.subr.bf16.mxu0 0
    %668 = vmatpush2.bf16.msra.mxu0 0
    %669 = vmatprep.subr.bf16.mxu0 0
    %670 = vmatpush2.bf16.msra.mxu0 0
    %671 = vmatprep.subr.bf16.mxu0 0
    %672 = vmatpush2.bf16.msra.mxu0 0
    %673 = vmatprep.subr.bf16.mxu0 0
    %674 = vmatpush2.bf16.msra.mxu0 0
    %675 = vmatprep.subr.bf16.mxu0 0
    %676 = vmatpush2.bf16.msra.mxu0 0
    %677 = vmatprep.subr.bf16.mxu0 0
    %678 = vmatpush2.bf16.msra.mxu0 0
    %679 = vmatprep.subr.bf16.mxu0 0
    %680 = vmatpush2.bf16.msra.mxu0 0
    %681 = vmatprep.mubr.bf16.mxu0 0
    %682 = vmatmul.mubr.bf16.gmra.mxu0 0
    %v683 = vpop.f32.mrf.mxu0
    %v684 = vadd.f32 %v600, %v683
    %v685 = vpop.f32.mrf.mxu0
    %v686 = vpop.f32.mrf.mxu0
    %v687 = vpop.f32.mrf.mxu0
    %688 = vdwg.mxu0
    %v690 = vrot.slane %v684, 1
    %v692 = vadd.f32 %v453, %v690
    %v693 = vxor.u32 %v692, 2147483648
    %v694 = vmul.f32 %v693, 1.442695
    %v695 = vpow.pop %v694
    %v696 = vadd.f32 %v695, 1.0
    %v697 = vrcp.pop %v696
    %v698 = vmul.f32 1.0, %v697
    %v700 = vrot.slane %v698, 7
    %702 = vrot.lane.b32.xlu0 %v700, 64
    %v703 = vpop.permute.xlu0 %702
    %v704 = vmul.f32 %v703, %v684
    %v706 = vrot.slane %v704, 1
    %v708 = vadd.f32 %v453, %v706
    %v709 = vtanh.pop %v708
    %710 = vrot.lane.b32.xlu0 %v700, 96
    %v711 = vpop.permute.xlu0 %710
    %v713 = vrot.slane %v709, 7
    %715 = vrot.lane.b32.xlu0 %v713, 64
    %v716 = vpop.permute.xlu0 %715
    %v717 = vsub.f32 1.0, %v711
    %v718 = vmul.f32 %v717, %v716
    %v719 = vmul.f32 %v711, 0.0
    %v720 = vadd.f32 %v718, %v719
    %v721 = vmul.f32 %v720, %v201
    %722 = vst [vmem:[#allocation3] sm:$0x1] %v583
    %723 = vst [vmem:[#allocation4 + $0x7] sm:$0x1] %v721
    %v724 = vpack.c.bf16 %v583, %v583
    %v725 = vld [vmem:[#allocation13] sm:$0xf]
    %v726 = vld [vmem:[#allocation13 + $0x4] sm:$0xf]
    %v727 = vld [vmem:[#allocation13 + $0x8] sm:$0xf]
    %v728 = vld [vmem:[#allocation13 + $0xc] sm:$0xf]
    %v729 = vld [vmem:[#allocation13 + $0x10] sm:$0xf]
    %v730 = vld [vmem:[#allocation13 + $0x14] sm:$0xf]
    %v731 = vld [vmem:[#allocation13 + $0x18] sm:$0xf]
    %v732 = vld [vmem:[#allocation13 + $0x1c] sm:$0xf]
    %v733 = vld [vmem:[#allocation13 + $0x20] sm:$0xf]
    %v734 = vld [vmem:[#allocation13 + $0x24] sm:$0xf]
    %v735 = vld [vmem:[#allocation13 + $0x28] sm:$0xf]
    %v736 = vld [vmem:[#allocation13 + $0x2c] sm:$0xf]
    %v737 = vld [vmem:[#allocation13 + $0x30] sm:$0xf]
    %v738 = vld [vmem:[#allocation13 + $0x34] sm:$0xf]
    %v739 = vld [vmem:[#allocation13 + $0x38] sm:$0xf]
    %v740 = vld [vmem:[#allocation13 + $0x3c] sm:$0xf]
    %v741 = vld [vmem:[%s5] sm:$0x1]
    %v758 = vunpack.c.l.b16 %v725
    %v759 = vunpack.c.l.b16 %v726
    %v760 = vunpack.c.l.b16 %v727
    %v761 = vunpack.c.l.b16 %v728
    %v762 = vunpack.c.l.b16 %v729
    %v763 = vunpack.c.l.b16 %v730
    %v764 = vunpack.c.l.b16 %v731
    %v765 = vunpack.c.l.b16 %v732
    %v766 = vunpack.c.l.b16 %v733
    %v767 = vunpack.c.l.b16 %v734
    %v768 = vunpack.c.l.b16 %v735
    %v769 = vunpack.c.l.b16 %v736
    %v770 = vunpack.c.l.b16 %v737
    %v771 = vunpack.c.l.b16 %v738
    %v772 = vunpack.c.l.b16 %v739
    %v773 = vunpack.c.l.b16 %v740
    %v774 = vpack.c.b16 %v759, %v758
    %v775 = vpack.c.b16 %v761, %v760
    %v776 = vpack.c.b16 %v763, %v762
    %v777 = vpack.c.b16 %v765, %v764
    %v778 = vpack.c.b16 %v767, %v766
    %v779 = vpack.c.b16 %v769, %v768
    %v780 = vpack.c.b16 %v771, %v770
    %v781 = vpack.c.b16 %v773, %v772
    %790 = vmatprep.subr.bf16.mxu0 0
    %791 = vmatpush1.bf16.msra.mxu0 %v781
    %792 = vmatprep.subr.bf16.mxu0 0
    %793 = vmatpush1.bf16.msra.mxu0 %v780
    %794 = vmatprep.subr.bf16.mxu0 0
    %795 = vmatpush1.bf16.msra.mxu0 %v779
    %796 = vmatprep.subr.bf16.mxu0 0
    %797 = vmatpush1.bf16.msra.mxu0 %v778
    %798 = vmatprep.subr.bf16.mxu0 0
    %799 = vmatpush1.bf16.msra.mxu0 %v777
    %800 = vmatprep.subr.bf16.mxu0 0
    %801 = vmatpush1.bf16.msra.mxu0 %v776
    %802 = vmatprep.subr.bf16.mxu0 0
    %803 = vmatpush1.bf16.msra.mxu0 %v775
    %804 = vmatprep.subr.bf16.mxu0 0
    %805 = vmatpush1.bf16.msra.mxu0 %v774
    %806 = vmatprep.subr.bf16.mxu0 0
    %807 = vmatpush2.bf16.msra.mxu0 0
    %808 = vmatprep.subr.bf16.mxu0 0
    %809 = vmatpush2.bf16.msra.mxu0 0
    %810 = vmatprep.subr.bf16.mxu0 0
    %811 = vmatpush2.bf16.msra.mxu0 0
    %812 = vmatprep.subr.bf16.mxu0 0
    %813 = vmatpush2.bf16.msra.mxu0 0
    %814 = vmatprep.subr.bf16.mxu0 0
    %815 = vmatpush2.bf16.msra.mxu0 0
    %816 = vmatprep.subr.bf16.mxu0 0
    %817 = vmatpush2.bf16.msra.mxu0 0
    %818 = vmatprep.subr.bf16.mxu0 0
    %819 = vmatpush2.bf16.msra.mxu0 0
    %820 = vmatprep.subr.bf16.mxu0 0
    %821 = vmatpush2.bf16.msra.mxu0 0
    %822 = vmatprep.mubr.bf16.mxu0 0
    %823 = vmatmul.mubr.bf16.gmra.mxu0 %v724
    %v824 = vpop.f32.mrf.mxu0
    %v825 = vadd.f32 %v741, %v824
    %v826 = vpop.f32.mrf.mxu0
    %v827 = vpop.f32.mrf.mxu0
    %v828 = vpop.f32.mrf.mxu0
    %829 = vdwg.mxu0
    %v831 = vrot.slane %v825, 7
    %v833 = vadd.f32 %v342, %v831
    %v834 = vxor.u32 %v833, 2147483648
    %v835 = vmul.f32 %v834, 1.442695
    %v836 = vpow.pop %v835
    %v837 = vadd.f32 %v836, 1.0
    %v838 = vrcp.pop %v837
    %v839 = vmul.f32 1.0, %v838
    %v841 = vrot.slane %v839, 1
    %843 = vrot.lane.b32.xlu0 %v841, 64
    %v844 = vpop.permute.xlu0 %843
    %v845 = vmul.f32 %v844, %v825
    %v847 = vrot.slane %v845, 7
    %v849 = vadd.f32 %v342, %v847
    %v850 = vtanh.pop %v849
    %851 = vrot.lane.b32.xlu0 %v841, 96
    %v852 = vpop.permute.xlu0 %851
    %v854 = vrot.slane %v850, 1
    %856 = vrot.lane.b32.xlu0 %v854, 64
    %v857 = vpop.permute.xlu0 %856
    %v858 = vsub.f32 1.0, %v852
    %v859 = vmul.f32 %v858, %v857
    %v860 = vmul.f32 %v852, %v583
    %v861 = vadd.f32 %v859, %v860
    %v862 = vmul.f32 %v861, %v201
    %v863 = vpack.c.bf16 %v721, %v721
    %v864 = vld [vmem:[#allocation16] sm:$0xf]
    %v865 = vld [vmem:[#allocation16 + $0x4] sm:$0xf]
    %v866 = vld [vmem:[#allocation16 + $0x8] sm:$0xf]
    %v867 = vld [vmem:[#allocation16 + $0xc] sm:$0xf]
    %v868 = vld [vmem:[#allocation16 + $0x10] sm:$0xf]
    %v869 = vld [vmem:[#allocation16 + $0x14] sm:$0xf]
    %v870 = vld [vmem:[#allocation16 + $0x18] sm:$0xf]
    %v871 = vld [vmem:[#allocation16 + $0x1c] sm:$0xf]
    %v872 = vld [vmem:[#allocation16 + $0x20] sm:$0xf]
    %v873 = vld [vmem:[#allocation16 + $0x24] sm:$0xf]
    %v874 = vld [vmem:[#allocation16 + $0x28] sm:$0xf]
    %v875 = vld [vmem:[#allocation16 + $0x2c] sm:$0xf]
    %v876 = vld [vmem:[#allocation16 + $0x30] sm:$0xf]
    %v877 = vld [vmem:[#allocation16 + $0x34] sm:$0xf]
    %v878 = vld [vmem:[#allocation16 + $0x38] sm:$0xf]
    %v879 = vld [vmem:[#allocation16 + $0x3c] sm:$0xf]
    %v880 = vld [vmem:[%s9] sm:$0x1]
    %v897 = vunpack.c.l.b16 %v864
    %v898 = vunpack.c.l.b16 %v865
    %v899 = vunpack.c.l.b16 %v866
    %v900 = vunpack.c.l.b16 %v867
    %v901 = vunpack.c.l.b16 %v868
    %v902 = vunpack.c.l.b16 %v869
    %v903 = vunpack.c.l.b16 %v870
    %v904 = vunpack.c.l.b16 %v871
    %v905 = vunpack.c.l.b16 %v872
    %v906 = vunpack.c.l.b16 %v873
    %v907 = vunpack.c.l.b16 %v874
    %v908 = vunpack.c.l.b16 %v875
    %v909 = vunpack.c.l.b16 %v876
    %v910 = vunpack.c.l.b16 %v877
    %v911 = vunpack.c.l.b16 %v878
    %v912 = vunpack.c.l.b16 %v879
    %v913 = vpack.c.b16 %v898, %v897
    %v914 = vpack.c.b16 %v900, %v899
    %v915 = vpack.c.b16 %v902, %v901
    %v916 = vpack.c.b16 %v904, %v903
    %v917 = vpack.c.b16 %v906, %v905
    %v918 = vpack.c.b16 %v908, %v907
    %v919 = vpack.c.b16 %v910, %v909
    %v920 = vpack.c.b16 %v912, %v911
    %929 = vmatprep.subr.bf16.mxu0 0
    %930 = vmatpush1.bf16.msra.mxu0 %v920
    %931 = vmatprep.subr.bf16.mxu0 0
    %932 = vmatpush1.bf16.msra.mxu0 %v919
    %933 = vmatprep.subr.bf16.mxu0 0
    %934 = vmatpush1.bf16.msra.mxu0 %v918
    %935 = vmatprep.subr.bf16.mxu0 0
    %936 = vmatpush1.bf16.msra.mxu0 %v917
    %937 = vmatprep.subr.bf16.mxu0 0
    %938 = vmatpush1.bf16.msra.mxu0 %v916
    %939 = vmatprep.subr.bf16.mxu0 0
    %940 = vmatpush1.bf16.msra.mxu0 %v915
    %941 = vmatprep.subr.bf16.mxu0 0
    %942 = vmatpush1.bf16.msra.mxu0 %v914
    %943 = vmatprep.subr.bf16.mxu0 0
    %944 = vmatpush1.bf16.msra.mxu0 %v913
    %945 = vmatprep.subr.bf16.mxu0 0
    %946 = vmatpush2.bf16.msra.mxu0 0
    %947 = vmatprep.subr.bf16.mxu0 0
    %948 = vmatpush2.bf16.msra.mxu0 0
    %949 = vmatprep.subr.bf16.mxu0 0
    %950 = vmatpush2.bf16.msra.mxu0 0
    %951 = vmatprep.subr.bf16.mxu0 0
    %952 = vmatpush2.bf16.msra.mxu0 0
    %953 = vmatprep.subr.bf16.mxu0 0
    %954 = vmatpush2.bf16.msra.mxu0 0
    %955 = vmatprep.subr.bf16.mxu0 0
    %956 = vmatpush2.bf16.msra.mxu0 0
    %957 = vmatprep.subr.bf16.mxu0 0
    %958 = vmatpush2.bf16.msra.mxu0 0
    %959 = vmatprep.subr.bf16.mxu0 0
    %960 = vmatpush2.bf16.msra.mxu0 0
    %961 = vmatprep.mubr.bf16.mxu0 0
    %962 = vmatmul.mubr.bf16.gmra.mxu0 %v863
    %v963 = vpop.f32.mrf.mxu0
    %v964 = vadd.f32 %v880, %v963
    %v965 = vpop.f32.mrf.mxu0
    %v966 = vpop.f32.mrf.mxu0
    %v967 = vpop.f32.mrf.mxu0
    %968 = vdwg.mxu0
    %v970 = vrot.slane %v964, 2
    %v972 = vadd.f32 %v453, %v970
    %v973 = vxor.u32 %v972, 2147483648
    %v974 = vmul.f32 %v973, 1.442695
    %v975 = vpow.pop %v974
    %v976 = vadd.f32 %v975, 1.0
    %v977 = vrcp.pop %v976
    %v978 = vmul.f32 1.0, %v977
    %v980 = vrot.slane %v978, 6
    %982 = vrot.lane.b32.xlu0 %v980, 64
    %v983 = vpop.permute.xlu0 %982
    %v984 = vmul.f32 %v983, %v964
    %v986 = vrot.slane %v984, 2
    %v988 = vadd.f32 %v453, %v986
    %v989 = vtanh.pop %v988
    %990 = vrot.lane.b32.xlu0 %v980, 96
    %v991 = vpop.permute.xlu0 %990
    %v993 = vrot.slane %v989, 6
    %995 = vrot.lane.b32.xlu0 %v993, 64
    %v996 = vpop.permute.xlu0 %995
    %v997 = vsub.f32 1.0, %v991
    %v998 = vmul.f32 %v997, %v996
    %v999 = vmul.f32 %v991, %v721
    %v1000 = vadd.f32 %v998, %v999
    %v1001 = vmul.f32 %v1000, %v201
    %1002 = vst [vmem:[#allocation3 + $0x1] sm:$0x1] %v862
    %1003 = vst [vmem:[#allocation4 + $0x6] sm:$0x1] %v1001
    %v1004 = vpack.c.bf16 %v862, %v862
    %v1005 = vld [vmem:[#allocation13] sm:$0xf]
    %v1006 = vld [vmem:[#allocation13 + $0x4] sm:$0xf]
    %v1007 = vld [vmem:[#allocation13 + $0x8] sm:$0xf]
    %v1008 = vld [vmem:[#allocation13 + $0xc] sm:$0xf]
    %v1009 = vld [vmem:[#allocation13 + $0x10] sm:$0xf]
    %v1010 = vld [vmem:[#allocation13 + $0x14] sm:$0xf]
    %v1011 = vld [vmem:[#allocation13 + $0x18] sm:$0xf]
    %v1012 = vld [vmem:[#allocation13 + $0x1c] sm:$0xf]
    %v1013 = vld [vmem:[#allocation13 + $0x20] sm:$0xf]
    %v1014 = vld [vmem:[#allocation13 + $0x24] sm:$0xf]
    %v1015 = vld [vmem:[#allocation13 + $0x28] sm:$0xf]
    %v1016 = vld [vmem:[#allocation13 + $0x2c] sm:$0xf]
    %v1017 = vld [vmem:[#allocation13 + $0x30] sm:$0xf]
    %v1018 = vld [vmem:[#allocation13 + $0x34] sm:$0xf]
    %v1019 = vld [vmem:[#allocation13 + $0x38] sm:$0xf]
    %v1020 = vld [vmem:[#allocation13 + $0x3c] sm:$0xf]
    %v1021 = vld [vmem:[%s5] sm:$0x1]
    %v1038 = vunpack.c.l.b16 %v1005
    %v1039 = vunpack.c.l.b16 %v1006
    %v1040 = vunpack.c.l.b16 %v1007
    %v1041 = vunpack.c.l.b16 %v1008
    %v1042 = vunpack.c.l.b16 %v1009
    %v1043 = vunpack.c.l.b16 %v1010
    %v1044 = vunpack.c.l.b16 %v1011
    %v1045 = vunpack.c.l.b16 %v1012
    %v1046 = vunpack.c.l.b16 %v1013
    %v1047 = vunpack.c.l.b16 %v1014
    %v1048 = vunpack.c.l.b16 %v1015
    %v1049 = vunpack.c.l.b16 %v1016
    %v1050 = vunpack.c.l.b16 %v1017
    %v1051 = vunpack.c.l.b16 %v1018
    %v1052 = vunpack.c.l.b16 %v1019
    %v1053 = vunpack.c.l.b16 %v1020
    %v1054 = vpack.c.b16 %v1039, %v1038
    %v1055 = vpack.c.b16 %v1041, %v1040
    %v1056 = vpack.c.b16 %v1043, %v1042
    %v1057 = vpack.c.b16 %v1045, %v1044
    %v1058 = vpack.c.b16 %v1047, %v1046
    %v1059 = vpack.c.b16 %v1049, %v1048
    %v1060 = vpack.c.b16 %v1051, %v1050
    %v1061 = vpack.c.b16 %v1053, %v1052
    %1070 = vmatprep.subr.bf16.mxu0 0
    %1071 = vmatpush1.bf16.msra.mxu0 %v1061
    %1072 = vmatprep.subr.bf16.mxu0 0
    %1073 = vmatpush1.bf16.msra.mxu0 %v1060
    %1074 = vmatprep.subr.bf16.mxu0 0
    %1075 = vmatpush1.bf16.msra.mxu0 %v1059
    %1076 = vmatprep.subr.bf16.mxu0 0
    %1077 = vmatpush1.bf16.msra.mxu0 %v1058
    %1078 = vmatprep.subr.bf16.mxu0 0
    %1079 = vmatpush1.bf16.msra.mxu0 %v1057
    %1080 = vmatprep.subr.bf16.mxu0 0
    %1081 = vmatpush1.bf16.msra.mxu0 %v1056
    %1082 = vmatprep.subr.bf16.mxu0 0
    %1083 = vmatpush1.bf16.msra.mxu0 %v1055
    %1084 = vmatprep.subr.bf16.mxu0 0
    %1085 = vmatpush1.bf16.msra.mxu0 %v1054
    %1086 = vmatprep.subr.bf16.mxu0 0
    %1087 = vmatpush2.bf16.msra.mxu0 0
    %1088 = vmatprep.subr.bf16.mxu0 0
    %1089 = vmatpush2.bf16.msra.mxu0 0
    %1090 = vmatprep.subr.bf16.mxu0 0
    %1091 = vmatpush2.bf16.msra.mxu0 0
    %1092 = vmatprep.subr.bf16.mxu0 0
    %1093 = vmatpush2.bf16.msra.mxu0 0
    %1094 = vmatprep.subr.bf16.mxu0 0
    %1095 = vmatpush2.bf16.msra.mxu0 0
    %1096 = vmatprep.subr.bf16.mxu0 0
    %1097 = vmatpush2.bf16.msra.mxu0 0
    %1098 = vmatprep.subr.bf16.mxu0 0
    %1099 = vmatpush2.bf16.msra.mxu0 0
    %1100 = vmatprep.subr.bf16.mxu0 0
    %1101 = vmatpush2.bf16.msra.mxu0 0
    %1102 = vmatprep.mubr.bf16.mxu0 0
    %1103 = vmatmul.mubr.bf16.gmra.mxu0 %v1004
    %v1104 = vpop.f32.mrf.mxu0
    %v1105 = vadd.f32 %v1021, %v1104
    %v1106 = vpop.f32.mrf.mxu0
    %v1107 = vpop.f32.mrf.mxu0
    %v1108 = vpop.f32.mrf.mxu0
    %1109 = vdwg.mxu0
    %v1111 = vrot.slane %v1105, 6
    %v1113 = vadd.f32 %v342, %v1111
    %v1114 = vxor.u32 %v1113, 2147483648
    %v1115 = vmul.f32 %v1114, 1.442695
    %v1116 = vpow.pop %v1115
    %v1117 = vadd.f32 %v1116, 1.0
    %v1118 = vrcp.pop %v1117
    %v1119 = vmul.f32 1.0, %v1118
    %v1121 = vrot.slane %v1119, 2
    %1123 = vrot.lane.b32.xlu0 %v1121, 64
    %v1124 = vpop.permute.xlu0 %1123
    %v1125 = vmul.f32 %v1124, %v1105
    %v1127 = vrot.slane %v1125, 6
    %v1129 = vadd.f32 %v342, %v1127
    %v1130 = vtanh.pop %v1129
    %1131 = vrot.lane.b32.xlu0 %v1121, 96
    %v1132 = vpop.permute.xlu0 %1131
    %v1134 = vrot.slane %v1130, 2
    %1136 = vrot.lane.b32.xlu0 %v1134, 64
    %v1137 = vpop.permute.xlu0 %1136
    %v1138 = vsub.f32 1.0, %v1132
    %v1139 = vmul.f32 %v1138, %v1137
    %v1140 = vmul.f32 %v1132, %v862
    %v1141 = vadd.f32 %v1139, %v1140
    %v1142 = vmul.f32 %v1141, %v201
    %v1143 = vpack.c.bf16 %v1001, %v1001
    %v1144 = vld [vmem:[#allocation16] sm:$0xf]
    %v1145 = vld [vmem:[#allocation16 + $0x4] sm:$0xf]
    %v1146 = vld [vmem:[#allocation16 + $0x8] sm:$0xf]
    %v1147 = vld [vmem:[#allocation16 + $0xc] sm:$0xf]
    %v1148 = vld [vmem:[#allocation16 + $0x10] sm:$0xf]
    %v1149 = vld [vmem:[#allocation16 + $0x14] sm:$0xf]
    %v1150 = vld [vmem:[#allocation16 + $0x18] sm:$0xf]
    %v1151 = vld [vmem:[#allocation16 + $0x1c] sm:$0xf]
    %v1152 = vld [vmem:[#allocation16 + $0x20] sm:$0xf]
    %v1153 = vld [vmem:[#allocation16 + $0x24] sm:$0xf]
    %v1154 = vld [vmem:[#allocation16 + $0x28] sm:$0xf]
    %v1155 = vld [vmem:[#allocation16 + $0x2c] sm:$0xf]
    %v1156 = vld [vmem:[#allocation16 + $0x30] sm:$0xf]
    %v1157 = vld [vmem:[#allocation16 + $0x34] sm:$0xf]
    %v1158 = vld [vmem:[#allocation16 + $0x38] sm:$0xf]
    %v1159 = vld [vmem:[#allocation16 + $0x3c] sm:$0xf]
    %v1160 = vld [vmem:[%s9] sm:$0x1]
    %v1177 = vunpack.c.l.b16 %v1144
    %v1178 = vunpack.c.l.b16 %v1145
    %v1179 = vunpack.c.l.b16 %v1146
    %v1180 = vunpack.c.l.b16 %v1147
    %v1181 = vunpack.c.l.b16 %v1148
    %v1182 = vunpack.c.l.b16 %v1149
    %v1183 = vunpack.c.l.b16 %v1150
    %v1184 = vunpack.c.l.b16 %v1151
    %v1185 = vunpack.c.l.b16 %v1152
    %v1186 = vunpack.c.l.b16 %v1153
    %v1187 = vunpack.c.l.b16 %v1154
    %v1188 = vunpack.c.l.b16 %v1155
    %v1189 = vunpack.c.l.b16 %v1156
    %v1190 = vunpack.c.l.b16 %v1157
    %v1191 = vunpack.c.l.b16 %v1158
    %v1192 = vunpack.c.l.b16 %v1159
    %v1193 = vpack.c.b16 %v1178, %v1177
    %v1194 = vpack.c.b16 %v1180, %v1179
    %v1195 = vpack.c.b16 %v1182, %v1181
    %v1196 = vpack.c.b16 %v1184, %v1183
    %v1197 = vpack.c.b16 %v1186, %v1185
    %v1198 = vpack.c.b16 %v1188, %v1187
    %v1199 = vpack.c.b16 %v1190, %v1189
    %v1200 = vpack.c.b16 %v1192, %v1191
    %1209 = vmatprep.subr.bf16.mxu0 0
    %1210 = vmatpush1.bf16.msra.mxu0 %v1200
    %1211 = vmatprep.subr.bf16.mxu0 0
    %1212 = vmatpush1.bf16.msra.mxu0 %v1199
    %1213 = vmatprep.subr.bf16.mxu0 0
    %1214 = vmatpush1.bf16.msra.mxu0 %v1198
    %1215 = vmatprep.subr.bf16.mxu0 0
    %1216 = vmatpush1.bf16.msra.mxu0 %v1197
    %1217 = vmatprep.subr.bf16.mxu0 0
    %1218 = vmatpush1.bf16.msra.mxu0 %v1196
    %1219 = vmatprep.subr.bf16.mxu0 0
    %1220 = vmatpush1.bf16.msra.mxu0 %v1195
    %1221 = vmatprep.subr.bf16.mxu0 0
    %1222 = vmatpush1.bf16.msra.mxu0 %v1194
    %1223 = vmatprep.subr.bf16.mxu0 0
    %1224 = vmatpush1.bf16.msra.mxu0 %v1193
    %1225 = vmatprep.subr.bf16.mxu0 0
    %1226 = vmatpush2.bf16.msra.mxu0 0
    %1227 = vmatprep.subr.bf16.mxu0 0
    %1228 = vmatpush2.bf16.msra.mxu0 0
    %1229 = vmatprep.subr.bf16.mxu0 0
    %1230 = vmatpush2.bf16.msra.mxu0 0
    %1231 = vmatprep.subr.bf16.mxu0 0
    %1232 = vmatpush2.bf16.msra.mxu0 0
    %1233 = vmatprep.subr.bf16.mxu0 0
    %1234 = vmatpush2.bf16.msra.mxu0 0
    %1235 = vmatprep.subr.bf16.mxu0 0
    %1236 = vmatpush2.bf16.msra.mxu0 0
    %1237 = vmatprep.subr.bf16.mxu0 0
    %1238 = vmatpush2.bf16.msra.mxu0 0
    %1239 = vmatprep.subr.bf16.mxu0 0
    %1240 = vmatpush2.bf16.msra.mxu0 0
    %1241 = vmatprep.mubr.bf16.mxu0 0
    %1242 = vmatmul.mubr.bf16.gmra.mxu0 %v1143
    %v1243 = vpop.f32.mrf.mxu0
    %v1244 = vadd.f32 %v1160, %v1243
    %v1245 = vpop.f32.mrf.mxu0
    %v1246 = vpop.f32.mrf.mxu0
    %v1247 = vpop.f32.mrf.mxu0
    %1248 = vdwg.mxu0
    %v1250 = vrot.slane %v1244, 3
    %v1252 = vadd.f32 %v453, %v1250
    %v1253 = vxor.u32 %v1252, 2147483648
    %v1254 = vmul.f32 %v1253, 1.442695
    %v1255 = vpow.pop %v1254
    %v1256 = vadd.f32 %v1255, 1.0
    %v1257 = vrcp.pop %v1256
    %v1258 = vmul.f32 1.0, %v1257
    %v1260 = vrot.slane %v1258, 5
    %1262 = vrot.lane.b32.xlu0 %v1260, 64
    %v1263 = vpop.permute.xlu0 %1262
    %v1264 = vmul.f32 %v1263, %v1244
    %v1266 = vrot.slane %v1264, 3
    %v1268 = vadd.f32 %v453, %v1266
    %v1269 = vtanh.pop %v1268
    %1270 = vrot.lane.b32.xlu0 %v1260, 96
    %v1271 = vpop.permute.xlu0 %1270
    %v1273 = vrot.slane %v1269, 5
    %1275 = vrot.lane.b32.xlu0 %v1273, 64
    %v1276 = vpop.permute.xlu0 %1275
    %v1277 = vsub.f32 1.0, %v1271
    %v1278 = vmul.f32 %v1277, %v1276
    %v1279 = vmul.f32 %v1271, %v1001
    %v1280 = vadd.f32 %v1278, %v1279
    %v1281 = vmul.f32 %v1280, %v201
    %1282 = vst [vmem:[#allocation3 + $0x2] sm:$0x1] %v1142
    %1283 = vst [vmem:[#allocation4 + $0x5] sm:$0x1] %v1281
    %v1284 = vpack.c.bf16 %v1142, %v1142
    %v1285 = vld [vmem:[#allocation13] sm:$0xf]
    %v1286 = vld [vmem:[#allocation13 + $0x4] sm:$0xf]
    %v1287 = vld [vmem:[#allocation13 + $0x8] sm:$0xf]
    %v1288 = vld [vmem:[#allocation13 + $0xc] sm:$0xf]
    %v1289 = vld [vmem:[#allocation13 + $0x10] sm:$0xf]
    %v1290 = vld [vmem:[#allocation13 + $0x14] sm:$0xf]
    %v1291 = vld [vmem:[#allocation13 + $0x18] sm:$0xf]
    %v1292 = vld [vmem:[#allocation13 + $0x1c] sm:$0xf]
    %v1293 = vld [vmem:[#allocation13 + $0x20] sm:$0xf]
    %v1294 = vld [vmem:[#allocation13 + $0x24] sm:$0xf]
    %v1295 = vld [vmem:[#allocation13 + $0x28] sm:$0xf]
    %v1296 = vld [vmem:[#allocation13 + $0x2c] sm:$0xf]
    %v1297 = vld [vmem:[#allocation13 + $0x30] sm:$0xf]
    %v1298 = vld [vmem:[#allocation13 + $0x34] sm:$0xf]
    %v1299 = vld [vmem:[#allocation13 + $0x38] sm:$0xf]
    %v1300 = vld [vmem:[#allocation13 + $0x3c] sm:$0xf]
    %v1301 = vld [vmem:[%s5] sm:$0x1]
    %v1318 = vunpack.c.l.b16 %v1285
    %v1319 = vunpack.c.l.b16 %v1286
    %v1320 = vunpack.c.l.b16 %v1287
    %v1321 = vunpack.c.l.b16 %v1288
    %v1322 = vunpack.c.l.b16 %v1289
    %v1323 = vunpack.c.l.b16 %v1290
    %v1324 = vunpack.c.l.b16 %v1291
    %v1325 = vunpack.c.l.b16 %v1292
    %v1326 = vunpack.c.l.b16 %v1293
    %v1327 = vunpack.c.l.b16 %v1294
    %v1328 = vunpack.c.l.b16 %v1295
    %v1329 = vunpack.c.l.b16 %v1296
    %v1330 = vunpack.c.l.b16 %v1297
    %v1331 = vunpack.c.l.b16 %v1298
    %v1332 = vunpack.c.l.b16 %v1299
    %v1333 = vunpack.c.l.b16 %v1300
    %v1334 = vpack.c.b16 %v1319, %v1318
    %v1335 = vpack.c.b16 %v1321, %v1320
    %v1336 = vpack.c.b16 %v1323, %v1322
    %v1337 = vpack.c.b16 %v1325, %v1324
    %v1338 = vpack.c.b16 %v1327, %v1326
    %v1339 = vpack.c.b16 %v1329, %v1328
    %v1340 = vpack.c.b16 %v1331, %v1330
    %v1341 = vpack.c.b16 %v1333, %v1332
    %1350 = vmatprep.subr.bf16.mxu0 0
    %1351 = vmatpush1.bf16.msra.mxu0 %v1341
    %1352 = vmatprep.subr.bf16.mxu0 0
    %1353 = vmatpush1.bf16.msra.mxu0 %v1340
    %1354 = vmatprep.subr.bf16.mxu0 0
    %1355 = vmatpush1.bf16.msra.mxu0 %v1339
    %1356 = vmatprep.subr.bf16.mxu0 0
    %1357 = vmatpush1.bf16.msra.mxu0 %v1338
    %1358 = vmatprep.subr.bf16.mxu0 0
    %1359 = vmatpush1.bf16.msra.mxu0 %v1337
    %1360 = vmatprep.subr.bf16.mxu0 0
    %1361 = vmatpush1.bf16.msra.mxu0 %v1336
    %1362 = vmatprep.subr.bf16.mxu0 0
    %1363 = vmatpush1.bf16.msra.mxu0 %v1335
    %1364 = vmatprep.subr.bf16.mxu0 0
    %1365 = vmatpush1.bf16.msra.mxu0 %v1334
    %1366 = vmatprep.subr.bf16.mxu0 0
    %1367 = vmatpush2.bf16.msra.mxu0 0
    %1368 = vmatprep.subr.bf16.mxu0 0
    %1369 = vmatpush2.bf16.msra.mxu0 0
    %1370 = vmatprep.subr.bf16.mxu0 0
    %1371 = vmatpush2.bf16.msra.mxu0 0
    %1372 = vmatprep.subr.bf16.mxu0 0
    %1373 = vmatpush2.bf16.msra.mxu0 0
    %1374 = vmatprep.subr.bf16.mxu0 0
    %1375 = vmatpush2.bf16.msra.mxu0 0
    %1376 = vmatprep.subr.bf16.mxu0 0
    %1377 = vmatpush2.bf16.msra.mxu0 0
    %1378 = vmatprep.subr.bf16.mxu0 0
    %1379 = vmatpush2.bf16.msra.mxu0 0
    %1380 = vmatprep.subr.bf16.mxu0 0
    %1381 = vmatpush2.bf16.msra.mxu0 0
    %1382 = vmatprep.mubr.bf16.mxu0 0
    %1383 = vmatmul.mubr.bf16.gmra.mxu0 %v1284
    %v1384 = vpop.f32.mrf.mxu0
    %v1385 = vadd.f32 %v1301, %v1384
    %v1386 = vpop.f32.mrf.mxu0
    %v1387 = vpop.f32.mrf.mxu0
    %v1388 = vpop.f32.mrf.mxu0
    %1389 = vdwg.mxu0
    %v1391 = vrot.slane %v1385, 5
    %v1393 = vadd.f32 %v342, %v1391
    %v1394 = vxor.u32 %v1393, 2147483648
    %v1395 = vmul.f32 %v1394, 1.442695
    %v1396 = vpow.pop %v1395
    %v1397 = vadd.f32 %v1396, 1.0
    %v1398 = vrcp.pop %v1397
    %v1399 = vmul.f32 1.0, %v1398
    %v1401 = vrot.slane %v1399, 3
    %1403 = vrot.lane.b32.xlu0 %v1401, 64
    %v1404 = vpop.permute.xlu0 %1403
    %v1405 = vmul.f32 %v1404, %v1385
    %v1407 = vrot.slane %v1405, 5
    %v1409 = vadd.f32 %v342, %v1407
    %v1410 = vtanh.pop %v1409
    %1411 = vrot.lane.b32.xlu0 %v1401, 96
    %v1412 = vpop.permute.xlu0 %1411
    %v1414 = vrot.slane %v1410, 3
    %1416 = vrot.lane.b32.xlu0 %v1414, 64
    %v1417 = vpop.permute.xlu0 %1416
    %v1418 = vsub.f32 1.0, %v1412
    %v1419 = vmul.f32 %v1418, %v1417
    %v1420 = vmul.f32 %v1412, %v1142
    %v1421 = vadd.f32 %v1419, %v1420
    %v1422 = vmul.f32 %v1421, %v201
    %v1423 = vpack.c.bf16 %v1281, %v1281
    %v1424 = vld [vmem:[#allocation16] sm:$0xf]
    %v1425 = vld [vmem:[#allocation16 + $0x4] sm:$0xf]
    %v1426 = vld [vmem:[#allocation16 + $0x8] sm:$0xf]
    %v1427 = vld [vmem:[#allocation16 + $0xc] sm:$0xf]
    %v1428 = vld [vmem:[#allocation16 + $0x10] sm:$0xf]
    %v1429 = vld [vmem:[#allocation16 + $0x14] sm:$0xf]
    %v1430 = vld [vmem:[#allocation16 + $0x18] sm:$0xf]
    %v1431 = vld [vmem:[#allocation16 + $0x1c] sm:$0xf]
    %v1432 = vld [vmem:[#allocation16 + $0x20] sm:$0xf]
    %v1433 = vld [vmem:[#allocation16 + $0x24] sm:$0xf]
    %v1434 = vld [vmem:[#allocation16 + $0x28] sm:$0xf]
    %v1435 = vld [vmem:[#allocation16 + $0x2c] sm:$0xf]
    %v1436 = vld [vmem:[#allocation16 + $0x30] sm:$0xf]
    %v1437 = vld [vmem:[#allocation16 + $0x34] sm:$0xf]
    %v1438 = vld [vmem:[#allocation16 + $0x38] sm:$0xf]
    %v1439 = vld [vmem:[#allocation16 + $0x3c] sm:$0xf]
    %v1440 = vld [vmem:[%s9] sm:$0x1]
    %v1457 = vunpack.c.l.b16 %v1424
    %v1458 = vunpack.c.l.b16 %v1425
    %v1459 = vunpack.c.l.b16 %v1426
    %v1460 = vunpack.c.l.b16 %v1427
    %v1461 = vunpack.c.l.b16 %v1428
    %v1462 = vunpack.c.l.b16 %v1429
    %v1463 = vunpack.c.l.b16 %v1430
    %v1464 = vunpack.c.l.b16 %v1431
    %v1465 = vunpack.c.l.b16 %v1432
    %v1466 = vunpack.c.l.b16 %v1433
    %v1467 = vunpack.c.l.b16 %v1434
    %v1468 = vunpack.c.l.b16 %v1435
    %v1469 = vunpack.c.l.b16 %v1436
    %v1470 = vunpack.c.l.b16 %v1437
    %v1471 = vunpack.c.l.b16 %v1438
    %v1472 = vunpack.c.l.b16 %v1439
    %v1473 = vpack.c.b16 %v1458, %v1457
    %v1474 = vpack.c.b16 %v1460, %v1459
    %v1475 = vpack.c.b16 %v1462, %v1461
    %v1476 = vpack.c.b16 %v1464, %v1463
    %v1477 = vpack.c.b16 %v1466, %v1465
    %v1478 = vpack.c.b16 %v1468, %v1467
    %v1479 = vpack.c.b16 %v1470, %v1469
    %v1480 = vpack.c.b16 %v1472, %v1471
    %1489 = vmatprep.subr.bf16.mxu0 0
    %1490 = vmatpush1.bf16.msra.mxu0 %v1480
    %1491 = vmatprep.subr.bf16.mxu0 0
    %1492 = vmatpush1.bf16.msra.mxu0 %v1479
    %1493 = vmatprep.subr.bf16.mxu0 0
    %1494 = vmatpush1.bf16.msra.mxu0 %v1478
    %1495 = vmatprep.subr.bf16.mxu0 0
    %1496 = vmatpush1.bf16.msra.mxu0 %v1477
    %1497 = vmatprep.subr.bf16.mxu0 0
    %1498 = vmatpush1.bf16.msra.mxu0 %v1476
    %1499 = vmatprep.subr.bf16.mxu0 0
    %1500 = vmatpush1.bf16.msra.mxu0 %v1475
    %1501 = vmatprep.subr.bf16.mxu0 0
    %1502 = vmatpush1.bf16.msra.mxu0 %v1474
    %1503 = vmatprep.subr.bf16.mxu0 0
    %1504 = vmatpush1.bf16.msra.mxu0 %v1473
    %1505 = vmatprep.subr.bf16.mxu0 0
    %1506 = vmatpush2.bf16.msra.mxu0 0
    %1507 = vmatprep.subr.bf16.mxu0 0
    %1508 = vmatpush2.bf16.msra.mxu0 0
    %1509 = vmatprep.subr.bf16.mxu0 0
    %1510 = vmatpush2.bf16.msra.mxu0 0
    %1511 = vmatprep.subr.bf16.mxu0 0
    %1512 = vmatpush2.bf16.msra.mxu0 0
    %1513 = vmatprep.subr.bf16.mxu0 0
    %1514 = vmatpush2.bf16.msra.mxu0 0
    %1515 = vmatprep.subr.bf16.mxu0 0
    %1516 = vmatpush2.bf16.msra.mxu0 0
    %1517 = vmatprep.subr.bf16.mxu0 0
    %1518 = vmatpush2.bf16.msra.mxu0 0
    %1519 = vmatprep.subr.bf16.mxu0 0
    %1520 = vmatpush2.bf16.msra.mxu0 0
    %1521 = vmatprep.mubr.bf16.mxu0 0
    %1522 = vmatmul.mubr.bf16.gmra.mxu0 %v1423
    %v1523 = vpop.f32.mrf.mxu0
    %v1524 = vadd.f32 %v1440, %v1523
    %v1525 = vpop.f32.mrf.mxu0
    %v1526 = vpop.f32.mrf.mxu0
    %v1527 = vpop.f32.mrf.mxu0
    %1528 = vdwg.mxu0
    %v1530 = vrot.slane %v1524, 4
    %v1532 = vadd.f32 %v453, %v1530
    %v1533 = vxor.u32 %v1532, 2147483648
    %v1534 = vmul.f32 %v1533, 1.442695
    %v1535 = vpow.pop %v1534
    %v1536 = vadd.f32 %v1535, 1.0
    %v1537 = vrcp.pop %v1536
    %v1538 = vmul.f32 1.0, %v1537
    %v1540 = vrot.slane %v1538, 4
    %1542 = vrot.lane.b32.xlu0 %v1540, 64
    %v1543 = vpop.permute.xlu0 %1542
    %v1544 = vmul.f32 %v1543, %v1524
    %v1546 = vrot.slane %v1544, 4
    %v1548 = vadd.f32 %v453, %v1546
    %v1549 = vtanh.pop %v1548
    %1550 = vrot.lane.b32.xlu0 %v1540, 96
    %v1551 = vpop.permute.xlu0 %1550
    %v1553 = vrot.slane %v1549, 4
    %1555 = vrot.lane.b32.xlu0 %v1553, 64
    %v1556 = vpop.permute.xlu0 %1555
    %v1557 = vsub.f32 1.0, %v1551
    %v1558 = vmul.f32 %v1557, %v1556
    %v1559 = vmul.f32 %v1551, %v1281
    %v1560 = vadd.f32 %v1558, %v1559
    %v1561 = vmul.f32 %v1560, %v201
    %1562 = vst [vmem:[#allocation3 + $0x3] sm:$0x1] %v1422
    %1563 = vst [vmem:[#allocation4 + $0x4] sm:$0x1] %v1561
    %v1564 = vpack.c.bf16 %v1422, %v1422
    %v1565 = vld [vmem:[#allocation13] sm:$0xf]
    %v1566 = vld [vmem:[#allocation13 + $0x4] sm:$0xf]
    %v1567 = vld [vmem:[#allocation13 + $0x8] sm:$0xf]
    %v1568 = vld [vmem:[#allocation13 + $0xc] sm:$0xf]
    %v1569 = vld [vmem:[#allocation13 + $0x10] sm:$0xf]
    %v1570 = vld [vmem:[#allocation13 + $0x14] sm:$0xf]
    %v1571 = vld [vmem:[#allocation13 + $0x18] sm:$0xf]
    %v1572 = vld [vmem:[#allocation13 + $0x1c] sm:$0xf]
    %v1573 = vld [vmem:[#allocation13 + $0x20] sm:$0xf]
    %v1574 = vld [vmem:[#allocation13 + $0x24] sm:$0xf]
    %v1575 = vld [vmem:[#allocation13 + $0x28] sm:$0xf]
    %v1576 = vld [vmem:[#allocation13 + $0x2c] sm:$0xf]
    %v1577 = vld [vmem:[#allocation13 + $0x30] sm:$0xf]
    %v1578 = vld [vmem:[#allocation13 + $0x34] sm:$0xf]
    %v1579 = vld [vmem:[#allocation13 + $0x38] sm:$0xf]
    %v1580 = vld [vmem:[#allocation13 + $0x3c] sm:$0xf]
    %v1581 = vld [vmem:[%s5] sm:$0x1]
    %v1598 = vunpack.c.l.b16 %v1565
    %v1599 = vunpack.c.l.b16 %v1566
    %v1600 = vunpack.c.l.b16 %v1567
    %v1601 = vunpack.c.l.b16 %v1568
    %v1602 = vunpack.c.l.b16 %v1569
    %v1603 = vunpack.c.l.b16 %v1570
    %v1604 = vunpack.c.l.b16 %v1571
    %v1605 = vunpack.c.l.b16 %v1572
    %v1606 = vunpack.c.l.b16 %v1573
    %v1607 = vunpack.c.l.b16 %v1574
    %v1608 = vunpack.c.l.b16 %v1575
    %v1609 = vunpack.c.l.b16 %v1576
    %v1610 = vunpack.c.l.b16 %v1577
    %v1611 = vunpack.c.l.b16 %v1578
    %v1612 = vunpack.c.l.b16 %v1579
    %v1613 = vunpack.c.l.b16 %v1580
    %v1614 = vpack.c.b16 %v1599, %v1598
    %v1615 = vpack.c.b16 %v1601, %v1600
    %v1616 = vpack.c.b16 %v1603, %v1602
    %v1617 = vpack.c.b16 %v1605, %v1604
    %v1618 = vpack.c.b16 %v1607, %v1606
    %v1619 = vpack.c.b16 %v1609, %v1608
    %v1620 = vpack.c.b16 %v1611, %v1610
    %v1621 = vpack.c.b16 %v1613, %v1612
    %1630 = vmatprep.subr.bf16.mxu0 0
    %1631 = vmatpush1.bf16.msra.mxu0 %v1621
    %1632 = vmatprep.subr.bf16.mxu0 0
    %1633 = vmatpush1.bf16.msra.mxu0 %v1620
    %1634 = vmatprep.subr.bf16.mxu0 0
    %1635 = vmatpush1.bf16.msra.mxu0 %v1619
    %1636 = vmatprep.subr.bf16.mxu0 0
    %1637 = vmatpush1.bf16.msra.mxu0 %v1618
    %1638 = vmatprep.subr.bf16.mxu0 0
    %1639 = vmatpush1.bf16.msra.mxu0 %v1617
    %1640 = vmatprep.subr.bf16.mxu0 0
    %1641 = vmatpush1.bf16.msra.mxu0 %v1616
    %1642 = vmatprep.subr.bf16.mxu0 0
    %1643 = vmatpush1.bf16.msra.mxu0 %v1615
    %1644 = vmatprep.subr.bf16.mxu0 0
    %1645 = vmatpush1.bf16.msra.mxu0 %v1614
    %1646 = vmatprep.subr.bf16.mxu0 0
    %1647 = vmatpush2.bf16.msra.mxu0 0
    %1648 = vmatprep.subr.bf16.mxu0 0
    %1649 = vmatpush2.bf16.msra.mxu0 0
    %1650 = vmatprep.subr.bf16.mxu0 0
    %1651 = vmatpush2.bf16.msra.mxu0 0
    %1652 = vmatprep.subr.bf16.mxu0 0
    %1653 = vmatpush2.bf16.msra.mxu0 0
    %1654 = vmatprep.subr.bf16.mxu0 0
    %1655 = vmatpush2.bf16.msra.mxu0 0
    %1656 = vmatprep.subr.bf16.mxu0 0
    %1657 = vmatpush2.bf16.msra.mxu0 0
    %1658 = vmatprep.subr.bf16.mxu0 0
    %1659 = vmatpush2.bf16.msra.mxu0 0
    %1660 = vmatprep.subr.bf16.mxu0 0
    %1661 = vmatpush2.bf16.msra.mxu0 0
    %1662 = vmatprep.mubr.bf16.mxu0 0
    %1663 = vmatmul.mubr.bf16.gmra.mxu0 %v1564
    %v1664 = vpop.f32.mrf.mxu0
    %v1665 = vadd.f32 %v1581, %v1664
    %v1666 = vpop.f32.mrf.mxu0
    %v1667 = vpop.f32.mrf.mxu0
    %v1668 = vpop.f32.mrf.mxu0
    %1669 = vdwg.mxu0
    %v1671 = vrot.slane %v1665, 4
    %v1673 = vadd.f32 %v342, %v1671
    %v1674 = vxor.u32 %v1673, 2147483648
    %v1675 = vmul.f32 %v1674, 1.442695
    %v1676 = vpow.pop %v1675
    %v1677 = vadd.f32 %v1676, 1.0
    %v1678 = vrcp.pop %v1677
    %v1679 = vmul.f32 1.0, %v1678
    %v1681 = vrot.slane %v1679, 4
    %1683 = vrot.lane.b32.xlu0 %v1681, 64
    %v1684 = vpop.permute.xlu0 %1683
    %v1685 = vmul.f32 %v1684, %v1665
    %v1687 = vrot.slane %v1685, 4
    %v1689 = vadd.f32 %v342, %v1687
    %v1690 = vtanh.pop %v1689
    %1691 = vrot.lane.b32.xlu0 %v1681, 96
    %v1692 = vpop.permute.xlu0 %1691
    %v1694 = vrot.slane %v1690, 4
    %1696 = vrot.lane.b32.xlu0 %v1694, 64
    %v1697 = vpop.permute.xlu0 %1696
    %v1698 = vsub.f32 1.0, %v1692
    %v1699 = vmul.f32 %v1698, %v1697
    %v1700 = vmul.f32 %v1692, %v1422
    %v1701 = vadd.f32 %v1699, %v1700
    %v1702 = vmul.f32 %v1701, %v201
    %v1703 = vpack.c.bf16 %v1561, %v1561
    %v1704 = vld [vmem:[#allocation16] sm:$0xf]
    %v1705 = vld [vmem:[#allocation16 + $0x4] sm:$0xf]
    %v1706 = vld [vmem:[#allocation16 + $0x8] sm:$0xf]
    %v1707 = vld [vmem:[#allocation16 + $0xc] sm:$0xf]
    %v1708 = vld [vmem:[#allocation16 + $0x10] sm:$0xf]
    %v1709 = vld [vmem:[#allocation16 + $0x14] sm:$0xf]
    %v1710 = vld [vmem:[#allocation16 + $0x18] sm:$0xf]
    %v1711 = vld [vmem:[#allocation16 + $0x1c] sm:$0xf]
    %v1712 = vld [vmem:[#allocation16 + $0x20] sm:$0xf]
    %v1713 = vld [vmem:[#allocation16 + $0x24] sm:$0xf]
    %v1714 = vld [vmem:[#allocation16 + $0x28] sm:$0xf]
    %v1715 = vld [vmem:[#allocation16 + $0x2c] sm:$0xf]
    %v1716 = vld [vmem:[#allocation16 + $0x30] sm:$0xf]
    %v1717 = vld [vmem:[#allocation16 + $0x34] sm:$0xf]
    %v1718 = vld [vmem:[#allocation16 + $0x38] sm:$0xf]
    %v1719 = vld [vmem:[#allocation16 + $0x3c] sm:$0xf]
    %v1720 = vld [vmem:[%s9] sm:$0x1]
    %v1737 = vunpack.c.l.b16 %v1704
    %v1738 = vunpack.c.l.b16 %v1705
    %v1739 = vunpack.c.l.b16 %v1706
    %v1740 = vunpack.c.l.b16 %v1707
    %v1741 = vunpack.c.l.b16 %v1708
    %v1742 = vunpack.c.l.b16 %v1709
    %v1743 = vunpack.c.l.b16 %v1710
    %v1744 = vunpack.c.l.b16 %v1711
    %v1745 = vunpack.c.l.b16 %v1712
    %v1746 = vunpack.c.l.b16 %v1713
    %v1747 = vunpack.c.l.b16 %v1714
    %v1748 = vunpack.c.l.b16 %v1715
    %v1749 = vunpack.c.l.b16 %v1716
    %v1750 = vunpack.c.l.b16 %v1717
    %v1751 = vunpack.c.l.b16 %v1718
    %v1752 = vunpack.c.l.b16 %v1719
    %v1753 = vpack.c.b16 %v1738, %v1737
    %v1754 = vpack.c.b16 %v1740, %v1739
    %v1755 = vpack.c.b16 %v1742, %v1741
    %v1756 = vpack.c.b16 %v1744, %v1743
    %v1757 = vpack.c.b16 %v1746, %v1745
    %v1758 = vpack.c.b16 %v1748, %v1747
    %v1759 = vpack.c.b16 %v1750, %v1749
    %v1760 = vpack.c.b16 %v1752, %v1751
    %1769 = vmatprep.subr.bf16.mxu0 0
    %1770 = vmatpush1.bf16.msra.mxu0 %v1760
    %1771 = vmatprep.subr.bf16.mxu0 0
    %1772 = vmatpush1.bf16.msra.mxu0 %v1759
    %1773 = vmatprep.subr.bf16.mxu0 0
    %1774 = vmatpush1.bf16.msra.mxu0 %v1758
    %1775 = vmatprep.subr.bf16.mxu0 0
    %1776 = vmatpush1.bf16.msra.mxu0 %v1757
    %1777 = vmatprep.subr.bf16.mxu0 0
    %1778 = vmatpush1.bf16.msra.mxu0 %v1756
    %1779 = vmatprep.subr.bf16.mxu0 0
    %1780 = vmatpush1.bf16.msra.mxu0 %v1755
    %1781 = vmatprep.subr.bf16.mxu0 0
    %1782 = vmatpush1.bf16.msra.mxu0 %v1754
    %1783 = vmatprep.subr.bf16.mxu0 0
    %1784 = vmatpush1.bf16.msra.mxu0 %v1753
    %1785 = vmatprep.subr.bf16.mxu0 0
    %1786 = vmatpush2.bf16.msra.mxu0 0
    %1787 = vmatprep.subr.bf16.mxu0 0
    %1788 = vmatpush2.bf16.msra.mxu0 0
    %1789 = vmatprep.subr.bf16.mxu0 0
    %1790 = vmatpush2.bf16.msra.mxu0 0
    %1791 = vmatprep.subr.bf16.mxu0 0
    %1792 = vmatpush2.bf16.msra.mxu0 0
    %1793 = vmatprep.subr.bf16.mxu0 0
    %1794 = vmatpush2.bf16.msra.mxu0 0
    %1795 = vmatprep.subr.bf16.mxu0 0
    %1796 = vmatpush2.bf16.msra.mxu0 0
    %1797 = vmatprep.subr.bf16.mxu0 0
    %1798 = vmatpush2.bf16.msra.mxu0 0
    %1799 = vmatprep.subr.bf16.mxu0 0
    %1800 = vmatpush2.bf16.msra.mxu0 0
    %1801 = vmatprep.mubr.bf16.mxu0 0
    %1802 = vmatmul.mubr.bf16.gmra.mxu0 %v1703
    %v1803 = vpop.f32.mrf.mxu0
    %v1804 = vadd.f32 %v1720, %v1803
    %v1805 = vpop.f32.mrf.mxu0
    %v1806 = vpop.f32.mrf.mxu0
    %v1807 = vpop.f32.mrf.mxu0
    %1808 = vdwg.mxu0
    %v1810 = vrot.slane %v1804, 5
    %v1812 = vadd.f32 %v453, %v1810
    %v1813 = vxor.u32 %v1812, 2147483648
    %v1814 = vmul.f32 %v1813, 1.442695
    %v1815 = vpow.pop %v1814
    %v1816 = vadd.f32 %v1815, 1.0
    %v1817 = vrcp.pop %v1816
    %v1818 = vmul.f32 1.0, %v1817
    %v1820 = vrot.slane %v1818, 3
    %1822 = vrot.lane.b32.xlu0 %v1820, 64
    %v1823 = vpop.permute.xlu0 %1822
    %v1824 = vmul.f32 %v1823, %v1804
    %v1826 = vrot.slane %v1824, 5
    %v1828 = vadd.f32 %v453, %v1826
    %v1829 = vtanh.pop %v1828
    %1830 = vrot.lane.b32.xlu0 %v1820, 96
    %v1831 = vpop.permute.xlu0 %1830
    %v1833 = vrot.slane %v1829, 3
    %1835 = vrot.lane.b32.xlu0 %v1833, 64
    %v1836 = vpop.permute.xlu0 %1835
    %v1837 = vsub.f32 1.0, %v1831
    %v1838 = vmul.f32 %v1837, %v1836
    %v1839 = vmul.f32 %v1831, %v1561
    %v1840 = vadd.f32 %v1838, %v1839
    %v1841 = vmul.f32 %v1840, %v201
    %1842 = vst [vmem:[#allocation3 + $0x4] sm:$0x1] %v1702
    %1843 = vst [vmem:[#allocation4 + $0x3] sm:$0x1] %v1841
    %v1844 = vpack.c.bf16 %v1702, %v1702
    %v1845 = vld [vmem:[#allocation13] sm:$0xf]
    %v1846 = vld [vmem:[#allocation13 + $0x4] sm:$0xf]
    %v1847 = vld [vmem:[#allocation13 + $0x8] sm:$0xf]
    %v1848 = vld [vmem:[#allocation13 + $0xc] sm:$0xf]
    %v1849 = vld [vmem:[#allocation13 + $0x10] sm:$0xf]
    %v1850 = vld [vmem:[#allocation13 + $0x14] sm:$0xf]
    %v1851 = vld [vmem:[#allocation13 + $0x18] sm:$0xf]
    %v1852 = vld [vmem:[#allocation13 + $0x1c] sm:$0xf]
    %v1853 = vld [vmem:[#allocation13 + $0x20] sm:$0xf]
    %v1854 = vld [vmem:[#allocation13 + $0x24] sm:$0xf]
    %v1855 = vld [vmem:[#allocation13 + $0x28] sm:$0xf]
    %v1856 = vld [vmem:[#allocation13 + $0x2c] sm:$0xf]
    %v1857 = vld [vmem:[#allocation13 + $0x30] sm:$0xf]
    %v1858 = vld [vmem:[#allocation13 + $0x34] sm:$0xf]
    %v1859 = vld [vmem:[#allocation13 + $0x38] sm:$0xf]
    %v1860 = vld [vmem:[#allocation13 + $0x3c] sm:$0xf]
    %v1861 = vld [vmem:[%s5] sm:$0x1]
    %v1878 = vunpack.c.l.b16 %v1845
    %v1879 = vunpack.c.l.b16 %v1846
    %v1880 = vunpack.c.l.b16 %v1847
    %v1881 = vunpack.c.l.b16 %v1848
    %v1882 = vunpack.c.l.b16 %v1849
    %v1883 = vunpack.c.l.b16 %v1850
    %v1884 = vunpack.c.l.b16 %v1851
    %v1885 = vunpack.c.l.b16 %v1852
    %v1886 = vunpack.c.l.b16 %v1853
    %v1887 = vunpack.c.l.b16 %v1854
    %v1888 = vunpack.c.l.b16 %v1855
    %v1889 = vunpack.c.l.b16 %v1856
    %v1890 = vunpack.c.l.b16 %v1857
    %v1891 = vunpack.c.l.b16 %v1858
    %v1892 = vunpack.c.l.b16 %v1859
    %v1893 = vunpack.c.l.b16 %v1860
    %v1894 = vpack.c.b16 %v1879, %v1878
    %v1895 = vpack.c.b16 %v1881, %v1880
    %v1896 = vpack.c.b16 %v1883, %v1882
    %v1897 = vpack.c.b16 %v1885, %v1884
    %v1898 = vpack.c.b16 %v1887, %v1886
    %v1899 = vpack.c.b16 %v1889, %v1888
    %v1900 = vpack.c.b16 %v1891, %v1890
    %v1901 = vpack.c.b16 %v1893, %v1892
    %1910 = vmatprep.subr.bf16.mxu0 0
    %1911 = vmatpush1.bf16.msra.mxu0 %v1901
    %1912 = vmatprep.subr.bf16.mxu0 0
    %1913 = vmatpush1.bf16.msra.mxu0 %v1900
    %1914 = vmatprep.subr.bf16.mxu0 0
    %1915 = vmatpush1.bf16.msra.mxu0 %v1899
    %1916 = vmatprep.subr.bf16.mxu0 0
    %1917 = vmatpush1.bf16.msra.mxu0 %v1898
    %1918 = vmatprep.subr.bf16.mxu0 0
    %1919 = vmatpush1.bf16.msra.mxu0 %v1897
    %1920 = vmatprep.subr.bf16.mxu0 0
    %1921 = vmatpush1.bf16.msra.mxu0 %v1896
    %1922 = vmatprep.subr.bf16.mxu0 0
    %1923 = vmatpush1.bf16.msra.mxu0 %v1895
    %1924 = vmatprep.subr.bf16.mxu0 0
    %1925 = vmatpush1.bf16.msra.mxu0 %v1894
    %1926 = vmatprep.subr.bf16.mxu0 0
    %1927 = vmatpush2.bf16.msra.mxu0 0
    %1928 = vmatprep.subr.bf16.mxu0 0
    %1929 = vmatpush2.bf16.msra.mxu0 0
    %1930 = vmatprep.subr.bf16.mxu0 0
    %1931 = vmatpush2.bf16.msra.mxu0 0
    %1932 = vmatprep.subr.bf16.mxu0 0
    %1933 = vmatpush2.bf16.msra.mxu0 0
    %1934 = vmatprep.subr.bf16.mxu0 0
    %1935 = vmatpush2.bf16.msra.mxu0 0
    %1936 = vmatprep.subr.bf16.mxu0 0
    %1937 = vmatpush2.bf16.msra.mxu0 0
    %1938 = vmatprep.subr.bf16.mxu0 0
    %1939 = vmatpush2.bf16.msra.mxu0 0
    %1940 = vmatprep.subr.bf16.mxu0 0
    %1941 = vmatpush2.bf16.msra.mxu0 0
    %1942 = vmatprep.mubr.bf16.mxu0 0
    %1943 = vmatmul.mubr.bf16.gmra.mxu0 %v1844
    %v1944 = vpop.f32.mrf.mxu0
    %v1945 = vadd.f32 %v1861, %v1944
    %v1946 = vpop.f32.mrf.mxu0
    %v1947 = vpop.f32.mrf.mxu0
    %v1948 = vpop.f32.mrf.mxu0
    %1949 = vdwg.mxu0
    %v1951 = vrot.slane %v1945, 3
    %v1953 = vadd.f32 %v342, %v1951
    %v1954 = vxor.u32 %v1953, 2147483648
    %v1955 = vmul.f32 %v1954, 1.442695
    %v1956 = vpow.pop %v1955
    %v1957 = vadd.f32 %v1956, 1.0
    %v1958 = vrcp.pop %v1957
    %v1959 = vmul.f32 1.0, %v1958
    %v1961 = vrot.slane %v1959, 5
    %1963 = vrot.lane.b32.xlu0 %v1961, 64
    %v1964 = vpop.permute.xlu0 %1963
    %v1965 = vmul.f32 %v1964, %v1945
    %v1967 = vrot.slane %v1965, 3
    %v1969 = vadd.f32 %v342, %v1967
    %v1970 = vtanh.pop %v1969
    %1971 = vrot.lane.b32.xlu0 %v1961, 96
    %v1972 = vpop.permute.xlu0 %1971
    %v1974 = vrot.slane %v1970, 5
    %1976 = vrot.lane.b32.xlu0 %v1974, 64
    %v1977 = vpop.permute.xlu0 %1976
    %v1978 = vsub.f32 1.0, %v1972
    %v1979 = vmul.f32 %v1978, %v1977
    %v1980 = vmul.f32 %v1972, %v1702
    %v1981 = vadd.f32 %v1979, %v1980
    %v1982 = vmul.f32 %v1981, %v201
    %v1983 = vpack.c.bf16 %v1841, %v1841
    %v1984 = vld [vmem:[#allocation16] sm:$0xf]
    %v1985 = vld [vmem:[#allocation16 + $0x4] sm:$0xf]
    %v1986 = vld [vmem:[#allocation16 + $0x8] sm:$0xf]
    %v1987 = vld [vmem:[#allocation16 + $0xc] sm:$0xf]
    %v1988 = vld [vmem:[#allocation16 + $0x10] sm:$0xf]
    %v1989 = vld [vmem:[#allocation16 + $0x14] sm:$0xf]
    %v1990 = vld [vmem:[#allocation16 + $0x18] sm:$0xf]
    %v1991 = vld [vmem:[#allocation16 + $0x1c] sm:$0xf]
    %v1992 = vld [vmem:[#allocation16 + $0x20] sm:$0xf]
    %v1993 = vld [vmem:[#allocation16 + $0x24] sm:$0xf]
    %v1994 = vld [vmem:[#allocation16 + $0x28] sm:$0xf]
    %v1995 = vld [vmem:[#allocation16 + $0x2c] sm:$0xf]
    %v1996 = vld [vmem:[#allocation16 + $0x30] sm:$0xf]
    %v1997 = vld [vmem:[#allocation16 + $0x34] sm:$0xf]
    %v1998 = vld [vmem:[#allocation16 + $0x38] sm:$0xf]
    %v1999 = vld [vmem:[#allocation16 + $0x3c] sm:$0xf]
    %v2000 = vld [vmem:[%s9] sm:$0x1]
    %v2017 = vunpack.c.l.b16 %v1984
    %v2018 = vunpack.c.l.b16 %v1985
    %v2019 = vunpack.c.l.b16 %v1986
    %v2020 = vunpack.c.l.b16 %v1987
    %v2021 = vunpack.c.l.b16 %v1988
    %v2022 = vunpack.c.l.b16 %v1989
    %v2023 = vunpack.c.l.b16 %v1990
    %v2024 = vunpack.c.l.b16 %v1991
    %v2025 = vunpack.c.l.b16 %v1992
    %v2026 = vunpack.c.l.b16 %v1993
    %v2027 = vunpack.c.l.b16 %v1994
    %v2028 = vunpack.c.l.b16 %v1995
    %v2029 = vunpack.c.l.b16 %v1996
    %v2030 = vunpack.c.l.b16 %v1997
    %v2031 = vunpack.c.l.b16 %v1998
    %v2032 = vunpack.c.l.b16 %v1999
    %v2033 = vpack.c.b16 %v2018, %v2017
    %v2034 = vpack.c.b16 %v2020, %v2019
    %v2035 = vpack.c.b16 %v2022, %v2021
    %v2036 = vpack.c.b16 %v2024, %v2023
    %v2037 = vpack.c.b16 %v2026, %v2025
    %v2038 = vpack.c.b16 %v2028, %v2027
    %v2039 = vpack.c.b16 %v2030, %v2029
    %v2040 = vpack.c.b16 %v2032, %v2031
    %2049 = vmatprep.subr.bf16.mxu0 0
    %2050 = vmatpush1.bf16.msra.mxu0 %v2040
    %2051 = vmatprep.subr.bf16.mxu0 0
    %2052 = vmatpush1.bf16.msra.mxu0 %v2039
    %2053 = vmatprep.subr.bf16.mxu0 0
    %2054 = vmatpush1.bf16.msra.mxu0 %v2038
    %2055 = vmatprep.subr.bf16.mxu0 0
    %2056 = vmatpush1.bf16.msra.mxu0 %v2037
    %2057 = vmatprep.subr.bf16.mxu0 0
    %2058 = vmatpush1.bf16.msra.mxu0 %v2036
    %2059 = vmatprep.subr.bf16.mxu0 0
    %2060 = vmatpush1.bf16.msra.mxu0 %v2035
    %2061 = vmatprep.subr.bf16.mxu0 0
    %2062 = vmatpush1.bf16.msra.mxu0 %v2034
    %2063 = vmatprep.subr.bf16.mxu0 0
    %2064 = vmatpush1.bf16.msra.mxu0 %v2033
    %2065 = vmatprep.subr.bf16.mxu0 0
    %2066 = vmatpush2.bf16.msra.mxu0 0
    %2067 = vmatprep.subr.bf16.mxu0 0
    %2068 = vmatpush2.bf16.msra.mxu0 0
    %2069 = vmatprep.subr.bf16.mxu0 0
    %2070 = vmatpush2.bf16.msra.mxu0 0
    %2071 = vmatprep.subr.bf16.mxu0 0
    %2072 = vmatpush2.bf16.msra.mxu0 0
    %2073 = vmatprep.subr.bf16.mxu0 0
    %2074 = vmatpush2.bf16.msra.mxu0 0
    %2075 = vmatprep.subr.bf16.mxu0 0
    %2076 = vmatpush2.bf16.msra.mxu0 0
    %2077 = vmatprep.subr.bf16.mxu0 0
    %2078 = vmatpush2.bf16.msra.mxu0 0
    %2079 = vmatprep.subr.bf16.mxu0 0
    %2080 = vmatpush2.bf16.msra.mxu0 0
    %2081 = vmatprep.mubr.bf16.mxu0 0
    %2082 = vmatmul.mubr.bf16.gmra.mxu0 %v1983
    %v2083 = vpop.f32.mrf.mxu0
    %v2084 = vadd.f32 %v2000, %v2083
    %v2085 = vpop.f32.mrf.mxu0
    %v2086 = vpop.f32.mrf.mxu0
    %v2087 = vpop.f32.mrf.mxu0
    %2088 = vdwg.mxu0
    %v2090 = vrot.slane %v2084, 6
    %v2092 = vadd.f32 %v453, %v2090
    %v2093 = vxor.u32 %v2092, 2147483648
    %v2094 = vmul.f32 %v2093, 1.442695
    %v2095 = vpow.pop %v2094
    %v2096 = vadd.f32 %v2095, 1.0
    %v2097 = vrcp.pop %v2096
    %v2098 = vmul.f32 1.0, %v2097
    %v2100 = vrot.slane %v2098, 2
    %2102 = vrot.lane.b32.xlu0 %v2100, 64
    %v2103 = vpop.permute.xlu0 %2102
    %v2104 = vmul.f32 %v2103, %v2084
    %v2106 = vrot.slane %v2104, 6
    %v2108 = vadd.f32 %v453, %v2106
    %v2109 = vtanh.pop %v2108
    %2110 = vrot.lane.b32.xlu0 %v2100, 96
    %v2111 = vpop.permute.xlu0 %2110
    %v2113 = vrot.slane %v2109, 2
    %2115 = vrot.lane.b32.xlu0 %v2113, 64
    %v2116 = vpop.permute.xlu0 %2115
    %v2117 = vsub.f32 1.0, %v2111
    %v2118 = vmul.f32 %v2117, %v2116
    %v2119 = vmul.f32 %v2111, %v1841
    %v2120 = vadd.f32 %v2118, %v2119
    %v2121 = vmul.f32 %v2120, %v201
    %2122 = vst [vmem:[#allocation3 + $0x5] sm:$0x1] %v1982
    %2123 = vst [vmem:[#allocation4 + $0x2] sm:$0x1] %v2121
    %v2124 = vpack.c.bf16 %v1982, %v1982
    %v2125 = vld [vmem:[#allocation13] sm:$0xf]
    %v2126 = vld [vmem:[#allocation13 + $0x4] sm:$0xf]
    %v2127 = vld [vmem:[#allocation13 + $0x8] sm:$0xf]
    %v2128 = vld [vmem:[#allocation13 + $0xc] sm:$0xf]
    %v2129 = vld [vmem:[#allocation13 + $0x10] sm:$0xf]
    %v2130 = vld [vmem:[#allocation13 + $0x14] sm:$0xf]
    %v2131 = vld [vmem:[#allocation13 + $0x18] sm:$0xf]
    %v2132 = vld [vmem:[#allocation13 + $0x1c] sm:$0xf]
    %v2133 = vld [vmem:[#allocation13 + $0x20] sm:$0xf]
    %v2134 = vld [vmem:[#allocation13 + $0x24] sm:$0xf]
    %v2135 = vld [vmem:[#allocation13 + $0x28] sm:$0xf]
    %v2136 = vld [vmem:[#allocation13 + $0x2c] sm:$0xf]
    %v2137 = vld [vmem:[#allocation13 + $0x30] sm:$0xf]
    %v2138 = vld [vmem:[#allocation13 + $0x34] sm:$0xf]
    %v2139 = vld [vmem:[#allocation13 + $0x38] sm:$0xf]
    %v2140 = vld [vmem:[#allocation13 + $0x3c] sm:$0xf]
    %v2141 = vld [vmem:[%s5] sm:$0x1]
    %v2158 = vunpack.c.l.b16 %v2125
    %v2159 = vunpack.c.l.b16 %v2126
    %v2160 = vunpack.c.l.b16 %v2127
    %v2161 = vunpack.c.l.b16 %v2128
    %v2162 = vunpack.c.l.b16 %v2129
    %v2163 = vunpack.c.l.b16 %v2130
    %v2164 = vunpack.c.l.b16 %v2131
    %v2165 = vunpack.c.l.b16 %v2132
    %v2166 = vunpack.c.l.b16 %v2133
    %v2167 = vunpack.c.l.b16 %v2134
    %v2168 = vunpack.c.l.b16 %v2135
    %v2169 = vunpack.c.l.b16 %v2136
    %v2170 = vunpack.c.l.b16 %v2137
    %v2171 = vunpack.c.l.b16 %v2138
    %v2172 = vunpack.c.l.b16 %v2139
    %v2173 = vunpack.c.l.b16 %v2140
    %v2174 = vpack.c.b16 %v2159, %v2158
    %v2175 = vpack.c.b16 %v2161, %v2160
    %v2176 = vpack.c.b16 %v2163, %v2162
    %v2177 = vpack.c.b16 %v2165, %v2164
    %v2178 = vpack.c.b16 %v2167, %v2166
    %v2179 = vpack.c.b16 %v2169, %v2168
    %v2180 = vpack.c.b16 %v2171, %v2170
    %v2181 = vpack.c.b16 %v2173, %v2172
    %2190 = vmatprep.subr.bf16.mxu0 0
    %2191 = vmatpush1.bf16.msra.mxu0 %v2181
    %2192 = vmatprep.subr.bf16.mxu0 0
    %2193 = vmatpush1.bf16.msra.mxu0 %v2180
    %2194 = vmatprep.subr.bf16.mxu0 0
    %2195 = vmatpush1.bf16.msra.mxu0 %v2179
    %2196 = vmatprep.subr.bf16.mxu0 0
    %2197 = vmatpush1.bf16.msra.mxu0 %v2178
    %2198 = vmatprep.subr.bf16.mxu0 0
    %2199 = vmatpush1.bf16.msra.mxu0 %v2177
    %2200 = vmatprep.subr.bf16.mxu0 0
    %2201 = vmatpush1.bf16.msra.mxu0 %v2176
    %2202 = vmatprep.subr.bf16.mxu0 0
    %2203 = vmatpush1.bf16.msra.mxu0 %v2175
    %2204 = vmatprep.subr.bf16.mxu0 0
    %2205 = vmatpush1.bf16.msra.mxu0 %v2174
    %2206 = vmatprep.subr.bf16.mxu0 0
    %2207 = vmatpush2.bf16.msra.mxu0 0
    %2208 = vmatprep.subr.bf16.mxu0 0
    %2209 = vmatpush2.bf16.msra.mxu0 0
    %2210 = vmatprep.subr.bf16.mxu0 0
    %2211 = vmatpush2.bf16.msra.mxu0 0
    %2212 = vmatprep.subr.bf16.mxu0 0
    %2213 = vmatpush2.bf16.msra.mxu0 0
    %2214 = vmatprep.subr.bf16.mxu0 0
    %2215 = vmatpush2.bf16.msra.mxu0 0
    %2216 = vmatprep.subr.bf16.mxu0 0
    %2217 = vmatpush2.bf16.msra.mxu0 0
    %2218 = vmatprep.subr.bf16.mxu0 0
    %2219 = vmatpush2.bf16.msra.mxu0 0
    %2220 = vmatprep.subr.bf16.mxu0 0
    %2221 = vmatpush2.bf16.msra.mxu0 0
    %2222 = vmatprep.mubr.bf16.mxu0 0
    %2223 = vmatmul.mubr.bf16.gmra.mxu0 %v2124
    %v2224 = vpop.f32.mrf.mxu0
    %v2225 = vadd.f32 %v2141, %v2224
    %v2226 = vpop.f32.mrf.mxu0
    %v2227 = vpop.f32.mrf.mxu0
    %v2228 = vpop.f32.mrf.mxu0
    %2229 = vdwg.mxu0
    %v2231 = vrot.slane %v2225, 2
    %v2233 = vadd.f32 %v342, %v2231
    %v2234 = vxor.u32 %v2233, 2147483648
    %v2235 = vmul.f32 %v2234, 1.442695
    %v2236 = vpow.pop %v2235
    %v2237 = vadd.f32 %v2236, 1.0
    %v2238 = vrcp.pop %v2237
    %v2239 = vmul.f32 1.0, %v2238
    %v2241 = vrot.slane %v2239, 6
    %2243 = vrot.lane.b32.xlu0 %v2241, 64
    %v2244 = vpop.permute.xlu0 %2243
    %v2245 = vmul.f32 %v2244, %v2225
    %v2247 = vrot.slane %v2245, 2
    %v2249 = vadd.f32 %v342, %v2247
    %v2250 = vtanh.pop %v2249
    %2251 = vrot.lane.b32.xlu0 %v2241, 96
    %v2252 = vpop.permute.xlu0 %2251
    %v2254 = vrot.slane %v2250, 6
    %2256 = vrot.lane.b32.xlu0 %v2254, 64
    %v2257 = vpop.permute.xlu0 %2256
    %v2258 = vsub.f32 1.0, %v2252
    %v2259 = vmul.f32 %v2258, %v2257
    %v2260 = vmul.f32 %v2252, %v1982
    %v2261 = vadd.f32 %v2259, %v2260
    %v2262 = vmul.f32 %v2261, %v201
    %v2263 = vpack.c.bf16 %v2121, %v2121
    %v2264 = vld [vmem:[#allocation16] sm:$0xf]
    %v2265 = vld [vmem:[#allocation16 + $0x4] sm:$0xf]
    %v2266 = vld [vmem:[#allocation16 + $0x8] sm:$0xf]
    %v2267 = vld [vmem:[#allocation16 + $0xc] sm:$0xf]
    %v2268 = vld [vmem:[#allocation16 + $0x10] sm:$0xf]
    %v2269 = vld [vmem:[#allocation16 + $0x14] sm:$0xf]
    %v2270 = vld [vmem:[#allocation16 + $0x18] sm:$0xf]
    %v2271 = vld [vmem:[#allocation16 + $0x1c] sm:$0xf]
    %v2272 = vld [vmem:[#allocation16 + $0x20] sm:$0xf]
    %v2273 = vld [vmem:[#allocation16 + $0x24] sm:$0xf]
    %v2274 = vld [vmem:[#allocation16 + $0x28] sm:$0xf]
    %v2275 = vld [vmem:[#allocation16 + $0x2c] sm:$0xf]
    %v2276 = vld [vmem:[#allocation16 + $0x30] sm:$0xf]
    %v2277 = vld [vmem:[#allocation16 + $0x34] sm:$0xf]
    %v2278 = vld [vmem:[#allocation16 + $0x38] sm:$0xf]
    %v2279 = vld [vmem:[#allocation16 + $0x3c] sm:$0xf]
    %v2280 = vld [vmem:[%s9] sm:$0x1]
    %v2297 = vunpack.c.l.b16 %v2264
    %v2298 = vunpack.c.l.b16 %v2265
    %v2299 = vunpack.c.l.b16 %v2266
    %v2300 = vunpack.c.l.b16 %v2267
    %v2301 = vunpack.c.l.b16 %v2268
    %v2302 = vunpack.c.l.b16 %v2269
    %v2303 = vunpack.c.l.b16 %v2270
    %v2304 = vunpack.c.l.b16 %v2271
    %v2305 = vunpack.c.l.b16 %v2272
    %v2306 = vunpack.c.l.b16 %v2273
    %v2307 = vunpack.c.l.b16 %v2274
    %v2308 = vunpack.c.l.b16 %v2275
    %v2309 = vunpack.c.l.b16 %v2276
    %v2310 = vunpack.c.l.b16 %v2277
    %v2311 = vunpack.c.l.b16 %v2278
    %v2312 = vunpack.c.l.b16 %v2279
    %v2313 = vpack.c.b16 %v2298, %v2297
    %v2314 = vpack.c.b16 %v2300, %v2299
    %v2315 = vpack.c.b16 %v2302, %v2301
    %v2316 = vpack.c.b16 %v2304, %v2303
    %v2317 = vpack.c.b16 %v2306, %v2305
    %v2318 = vpack.c.b16 %v2308, %v2307
    %v2319 = vpack.c.b16 %v2310, %v2309
    %v2320 = vpack.c.b16 %v2312, %v2311
    %2329 = vmatprep.subr.bf16.mxu0 0
    %2330 = vmatpush1.bf16.msra.mxu0 %v2320
    %2331 = vmatprep.subr.bf16.mxu0 0
    %2332 = vmatpush1.bf16.msra.mxu0 %v2319
    %2333 = vmatprep.subr.bf16.mxu0 0
    %2334 = vmatpush1.bf16.msra.mxu0 %v2318
    %2335 = vmatprep.subr.bf16.mxu0 0
    %2336 = vmatpush1.bf16.msra.mxu0 %v2317
    %2337 = vmatprep.subr.bf16.mxu0 0
    %2338 = vmatpush1.bf16.msra.mxu0 %v2316
    %2339 = vmatprep.subr.bf16.mxu0 0
    %2340 = vmatpush1.bf16.msra.mxu0 %v2315
    %2341 = vmatprep.subr.bf16.mxu0 0
    %2342 = vmatpush1.bf16.msra.mxu0 %v2314
    %2343 = vmatprep.subr.bf16.mxu0 0
    %2344 = vmatpush1.bf16.msra.mxu0 %v2313
    %2345 = vmatprep.subr.bf16.mxu0 0
    %2346 = vmatpush2.bf16.msra.mxu0 0
    %2347 = vmatprep.subr.bf16.mxu0 0
    %2348 = vmatpush2.bf16.msra.mxu0 0
    %2349 = vmatprep.subr.bf16.mxu0 0
    %2350 = vmatpush2.bf16.msra.mxu0 0
    %2351 = vmatprep.subr.bf16.mxu0 0
    %2352 = vmatpush2.bf16.msra.mxu0 0
    %2353 = vmatprep.subr.bf16.mxu0 0
    %2354 = vmatpush2.bf16.msra.mxu0 0
    %2355 = vmatprep.subr.bf16.mxu0 0
    %2356 = vmatpush2.bf16.msra.mxu0 0
    %2357 = vmatprep.subr.bf16.mxu0 0
    %2358 = vmatpush2.bf16.msra.mxu0 0
    %2359 = vmatprep.subr.bf16.mxu0 0
    %2360 = vmatpush2.bf16.msra.mxu0 0
    %2361 = vmatprep.mubr.bf16.mxu0 0
    %2362 = vmatmul.mubr.bf16.gmra.mxu0 %v2263
    %v2363 = vpop.f32.mrf.mxu0
    %v2364 = vadd.f32 %v2280, %v2363
    %v2365 = vpop.f32.mrf.mxu0
    %v2366 = vpop.f32.mrf.mxu0
    %v2367 = vpop.f32.mrf.mxu0
    %2368 = vdwg.mxu0
    %v2370 = vrot.slane %v2364, 7
    %v2372 = vadd.f32 %v453, %v2370
    %v2373 = vxor.u32 %v2372, 2147483648
    %v2374 = vmul.f32 %v2373, 1.442695
    %v2375 = vpow.pop %v2374
    %v2376 = vadd.f32 %v2375, 1.0
    %v2377 = vrcp.pop %v2376
    %v2378 = vmul.f32 1.0, %v2377
    %v2380 = vrot.slane %v2378, 1
    %2382 = vrot.lane.b32.xlu0 %v2380, 64
    %v2383 = vpop.permute.xlu0 %2382
    %v2384 = vmul.f32 %v2383, %v2364
    %v2386 = vrot.slane %v2384, 7
    %v2388 = vadd.f32 %v453, %v2386
    %v2389 = vtanh.pop %v2388
    %2390 = vrot.lane.b32.xlu0 %v2380, 96
    %v2391 = vpop.permute.xlu0 %2390
    %v2393 = vrot.slane %v2389, 1
    %2395 = vrot.lane.b32.xlu0 %v2393, 64
    %v2396 = vpop.permute.xlu0 %2395
    %v2397 = vsub.f32 1.0, %v2391
    %v2398 = vmul.f32 %v2397, %v2396
    %v2399 = vmul.f32 %v2391, %v2121
    %v2400 = vadd.f32 %v2398, %v2399
    %v2401 = vmul.f32 %v2400, %v201
    %2402 = vst [vmem:[#allocation3 + $0x6] sm:$0x1] %v2262
    %2403 = vst [vmem:[#allocation4 + $0x1] sm:$0x1] %v2401
    %v2404 = vpack.c.bf16 %v2262, %v2262
    %v2405 = vld [vmem:[#allocation13] sm:$0xf]
    %v2406 = vld [vmem:[#allocation13 + $0x4] sm:$0xf]
    %v2407 = vld [vmem:[#allocation13 + $0x8] sm:$0xf]
    %v2408 = vld [vmem:[#allocation13 + $0xc] sm:$0xf]
    %v2409 = vld [vmem:[#allocation13 + $0x10] sm:$0xf]
    %v2410 = vld [vmem:[#allocation13 + $0x14] sm:$0xf]
    %v2411 = vld [vmem:[#allocation13 + $0x18] sm:$0xf]
    %v2412 = vld [vmem:[#allocation13 + $0x1c] sm:$0xf]
    %v2413 = vld [vmem:[#allocation13 + $0x20] sm:$0xf]
    %v2414 = vld [vmem:[#allocation13 + $0x24] sm:$0xf]
    %v2415 = vld [vmem:[#allocation13 + $0x28] sm:$0xf]
    %v2416 = vld [vmem:[#allocation13 + $0x2c] sm:$0xf]
    %v2417 = vld [vmem:[#allocation13 + $0x30] sm:$0xf]
    %v2418 = vld [vmem:[#allocation13 + $0x34] sm:$0xf]
    %v2419 = vld [vmem:[#allocation13 + $0x38] sm:$0xf]
    %v2420 = vld [vmem:[#allocation13 + $0x3c] sm:$0xf]
    %v2421 = vld [vmem:[%s5] sm:$0x1]
    %v2438 = vunpack.c.l.b16 %v2405
    %v2439 = vunpack.c.l.b16 %v2406
    %v2440 = vunpack.c.l.b16 %v2407
    %v2441 = vunpack.c.l.b16 %v2408
    %v2442 = vunpack.c.l.b16 %v2409
    %v2443 = vunpack.c.l.b16 %v2410
    %v2444 = vunpack.c.l.b16 %v2411
    %v2445 = vunpack.c.l.b16 %v2412
    %v2446 = vunpack.c.l.b16 %v2413
    %v2447 = vunpack.c.l.b16 %v2414
    %v2448 = vunpack.c.l.b16 %v2415
    %v2449 = vunpack.c.l.b16 %v2416
    %v2450 = vunpack.c.l.b16 %v2417
    %v2451 = vunpack.c.l.b16 %v2418
    %v2452 = vunpack.c.l.b16 %v2419
    %v2453 = vunpack.c.l.b16 %v2420
    %v2454 = vpack.c.b16 %v2439, %v2438
    %v2455 = vpack.c.b16 %v2441, %v2440
    %v2456 = vpack.c.b16 %v2443, %v2442
    %v2457 = vpack.c.b16 %v2445, %v2444
    %v2458 = vpack.c.b16 %v2447, %v2446
    %v2459 = vpack.c.b16 %v2449, %v2448
    %v2460 = vpack.c.b16 %v2451, %v2450
    %v2461 = vpack.c.b16 %v2453, %v2452
    %2470 = vmatprep.subr.bf16.mxu0 0
    %2471 = vmatpush1.bf16.msra.mxu0 %v2461
    %2472 = vmatprep.subr.bf16.mxu0 0
    %2473 = vmatpush1.bf16.msra.mxu0 %v2460
    %2474 = vmatprep.subr.bf16.mxu0 0
    %2475 = vmatpush1.bf16.msra.mxu0 %v2459
    %2476 = vmatprep.subr.bf16.mxu0 0
    %2477 = vmatpush1.bf16.msra.mxu0 %v2458
    %2478 = vmatprep.subr.bf16.mxu0 0
    %2479 = vmatpush1.bf16.msra.mxu0 %v2457
    %2480 = vmatprep.subr.bf16.mxu0 0
    %2481 = vmatpush1.bf16.msra.mxu0 %v2456
    %2482 = vmatprep.subr.bf16.mxu0 0
    %2483 = vmatpush1.bf16.msra.mxu0 %v2455
    %2484 = vmatprep.subr.bf16.mxu0 0
    %2485 = vmatpush1.bf16.msra.mxu0 %v2454
    %2486 = vmatprep.subr.bf16.mxu0 0
    %2487 = vmatpush2.bf16.msra.mxu0 0
    %2488 = vmatprep.subr.bf16.mxu0 0
    %2489 = vmatpush2.bf16.msra.mxu0 0
    %2490 = vmatprep.subr.bf16.mxu0 0
    %2491 = vmatpush2.bf16.msra.mxu0 0
    %2492 = vmatprep.subr.bf16.mxu0 0
    %2493 = vmatpush2.bf16.msra.mxu0 0
    %2494 = vmatprep.subr.bf16.mxu0 0
    %2495 = vmatpush2.bf16.msra.mxu0 0
    %2496 = vmatprep.subr.bf16.mxu0 0
    %2497 = vmatpush2.bf16.msra.mxu0 0
    %2498 = vmatprep.subr.bf16.mxu0 0
    %2499 = vmatpush2.bf16.msra.mxu0 0
    %2500 = vmatprep.subr.bf16.mxu0 0
    %2501 = vmatpush2.bf16.msra.mxu0 0
    %2502 = vmatprep.mubr.bf16.mxu0 0
    %2503 = vmatmul.mubr.bf16.gmra.mxu0 %v2404
    %v2504 = vpop.f32.mrf.mxu0
    %v2505 = vadd.f32 %v2421, %v2504
    %v2506 = vpop.f32.mrf.mxu0
    %v2507 = vpop.f32.mrf.mxu0
    %v2508 = vpop.f32.mrf.mxu0
    %2509 = vdwg.mxu0
    %v2511 = vrot.slane %v2505, 1
    %v2513 = vadd.f32 %v342, %v2511
    %v2514 = vxor.u32 %v2513, 2147483648
    %v2515 = vmul.f32 %v2514, 1.442695
    %v2516 = vpow.pop %v2515
    %v2517 = vadd.f32 %v2516, 1.0
    %v2518 = vrcp.pop %v2517
    %v2519 = vmul.f32 1.0, %v2518
    %v2521 = vrot.slane %v2519, 7
    %2523 = vrot.lane.b32.xlu0 %v2521, 64
    %v2524 = vpop.permute.xlu0 %2523
    %v2525 = vmul.f32 %v2524, %v2505
    %v2527 = vrot.slane %v2525, 1
    %v2529 = vadd.f32 %v342, %v2527
    %v2530 = vtanh.pop %v2529
    %2531 = vrot.lane.b32.xlu0 %v2521, 96
    %v2532 = vpop.permute.xlu0 %2531
    %v2534 = vrot.slane %v2530, 7
    %2536 = vrot.lane.b32.xlu0 %v2534, 64
    %v2537 = vpop.permute.xlu0 %2536
    %v2538 = vsub.f32 1.0, %v2532
    %v2539 = vmul.f32 %v2538, %v2537
    %v2540 = vmul.f32 %v2532, %v2262
    %v2541 = vadd.f32 %v2539, %v2540
    %v2542 = vmul.f32 %v2541, %v201
    %v2543 = vpack.c.bf16 %v2401, %v2401
    %v2544 = vld [vmem:[#allocation16] sm:$0xf]
    %v2545 = vld [vmem:[#allocation16 + $0x4] sm:$0xf]
    %v2546 = vld [vmem:[#allocation16 + $0x8] sm:$0xf]
    %v2547 = vld [vmem:[#allocation16 + $0xc] sm:$0xf]
    %v2548 = vld [vmem:[#allocation16 + $0x10] sm:$0xf]
    %v2549 = vld [vmem:[#allocation16 + $0x14] sm:$0xf]
    %v2550 = vld [vmem:[#allocation16 + $0x18] sm:$0xf]
    %v2551 = vld [vmem:[#allocation16 + $0x1c] sm:$0xf]
    %v2552 = vld [vmem:[#allocation16 + $0x20] sm:$0xf]
    %v2553 = vld [vmem:[#allocation16 + $0x24] sm:$0xf]
    %v2554 = vld [vmem:[#allocation16 + $0x28] sm:$0xf]
    %v2555 = vld [vmem:[#allocation16 + $0x2c] sm:$0xf]
    %v2556 = vld [vmem:[#allocation16 + $0x30] sm:$0xf]
    %v2557 = vld [vmem:[#allocation16 + $0x34] sm:$0xf]
    %v2558 = vld [vmem:[#allocation16 + $0x38] sm:$0xf]
    %v2559 = vld [vmem:[#allocation16 + $0x3c] sm:$0xf]
    %v2560 = vld [vmem:[%s9] sm:$0x1]
    %v2577 = vunpack.c.l.b16 %v2544
    %v2578 = vunpack.c.l.b16 %v2545
    %v2579 = vunpack.c.l.b16 %v2546
    %v2580 = vunpack.c.l.b16 %v2547
    %v2581 = vunpack.c.l.b16 %v2548
    %v2582 = vunpack.c.l.b16 %v2549
    %v2583 = vunpack.c.l.b16 %v2550
    %v2584 = vunpack.c.l.b16 %v2551
    %v2585 = vunpack.c.l.b16 %v2552
    %v2586 = vunpack.c.l.b16 %v2553
    %v2587 = vunpack.c.l.b16 %v2554
    %v2588 = vunpack.c.l.b16 %v2555
    %v2589 = vunpack.c.l.b16 %v2556
    %v2590 = vunpack.c.l.b16 %v2557
    %v2591 = vunpack.c.l.b16 %v2558
    %v2592 = vunpack.c.l.b16 %v2559
    %v2593 = vpack.c.b16 %v2578, %v2577
    %v2594 = vpack.c.b16 %v2580, %v2579
    %v2595 = vpack.c.b16 %v2582, %v2581
    %v2596 = vpack.c.b16 %v2584, %v2583
    %v2597 = vpack.c.b16 %v2586, %v2585
    %v2598 = vpack.c.b16 %v2588, %v2587
    %v2599 = vpack.c.b16 %v2590, %v2589
    %v2600 = vpack.c.b16 %v2592, %v2591
    %2609 = vmatprep.subr.bf16.mxu0 0
    %2610 = vmatpush1.bf16.msra.mxu0 %v2600
    %2611 = vmatprep.subr.bf16.mxu0 0
    %2612 = vmatpush1.bf16.msra.mxu0 %v2599
    %2613 = vmatprep.subr.bf16.mxu0 0
    %2614 = vmatpush1.bf16.msra.mxu0 %v2598
    %2615 = vmatprep.subr.bf16.mxu0 0
    %2616 = vmatpush1.bf16.msra.mxu0 %v2597
    %2617 = vmatprep.subr.bf16.mxu0 0
    %2618 = vmatpush1.bf16.msra.mxu0 %v2596
    %2619 = vmatprep.subr.bf16.mxu0 0
    %2620 = vmatpush1.bf16.msra.mxu0 %v2595
    %2621 = vmatprep.subr.bf16.mxu0 0
    %2622 = vmatpush1.bf16.msra.mxu0 %v2594
    %2623 = vmatprep.subr.bf16.mxu0 0
    %2624 = vmatpush1.bf16.msra.mxu0 %v2593
    %2625 = vmatprep.subr.bf16.mxu0 0
    %2626 = vmatpush2.bf16.msra.mxu0 0
    %2627 = vmatprep.subr.bf16.mxu0 0
    %2628 = vmatpush2.bf16.msra.mxu0 0
    %2629 = vmatprep.subr.bf16.mxu0 0
    %2630 = vmatpush2.bf16.msra.mxu0 0
    %2631 = vmatprep.subr.bf16.mxu0 0
    %2632 = vmatpush2.bf16.msra.mxu0 0
    %2633 = vmatprep.subr.bf16.mxu0 0
    %2634 = vmatpush2.bf16.msra.mxu0 0
    %2635 = vmatprep.subr.bf16.mxu0 0
    %2636 = vmatpush2.bf16.msra.mxu0 0
    %2637 = vmatprep.subr.bf16.mxu0 0
    %2638 = vmatpush2.bf16.msra.mxu0 0
    %2639 = vmatprep.subr.bf16.mxu0 0
    %2640 = vmatpush2.bf16.msra.mxu0 0
    %2641 = vmatprep.mubr.bf16.mxu0 0
    %2642 = vmatmul.mubr.bf16.gmra.mxu0 %v2543
    %v2643 = vpop.f32.mrf.mxu0
    %v2644 = vadd.f32 %v2560, %v2643
    %v2645 = vpop.f32.mrf.mxu0
    %v2646 = vpop.f32.mrf.mxu0
    %v2647 = vpop.f32.mrf.mxu0
    %2648 = vdwg.mxu0
    %v2649 = vadd.f32 %v453, %v2644
    %v2650 = vxor.u32 %v2649, 2147483648
    %v2651 = vmul.f32 %v2650, 1.442695
    %v2652 = vpow.pop %v2651
    %v2653 = vadd.f32 %v2652, 1.0
    %v2654 = vrcp.pop %v2653
    %v2655 = vmul.f32 1.0, %v2654
    %2656 = vrot.lane.b32.xlu0 %v2655, 64
    %v2657 = vpop.permute.xlu0 %2656
    %v2658 = vmul.f32 %v2657, %v2644
    %v2659 = vadd.f32 %v453, %v2658
    %v2660 = vtanh.pop %v2659
    %2661 = vrot.lane.b32.xlu0 %v2655, 96
    %v2662 = vpop.permute.xlu0 %2661
    %2663 = vrot.lane.b32.xlu0 %v2660, 64
    %v2664 = vpop.permute.xlu0 %2663
    %v2665 = vsub.f32 1.0, %v2662
    %v2666 = vmul.f32 %v2665, %v2664
    %v2667 = vmul.f32 %v2662, %v2401
    %v2668 = vadd.f32 %v2666, %v2667
    %v2669 = vmul.f32 %v2668, %v201
    %2670 = vst [vmem:[#allocation3 + $0x7] sm:$0x1] %v2542
    %2671 = vst [vmem:[#allocation4] sm:$0x1] %v2669
    %v2672 = vld [vmem:[#allocation3] sm:$0xff]
    %v2673 = vld [vmem:[#allocation4] sm:$0xff]
    %v2674 = vadd.f32 %v2672, %v2673
    %v2675 = vld [vmem:[#allocation10] sm:$0xff]
    %v2676 = vld [vmem:[#allocation10 + $0x8] sm:$0xff]
    %v2677 = vld [vmem:[#allocation10 + $0x10] sm:$0xff]
    %v2678 = vld [vmem:[#allocation10 + $0x18] sm:$0xff]
    %v2679 = vld [vmem:[#allocation10 + $0x20] sm:$0xff]
    %v2680 = vld [vmem:[#allocation10 + $0x28] sm:$0xff]
    %v2681 = vld [vmem:[#allocation10 + $0x30] sm:$0xff]
    %v2682 = vld [vmem:[#allocation10 + $0x38] sm:$0xff]
    %v2683 = vld [vmem:[#allocation10 + $0x40] sm:$0xff]
    %v2684 = vld [vmem:[#allocation10 + $0x48] sm:$0xff]
    %v2685 = vld [vmem:[#allocation10 + $0x50] sm:$0xff]
    %v2686 = vld [vmem:[#allocation10 + $0x58] sm:$0xff]
    %v2687 = vld [vmem:[#allocation10 + $0x60] sm:$0xff]
    %v2688 = vld [vmem:[#allocation10 + $0x68] sm:$0xff]
    %v2689 = vld [vmem:[#allocation10 + $0x70] sm:$0xff]
    %v2690 = vld [vmem:[#allocation10 + $0x78] sm:$0xff]
    %v2691 = vpack.c.bf16 %v2676, %v2675
    %v2692 = vpack.c.bf16 %v2678, %v2677
    %v2693 = vpack.c.bf16 %v2680, %v2679
    %v2694 = vpack.c.bf16 %v2682, %v2681
    %v2695 = vpack.c.bf16 %v2684, %v2683
    %v2696 = vpack.c.bf16 %v2686, %v2685
    %v2697 = vpack.c.bf16 %v2688, %v2687
    %v2698 = vpack.c.bf16 %v2690, %v2689
    %v2699 = vld [vmem:[#allocation17] sm:$0xf]
    %v2700 = vld [vmem:[#allocation17 + $0x4] sm:$0xf]
    %v2701 = vld [vmem:[#allocation17 + $0x8] sm:$0xf]
    %v2702 = vld [vmem:[#allocation17 + $0xc] sm:$0xf]
    %v2703 = vld [vmem:[#allocation17 + $0x10] sm:$0xf]
    %v2704 = vld [vmem:[#allocation17 + $0x14] sm:$0xf]
    %v2705 = vld [vmem:[#allocation17 + $0x18] sm:$0xf]
    %v2706 = vld [vmem:[#allocation17 + $0x1c] sm:$0xf]
    %v2707 = vld [vmem:[#allocation17 + $0x20] sm:$0xf]
    %v2708 = vld [vmem:[#allocation17 + $0x24] sm:$0xf]
    %v2709 = vld [vmem:[#allocation17 + $0x28] sm:$0xf]
    %v2710 = vld [vmem:[#allocation17 + $0x2c] sm:$0xf]
    %v2711 = vld [vmem:[#allocation17 + $0x30] sm:$0xf]
    %v2712 = vld [vmem:[#allocation17 + $0x34] sm:$0xf]
    %v2713 = vld [vmem:[#allocation17 + $0x38] sm:$0xf]
    %v2714 = vld [vmem:[#allocation17 + $0x3c] sm:$0xf]
    %v2715 = vld [vmem:[%s12] sm:$0x1]
    %v2717 = vlaneseq
    %v2718 = vshrl.u32 %v2717, 7
    %v2719 = vsub.s32 0, %v2718
    %v2720 = vrot.slane %v2715, %v2719
    %v2738 = vunpack.c.l.b16 %v2699
    %v2739 = vunpack.c.l.b16 %v2700
    %v2740 = vunpack.c.l.b16 %v2701
    %v2741 = vunpack.c.l.b16 %v2702
    %v2742 = vunpack.c.l.b16 %v2703
    %v2743 = vunpack.c.l.b16 %v2704
    %v2744 = vunpack.c.l.b16 %v2705
    %v2745 = vunpack.c.l.b16 %v2706
    %v2746 = vunpack.c.l.b16 %v2707
    %v2747 = vunpack.c.l.b16 %v2708
    %v2748 = vunpack.c.l.b16 %v2709
    %v2749 = vunpack.c.l.b16 %v2710
    %v2750 = vunpack.c.l.b16 %v2711
    %v2751 = vunpack.c.l.b16 %v2712
    %v2752 = vunpack.c.l.b16 %v2713
    %v2753 = vunpack.c.l.b16 %v2714
    %v2754 = vpack.c.b16 %v2739, %v2738
    %v2755 = vpack.c.b16 %v2741, %v2740
    %v2756 = vpack.c.b16 %v2743, %v2742
    %v2757 = vpack.c.b16 %v2745, %v2744
    %v2758 = vpack.c.b16 %v2747, %v2746
    %v2759 = vpack.c.b16 %v2749, %v2748
    %v2760 = vpack.c.b16 %v2751, %v2750
    %v2761 = vpack.c.b16 %v2753, %v2752
    %2770 = vmatprep.subr.bf16.mxu0 0
    %2771 = vmatpush1.bf16.msra.mxu0 %v2761
    %2772 = vmatprep.subr.bf16.mxu0 0
    %2773 = vmatpush1.bf16.msra.mxu0 %v2760
    %2774 = vmatprep.subr.bf16.mxu0 0
    %2775 = vmatpush1.bf16.msra.mxu0 %v2759
    %2776 = vmatprep.subr.bf16.mxu0 0
    %2777 = vmatpush1.bf16.msra.mxu0 %v2758
    %2778 = vmatprep.subr.bf16.mxu0 0
    %2779 = vmatpush1.bf16.msra.mxu0 %v2757
    %2780 = vmatprep.subr.bf16.mxu0 0
    %2781 = vmatpush1.bf16.msra.mxu0 %v2756
    %2782 = vmatprep.subr.bf16.mxu0 0
    %2783 = vmatpush1.bf16.msra.mxu0 %v2755
    %2784 = vmatprep.subr.bf16.mxu0 0
    %2785 = vmatpush1.bf16.msra.mxu0 %v2754
    %2786 = vmatprep.subr.bf16.mxu0 0
    %2787 = vmatpush2.bf16.msra.mxu0 0
    %2788 = vmatprep.subr.bf16.mxu0 0
    %2789 = vmatpush2.bf16.msra.mxu0 0
    %2790 = vmatprep.subr.bf16.mxu0 0
    %2791 = vmatpush2.bf16.msra.mxu0 0
    %2792 = vmatprep.subr.bf16.mxu0 0
    %2793 = vmatpush2.bf16.msra.mxu0 0
    %2794 = vmatprep.subr.bf16.mxu0 0
    %2795 = vmatpush2.bf16.msra.mxu0 0
    %2796 = vmatprep.subr.bf16.mxu0 0
    %2797 = vmatpush2.bf16.msra.mxu0 0
    %2798 = vmatprep.subr.bf16.mxu0 0
    %2799 = vmatpush2.bf16.msra.mxu0 0
    %2800 = vmatprep.subr.bf16.mxu0 0
    %2801 = vmatpush2.bf16.msra.mxu0 0
    %2802 = vmatprep.mubr.bf16.mxu0 0
    %2803 = vmatmul.mubr.bf16.gmra.mxu0 %v2691
    %v2804 = vpop.f32.mrf.mxu0
    %v2805 = vadd.f32 %v2720, %v2804
    %v2806 = vpop.f32.mrf.mxu0
    %v2807 = vpop.f32.mrf.mxu0
    %v2808 = vadd.f32 %v2720, %v2807
    %v2809 = vpop.f32.mrf.mxu0
    %2810 = vmatprep.mubr.bf16.mxu0 0
    %2811 = vmatmul.mubr.bf16.gmra.mxu0 %v2692
    %v2812 = vpop.f32.mrf.mxu0
    %v2813 = vadd.f32 %v2720, %v2812
    %v2814 = vpop.f32.mrf.mxu0
    %v2815 = vpop.f32.mrf.mxu0
    %v2816 = vadd.f32 %v2720, %v2815
    %v2817 = vpop.f32.mrf.mxu0
    %2818 = vmatprep.mubr.bf16.mxu0 0
    %2819 = vmatmul.mubr.bf16.gmra.mxu0 %v2693
    %v2820 = vpop.f32.mrf.mxu0
    %v2821 = vadd.f32 %v2720, %v2820
    %v2822 = vpop.f32.mrf.mxu0
    %v2823 = vpop.f32.mrf.mxu0
    %v2824 = vadd.f32 %v2720, %v2823
    %v2825 = vpop.f32.mrf.mxu0
    %2826 = vmatprep.mubr.bf16.mxu0 0
    %2827 = vmatmul.mubr.bf16.gmra.mxu0 %v2694
    %v2828 = vpop.f32.mrf.mxu0
    %v2829 = vadd.f32 %v2720, %v2828
    %v2830 = vpop.f32.mrf.mxu0
    %v2831 = vpop.f32.mrf.mxu0
    %v2832 = vadd.f32 %v2720, %v2831
    %v2833 = vpop.f32.mrf.mxu0
    %2834 = vmatprep.mubr.bf16.mxu0 0
    %2835 = vmatmul.mubr.bf16.gmra.mxu0 %v2695
    %v2836 = vpop.f32.mrf.mxu0
    %v2837 = vadd.f32 %v2720, %v2836
    %v2838 = vpop.f32.mrf.mxu0
    %v2839 = vpop.f32.mrf.mxu0
    %v2840 = vadd.f32 %v2720, %v2839
    %v2841 = vpop.f32.mrf.mxu0
    %2842 = vmatprep.mubr.bf16.mxu0 0
    %2843 = vmatmul.mubr.bf16.gmra.mxu0 %v2696
    %v2844 = vpop.f32.mrf.mxu0
    %v2845 = vadd.f32 %v2720, %v2844
    %v2846 = vpop.f32.mrf.mxu0
    %v2847 = vpop.f32.mrf.mxu0
    %v2848 = vadd.f32 %v2720, %v2847
    %v2849 = vpop.f32.mrf.mxu0
    %2850 = vmatprep.mubr.bf16.mxu0 0
    %2851 = vmatmul.mubr.bf16.gmra.mxu0 %v2697
    %v2852 = vpop.f32.mrf.mxu0
    %v2853 = vadd.f32 %v2720, %v2852
    %v2854 = vpop.f32.mrf.mxu0
    %v2855 = vpop.f32.mrf.mxu0
    %v2856 = vadd.f32 %v2720, %v2855
    %v2857 = vpop.f32.mrf.mxu0
    %2858 = vmatprep.mubr.bf16.mxu0 0
    %2859 = vmatmul.mubr.bf16.gmra.mxu0 %v2698
    %v2860 = vpop.f32.mrf.mxu0
    %v2861 = vadd.f32 %v2720, %v2860
    %v2862 = vpop.f32.mrf.mxu0
    %v2863 = vpop.f32.mrf.mxu0
    %v2864 = vadd.f32 %v2720, %v2863
    %v2865 = vpop.f32.mrf.mxu0
    %2866 = vdwg.mxu0
    %v2867 = vpack.c.bf16 %v2808, %v2805
    %v2868 = vpack.c.bf16 %v2816, %v2813
    %v2869 = vpack.c.bf16 %v2824, %v2821
    %v2870 = vpack.c.bf16 %v2832, %v2829
    %v2871 = vpack.c.bf16 %v2840, %v2837
    %v2872 = vpack.c.bf16 %v2848, %v2845
    %v2873 = vpack.c.bf16 %v2856, %v2853
    %v2874 = vpack.c.bf16 %v2864, %v2861
    %v2883 = vunpack.c.l.b16 %v2867
    %v2884 = vunpack.c.h.b16 %v2867
    %v2885 = vunpack.c.l.b16 %v2868
    %v2886 = vunpack.c.h.b16 %v2868
    %v2887 = vunpack.c.l.b16 %v2869
    %v2888 = vunpack.c.h.b16 %v2869
    %v2889 = vunpack.c.l.b16 %v2870
    %v2890 = vunpack.c.h.b16 %v2870
    %v2891 = vunpack.c.l.b16 %v2871
    %v2892 = vunpack.c.h.b16 %v2871
    %v2893 = vunpack.c.l.b16 %v2872
    %v2894 = vunpack.c.h.b16 %v2872
    %v2895 = vunpack.c.l.b16 %v2873
    %v2896 = vunpack.c.h.b16 %v2873
    %v2897 = vunpack.c.l.b16 %v2874
    %v2898 = vunpack.c.h.b16 %v2874
    %v2899 = vpack.c.b16 %v2883, %v2883
    %v2900 = vpack.c.b16 %v2884, %v2884
    %v2901 = vpack.c.b16 %v2885, %v2885
    %v2902 = vpack.c.b16 %v2886, %v2886
    %v2903 = vpack.c.b16 %v2887, %v2887
    %v2904 = vpack.c.b16 %v2888, %v2888
    %v2905 = vpack.c.b16 %v2889, %v2889
    %v2906 = vpack.c.b16 %v2890, %v2890
    %v2907 = vpack.c.b16 %v2891, %v2891
    %v2908 = vpack.c.b16 %v2892, %v2892
    %v2909 = vpack.c.b16 %v2893, %v2893
    %v2910 = vpack.c.b16 %v2894, %v2894
    %v2911 = vpack.c.b16 %v2895, %v2895
    %v2912 = vpack.c.b16 %v2896, %v2896
    %v2913 = vpack.c.b16 %v2897, %v2897
    %v2914 = vpack.c.b16 %v2898, %v2898
    %2931 = vst [vmem:[#allocation5] sm:$0xf] %v2899
    %2932 = vst [vmem:[#allocation5 + $0x4] sm:$0xf] %v2900
    %2933 = vst [vmem:[#allocation5 + $0x8] sm:$0xf] %v2901
    %2934 = vst [vmem:[#allocation5 + $0xc] sm:$0xf] %v2902
    %2935 = vst [vmem:[#allocation5 + $0x10] sm:$0xf] %v2903
    %2936 = vst [vmem:[#allocation5 + $0x14] sm:$0xf] %v2904
    %2937 = vst [vmem:[#allocation5 + $0x18] sm:$0xf] %v2905
    %2938 = vst [vmem:[#allocation5 + $0x1c] sm:$0xf] %v2906
    %2939 = vst [vmem:[#allocation5 + $0x20] sm:$0xf] %v2907
    %2940 = vst [vmem:[#allocation5 + $0x24] sm:$0xf] %v2908
    %2941 = vst [vmem:[#allocation5 + $0x28] sm:$0xf] %v2909
    %2942 = vst [vmem:[#allocation5 + $0x2c] sm:$0xf] %v2910
    %2943 = vst [vmem:[#allocation5 + $0x30] sm:$0xf] %v2911
    %2944 = vst [vmem:[#allocation5 + $0x34] sm:$0xf] %v2912
    %2945 = vst [vmem:[#allocation5 + $0x38] sm:$0xf] %v2913
    %2946 = vst [vmem:[#allocation5 + $0x3c] sm:$0xf] %v2914
    %vm2947 = vcmp.eq.s32.totalorder %v198, 1
    %v2948 = vsel %vm2947, 1, 0
    %v2949 = vcvt.s32.f32 %v2948
    %v2950 = vpack.c.bf16 %v2949, %v2949
    %v2951 = vld [vmem:[#allocation5] sm:$0xf]
    %v2952 = vld [vmem:[#allocation5 + $0x4] sm:$0xf]
    %v2953 = vld [vmem:[#allocation5 + $0x8] sm:$0xf]
    %v2954 = vld [vmem:[#allocation5 + $0xc] sm:$0xf]
    %v2955 = vld [vmem:[#allocation5 + $0x10] sm:$0xf]
    %v2956 = vld [vmem:[#allocation5 + $0x14] sm:$0xf]
    %v2957 = vld [vmem:[#allocation5 + $0x18] sm:$0xf]
    %v2958 = vld [vmem:[#allocation5 + $0x1c] sm:$0xf]
    %v2959 = vld [vmem:[#allocation5 + $0x20] sm:$0xf]
    %v2960 = vld [vmem:[#allocation5 + $0x24] sm:$0xf]
    %v2961 = vld [vmem:[#allocation5 + $0x28] sm:$0xf]
    %v2962 = vld [vmem:[#allocation5 + $0x2c] sm:$0xf]
    %v2963 = vld [vmem:[#allocation5 + $0x30] sm:$0xf]
    %v2964 = vld [vmem:[#allocation5 + $0x34] sm:$0xf]
    %v2965 = vld [vmem:[#allocation5 + $0x38] sm:$0xf]
    %v2966 = vld [vmem:[#allocation5 + $0x3c] sm:$0xf]
    %v2983 = vunpack.c.l.b16 %v2951
    %v2984 = vunpack.c.l.b16 %v2952
    %v2985 = vunpack.c.l.b16 %v2953
    %v2986 = vunpack.c.l.b16 %v2954
    %v2987 = vunpack.c.l.b16 %v2955
    %v2988 = vunpack.c.l.b16 %v2956
    %v2989 = vunpack.c.l.b16 %v2957
    %v2990 = vunpack.c.l.b16 %v2958
    %v2991 = vunpack.c.l.b16 %v2959
    %v2992 = vunpack.c.l.b16 %v2960
    %v2993 = vunpack.c.l.b16 %v2961
    %v2994 = vunpack.c.l.b16 %v2962
    %v2995 = vunpack.c.l.b16 %v2963
    %v2996 = vunpack.c.l.b16 %v2964
    %v2997 = vunpack.c.l.b16 %v2965
    %v2998 = vunpack.c.l.b16 %v2966
    %v2999 = vpack.c.b16 %v2984, %v2983
    %v3000 = vpack.c.b16 %v2986, %v2985
    %v3001 = vpack.c.b16 %v2988, %v2987
    %v3002 = vpack.c.b16 %v2990, %v2989
    %v3003 = vpack.c.b16 %v2992, %v2991
    %v3004 = vpack.c.b16 %v2994, %v2993
    %v3005 = vpack.c.b16 %v2996, %v2995
    %v3006 = vpack.c.b16 %v2998, %v2997
    %3015 = vmatprep.subr.bf16.mxu0 0
    %3016 = vmatpush1.bf16.msra.mxu0 %v3006
    %3017 = vmatprep.subr.bf16.mxu0 0
    %3018 = vmatpush1.bf16.msra.mxu0 %v3005
    %3019 = vmatprep.subr.bf16.mxu0 0
    %3020 = vmatpush1.bf16.msra.mxu0 %v3004
    %3021 = vmatprep.subr.bf16.mxu0 0
    %3022 = vmatpush1.bf16.msra.mxu0 %v3003
    %3023 = vmatprep.subr.bf16.mxu0 0
    %3024 = vmatpush1.bf16.msra.mxu0 %v3002
    %3025 = vmatprep.subr.bf16.mxu0 0
    %3026 = vmatpush1.bf16.msra.mxu0 %v3001
    %3027 = vmatprep.subr.bf16.mxu0 0
    %3028 = vmatpush1.bf16.msra.mxu0 %v3000
    %3029 = vmatprep.subr.bf16.mxu0 0
    %3030 = vmatpush1.bf16.msra.mxu0 %v2999
    %3031 = vmatprep.subr.bf16.mxu0 0
    %3032 = vmatpush2.bf16.msra.mxu0 0
    %3033 = vmatprep.subr.bf16.mxu0 0
    %3034 = vmatpush2.bf16.msra.mxu0 0
    %3035 = vmatprep.subr.bf16.mxu0 0
    %3036 = vmatpush2.bf16.msra.mxu0 0
    %3037 = vmatprep.subr.bf16.mxu0 0
    %3038 = vmatpush2.bf16.msra.mxu0 0
    %3039 = vmatprep.subr.bf16.mxu0 0
    %3040 = vmatpush2.bf16.msra.mxu0 0
    %3041 = vmatprep.subr.bf16.mxu0 0
    %3042 = vmatpush2.bf16.msra.mxu0 0
    %3043 = vmatprep.subr.bf16.mxu0 0
    %3044 = vmatpush2.bf16.msra.mxu0 0
    %3045 = vmatprep.subr.bf16.mxu0 0
    %3046 = vmatpush2.bf16.msra.mxu0 0
    %3047 = vmatprep.mubr.bf16.mxu0 0
    %3048 = vmatmul.mubr.bf16.gmra.mxu0 %v2950
    %v3049 = vpop.f32.mrf.mxu0
    %v3050 = vadd.f32 0.0, %v3049
    %v3051 = vpop.f32.mrf.mxu0
    %v3052 = vpop.f32.mrf.mxu0
    %v3053 = vpop.f32.mrf.mxu0
    %3054 = vdwg.mxu0
    %v3055 = vpack.c.bf16 %v2542, %v2542
    %v3056 = vld [vmem:[#allocation19] sm:$0xf]
    %v3057 = vld [vmem:[#allocation19 + $0x4] sm:$0xf]
    %v3058 = vld [vmem:[#allocation19 + $0x8] sm:$0xf]
    %v3059 = vld [vmem:[#allocation19 + $0xc] sm:$0xf]
    %v3060 = vld [vmem:[#allocation19 + $0x10] sm:$0xf]
    %v3061 = vld [vmem:[#allocation19 + $0x14] sm:$0xf]
    %v3062 = vld [vmem:[#allocation19 + $0x18] sm:$0xf]
    %v3063 = vld [vmem:[#allocation19 + $0x1c] sm:$0xf]
    %v3064 = vld [vmem:[#allocation19 + $0x20] sm:$0xf]
    %v3065 = vld [vmem:[#allocation19 + $0x24] sm:$0xf]
    %v3066 = vld [vmem:[#allocation19 + $0x28] sm:$0xf]
    %v3067 = vld [vmem:[#allocation19 + $0x2c] sm:$0xf]
    %v3068 = vld [vmem:[#allocation19 + $0x30] sm:$0xf]
    %v3069 = vld [vmem:[#allocation19 + $0x34] sm:$0xf]
    %v3070 = vld [vmem:[#allocation19 + $0x38] sm:$0xf]
    %v3071 = vld [vmem:[#allocation19 + $0x3c] sm:$0xf]
    %v3072 = vld [vmem:[%s13] sm:$0x1]
    %v3089 = vunpack.c.l.b16 %v3056
    %v3090 = vunpack.c.l.b16 %v3057
    %v3091 = vunpack.c.l.b16 %v3058
    %v3092 = vunpack.c.l.b16 %v3059
    %v3093 = vunpack.c.l.b16 %v3060
    %v3094 = vunpack.c.l.b16 %v3061
    %v3095 = vunpack.c.l.b16 %v3062
    %v3096 = vunpack.c.l.b16 %v3063
    %v3097 = vunpack.c.l.b16 %v3064
    %v3098 = vunpack.c.l.b16 %v3065
    %v3099 = vunpack.c.l.b16 %v3066
    %v3100 = vunpack.c.l.b16 %v3067
    %v3101 = vunpack.c.l.b16 %v3068
    %v3102 = vunpack.c.l.b16 %v3069
    %v3103 = vunpack.c.l.b16 %v3070
    %v3104 = vunpack.c.l.b16 %v3071
    %v3105 = vpack.c.b16 %v3090, %v3089
    %v3106 = vpack.c.b16 %v3092, %v3091
    %v3107 = vpack.c.b16 %v3094, %v3093
    %v3108 = vpack.c.b16 %v3096, %v3095
    %v3109 = vpack.c.b16 %v3098, %v3097
    %v3110 = vpack.c.b16 %v3100, %v3099
    %v3111 = vpack.c.b16 %v3102, %v3101
    %v3112 = vpack.c.b16 %v3104, %v3103
    %3121 = vmatprep.subr.bf16.mxu0 0
    %3122 = vmatpush1.bf16.msra.mxu0 %v3112
    %3123 = vmatprep.subr.bf16.mxu0 0
    %3124 = vmatpush1.bf16.msra.mxu0 %v3111
    %3125 = vmatprep.subr.bf16.mxu0 0
    %3126 = vmatpush1.bf16.msra.mxu0 %v3110
    %3127 = vmatprep.subr.bf16.mxu0 0
    %3128 = vmatpush1.bf16.msra.mxu0 %v3109
    %3129 = vmatprep.subr.bf16.mxu0 0
    %3130 = vmatpush1.bf16.msra.mxu0 %v3108
    %3131 = vmatprep.subr.bf16.mxu0 0
    %3132 = vmatpush1.bf16.msra.mxu0 %v3107
    %3133 = vmatprep.subr.bf16.mxu0 0
    %3134 = vmatpush1.bf16.msra.mxu0 %v3106
    %3135 = vmatprep.subr.bf16.mxu0 0
    %3136 = vmatpush1.bf16.msra.mxu0 %v3105
    %3137 = vmatprep.subr.bf16.mxu0 0
    %3138 = vmatpush2.bf16.msra.mxu0 0
    %3139 = vmatprep.subr.bf16.mxu0 0
    %3140 = vmatpush2.bf16.msra.mxu0 0
    %3141 = vmatprep.subr.bf16.mxu0 0
    %3142 = vmatpush2.bf16.msra.mxu0 0
    %3143 = vmatprep.subr.bf16.mxu0 0
    %3144 = vmatpush2.bf16.msra.mxu0 0
    %3145 = vmatprep.subr.bf16.mxu0 0
    %3146 = vmatpush2.bf16.msra.mxu0 0
    %3147 = vmatprep.subr.bf16.mxu0 0
    %3148 = vmatpush2.bf16.msra.mxu0 0
    %3149 = vmatprep.subr.bf16.mxu0 0
    %3150 = vmatpush2.bf16.msra.mxu0 0
    %3151 = vmatprep.subr.bf16.mxu0 0
    %3152 = vmatpush2.bf16.msra.mxu0 0
    %3153 = vmatprep.mubr.bf16.mxu0 0
    %3154 = vmatmul.mubr.bf16.gmra.mxu0 %v3055
    %v3155 = vpop.f32.mrf.mxu0
    %v3156 = vadd.f32 %v3072, %v3155
    %v3157 = vpop.f32.mrf.mxu0
    %v3158 = vpop.f32.mrf.mxu0
    %v3159 = vpop.f32.mrf.mxu0
    %3160 = vdwg.mxu0
    %v3161 = vadd.f32 %v3050, %v3156
    %v3162 = vxor.u32 %v3161, 2147483648
    %v3163 = vmul.f32 %v3162, 1.442695
    %v3164 = vpow.pop %v3163
    %v3165 = vadd.f32 %v3164, 1.0
    %v3166 = vrcp.pop %v3165
    %v3167 = vmul.f32 1.0, %v3166
    %3168 = vrot.lane.b32.xlu0 %v3167, 64
    %v3169 = vpop.permute.xlu0 %3168
    %v3170 = vmul.f32 %v3169, %v3156
    %v3171 = vadd.f32 %v3050, %v3170
    %v3172 = vtanh.pop %v3171
    %3173 = vrot.lane.b32.xlu0 %v3167, 96
    %v3174 = vpop.permute.xlu0 %3173
    %3175 = vrot.lane.b32.xlu0 %v3172, 64
    %v3176 = vpop.permute.xlu0 %3175
    %v3177 = vsub.f32 1.0, %v3174
    %v3178 = vmul.f32 %v3177, %v3176
    %v3179 = vmul.f32 %v3174, %v2542
    %v3180 = vadd.f32 %v3178, %v3179
    %v3181 = vmul.f32 %v3180, %v201
    %3182 = vmatprep.subr.mxu0 0.0
    %3183 = vmatpush1.xpose.msra.mxu0 0.0
    %3184 = vmatprep.subr.mxu0 0.0
    %3185 = vmatpush1.xpose.msra.mxu0 0.0
    %3186 = vmatprep.subr.mxu0 0.0
    %3187 = vmatpush1.xpose.msra.mxu0 0.0
    %3188 = vmatprep.subr.mxu0 0.0
    %3189 = vmatpush1.xpose.msra.mxu0 0.0
    %3190 = vmatprep.subr.mxu0 0.0
    %3191 = vmatpush1.xpose.msra.mxu0 0.0
    %3192 = vmatprep.subr.mxu0 0.0
    %3193 = vmatpush1.xpose.msra.mxu0 0.0
    %3194 = vmatprep.subr.mxu0 0.0
    %3195 = vmatpush1.xpose.msra.mxu0 0.0
    %3196 = vmatprep.subr.mxu0 0.0
    %3197 = vmatpush1.xpose.msra.mxu0 0.0
    %3198 = vmatprep.subr.mxu0 0.0
    %3199 = vmatpush1.xpose.msra.mxu0 0.0
    %3200 = vmatprep.subr.mxu0 0.0
    %3201 = vmatpush1.xpose.msra.mxu0 0.0
    %3202 = vmatprep.subr.mxu0 0.0
    %3203 = vmatpush1.xpose.msra.mxu0 0.0
    %3204 = vmatprep.subr.mxu0 0.0
    %3205 = vmatpush1.xpose.msra.mxu0 0.0
    %3206 = vmatprep.subr.mxu0 0.0
    %3207 = vmatpush1.xpose.msra.mxu0 0.0
    %3208 = vmatprep.subr.mxu0 0.0
    %3209 = vmatpush1.xpose.msra.mxu0 0.0
    %3210 = vmatprep.subr.mxu0 0.0
    %3211 = vmatpush1.xpose.msra.mxu0 0.0
    %3212 = vmatprep.subr.mxu0 0.0
    %3213 = vmatpush1.xpose.msra.mxu0 %v2674
    %3214 = vmatprep.subr.mxu0 0.0
    %3215 = vmatpush2.xpose.msra.mxu0 0.0
    %3216 = vmatprep.subr.mxu0 0.0
    %3217 = vmatpush2.xpose.msra.mxu0 0.0
    %3218 = vmatprep.subr.mxu0 0.0
    %3219 = vmatpush2.xpose.msra.mxu0 0.0
    %3220 = vmatprep.subr.mxu0 0.0
    %3221 = vmatpush2.xpose.msra.mxu0 0.0
    %3222 = vmatprep.subr.mxu0 0.0
    %3223 = vmatpush2.xpose.msra.mxu0 0.0
    %3224 = vmatprep.subr.mxu0 0.0
    %3225 = vmatpush2.xpose.msra.mxu0 0.0
    %3226 = vmatprep.subr.mxu0 0.0
    %3227 = vmatpush2.xpose.msra.mxu0 0.0
    %3228 = vmatprep.subr.mxu0 0.0
    %3229 = vmatpush2.xpose.msra.mxu0 0.0
    %3230 = vmatprep.subr.mxu0 0.0
    %3231 = vmatpush2.xpose.msra.mxu0 0.0
    %3232 = vmatprep.subr.mxu0 0.0
    %3233 = vmatpush2.xpose.msra.mxu0 0.0
    %3234 = vmatprep.subr.mxu0 0.0
    %3235 = vmatpush2.xpose.msra.mxu0 0.0
    %3236 = vmatprep.subr.mxu0 0.0
    %3237 = vmatpush2.xpose.msra.mxu0 0.0
    %3238 = vmatprep.subr.mxu0 0.0
    %3239 = vmatpush2.xpose.msra.mxu0 0.0
    %3240 = vmatprep.subr.mxu0 0.0
    %3241 = vmatpush2.xpose.msra.mxu0 0.0
    %3242 = vmatprep.subr.mxu0 0.0
    %3243 = vmatpush2.xpose.msra.mxu0 0.0
    %3244 = vmatprep.subr.mxu0 0.0
    %3245 = vmatpush2.xpose.msra.mxu0 0.0
    %3246 = vmatprep.mubr.f32.mxu0 0.0
    %3247 = vmatmul.mubr.f32.gmra.mxu0 %v3181
    %v3248 = vpop.f32.mrf.mxu0
    %v3249 = vadd.f32 0.0, %v3248
    %v3250 = vpop.f32.mrf.mxu0
    %3251 = vdwg.mxu0
    %vm3252 = vcmask 57344
    %v3253 = vsel %vm3252, %v3249, -inf
    %3254 = vmax.xlane.f32.xlu0 %v3253
    %v3255 = vpop.xlane.xlu0 %3254
    %v3256 = vsub.f32 %v3249, %v3255
    %v3257 = vmul.f32 %v3256, 1.442695
    %v3258 = vpow.pop %v3257
    %v3259 = vsel %vm3252, %v3258, 0.0
    %3260 = vadd.xlane.f32.xlu0 %v3259
    %v3261 = vpop.xlane.xlu0 %3260
    %v3262 = vrcp.pop %v3261
    %v3263 = vmul.f32 %v3258, %v3262
    %vm3264 = vcmask 64512
    %v3266 = vsel %vm3264, %v3263, 0
    %3268 = vmatprep.subr.mxu0 0.0
    %3269 = vmatpush1.msra.mxu0 0.0
    %3270 = vmatprep.subr.mxu0 0.0
    %3271 = vmatpush1.msra.mxu0 0.0
    %3272 = vmatprep.subr.mxu0 0.0
    %3273 = vmatpush1.msra.mxu0 0.0
    %3274 = vmatprep.subr.mxu0 0.0
    %3275 = vmatpush1.msra.mxu0 0.0
    %3276 = vmatprep.subr.mxu0 0.0
    %3277 = vmatpush1.msra.mxu0 0.0
    %3278 = vmatprep.subr.mxu0 0.0
    %3279 = vmatpush1.msra.mxu0 0.0
    %3280 = vmatprep.subr.mxu0 0.0
    %3281 = vmatpush1.msra.mxu0 0.0
    %3282 = vmatprep.subr.mxu0 0.0
    %3283 = vmatpush1.msra.mxu0 0.0
    %3284 = vmatprep.subr.mxu0 0.0
    %3285 = vmatpush1.msra.mxu0 0.0
    %3286 = vmatprep.subr.mxu0 0.0
    %3287 = vmatpush1.msra.mxu0 0.0
    %3288 = vmatprep.subr.mxu0 0.0
    %3289 = vmatpush1.msra.mxu0 0.0
    %3290 = vmatprep.subr.mxu0 0.0
    %3291 = vmatpush1.msra.mxu0 0.0
    %3292 = vmatprep.subr.mxu0 0.0
    %3293 = vmatpush1.msra.mxu0 0.0
    %3294 = vmatprep.subr.mxu0 0.0
    %3295 = vmatpush1.msra.mxu0 0.0
    %3296 = vmatprep.subr.mxu0 0.0
    %3297 = vmatpush1.msra.mxu0 0.0
    %3298 = vmatprep.subr.mxu0 0.0
    %3299 = vmatpush1.msra.mxu0 %v2674
    %3300 = vmatprep.subr.mxu0 0.0
    %3301 = vmatpush2.msra.mxu0 0.0
    %3302 = vmatprep.subr.mxu0 0.0
    %3303 = vmatpush2.msra.mxu0 0.0
    %3304 = vmatprep.subr.mxu0 0.0
    %3305 = vmatpush2.msra.mxu0 0.0
    %3306 = vmatprep.subr.mxu0 0.0
    %3307 = vmatpush2.msra.mxu0 0.0
    %3308 = vmatprep.subr.mxu0 0.0
    %3309 = vmatpush2.msra.mxu0 0.0
    %3310 = vmatprep.subr.mxu0 0.0
    %3311 = vmatpush2.msra.mxu0 0.0
    %3312 = vmatprep.subr.mxu0 0.0
    %3313 = vmatpush2.msra.mxu0 0.0
    %3314 = vmatprep.subr.mxu0 0.0
    %3315 = vmatpush2.msra.mxu0 0.0
    %3316 = vmatprep.subr.mxu0 0.0
    %3317 = vmatpush2.msra.mxu0 0.0
    %3318 = vmatprep.subr.mxu0 0.0
    %3319 = vmatpush2.msra.mxu0 0.0
    %3320 = vmatprep.subr.mxu0 0.0
    %3321 = vmatpush2.msra.mxu0 0.0
    %3322 = vmatprep.subr.mxu0 0.0
    %3323 = vmatpush2.msra.mxu0 0.0
    %3324 = vmatprep.subr.mxu0 0.0
    %3325 = vmatpush2.msra.mxu0 0.0
    %3326 = vmatprep.subr.mxu0 0.0
    %3327 = vmatpush2.msra.mxu0 0.0
    %3328 = vmatprep.subr.mxu0 0.0
    %3329 = vmatpush2.msra.mxu0 0.0
    %3330 = vmatprep.subr.mxu0 0.0
    %3331 = vmatpush2.msra.mxu0 0.0
    %3332 = vmatprep.mubr.f32.mxu0 0.0
    %3333 = vmatmul.mubr.f32.gmra.mxu0 %v3266
    %v3334 = vpop.f32.mrf.mxu0
    %v3335 = vadd.f32 0.0, %v3334
    %v3336 = vpop.f32.mrf.mxu0
    %3337 = vdwg.mxu0
    %v3338 = vpack.c.bf16 %v3181, %v3181
    %v3339 = vpack.c.bf16 %v3335, %v3335
    %v3340 = vld [vmem:[#allocation20] sm:$0xf]
    %v3341 = vld [vmem:[#allocation20 + $0x4] sm:$0xf]
    %v3342 = vld [vmem:[#allocation20 + $0x8] sm:$0xf]
    %v3343 = vld [vmem:[#allocation20 + $0xc] sm:$0xf]
    %v3344 = vld [vmem:[#allocation20 + $0x10] sm:$0xf]
    %v3345 = vld [vmem:[#allocation20 + $0x14] sm:$0xf]
    %v3346 = vld [vmem:[#allocation20 + $0x18] sm:$0xf]
    %v3347 = vld [vmem:[#allocation20 + $0x1c] sm:$0xf]
    %v3348 = vld [vmem:[#allocation20 + $0x20] sm:$0xf]
    %v3349 = vld [vmem:[#allocation20 + $0x24] sm:$0xf]
    %v3350 = vld [vmem:[#allocation20 + $0x28] sm:$0xf]
    %v3351 = vld [vmem:[#allocation20 + $0x2c] sm:$0xf]
    %v3352 = vld [vmem:[#allocation20 + $0x30] sm:$0xf]
    %v3353 = vld [vmem:[#allocation20 + $0x34] sm:$0xf]
    %v3354 = vld [vmem:[#allocation20 + $0x38] sm:$0xf]
    %v3355 = vld [vmem:[#allocation20 + $0x3c] sm:$0xf]
    %v3356 = vld [vmem:[#allocation20 + $0x40] sm:$0xf]
    %v3357 = vld [vmem:[#allocation20 + $0x44] sm:$0xf]
    %v3358 = vld [vmem:[#allocation20 + $0x48] sm:$0xf]
    %v3359 = vld [vmem:[#allocation20 + $0x4c] sm:$0xf]
    %v3360 = vld [vmem:[#allocation20 + $0x50] sm:$0xf]
    %v3361 = vld [vmem:[#allocation20 + $0x54] sm:$0xf]
    %v3362 = vld [vmem:[#allocation20 + $0x58] sm:$0xf]
    %v3363 = vld [vmem:[#allocation20 + $0x5c] sm:$0xf]
    %v3364 = vld [vmem:[#allocation20 + $0x60] sm:$0xf]
    %v3365 = vld [vmem:[#allocation20 + $0x64] sm:$0xf]
    %v3366 = vld [vmem:[#allocation20 + $0x68] sm:$0xf]
    %v3367 = vld [vmem:[#allocation20 + $0x6c] sm:$0xf]
    %v3368 = vld [vmem:[#allocation20 + $0x70] sm:$0xf]
    %v3369 = vld [vmem:[#allocation20 + $0x74] sm:$0xf]
    %v3370 = vld [vmem:[#allocation20 + $0x78] sm:$0xf]
    %v3371 = vld [vmem:[#allocation20 + $0x7c] sm:$0xf]
    %v3372 = vld [vmem:[%s15] sm:$0x1]
    %v3405 = vunpack.c.l.b16 %v3340
    %v3406 = vunpack.c.l.b16 %v3341
    %v3407 = vunpack.c.l.b16 %v3342
    %v3408 = vunpack.c.l.b16 %v3343
    %v3409 = vunpack.c.l.b16 %v3344
    %v3410 = vunpack.c.l.b16 %v3345
    %v3411 = vunpack.c.l.b16 %v3346
    %v3412 = vunpack.c.l.b16 %v3347
    %v3413 = vunpack.c.l.b16 %v3348
    %v3414 = vunpack.c.l.b16 %v3349
    %v3415 = vunpack.c.l.b16 %v3350
    %v3416 = vunpack.c.l.b16 %v3351
    %v3417 = vunpack.c.l.b16 %v3352
    %v3418 = vunpack.c.l.b16 %v3353
    %v3419 = vunpack.c.l.b16 %v3354
    %v3420 = vunpack.c.l.b16 %v3355
    %v3421 = vunpack.c.l.b16 %v3356
    %v3422 = vunpack.c.l.b16 %v3357
    %v3423 = vunpack.c.l.b16 %v3358
    %v3424 = vunpack.c.l.b16 %v3359
    %v3425 = vunpack.c.l.b16 %v3360
    %v3426 = vunpack.c.l.b16 %v3361
    %v3427 = vunpack.c.l.b16 %v3362
    %v3428 = vunpack.c.l.b16 %v3363
    %v3429 = vunpack.c.l.b16 %v3364
    %v3430 = vunpack.c.l.b16 %v3365
    %v3431 = vunpack.c.l.b16 %v3366
    %v3432 = vunpack.c.l.b16 %v3367
    %v3433 = vunpack.c.l.b16 %v3368
    %v3434 = vunpack.c.l.b16 %v3369
    %v3435 = vunpack.c.l.b16 %v3370
    %v3436 = vunpack.c.l.b16 %v3371
    %v3437 = vpack.c.b16 %v3406, %v3405
    %v3438 = vpack.c.b16 %v3408, %v3407
    %v3439 = vpack.c.b16 %v3410, %v3409
    %v3440 = vpack.c.b16 %v3412, %v3411
    %v3441 = vpack.c.b16 %v3414, %v3413
    %v3442 = vpack.c.b16 %v3416, %v3415
    %v3443 = vpack.c.b16 %v3418, %v3417
    %v3444 = vpack.c.b16 %v3420, %v3419
    %v3445 = vpack.c.b16 %v3422, %v3421
    %v3446 = vpack.c.b16 %v3424, %v3423
    %v3447 = vpack.c.b16 %v3426, %v3425
    %v3448 = vpack.c.b16 %v3428, %v3427
    %v3449 = vpack.c.b16 %v3430, %v3429
    %v3450 = vpack.c.b16 %v3432, %v3431
    %v3451 = vpack.c.b16 %v3434, %v3433
    %v3452 = vpack.c.b16 %v3436, %v3435
    %3469 = vmatprep.subr.bf16.mxu0 0
    %3470 = vmatpush1.bf16.msra.mxu0 %v3444
    %3471 = vmatprep.subr.bf16.mxu0 0
    %3472 = vmatpush1.bf16.msra.mxu0 %v3443
    %3473 = vmatprep.subr.bf16.mxu0 0
    %3474 = vmatpush1.bf16.msra.mxu0 %v3442
    %3475 = vmatprep.subr.bf16.mxu0 0
    %3476 = vmatpush1.bf16.msra.mxu0 %v3441
    %3477 = vmatprep.subr.bf16.mxu0 0
    %3478 = vmatpush1.bf16.msra.mxu0 %v3440
    %3479 = vmatprep.subr.bf16.mxu0 0
    %3480 = vmatpush1.bf16.msra.mxu0 %v3439
    %3481 = vmatprep.subr.bf16.mxu0 0
    %3482 = vmatpush1.bf16.msra.mxu0 %v3438
    %3483 = vmatprep.subr.bf16.mxu0 0
    %3484 = vmatpush1.bf16.msra.mxu0 %v3437
    %3485 = vmatprep.subr.bf16.mxu0 0
    %3486 = vmatpush2.bf16.msra.mxu0 %v3452
    %3487 = vmatprep.subr.bf16.mxu0 0
    %3488 = vmatpush2.bf16.msra.mxu0 %v3451
    %3489 = vmatprep.subr.bf16.mxu0 0
    %3490 = vmatpush2.bf16.msra.mxu0 %v3450
    %3491 = vmatprep.subr.bf16.mxu0 0
    %3492 = vmatpush2.bf16.msra.mxu0 %v3449
    %3493 = vmatprep.subr.bf16.mxu0 0
    %3494 = vmatpush2.bf16.msra.mxu0 %v3448
    %3495 = vmatprep.subr.bf16.mxu0 0
    %3496 = vmatpush2.bf16.msra.mxu0 %v3447
    %3497 = vmatprep.subr.bf16.mxu0 0
    %3498 = vmatpush2.bf16.msra.mxu0 %v3446
    %3499 = vmatprep.subr.bf16.mxu0 0
    %3500 = vmatpush2.bf16.msra.mxu0 %v3445
    %3501 = vmatprep.mubr.bf16.mxu0 %v3339
    %3502 = vmatmul.mubr.bf16.gmra.mxu0 %v3338
    %v3503 = vpop.f32.mrf.mxu0
    %v3504 = vadd.f32 %v3372, %v3503
    %v3505 = vpop.f32.mrf.mxu0
    %v3506 = vpop.f32.mrf.mxu0
    %v3507 = vpop.f32.mrf.mxu0
    %3508 = vdwg.mxu0
    %v3509 = vtanh.pop %v3504
    %v3510 = vpack.c.bf16 %v3509, %v3509
    %v3511 = vld [vmem:[#allocation22] sm:$0xf]
    %v3512 = vld [vmem:[#allocation22 + $0x4] sm:$0xf]
    %v3513 = vld [vmem:[#allocation22 + $0x8] sm:$0xf]
    %v3514 = vld [vmem:[#allocation22 + $0xc] sm:$0xf]
    %v3515 = vld [vmem:[#allocation22 + $0x10] sm:$0xf]
    %v3516 = vld [vmem:[#allocation22 + $0x14] sm:$0xf]
    %v3517 = vld [vmem:[#allocation22 + $0x18] sm:$0xf]
    %v3518 = vld [vmem:[#allocation22 + $0x1c] sm:$0xf]
    %v3519 = vld [vmem:[#allocation22 + $0x20] sm:$0xf]
    %v3520 = vld [vmem:[#allocation22 + $0x24] sm:$0xf]
    %v3521 = vld [vmem:[#allocation22 + $0x28] sm:$0xf]
    %v3522 = vld [vmem:[#allocation22 + $0x2c] sm:$0xf]
    %v3523 = vld [vmem:[#allocation22 + $0x30] sm:$0xf]
    %v3524 = vld [vmem:[#allocation22 + $0x34] sm:$0xf]
    %v3525 = vld [vmem:[#allocation22 + $0x38] sm:$0xf]
    %v3526 = vld [vmem:[#allocation22 + $0x3c] sm:$0xf]
    %v3527 = vld [vmem:[%s17] sm:$0x1]
    %v3544 = vunpack.c.l.b16 %v3511
    %v3545 = vunpack.c.l.b16 %v3512
    %v3546 = vunpack.c.l.b16 %v3513
    %v3547 = vunpack.c.l.b16 %v3514
    %v3548 = vunpack.c.l.b16 %v3515
    %v3549 = vunpack.c.l.b16 %v3516
    %v3550 = vunpack.c.l.b16 %v3517
    %v3551 = vunpack.c.l.b16 %v3518
    %v3552 = vunpack.c.l.b16 %v3519
    %v3553 = vunpack.c.l.b16 %v3520
    %v3554 = vunpack.c.l.b16 %v3521
    %v3555 = vunpack.c.l.b16 %v3522
    %v3556 = vunpack.c.l.b16 %v3523
    %v3557 = vunpack.c.l.b16 %v3524
    %v3558 = vunpack.c.l.b16 %v3525
    %v3559 = vunpack.c.l.b16 %v3526
    %v3560 = vpack.c.b16 %v3545, %v3544
    %v3561 = vpack.c.b16 %v3547, %v3546
    %v3562 = vpack.c.b16 %v3549, %v3548
    %v3563 = vpack.c.b16 %v3551, %v3550
    %v3564 = vpack.c.b16 %v3553, %v3552
    %v3565 = vpack.c.b16 %v3555, %v3554
    %v3566 = vpack.c.b16 %v3557, %v3556
    %v3567 = vpack.c.b16 %v3559, %v3558
    %3576 = vmatprep.subr.bf16.mxu0 0
    %3577 = vmatpush1.bf16.msra.mxu0 %v3567
    %3578 = vmatprep.subr.bf16.mxu0 0
    %3579 = vmatpush1.bf16.msra.mxu0 %v3566
    %3580 = vmatprep.subr.bf16.mxu0 0
    %3581 = vmatpush1.bf16.msra.mxu0 %v3565
    %3582 = vmatprep.subr.bf16.mxu0 0
    %3583 = vmatpush1.bf16.msra.mxu0 %v3564
    %3584 = vmatprep.subr.bf16.mxu0 0
    %3585 = vmatpush1.bf16.msra.mxu0 %v3563
    %3586 = vmatprep.subr.bf16.mxu0 0
    %3587 = vmatpush1.bf16.msra.mxu0 %v3562
    %3588 = vmatprep.subr.bf16.mxu0 0
    %3589 = vmatpush1.bf16.msra.mxu0 %v3561
    %3590 = vmatprep.subr.bf16.mxu0 0
    %3591 = vmatpush1.bf16.msra.mxu0 %v3560
    %3592 = vmatprep.subr.bf16.mxu0 0
    %3593 = vmatpush2.bf16.msra.mxu0 0
    %3594 = vmatprep.subr.bf16.mxu0 0
    %3595 = vmatpush2.bf16.msra.mxu0 0
    %3596 = vmatprep.subr.bf16.mxu0 0
    %3597 = vmatpush2.bf16.msra.mxu0 0
    %3598 = vmatprep.subr.bf16.mxu0 0
    %3599 = vmatpush2.bf16.msra.mxu0 0
    %3600 = vmatprep.subr.bf16.mxu0 0
    %3601 = vmatpush2.bf16.msra.mxu0 0
    %3602 = vmatprep.subr.bf16.mxu0 0
    %3603 = vmatpush2.bf16.msra.mxu0 0
    %3604 = vmatprep.subr.bf16.mxu0 0
    %3605 = vmatpush2.bf16.msra.mxu0 0
    %3606 = vmatprep.subr.bf16.mxu0 0
    %3607 = vmatpush2.bf16.msra.mxu0 0
    %3608 = vmatprep.mubr.bf16.mxu0 0
    %3609 = vmatmul.mubr.bf16.gmra.mxu0 %v3510
    %v3610 = vpop.f32.mrf.mxu0
    %v3611 = vadd.f32 %v3527, %v3610
    %v3612 = vpop.f32.mrf.mxu0
    %v3613 = vpop.f32.mrf.mxu0
    %v3614 = vpop.f32.mrf.mxu0
    %3615 = vdwg.mxu0
    %vm3616 = vcmask 1040384
    %v3617 = vsel %vm3616, %v3611, -inf
    %3618 = vmax.xlane.f32.xlu0 %v3617
    %v3619 = vpop.xlane.xlu0 %3618
    %v3620 = vsub.f32 %v3611, %v3619
    %v3621 = vmul.f32 %v3620, 1.442695
    %v3622 = vpow.pop %v3621
    %v3623 = vsel %vm3616, %v3622, 0.0
    %3624 = vadd.xlane.f32.xlu0 %v3623
    %v3625 = vpop.xlane.xlu0 %3624
    %v3626 = vrcp.pop %v3625
    %vm3627 = vcmp.ge.f32.partialorder %v3611, %v3619
    %v3628 = vsel %vm3627, %v198, 128
    %v3629 = vsel %vm3616, %v3628, 2147483647
    %v3630 = vand.u32 %v3629, 65535
    %v3631 = vshra.s32 %v3629, 16
    %v3632 = vcvt.s32.f32 %v3630
    %v3633 = vcvt.s32.f32 %v3631
    %3634 = vmin.xlane.f32.xlu0 %v3633
    %v3635 = vpop.xlane.xlu0 %3634
    %vm3636 = vcmp.eq.f32.partialorder %v3633, %v3635
    %v3637 = vsel %vm3636, %v3632, inf
    %3638 = vmin.xlane.f32.xlu0 %v3637
    %v3639 = vpop.xlane.xlu0 %3638
    %v3640 = vcvt.f32.s32 %v3639
    %v3641 = vcvt.f32.s32 %v3635
    %v3642 = vshll.u32 %v3641, 16
    %v3643 = vadd.s32 %v3642, %v3640
    %vm3644 = vcmp.eq.s32.totalorder %v198, 0
    %v3645 = vsel %vm3644, %v3643, 0
    %v3646 = vsel %vm3644, %v3626, 0.0
    %vm3647 = vcmp.eq.s32.totalorder %v198, %v3643
    %v3648 = vsel %vm3647, 1, 0
    %v3649 = vcvt.s32.f32 %v3648
    %v3650 = vpack.c.bf16 %v3649, %v3649
    %3651 = vmatprep.subr.bf16.mxu0 0
    %3652 = vmatpush1.bf16.msra.mxu0 %v3006
    %3653 = vmatprep.subr.bf16.mxu0 0
    %3654 = vmatpush1.bf16.msra.mxu0 %v3005
    %3655 = vmatprep.subr.bf16.mxu0 0
    %3656 = vmatpush1.bf16.msra.mxu0 %v3004
    %3657 = vmatprep.subr.bf16.mxu0 0
    %3658 = vmatpush1.bf16.msra.mxu0 %v3003
    %3659 = vmatprep.subr.bf16.mxu0 0
    %3660 = vmatpush1.bf16.msra.mxu0 %v3002
    %3661 = vmatprep.subr.bf16.mxu0 0
    %3662 = vmatpush1.bf16.msra.mxu0 %v3001
    %3663 = vmatprep.subr.bf16.mxu0 0
    %3664 = vmatpush1.bf16.msra.mxu0 %v3000
    %3665 = vmatprep.subr.bf16.mxu0 0
    %3666 = vmatpush1.bf16.msra.mxu0 %v2999
    %3667 = vmatprep.subr.bf16.mxu0 0
    %3668 = vmatpush2.bf16.msra.mxu0 0
    %3669 = vmatprep.subr.bf16.mxu0 0
    %3670 = vmatpush2.bf16.msra.mxu0 0
    %3671 = vmatprep.subr.bf16.mxu0 0
    %3672 = vmatpush2.bf16.msra.mxu0 0
    %3673 = vmatprep.subr.bf16.mxu0 0
    %3674 = vmatpush2.bf16.msra.mxu0 0
    %3675 = vmatprep.subr.bf16.mxu0 0
    %3676 = vmatpush2.bf16.msra.mxu0 0
    %3677 = vmatprep.subr.bf16.mxu0 0
    %3678 = vmatpush2.bf16.msra.mxu0 0
    %3679 = vmatprep.subr.bf16.mxu0 0
    %3680 = vmatpush2.bf16.msra.mxu0 0
    %3681 = vmatprep.subr.bf16.mxu0 0
    %3682 = vmatpush2.bf16.msra.mxu0 0
    %3683 = vmatprep.mubr.bf16.mxu0 0
    %3684 = vmatmul.mubr.bf16.gmra.mxu0 %v3650
    %v3685 = vpop.f32.mrf.mxu0
    %v3686 = vadd.f32 0.0, %v3685
    %v3687 = vpop.f32.mrf.mxu0
    %v3688 = vpop.f32.mrf.mxu0
    %v3689 = vpop.f32.mrf.mxu0
    %3690 = vdwg.mxu0
    %3691 = vmatprep.subr.bf16.mxu0 0
    %3692 = vmatpush1.bf16.msra.mxu0 %v3112
    %3693 = vmatprep.subr.bf16.mxu0 0
    %3694 = vmatpush1.bf16.msra.mxu0 %v3111
    %3695 = vmatprep.subr.bf16.mxu0 0
    %3696 = vmatpush1.bf16.msra.mxu0 %v3110
    %3697 = vmatprep.subr.bf16.mxu0 0
    %3698 = vmatpush1.bf16.msra.mxu0 %v3109
    %3699 = vmatprep.subr.bf16.mxu0 0
    %3700 = vmatpush1.bf16.msra.mxu0 %v3108
    %3701 = vmatprep.subr.bf16.mxu0 0
    %3702 = vmatpush1.bf16.msra.mxu0 %v3107
    %3703 = vmatprep.subr.bf16.mxu0 0
    %3704 = vmatpush1.bf16.msra.mxu0 %v3106
    %3705 = vmatprep.subr.bf16.mxu0 0
    %3706 = vmatpush1.bf16.msra.mxu0 %v3105
    %3707 = vmatprep.subr.bf16.mxu0 0
    %3708 = vmatpush2.bf16.msra.mxu0 0
    %3709 = vmatprep.subr.bf16.mxu0 0
    %3710 = vmatpush2.bf16.msra.mxu0 0
    %3711 = vmatprep.subr.bf16.mxu0 0
    %3712 = vmatpush2.bf16.msra.mxu0 0
    %3713 = vmatprep.subr.bf16.mxu0 0
    %3714 = vmatpush2.bf16.msra.mxu0 0
    %3715 = vmatprep.subr.bf16.mxu0 0
    %3716 = vmatpush2.bf16.msra.mxu0 0
    %3717 = vmatprep.subr.bf16.mxu0 0
    %3718 = vmatpush2.bf16.msra.mxu0 0
    %3719 = vmatprep.subr.bf16.mxu0 0
    %3720 = vmatpush2.bf16.msra.mxu0 0
    %3721 = vmatprep.subr.bf16.mxu0 0
    %3722 = vmatpush2.bf16.msra.mxu0 0
    %3723 = vmatprep.mubr.bf16.mxu0 0
    %3724 = vmatmul.mubr.bf16.gmra.mxu0 %v3338
    %v3725 = vpop.f32.mrf.mxu0
    %v3726 = vadd.f32 %v3072, %v3725
    %v3727 = vpop.f32.mrf.mxu0
    %v3728 = vpop.f32.mrf.mxu0
    %v3729 = vpop.f32.mrf.mxu0
    %3730 = vdwg.mxu0
    %v3731 = vadd.f32 %v3686, %v3726
    %v3732 = vxor.u32 %v3731, 2147483648
    %v3733 = vmul.f32 %v3732, 1.442695
    %v3734 = vpow.pop %v3733
    %v3735 = vadd.f32 %v3734, 1.0
    %v3736 = vrcp.pop %v3735
    %v3737 = vmul.f32 1.0, %v3736
    %3738 = vrot.lane.b32.xlu0 %v3737, 64
    %v3739 = vpop.permute.xlu0 %3738
    %v3740 = vmul.f32 %v3739, %v3726
    %v3741 = vadd.f32 %v3686, %v3740
    %v3742 = vtanh.pop %v3741
    %3743 = vrot.lane.b32.xlu0 %v3737, 96
    %v3744 = vpop.permute.xlu0 %3743
    %3745 = vrot.lane.b32.xlu0 %v3742, 64
    %v3746 = vpop.permute.xlu0 %3745
    %v3747 = vsub.f32 1.0, %v3744
    %v3748 = vmul.f32 %v3747, %v3746
    %v3749 = vmul.f32 %v3744, %v3181
    %v3750 = vadd.f32 %v3748, %v3749
    %v3751 = vmul.f32 %v3750, %v201
    %3752 = vmatprep.subr.mxu0 0.0
    %3753 = vmatpush1.xpose.msra.mxu0 0.0
    %3754 = vmatprep.subr.mxu0 0.0
    %3755 = vmatpush1.xpose.msra.mxu0 0.0
    %3756 = vmatprep.subr.mxu0 0.0
    %3757 = vmatpush1.xpose.msra.mxu0 0.0
    %3758 = vmatprep.subr.mxu0 0.0
    %3759 = vmatpush1.xpose.msra.mxu0 0.0
    %3760 = vmatprep.subr.mxu0 0.0
    %3761 = vmatpush1.xpose.msra.mxu0 0.0
    %3762 = vmatprep.subr.mxu0 0.0
    %3763 = vmatpush1.xpose.msra.mxu0 0.0
    %3764 = vmatprep.subr.mxu0 0.0
    %3765 = vmatpush1.xpose.msra.mxu0 0.0
    %3766 = vmatprep.subr.mxu0 0.0
    %3767 = vmatpush1.xpose.msra.mxu0 0.0
    %3768 = vmatprep.subr.mxu0 0.0
    %3769 = vmatpush1.xpose.msra.mxu0 0.0
    %3770 = vmatprep.subr.mxu0 0.0
    %3771 = vmatpush1.xpose.msra.mxu0 0.0
    %3772 = vmatprep.subr.mxu0 0.0
    %3773 = vmatpush1.xpose.msra.mxu0 0.0
    %3774 = vmatprep.subr.mxu0 0.0
    %3775 = vmatpush1.xpose.msra.mxu0 0.0
    %3776 = vmatprep.subr.mxu0 0.0
    %3777 = vmatpush1.xpose.msra.mxu0 0.0
    %3778 = vmatprep.subr.mxu0 0.0
    %3779 = vmatpush1.xpose.msra.mxu0 0.0
    %3780 = vmatprep.subr.mxu0 0.0
    %3781 = vmatpush1.xpose.msra.mxu0 0.0
    %3782 = vmatprep.subr.mxu0 0.0
    %3783 = vmatpush1.xpose.msra.mxu0 %v2674
    %3784 = vmatprep.subr.mxu0 0.0
    %3785 = vmatpush2.xpose.msra.mxu0 0.0
    %3786 = vmatprep.subr.mxu0 0.0
    %3787 = vmatpush2.xpose.msra.mxu0 0.0
    %3788 = vmatprep.subr.mxu0 0.0
    %3789 = vmatpush2.xpose.msra.mxu0 0.0
    %3790 = vmatprep.subr.mxu0 0.0
    %3791 = vmatpush2.xpose.msra.mxu0 0.0
    %3792 = vmatprep.subr.mxu0 0.0
    %3793 = vmatpush2.xpose.msra.mxu0 0.0
    %3794 = vmatprep.subr.mxu0 0.0
    %3795 = vmatpush2.xpose.msra.mxu0 0.0
    %3796 = vmatprep.subr.mxu0 0.0
    %3797 = vmatpush2.xpose.msra.mxu0 0.0
    %3798 = vmatprep.subr.mxu0 0.0
    %3799 = vmatpush2.xpose.msra.mxu0 0.0
    %3800 = vmatprep.subr.mxu0 0.0
    %3801 = vmatpush2.xpose.msra.mxu0 0.0
    %3802 = vmatprep.subr.mxu0 0.0
    %3803 = vmatpush2.xpose.msra.mxu0 0.0
    %3804 = vmatprep.subr.mxu0 0.0
    %3805 = vmatpush2.xpose.msra.mxu0 0.0
    %3806 = vmatprep.subr.mxu0 0.0
    %3807 = vmatpush2.xpose.msra.mxu0 0.0
    %3808 = vmatprep.subr.mxu0 0.0
    %3809 = vmatpush2.xpose.msra.mxu0 0.0
    %3810 = vmatprep.subr.mxu0 0.0
    %3811 = vmatpush2.xpose.msra.mxu0 0.0
    %3812 = vmatprep.subr.mxu0 0.0
    %3813 = vmatpush2.xpose.msra.mxu0 0.0
    %3814 = vmatprep.subr.mxu0 0.0
    %3815 = vmatpush2.xpose.msra.mxu0 0.0
    %3816 = vmatprep.mubr.f32.mxu0 0.0
    %3817 = vmatmul.mubr.f32.gmra.mxu0 %v3751
    %v3818 = vpop.f32.mrf.mxu0
    %v3819 = vadd.f32 0.0, %v3818
    %v3820 = vpop.f32.mrf.mxu0
    %3821 = vdwg.mxu0
    %v3822 = vsel %vm3252, %v3819, -inf
    %3823 = vmax.xlane.f32.xlu0 %v3822
    %v3824 = vpop.xlane.xlu0 %3823
    %v3825 = vsub.f32 %v3819, %v3824
    %v3826 = vmul.f32 %v3825, 1.442695
    %v3827 = vpow.pop %v3826
    %v3828 = vsel %vm3252, %v3827, 0.0
    %3829 = vadd.xlane.f32.xlu0 %v3828
    %v3830 = vpop.xlane.xlu0 %3829
    %v3831 = vrcp.pop %v3830
    %v3832 = vmul.f32 %v3827, %v3831
    %v3834 = vsel %vm3264, %v3832, 0
    %3836 = vmatprep.subr.mxu0 0.0
    %3837 = vmatpush1.msra.mxu0 0.0
    %3838 = vmatprep.subr.mxu0 0.0
    %3839 = vmatpush1.msra.mxu0 0.0
    %3840 = vmatprep.subr.mxu0 0.0
    %3841 = vmatpush1.msra.mxu0 0.0
    %3842 = vmatprep.subr.mxu0 0.0
    %3843 = vmatpush1.msra.mxu0 0.0
    %3844 = vmatprep.subr.mxu0 0.0
    %3845 = vmatpush1.msra.mxu0 0.0
    %3846 = vmatprep.subr.mxu0 0.0
    %3847 = vmatpush1.msra.mxu0 0.0
    %3848 = vmatprep.subr.mxu0 0.0
    %3849 = vmatpush1.msra.mxu0 0.0
    %3850 = vmatprep.subr.mxu0 0.0
    %3851 = vmatpush1.msra.mxu0 0.0
    %3852 = vmatprep.subr.mxu0 0.0
    %3853 = vmatpush1.msra.mxu0 0.0
    %3854 = vmatprep.subr.mxu0 0.0
    %3855 = vmatpush1.msra.mxu0 0.0
    %3856 = vmatprep.subr.mxu0 0.0
    %3857 = vmatpush1.msra.mxu0 0.0
    %3858 = vmatprep.subr.mxu0 0.0
    %3859 = vmatpush1.msra.mxu0 0.0
    %3860 = vmatprep.subr.mxu0 0.0
    %3861 = vmatpush1.msra.mxu0 0.0
    %3862 = vmatprep.subr.mxu0 0.0
    %3863 = vmatpush1.msra.mxu0 0.0
    %3864 = vmatprep.subr.mxu0 0.0
    %3865 = vmatpush1.msra.mxu0 0.0
    %3866 = vmatprep.subr.mxu0 0.0
    %3867 = vmatpush1.msra.mxu0 %v2674
    %3868 = vmatprep.subr.mxu0 0.0
    %3869 = vmatpush2.msra.mxu0 0.0
    %3870 = vmatprep.subr.mxu0 0.0
    %3871 = vmatpush2.msra.mxu0 0.0
    %3872 = vmatprep.subr.mxu0 0.0
    %3873 = vmatpush2.msra.mxu0 0.0
    %3874 = vmatprep.subr.mxu0 0.0
    %3875 = vmatpush2.msra.mxu0 0.0
    %3876 = vmatprep.subr.mxu0 0.0
    %3877 = vmatpush2.msra.mxu0 0.0
    %3878 = vmatprep.subr.mxu0 0.0
    %3879 = vmatpush2.msra.mxu0 0.0
    %3880 = vmatprep.subr.mxu0 0.0
    %3881 = vmatpush2.msra.mxu0 0.0
    %3882 = vmatprep.subr.mxu0 0.0
    %3883 = vmatpush2.msra.mxu0 0.0
    %3884 = vmatprep.subr.mxu0 0.0
    %3885 = vmatpush2.msra.mxu0 0.0
    %3886 = vmatprep.subr.mxu0 0.0
    %3887 = vmatpush2.msra.mxu0 0.0
    %3888 = vmatprep.subr.mxu0 0.0
    %3889 = vmatpush2.msra.mxu0 0.0
    %3890 = vmatprep.subr.mxu0 0.0
    %3891 = vmatpush2.msra.mxu0 0.0
    %3892 = vmatprep.subr.mxu0 0.0
    %3893 = vmatpush2.msra.mxu0 0.0
    %3894 = vmatprep.subr.mxu0 0.0
    %3895 = vmatpush2.msra.mxu0 0.0
    %3896 = vmatprep.subr.mxu0 0.0
    %3897 = vmatpush2.msra.mxu0 0.0
    %3898 = vmatprep.subr.mxu0 0.0
    %3899 = vmatpush2.msra.mxu0 0.0
    %3900 = vmatprep.mubr.f32.mxu0 0.0
    %3901 = vmatmul.mubr.f32.gmra.mxu0 %v3834
    %v3902 = vpop.f32.mrf.mxu0
    %v3903 = vadd.f32 0.0, %v3902
    %v3904 = vpop.f32.mrf.mxu0
    %3905 = vdwg.mxu0
    %v3906 = vpack.c.bf16 %v3751, %v3751
    %v3907 = vpack.c.bf16 %v3903, %v3903
    %3908 = vmatprep.subr.bf16.mxu0 0
    %3909 = vmatpush1.bf16.msra.mxu0 %v3444
    %3910 = vmatprep.subr.bf16.mxu0 0
    %3911 = vmatpush1.bf16.msra.mxu0 %v3443
    %3912 = vmatprep.subr.bf16.mxu0 0
    %3913 = vmatpush1.bf16.msra.mxu0 %v3442
    %3914 = vmatprep.subr.bf16.mxu0 0
    %3915 = vmatpush1.bf16.msra.mxu0 %v3441
    %3916 = vmatprep.subr.bf16.mxu0 0
    %3917 = vmatpush1.bf16.msra.mxu0 %v3440
    %3918 = vmatprep.subr.bf16.mxu0 0
    %3919 = vmatpush1.bf16.msra.mxu0 %v3439
    %3920 = vmatprep.subr.bf16.mxu0 0
    %3921 = vmatpush1.bf16.msra.mxu0 %v3438
    %3922 = vmatprep.subr.bf16.mxu0 0
    %3923 = vmatpush1.bf16.msra.mxu0 %v3437
    %3924 = vmatprep.subr.bf16.mxu0 0
    %3925 = vmatpush2.bf16.msra.mxu0 %v3452
    %3926 = vmatprep.subr.bf16.mxu0 0
    %3927 = vmatpush2.bf16.msra.mxu0 %v3451
    %3928 = vmatprep.subr.bf16.mxu0 0
    %3929 = vmatpush2.bf16.msra.mxu0 %v3450
    %3930 = vmatprep.subr.bf16.mxu0 0
    %3931 = vmatpush2.bf16.msra.mxu0 %v3449
    %3932 = vmatprep.subr.bf16.mxu0 0
    %3933 = vmatpush2.bf16.msra.mxu0 %v3448
    %3934 = vmatprep.subr.bf16.mxu0 0
    %3935 = vmatpush2.bf16.msra.mxu0 %v3447
    %3936 = vmatprep.subr.bf16.mxu0 0
    %3937 = vmatpush2.bf16.msra.mxu0 %v3446
    %3938 = vmatprep.subr.bf16.mxu0 0
    %3939 = vmatpush2.bf16.msra.mxu0 %v3445
    %3940 = vmatprep.mubr.bf16.mxu0 %v3907
    %3941 = vmatmul.mubr.bf16.gmra.mxu0 %v3906
    %v3942 = vpop.f32.mrf.mxu0
    %v3943 = vadd.f32 %v3372, %v3942
    %v3944 = vpop.f32.mrf.mxu0
    %v3945 = vpop.f32.mrf.mxu0
    %v3946 = vpop.f32.mrf.mxu0
    %3947 = vdwg.mxu0
    %v3948 = vtanh.pop %v3943
    %v3949 = vpack.c.bf16 %v3948, %v3948
    %3950 = vmatprep.subr.bf16.mxu0 0
    %3951 = vmatpush1.bf16.msra.mxu0 %v3567
    %3952 = vmatprep.subr.bf16.mxu0 0
    %3953 = vmatpush1.bf16.msra.mxu0 %v3566
    %3954 = vmatprep.subr.bf16.mxu0 0
    %3955 = vmatpush1.bf16.msra.mxu0 %v3565
    %3956 = vmatprep.subr.bf16.mxu0 0
    %3957 = vmatpush1.bf16.msra.mxu0 %v3564
    %3958 = vmatprep.subr.bf16.mxu0 0
    %3959 = vmatpush1.bf16.msra.mxu0 %v3563
    %3960 = vmatprep.subr.bf16.mxu0 0
    %3961 = vmatpush1.bf16.msra.mxu0 %v3562
    %3962 = vmatprep.subr.bf16.mxu0 0
    %3963 = vmatpush1.bf16.msra.mxu0 %v3561
    %3964 = vmatprep.subr.bf16.mxu0 0
    %3965 = vmatpush1.bf16.msra.mxu0 %v3560
    %3966 = vmatprep.subr.bf16.mxu0 0
    %3967 = vmatpush2.bf16.msra.mxu0 0
    %3968 = vmatprep.subr.bf16.mxu0 0
    %3969 = vmatpush2.bf16.msra.mxu0 0
    %3970 = vmatprep.subr.bf16.mxu0 0
    %3971 = vmatpush2.bf16.msra.mxu0 0
    %3972 = vmatprep.subr.bf16.mxu0 0
    %3973 = vmatpush2.bf16.msra.mxu0 0
    %3974 = vmatprep.subr.bf16.mxu0 0
    %3975 = vmatpush2.bf16.msra.mxu0 0
    %3976 = vmatprep.subr.bf16.mxu0 0
    %3977 = vmatpush2.bf16.msra.mxu0 0
    %3978 = vmatprep.subr.bf16.mxu0 0
    %3979 = vmatpush2.bf16.msra.mxu0 0
    %3980 = vmatprep.subr.bf16.mxu0 0
    %3981 = vmatpush2.bf16.msra.mxu0 0
    %3982 = vmatprep.mubr.bf16.mxu0 0
    %3983 = vmatmul.mubr.bf16.gmra.mxu0 %v3949
    %v3984 = vpop.f32.mrf.mxu0
    %v3985 = vadd.f32 %v3527, %v3984
    %v3986 = vpop.f32.mrf.mxu0
    %v3987 = vpop.f32.mrf.mxu0
    %v3988 = vpop.f32.mrf.mxu0
    %3989 = vdwg.mxu0
    %v3990 = vsel %vm3616, %v3985, -inf
    %3991 = vmax.xlane.f32.xlu0 %v3990
    %v3992 = vpop.xlane.xlu0 %3991
    %v3993 = vsub.f32 %v3985, %v3992
    %v3994 = vmul.f32 %v3993, 1.442695
    %v3995 = vpow.pop %v3994
    %v3996 = vsel %vm3616, %v3995, 0.0
    %3997 = vadd.xlane.f32.xlu0 %v3996
    %v3998 = vpop.xlane.xlu0 %3997
    %v3999 = vrcp.pop %v3998
    %vm4000 = vcmp.ge.f32.partialorder %v3985, %v3992
    %v4001 = vsel %vm4000, %v198, 128
    %v4002 = vsel %vm3616, %v4001, 2147483647
    %v4003 = vand.u32 %v4002, 65535
    %v4004 = vshra.s32 %v4002, 16
    %v4005 = vcvt.s32.f32 %v4003
    %v4006 = vcvt.s32.f32 %v4004
    %4007 = vmin.xlane.f32.xlu0 %v4006
    %v4008 = vpop.xlane.xlu0 %4007
    %vm4009 = vcmp.eq.f32.partialorder %v4006, %v4008
    %v4010 = vsel %vm4009, %v4005, inf
    %4011 = vmin.xlane.f32.xlu0 %v4010
    %v4012 = vpop.xlane.xlu0 %4011
    %v4013 = vcvt.f32.s32 %v4012
    %v4014 = vcvt.f32.s32 %v4008
    %v4015 = vshll.u32 %v4014, 16
    %v4016 = vadd.s32 %v4015, %v4013
    %v4017 = vsel %vm2947, %v4016, %v3645
    %v4018 = vsel %vm2947, %v3999, %v3646
    %vm4019 = vcmp.eq.s32.totalorder %v198, %v4016
    %v4020 = vsel %vm4019, 1, 0
    %v4021 = vcvt.s32.f32 %v4020
    %v4022 = vpack.c.bf16 %v4021, %v4021
    %4023 = vmatprep.subr.bf16.mxu0 0
    %4024 = vmatpush1.bf16.msra.mxu0 %v3006
    %4025 = vmatprep.subr.bf16.mxu0 0
    %4026 = vmatpush1.bf16.msra.mxu0 %v3005
    %4027 = vmatprep.subr.bf16.mxu0 0
    %4028 = vmatpush1.bf16.msra.mxu0 %v3004
    %4029 = vmatprep.subr.bf16.mxu0 0
    %4030 = vmatpush1.bf16.msra.mxu0 %v3003
    %4031 = vmatprep.subr.bf16.mxu0 0
    %4032 = vmatpush1.bf16.msra.mxu0 %v3002
    %4033 = vmatprep.subr.bf16.mxu0 0
    %4034 = vmatpush1.bf16.msra.mxu0 %v3001
    %4035 = vmatprep.subr.bf16.mxu0 0
    %4036 = vmatpush1.bf16.msra.mxu0 %v3000
    %4037 = vmatprep.subr.bf16.mxu0 0
    %4038 = vmatpush1.bf16.msra.mxu0 %v2999
    %4039 = vmatprep.subr.bf16.mxu0 0
    %4040 = vmatpush2.bf16.msra.mxu0 0
    %4041 = vmatprep.subr.bf16.mxu0 0
    %4042 = vmatpush2.bf16.msra.mxu0 0
    %4043 = vmatprep.subr.bf16.mxu0 0
    %4044 = vmatpush2.bf16.msra.mxu0 0
    %4045 = vmatprep.subr.bf16.mxu0 0
    %4046 = vmatpush2.bf16.msra.mxu0 0
    %4047 = vmatprep.subr.bf16.mxu0 0
    %4048 = vmatpush2.bf16.msra.mxu0 0
    %4049 = vmatprep.subr.bf16.mxu0 0
    %4050 = vmatpush2.bf16.msra.mxu0 0
    %4051 = vmatprep.subr.bf16.mxu0 0
    %4052 = vmatpush2.bf16.msra.mxu0 0
    %4053 = vmatprep.subr.bf16.mxu0 0
    %4054 = vmatpush2.bf16.msra.mxu0 0
    %4055 = vmatprep.mubr.bf16.mxu0 0
    %4056 = vmatmul.mubr.bf16.gmra.mxu0 %v4022
    %v4057 = vpop.f32.mrf.mxu0
    %v4058 = vadd.f32 0.0, %v4057
    %v4059 = vpop.f32.mrf.mxu0
    %v4060 = vpop.f32.mrf.mxu0
    %v4061 = vpop.f32.mrf.mxu0
    %4062 = vdwg.mxu0
    %4063 = vmatprep.subr.bf16.mxu0 0
    %4064 = vmatpush1.bf16.msra.mxu0 %v3112
    %4065 = vmatprep.subr.bf16.mxu0 0
    %4066 = vmatpush1.bf16.msra.mxu0 %v3111
    %4067 = vmatprep.subr.bf16.mxu0 0
    %4068 = vmatpush1.bf16.msra.mxu0 %v3110
    %4069 = vmatprep.subr.bf16.mxu0 0
    %4070 = vmatpush1.bf16.msra.mxu0 %v3109
    %4071 = vmatprep.subr.bf16.mxu0 0
    %4072 = vmatpush1.bf16.msra.mxu0 %v3108
    %4073 = vmatprep.subr.bf16.mxu0 0
    %4074 = vmatpush1.bf16.msra.mxu0 %v3107
    %4075 = vmatprep.subr.bf16.mxu0 0
    %4076 = vmatpush1.bf16.msra.mxu0 %v3106
    %4077 = vmatprep.subr.bf16.mxu0 0
    %4078 = vmatpush1.bf16.msra.mxu0 %v3105
    %4079 = vmatprep.subr.bf16.mxu0 0
    %4080 = vmatpush2.bf16.msra.mxu0 0
    %4081 = vmatprep.subr.bf16.mxu0 0
    %4082 = vmatpush2.bf16.msra.mxu0 0
    %4083 = vmatprep.subr.bf16.mxu0 0
    %4084 = vmatpush2.bf16.msra.mxu0 0
    %4085 = vmatprep.subr.bf16.mxu0 0
    %4086 = vmatpush2.bf16.msra.mxu0 0
    %4087 = vmatprep.subr.bf16.mxu0 0
    %4088 = vmatpush2.bf16.msra.mxu0 0
    %4089 = vmatprep.subr.bf16.mxu0 0
    %4090 = vmatpush2.bf16.msra.mxu0 0
    %4091 = vmatprep.subr.bf16.mxu0 0
    %4092 = vmatpush2.bf16.msra.mxu0 0
    %4093 = vmatprep.subr.bf16.mxu0 0
    %4094 = vmatpush2.bf16.msra.mxu0 0
    %4095 = vmatprep.mubr.bf16.mxu0 0
    %4096 = vmatmul.mubr.bf16.gmra.mxu0 %v3906
    %v4097 = vpop.f32.mrf.mxu0
    %v4098 = vadd.f32 %v3072, %v4097
    %v4099 = vpop.f32.mrf.mxu0
    %v4100 = vpop.f32.mrf.mxu0
    %v4101 = vpop.f32.mrf.mxu0
    %4102 = vdwg.mxu0
    %v4103 = vadd.f32 %v4058, %v4098
    %v4104 = vxor.u32 %v4103, 2147483648
    %v4105 = vmul.f32 %v4104, 1.442695
    %v4106 = vpow.pop %v4105
    %v4107 = vadd.f32 %v4106, 1.0
    %v4108 = vrcp.pop %v4107
    %v4109 = vmul.f32 1.0, %v4108
    %4110 = vrot.lane.b32.xlu0 %v4109, 64
    %v4111 = vpop.permute.xlu0 %4110
    %v4112 = vmul.f32 %v4111, %v4098
    %v4113 = vadd.f32 %v4058, %v4112
    %v4114 = vtanh.pop %v4113
    %4115 = vrot.lane.b32.xlu0 %v4109, 96
    %v4116 = vpop.permute.xlu0 %4115
    %4117 = vrot.lane.b32.xlu0 %v4114, 64
    %v4118 = vpop.permute.xlu0 %4117
    %v4119 = vsub.f32 1.0, %v4116
    %v4120 = vmul.f32 %v4119, %v4118
    %v4121 = vmul.f32 %v4116, %v3751
    %v4122 = vadd.f32 %v4120, %v4121
    %v4123 = vmul.f32 %v4122, %v201
    %4124 = vmatprep.subr.mxu0 0.0
    %4125 = vmatpush1.xpose.msra.mxu0 0.0
    %4126 = vmatprep.subr.mxu0 0.0
    %4127 = vmatpush1.xpose.msra.mxu0 0.0
    %4128 = vmatprep.subr.mxu0 0.0
    %4129 = vmatpush1.xpose.msra.mxu0 0.0
    %4130 = vmatprep.subr.mxu0 0.0
    %4131 = vmatpush1.xpose.msra.mxu0 0.0
    %4132 = vmatprep.subr.mxu0 0.0
    %4133 = vmatpush1.xpose.msra.mxu0 0.0
    %4134 = vmatprep.subr.mxu0 0.0
    %4135 = vmatpush1.xpose.msra.mxu0 0.0
    %4136 = vmatprep.subr.mxu0 0.0
    %4137 = vmatpush1.xpose.msra.mxu0 0.0
    %4138 = vmatprep.subr.mxu0 0.0
    %4139 = vmatpush1.xpose.msra.mxu0 0.0
    %4140 = vmatprep.subr.mxu0 0.0
    %4141 = vmatpush1.xpose.msra.mxu0 0.0
    %4142 = vmatprep.subr.mxu0 0.0
    %4143 = vmatpush1.xpose.msra.mxu0 0.0
    %4144 = vmatprep.subr.mxu0 0.0
    %4145 = vmatpush1.xpose.msra.mxu0 0.0
    %4146 = vmatprep.subr.mxu0 0.0
    %4147 = vmatpush1.xpose.msra.mxu0 0.0
    %4148 = vmatprep.subr.mxu0 0.0
    %4149 = vmatpush1.xpose.msra.mxu0 0.0
    %4150 = vmatprep.subr.mxu0 0.0
    %4151 = vmatpush1.xpose.msra.mxu0 0.0
    %4152 = vmatprep.subr.mxu0 0.0
    %4153 = vmatpush1.xpose.msra.mxu0 0.0
    %4154 = vmatprep.subr.mxu0 0.0
    %4155 = vmatpush1.xpose.msra.mxu0 %v2674
    %4156 = vmatprep.subr.mxu0 0.0
    %4157 = vmatpush2.xpose.msra.mxu0 0.0
    %4158 = vmatprep.subr.mxu0 0.0
    %4159 = vmatpush2.xpose.msra.mxu0 0.0
    %4160 = vmatprep.subr.mxu0 0.0
    %4161 = vmatpush2.xpose.msra.mxu0 0.0
    %4162 = vmatprep.subr.mxu0 0.0
    %4163 = vmatpush2.xpose.msra.mxu0 0.0
    %4164 = vmatprep.subr.mxu0 0.0
    %4165 = vmatpush2.xpose.msra.mxu0 0.0
    %4166 = vmatprep.subr.mxu0 0.0
    %4167 = vmatpush2.xpose.msra.mxu0 0.0
    %4168 = vmatprep.subr.mxu0 0.0
    %4169 = vmatpush2.xpose.msra.mxu0 0.0
    %4170 = vmatprep.subr.mxu0 0.0
    %4171 = vmatpush2.xpose.msra.mxu0 0.0
    %4172 = vmatprep.subr.mxu0 0.0
    %4173 = vmatpush2.xpose.msra.mxu0 0.0
    %4174 = vmatprep.subr.mxu0 0.0
    %4175 = vmatpush2.xpose.msra.mxu0 0.0
    %4176 = vmatprep.subr.mxu0 0.0
    %4177 = vmatpush2.xpose.msra.mxu0 0.0
    %4178 = vmatprep.subr.mxu0 0.0
    %4179 = vmatpush2.xpose.msra.mxu0 0.0
    %4180 = vmatprep.subr.mxu0 0.0
    %4181 = vmatpush2.xpose.msra.mxu0 0.0
    %4182 = vmatprep.subr.mxu0 0.0
    %4183 = vmatpush2.xpose.msra.mxu0 0.0
    %4184 = vmatprep.subr.mxu0 0.0
    %4185 = vmatpush2.xpose.msra.mxu0 0.0
    %4186 = vmatprep.subr.mxu0 0.0
    %4187 = vmatpush2.xpose.msra.mxu0 0.0
    %4188 = vmatprep.mubr.f32.mxu0 0.0
    %4189 = vmatmul.mubr.f32.gmra.mxu0 %v4123
    %v4190 = vpop.f32.mrf.mxu0
    %v4191 = vadd.f32 0.0, %v4190
    %v4192 = vpop.f32.mrf.mxu0
    %4193 = vdwg.mxu0
    %v4194 = vsel %vm3252, %v4191, -inf
    %4195 = vmax.xlane.f32.xlu0 %v4194
    %v4196 = vpop.xlane.xlu0 %4195
    %v4197 = vsub.f32 %v4191, %v4196
    %v4198 = vmul.f32 %v4197, 1.442695
    %v4199 = vpow.pop %v4198
    %v4200 = vsel %vm3252, %v4199, 0.0
    %4201 = vadd.xlane.f32.xlu0 %v4200
    %v4202 = vpop.xlane.xlu0 %4201
    %v4203 = vrcp.pop %v4202
    %v4204 = vmul.f32 %v4199, %v4203
    %v4206 = vsel %vm3264, %v4204, 0
    %4208 = vmatprep.subr.mxu0 0.0
    %4209 = vmatpush1.msra.mxu0 0.0
    %4210 = vmatprep.subr.mxu0 0.0
    %4211 = vmatpush1.msra.mxu0 0.0
    %4212 = vmatprep.subr.mxu0 0.0
    %4213 = vmatpush1.msra.mxu0 0.0
    %4214 = vmatprep.subr.mxu0 0.0
    %4215 = vmatpush1.msra.mxu0 0.0
    %4216 = vmatprep.subr.mxu0 0.0
    %4217 = vmatpush1.msra.mxu0 0.0
    %4218 = vmatprep.subr.mxu0 0.0
    %4219 = vmatpush1.msra.mxu0 0.0
    %4220 = vmatprep.subr.mxu0 0.0
    %4221 = vmatpush1.msra.mxu0 0.0
    %4222 = vmatprep.subr.mxu0 0.0
    %4223 = vmatpush1.msra.mxu0 0.0
    %4224 = vmatprep.subr.mxu0 0.0
    %4225 = vmatpush1.msra.mxu0 0.0
    %4226 = vmatprep.subr.mxu0 0.0
    %4227 = vmatpush1.msra.mxu0 0.0
    %4228 = vmatprep.subr.mxu0 0.0
    %4229 = vmatpush1.msra.mxu0 0.0
    %4230 = vmatprep.subr.mxu0 0.0
    %4231 = vmatpush1.msra.mxu0 0.0
    %4232 = vmatprep.subr.mxu0 0.0
    %4233 = vmatpush1.msra.mxu0 0.0
    %4234 = vmatprep.subr.mxu0 0.0
    %4235 = vmatpush1.msra.mxu0 0.0
    %4236 = vmatprep.subr.mxu0 0.0
    %4237 = vmatpush1.msra.mxu0 0.0
    %4238 = vmatprep.subr.mxu0 0.0
    %4239 = vmatpush1.msra.mxu0 %v2674
    %4240 = vmatprep.subr.mxu0 0.0
    %4241 = vmatpush2.msra.mxu0 0.0
    %4242 = vmatprep.subr.mxu0 0.0
    %4243 = vmatpush2.msra.mxu0 0.0
    %4244 = vmatprep.subr.mxu0 0.0
    %4245 = vmatpush2.msra.mxu0 0.0
    %4246 = vmatprep.subr.mxu0 0.0
    %4247 = vmatpush2.msra.mxu0 0.0
    %4248 = vmatprep.subr.mxu0 0.0
    %4249 = vmatpush2.msra.mxu0 0.0
    %4250 = vmatprep.subr.mxu0 0.0
    %4251 = vmatpush2.msra.mxu0 0.0
    %4252 = vmatprep.subr.mxu0 0.0
    %4253 = vmatpush2.msra.mxu0 0.0
    %4254 = vmatprep.subr.mxu0 0.0
    %4255 = vmatpush2.msra.mxu0 0.0
    %4256 = vmatprep.subr.mxu0 0.0
    %4257 = vmatpush2.msra.mxu0 0.0
    %4258 = vmatprep.subr.mxu0 0.0
    %4259 = vmatpush2.msra.mxu0 0.0
    %4260 = vmatprep.subr.mxu0 0.0
    %4261 = vmatpush2.msra.mxu0 0.0
    %4262 = vmatprep.subr.mxu0 0.0
    %4263 = vmatpush2.msra.mxu0 0.0
    %4264 = vmatprep.subr.mxu0 0.0
    %4265 = vmatpush2.msra.mxu0 0.0
    %4266 = vmatprep.subr.mxu0 0.0
    %4267 = vmatpush2.msra.mxu0 0.0
    %4268 = vmatprep.subr.mxu0 0.0
    %4269 = vmatpush2.msra.mxu0 0.0
    %4270 = vmatprep.subr.mxu0 0.0
    %4271 = vmatpush2.msra.mxu0 0.0
    %4272 = vmatprep.mubr.f32.mxu0 0.0
    %4273 = vmatmul.mubr.f32.gmra.mxu0 %v4206
    %v4274 = vpop.f32.mrf.mxu0
    %v4275 = vadd.f32 0.0, %v4274
    %v4276 = vpop.f32.mrf.mxu0
    %4277 = vdwg.mxu0
    %v4278 = vpack.c.bf16 %v4123, %v4123
    %v4279 = vpack.c.bf16 %v4275, %v4275
    %4280 = vmatprep.subr.bf16.mxu0 0
    %4281 = vmatpush1.bf16.msra.mxu0 %v3444
    %4282 = vmatprep.subr.bf16.mxu0 0
    %4283 = vmatpush1.bf16.msra.mxu0 %v3443
    %4284 = vmatprep.subr.bf16.mxu0 0
    %4285 = vmatpush1.bf16.msra.mxu0 %v3442
    %4286 = vmatprep.subr.bf16.mxu0 0
    %4287 = vmatpush1.bf16.msra.mxu0 %v3441
    %4288 = vmatprep.subr.bf16.mxu0 0
    %4289 = vmatpush1.bf16.msra.mxu0 %v3440
    %4290 = vmatprep.subr.bf16.mxu0 0
    %4291 = vmatpush1.bf16.msra.mxu0 %v3439
    %4292 = vmatprep.subr.bf16.mxu0 0
    %4293 = vmatpush1.bf16.msra.mxu0 %v3438
    %4294 = vmatprep.subr.bf16.mxu0 0
    %4295 = vmatpush1.bf16.msra.mxu0 %v3437
    %4296 = vmatprep.subr.bf16.mxu0 0
    %4297 = vmatpush2.bf16.msra.mxu0 %v3452
    %4298 = vmatprep.subr.bf16.mxu0 0
    %4299 = vmatpush2.bf16.msra.mxu0 %v3451
    %4300 = vmatprep.subr.bf16.mxu0 0
    %4301 = vmatpush2.bf16.msra.mxu0 %v3450
    %4302 = vmatprep.subr.bf16.mxu0 0
    %4303 = vmatpush2.bf16.msra.mxu0 %v3449
    %4304 = vmatprep.subr.bf16.mxu0 0
    %4305 = vmatpush2.bf16.msra.mxu0 %v3448
    %4306 = vmatprep.subr.bf16.mxu0 0
    %4307 = vmatpush2.bf16.msra.mxu0 %v3447
    %4308 = vmatprep.subr.bf16.mxu0 0
    %4309 = vmatpush2.bf16.msra.mxu0 %v3446
    %4310 = vmatprep.subr.bf16.mxu0 0
    %4311 = vmatpush2.bf16.msra.mxu0 %v3445
    %4312 = vmatprep.mubr.bf16.mxu0 %v4279
    %4313 = vmatmul.mubr.bf16.gmra.mxu0 %v4278
    %v4314 = vpop.f32.mrf.mxu0
    %v4315 = vadd.f32 %v3372, %v4314
    %v4316 = vpop.f32.mrf.mxu0
    %v4317 = vpop.f32.mrf.mxu0
    %v4318 = vpop.f32.mrf.mxu0
    %4319 = vdwg.mxu0
    %v4320 = vtanh.pop %v4315
    %v4321 = vpack.c.bf16 %v4320, %v4320
    %4322 = vmatprep.subr.bf16.mxu0 0
    %4323 = vmatpush1.bf16.msra.mxu0 %v3567
    %4324 = vmatprep.subr.bf16.mxu0 0
    %4325 = vmatpush1.bf16.msra.mxu0 %v3566
    %4326 = vmatprep.subr.bf16.mxu0 0
    %4327 = vmatpush1.bf16.msra.mxu0 %v3565
    %4328 = vmatprep.subr.bf16.mxu0 0
    %4329 = vmatpush1.bf16.msra.mxu0 %v3564
    %4330 = vmatprep.subr.bf16.mxu0 0
    %4331 = vmatpush1.bf16.msra.mxu0 %v3563
    %4332 = vmatprep.subr.bf16.mxu0 0
    %4333 = vmatpush1.bf16.msra.mxu0 %v3562
    %4334 = vmatprep.subr.bf16.mxu0 0
    %4335 = vmatpush1.bf16.msra.mxu0 %v3561
    %4336 = vmatprep.subr.bf16.mxu0 0
    %4337 = vmatpush1.bf16.msra.mxu0 %v3560
    %4338 = vmatprep.subr.bf16.mxu0 0
    %4339 = vmatpush2.bf16.msra.mxu0 0
    %4340 = vmatprep.subr.bf16.mxu0 0
    %4341 = vmatpush2.bf16.msra.mxu0 0
    %4342 = vmatprep.subr.bf16.mxu0 0
    %4343 = vmatpush2.bf16.msra.mxu0 0
    %4344 = vmatprep.subr.bf16.mxu0 0
    %4345 = vmatpush2.bf16.msra.mxu0 0
    %4346 = vmatprep.subr.bf16.mxu0 0
    %4347 = vmatpush2.bf16.msra.mxu0 0
    %4348 = vmatprep.subr.bf16.mxu0 0
    %4349 = vmatpush2.bf16.msra.mxu0 0
    %4350 = vmatprep.subr.bf16.mxu0 0
    %4351 = vmatpush2.bf16.msra.mxu0 0
    %4352 = vmatprep.subr.bf16.mxu0 0
    %4353 = vmatpush2.bf16.msra.mxu0 0
    %4354 = vmatprep.mubr.bf16.mxu0 0
    %4355 = vmatmul.mubr.bf16.gmra.mxu0 %v4321
    %v4356 = vpop.f32.mrf.mxu0
    %v4357 = vadd.f32 %v3527, %v4356
    %v4358 = vpop.f32.mrf.mxu0
    %v4359 = vpop.f32.mrf.mxu0
    %v4360 = vpop.f32.mrf.mxu0
    %4361 = vdwg.mxu0
    %v4362 = vsel %vm3616, %v4357, -inf
    %4363 = vmax.xlane.f32.xlu0 %v4362
    %v4364 = vpop.xlane.xlu0 %4363
    %v4365 = vsub.f32 %v4357, %v4364
    %v4366 = vmul.f32 %v4365, 1.442695
    %v4367 = vpow.pop %v4366
    %v4368 = vsel %vm3616, %v4367, 0.0
    %4369 = vadd.xlane.f32.xlu0 %v4368
    %v4370 = vpop.xlane.xlu0 %4369
    %v4371 = vrcp.pop %v4370
    %vm4372 = vcmp.ge.f32.partialorder %v4357, %v4364
    %v4373 = vsel %vm4372, %v198, 128
    %v4374 = vsel %vm3616, %v4373, 2147483647
    %v4375 = vand.u32 %v4374, 65535
    %v4376 = vshra.s32 %v4374, 16
    %v4377 = vcvt.s32.f32 %v4375
    %v4378 = vcvt.s32.f32 %v4376
    %4379 = vmin.xlane.f32.xlu0 %v4378
    %v4380 = vpop.xlane.xlu0 %4379
    %vm4381 = vcmp.eq.f32.partialorder %v4378, %v4380
    %v4382 = vsel %vm4381, %v4377, inf
    %4383 = vmin.xlane.f32.xlu0 %v4382
    %v4384 = vpop.xlane.xlu0 %4383
    %v4385 = vcvt.f32.s32 %v4384
    %v4386 = vcvt.f32.s32 %v4380
    %v4387 = vshll.u32 %v4386, 16
    %v4388 = vadd.s32 %v4387, %v4385
    %vm4389 = vcmp.eq.s32.totalorder %v198, 2
    %v4390 = vsel %vm4389, %v4388, %v4017
    %v4391 = vsel %vm4389, %v4371, %v4018
    %vm4392 = vcmp.eq.s32.totalorder %v198, %v4388
    %v4393 = vsel %vm4392, 1, 0
    %v4394 = vcvt.s32.f32 %v4393
    %v4395 = vpack.c.bf16 %v4394, %v4394
    %4396 = vmatprep.subr.bf16.mxu0 0
    %4397 = vmatpush1.bf16.msra.mxu0 %v3006
    %4398 = vmatprep.subr.bf16.mxu0 0
    %4399 = vmatpush1.bf16.msra.mxu0 %v3005
    %4400 = vmatprep.subr.bf16.mxu0 0
    %4401 = vmatpush1.bf16.msra.mxu0 %v3004
    %4402 = vmatprep.subr.bf16.mxu0 0
    %4403 = vmatpush1.bf16.msra.mxu0 %v3003
    %4404 = vmatprep.subr.bf16.mxu0 0
    %4405 = vmatpush1.bf16.msra.mxu0 %v3002
    %4406 = vmatprep.subr.bf16.mxu0 0
    %4407 = vmatpush1.bf16.msra.mxu0 %v3001
    %4408 = vmatprep.subr.bf16.mxu0 0
    %4409 = vmatpush1.bf16.msra.mxu0 %v3000
    %4410 = vmatprep.subr.bf16.mxu0 0
    %4411 = vmatpush1.bf16.msra.mxu0 %v2999
    %4412 = vmatprep.subr.bf16.mxu0 0
    %4413 = vmatpush2.bf16.msra.mxu0 0
    %4414 = vmatprep.subr.bf16.mxu0 0
    %4415 = vmatpush2.bf16.msra.mxu0 0
    %4416 = vmatprep.subr.bf16.mxu0 0
    %4417 = vmatpush2.bf16.msra.mxu0 0
    %4418 = vmatprep.subr.bf16.mxu0 0
    %4419 = vmatpush2.bf16.msra.mxu0 0
    %4420 = vmatprep.subr.bf16.mxu0 0
    %4421 = vmatpush2.bf16.msra.mxu0 0
    %4422 = vmatprep.subr.bf16.mxu0 0
    %4423 = vmatpush2.bf16.msra.mxu0 0
    %4424 = vmatprep.subr.bf16.mxu0 0
    %4425 = vmatpush2.bf16.msra.mxu0 0
    %4426 = vmatprep.subr.bf16.mxu0 0
    %4427 = vmatpush2.bf16.msra.mxu0 0
    %4428 = vmatprep.mubr.bf16.mxu0 0
    %4429 = vmatmul.mubr.bf16.gmra.mxu0 %v4395
    %v4430 = vpop.f32.mrf.mxu0
    %v4431 = vadd.f32 0.0, %v4430
    %v4432 = vpop.f32.mrf.mxu0
    %v4433 = vpop.f32.mrf.mxu0
    %v4434 = vpop.f32.mrf.mxu0
    %4435 = vdwg.mxu0
    %4436 = vmatprep.subr.bf16.mxu0 0
    %4437 = vmatpush1.bf16.msra.mxu0 %v3112
    %4438 = vmatprep.subr.bf16.mxu0 0
    %4439 = vmatpush1.bf16.msra.mxu0 %v3111
    %4440 = vmatprep.subr.bf16.mxu0 0
    %4441 = vmatpush1.bf16.msra.mxu0 %v3110
    %4442 = vmatprep.subr.bf16.mxu0 0
    %4443 = vmatpush1.bf16.msra.mxu0 %v3109
    %4444 = vmatprep.subr.bf16.mxu0 0
    %4445 = vmatpush1.bf16.msra.mxu0 %v3108
    %4446 = vmatprep.subr.bf16.mxu0 0
    %4447 = vmatpush1.bf16.msra.mxu0 %v3107
    %4448 = vmatprep.subr.bf16.mxu0 0
    %4449 = vmatpush1.bf16.msra.mxu0 %v3106
    %4450 = vmatprep.subr.bf16.mxu0 0
    %4451 = vmatpush1.bf16.msra.mxu0 %v3105
    %4452 = vmatprep.subr.bf16.mxu0 0
    %4453 = vmatpush2.bf16.msra.mxu0 0
    %4454 = vmatprep.subr.bf16.mxu0 0
    %4455 = vmatpush2.bf16.msra.mxu0 0
    %4456 = vmatprep.subr.bf16.mxu0 0
    %4457 = vmatpush2.bf16.msra.mxu0 0
    %4458 = vmatprep.subr.bf16.mxu0 0
    %4459 = vmatpush2.bf16.msra.mxu0 0
    %4460 = vmatprep.subr.bf16.mxu0 0
    %4461 = vmatpush2.bf16.msra.mxu0 0
    %4462 = vmatprep.subr.bf16.mxu0 0
    %4463 = vmatpush2.bf16.msra.mxu0 0
    %4464 = vmatprep.subr.bf16.mxu0 0
    %4465 = vmatpush2.bf16.msra.mxu0 0
    %4466 = vmatprep.subr.bf16.mxu0 0
    %4467 = vmatpush2.bf16.msra.mxu0 0
    %4468 = vmatprep.mubr.bf16.mxu0 0
    %4469 = vmatmul.mubr.bf16.gmra.mxu0 %v4278
    %v4470 = vpop.f32.mrf.mxu0
    %v4471 = vadd.f32 %v3072, %v4470
    %v4472 = vpop.f32.mrf.mxu0
    %v4473 = vpop.f32.mrf.mxu0
    %v4474 = vpop.f32.mrf.mxu0
    %4475 = vdwg.mxu0
    %v4476 = vadd.f32 %v4431, %v4471
    %v4477 = vxor.u32 %v4476, 2147483648
    %v4478 = vmul.f32 %v4477, 1.442695
    %v4479 = vpow.pop %v4478
    %v4480 = vadd.f32 %v4479, 1.0
    %v4481 = vrcp.pop %v4480
    %v4482 = vmul.f32 1.0, %v4481
    %4483 = vrot.lane.b32.xlu0 %v4482, 64
    %v4484 = vpop.permute.xlu0 %4483
    %v4485 = vmul.f32 %v4484, %v4471
    %v4486 = vadd.f32 %v4431, %v4485
    %v4487 = vtanh.pop %v4486
    %4488 = vrot.lane.b32.xlu0 %v4482, 96
    %v4489 = vpop.permute.xlu0 %4488
    %4490 = vrot.lane.b32.xlu0 %v4487, 64
    %v4491 = vpop.permute.xlu0 %4490
    %v4492 = vsub.f32 1.0, %v4489
    %v4493 = vmul.f32 %v4492, %v4491
    %v4494 = vmul.f32 %v4489, %v4123
    %v4495 = vadd.f32 %v4493, %v4494
    %v4496 = vmul.f32 %v4495, %v201
    %4497 = vmatprep.subr.mxu0 0.0
    %4498 = vmatpush1.xpose.msra.mxu0 0.0
    %4499 = vmatprep.subr.mxu0 0.0
    %4500 = vmatpush1.xpose.msra.mxu0 0.0
    %4501 = vmatprep.subr.mxu0 0.0
    %4502 = vmatpush1.xpose.msra.mxu0 0.0
    %4503 = vmatprep.subr.mxu0 0.0
    %4504 = vmatpush1.xpose.msra.mxu0 0.0
    %4505 = vmatprep.subr.mxu0 0.0
    %4506 = vmatpush1.xpose.msra.mxu0 0.0
    %4507 = vmatprep.subr.mxu0 0.0
    %4508 = vmatpush1.xpose.msra.mxu0 0.0
    %4509 = vmatprep.subr.mxu0 0.0
    %4510 = vmatpush1.xpose.msra.mxu0 0.0
    %4511 = vmatprep.subr.mxu0 0.0
    %4512 = vmatpush1.xpose.msra.mxu0 0.0
    %4513 = vmatprep.subr.mxu0 0.0
    %4514 = vmatpush1.xpose.msra.mxu0 0.0
    %4515 = vmatprep.subr.mxu0 0.0
    %4516 = vmatpush1.xpose.msra.mxu0 0.0
    %4517 = vmatprep.subr.mxu0 0.0
    %4518 = vmatpush1.xpose.msra.mxu0 0.0
    %4519 = vmatprep.subr.mxu0 0.0
    %4520 = vmatpush1.xpose.msra.mxu0 0.0
    %4521 = vmatprep.subr.mxu0 0.0
    %4522 = vmatpush1.xpose.msra.mxu0 0.0
    %4523 = vmatprep.subr.mxu0 0.0
    %4524 = vmatpush1.xpose.msra.mxu0 0.0
    %4525 = vmatprep.subr.mxu0 0.0
    %4526 = vmatpush1.xpose.msra.mxu0 0.0
    %4527 = vmatprep.subr.mxu0 0.0
    %4528 = vmatpush1.xpose.msra.mxu0 %v2674
    %4529 = vmatprep.subr.mxu0 0.0
    %4530 = vmatpush2.xpose.msra.mxu0 0.0
    %4531 = vmatprep.subr.mxu0 0.0
    %4532 = vmatpush2.xpose.msra.mxu0 0.0
    %4533 = vmatprep.subr.mxu0 0.0
    %4534 = vmatpush2.xpose.msra.mxu0 0.0
    %4535 = vmatprep.subr.mxu0 0.0
    %4536 = vmatpush2.xpose.msra.mxu0 0.0
    %4537 = vmatprep.subr.mxu0 0.0
    %4538 = vmatpush2.xpose.msra.mxu0 0.0
    %4539 = vmatprep.subr.mxu0 0.0
    %4540 = vmatpush2.xpose.msra.mxu0 0.0
    %4541 = vmatprep.subr.mxu0 0.0
    %4542 = vmatpush2.xpose.msra.mxu0 0.0
    %4543 = vmatprep.subr.mxu0 0.0
    %4544 = vmatpush2.xpose.msra.mxu0 0.0
    %4545 = vmatprep.subr.mxu0 0.0
    %4546 = vmatpush2.xpose.msra.mxu0 0.0
    %4547 = vmatprep.subr.mxu0 0.0
    %4548 = vmatpush2.xpose.msra.mxu0 0.0
    %4549 = vmatprep.subr.mxu0 0.0
    %4550 = vmatpush2.xpose.msra.mxu0 0.0
    %4551 = vmatprep.subr.mxu0 0.0
    %4552 = vmatpush2.xpose.msra.mxu0 0.0
    %4553 = vmatprep.subr.mxu0 0.0
    %4554 = vmatpush2.xpose.msra.mxu0 0.0
    %4555 = vmatprep.subr.mxu0 0.0
    %4556 = vmatpush2.xpose.msra.mxu0 0.0
    %4557 = vmatprep.subr.mxu0 0.0
    %4558 = vmatpush2.xpose.msra.mxu0 0.0
    %4559 = vmatprep.subr.mxu0 0.0
    %4560 = vmatpush2.xpose.msra.mxu0 0.0
    %4561 = vmatprep.mubr.f32.mxu0 0.0
    %4562 = vmatmul.mubr.f32.gmra.mxu0 %v4496
    %v4563 = vpop.f32.mrf.mxu0
    %v4564 = vadd.f32 0.0, %v4563
    %v4565 = vpop.f32.mrf.mxu0
    %4566 = vdwg.mxu0
    %v4567 = vsel %vm3252, %v4564, -inf
    %4568 = vmax.xlane.f32.xlu0 %v4567
    %v4569 = vpop.xlane.xlu0 %4568
    %v4570 = vsub.f32 %v4564, %v4569
    %v4571 = vmul.f32 %v4570, 1.442695
    %v4572 = vpow.pop %v4571
    %v4573 = vsel %vm3252, %v4572, 0.0
    %4574 = vadd.xlane.f32.xlu0 %v4573
    %v4575 = vpop.xlane.xlu0 %4574
    %v4576 = vrcp.pop %v4575
    %v4577 = vmul.f32 %v4572, %v4576
    %v4579 = vsel %vm3264, %v4577, 0
    %4581 = vmatprep.subr.mxu0 0.0
    %4582 = vmatpush1.msra.mxu0 0.0
    %4583 = vmatprep.subr.mxu0 0.0
    %4584 = vmatpush1.msra.mxu0 0.0
    %4585 = vmatprep.subr.mxu0 0.0
    %4586 = vmatpush1.msra.mxu0 0.0
    %4587 = vmatprep.subr.mxu0 0.0
    %4588 = vmatpush1.msra.mxu0 0.0
    %4589 = vmatprep.subr.mxu0 0.0
    %4590 = vmatpush1.msra.mxu0 0.0
    %4591 = vmatprep.subr.mxu0 0.0
    %4592 = vmatpush1.msra.mxu0 0.0
    %4593 = vmatprep.subr.mxu0 0.0
    %4594 = vmatpush1.msra.mxu0 0.0
    %4595 = vmatprep.subr.mxu0 0.0
    %4596 = vmatpush1.msra.mxu0 0.0
    %4597 = vmatprep.subr.mxu0 0.0
    %4598 = vmatpush1.msra.mxu0 0.0
    %4599 = vmatprep.subr.mxu0 0.0
    %4600 = vmatpush1.msra.mxu0 0.0
    %4601 = vmatprep.subr.mxu0 0.0
    %4602 = vmatpush1.msra.mxu0 0.0
    %4603 = vmatprep.subr.mxu0 0.0
    %4604 = vmatpush1.msra.mxu0 0.0
    %4605 = vmatprep.subr.mxu0 0.0
    %4606 = vmatpush1.msra.mxu0 0.0
    %4607 = vmatprep.subr.mxu0 0.0
    %4608 = vmatpush1.msra.mxu0 0.0
    %4609 = vmatprep.subr.mxu0 0.0
    %4610 = vmatpush1.msra.mxu0 0.0
    %4611 = vmatprep.subr.mxu0 0.0
    %4612 = vmatpush1.msra.mxu0 %v2674
    %4613 = vmatprep.subr.mxu0 0.0
    %4614 = vmatpush2.msra.mxu0 0.0
    %4615 = vmatprep.subr.mxu0 0.0
    %4616 = vmatpush2.msra.mxu0 0.0
    %4617 = vmatprep.subr.mxu0 0.0
    %4618 = vmatpush2.msra.mxu0 0.0
    %4619 = vmatprep.subr.mxu0 0.0
    %4620 = vmatpush2.msra.mxu0 0.0
    %4621 = vmatprep.subr.mxu0 0.0
    %4622 = vmatpush2.msra.mxu0 0.0
    %4623 = vmatprep.subr.mxu0 0.0
    %4624 = vmatpush2.msra.mxu0 0.0
    %4625 = vmatprep.subr.mxu0 0.0
    %4626 = vmatpush2.msra.mxu0 0.0
    %4627 = vmatprep.subr.mxu0 0.0
    %4628 = vmatpush2.msra.mxu0 0.0
    %4629 = vmatprep.subr.mxu0 0.0
    %4630 = vmatpush2.msra.mxu0 0.0
    %4631 = vmatprep.subr.mxu0 0.0
    %4632 = vmatpush2.msra.mxu0 0.0
    %4633 = vmatprep.subr.mxu0 0.0
    %4634 = vmatpush2.msra.mxu0 0.0
    %4635 = vmatprep.subr.mxu0 0.0
    %4636 = vmatpush2.msra.mxu0 0.0
    %4637 = vmatprep.subr.mxu0 0.0
    %4638 = vmatpush2.msra.mxu0 0.0
    %4639 = vmatprep.subr.mxu0 0.0
    %4640 = vmatpush2.msra.mxu0 0.0
    %4641 = vmatprep.subr.mxu0 0.0
    %4642 = vmatpush2.msra.mxu0 0.0
    %4643 = vmatprep.subr.mxu0 0.0
    %4644 = vmatpush2.msra.mxu0 0.0
    %4645 = vmatprep.mubr.f32.mxu0 0.0
    %4646 = vmatmul.mubr.f32.gmra.mxu0 %v4579
    %v4647 = vpop.f32.mrf.mxu0
    %v4648 = vadd.f32 0.0, %v4647
    %v4649 = vpop.f32.mrf.mxu0
    %4650 = vdwg.mxu0
    %v4651 = vpack.c.bf16 %v4496, %v4496
    %v4652 = vpack.c.bf16 %v4648, %v4648
    %4653 = vmatprep.subr.bf16.mxu0 0
    %4654 = vmatpush1.bf16.msra.mxu0 %v3444
    %4655 = vmatprep.subr.bf16.mxu0 0
    %4656 = vmatpush1.bf16.msra.mxu0 %v3443
    %4657 = vmatprep.subr.bf16.mxu0 0
    %4658 = vmatpush1.bf16.msra.mxu0 %v3442
    %4659 = vmatprep.subr.bf16.mxu0 0
    %4660 = vmatpush1.bf16.msra.mxu0 %v3441
    %4661 = vmatprep.subr.bf16.mxu0 0
    %4662 = vmatpush1.bf16.msra.mxu0 %v3440
    %4663 = vmatprep.subr.bf16.mxu0 0
    %4664 = vmatpush1.bf16.msra.mxu0 %v3439
    %4665 = vmatprep.subr.bf16.mxu0 0
    %4666 = vmatpush1.bf16.msra.mxu0 %v3438
    %4667 = vmatprep.subr.bf16.mxu0 0
    %4668 = vmatpush1.bf16.msra.mxu0 %v3437
    %4669 = vmatprep.subr.bf16.mxu0 0
    %4670 = vmatpush2.bf16.msra.mxu0 %v3452
    %4671 = vmatprep.subr.bf16.mxu0 0
    %4672 = vmatpush2.bf16.msra.mxu0 %v3451
    %4673 = vmatprep.subr.bf16.mxu0 0
    %4674 = vmatpush2.bf16.msra.mxu0 %v3450
    %4675 = vmatprep.subr.bf16.mxu0 0
    %4676 = vmatpush2.bf16.msra.mxu0 %v3449
    %4677 = vmatprep.subr.bf16.mxu0 0
    %4678 = vmatpush2.bf16.msra.mxu0 %v3448
    %4679 = vmatprep.subr.bf16.mxu0 0
    %4680 = vmatpush2.bf16.msra.mxu0 %v3447
    %4681 = vmatprep.subr.bf16.mxu0 0
    %4682 = vmatpush2.bf16.msra.mxu0 %v3446
    %4683 = vmatprep.subr.bf16.mxu0 0
    %4684 = vmatpush2.bf16.msra.mxu0 %v3445
    %4685 = vmatprep.mubr.bf16.mxu0 %v4652
    %4686 = vmatmul.mubr.bf16.gmra.mxu0 %v4651
    %v4687 = vpop.f32.mrf.mxu0
    %v4688 = vadd.f32 %v3372, %v4687
    %v4689 = vpop.f32.mrf.mxu0
    %v4690 = vpop.f32.mrf.mxu0
    %v4691 = vpop.f32.mrf.mxu0
    %4692 = vdwg.mxu0
    %v4693 = vtanh.pop %v4688
    %v4694 = vpack.c.bf16 %v4693, %v4693
    %4695 = vmatprep.subr.bf16.mxu0 0
    %4696 = vmatpush1.bf16.msra.mxu0 %v3567
    %4697 = vmatprep.subr.bf16.mxu0 0
    %4698 = vmatpush1.bf16.msra.mxu0 %v3566
    %4699 = vmatprep.subr.bf16.mxu0 0
    %4700 = vmatpush1.bf16.msra.mxu0 %v3565
    %4701 = vmatprep.subr.bf16.mxu0 0
    %4702 = vmatpush1.bf16.msra.mxu0 %v3564
    %4703 = vmatprep.subr.bf16.mxu0 0
    %4704 = vmatpush1.bf16.msra.mxu0 %v3563
    %4705 = vmatprep.subr.bf16.mxu0 0
    %4706 = vmatpush1.bf16.msra.mxu0 %v3562
    %4707 = vmatprep.subr.bf16.mxu0 0
    %4708 = vmatpush1.bf16.msra.mxu0 %v3561
    %4709 = vmatprep.subr.bf16.mxu0 0
    %4710 = vmatpush1.bf16.msra.mxu0 %v3560
    %4711 = vmatprep.subr.bf16.mxu0 0
    %4712 = vmatpush2.bf16.msra.mxu0 0
    %4713 = vmatprep.subr.bf16.mxu0 0
    %4714 = vmatpush2.bf16.msra.mxu0 0
    %4715 = vmatprep.subr.bf16.mxu0 0
    %4716 = vmatpush2.bf16.msra.mxu0 0
    %4717 = vmatprep.subr.bf16.mxu0 0
    %4718 = vmatpush2.bf16.msra.mxu0 0
    %4719 = vmatprep.subr.bf16.mxu0 0
    %4720 = vmatpush2.bf16.msra.mxu0 0
    %4721 = vmatprep.subr.bf16.mxu0 0
    %4722 = vmatpush2.bf16.msra.mxu0 0
    %4723 = vmatprep.subr.bf16.mxu0 0
    %4724 = vmatpush2.bf16.msra.mxu0 0
    %4725 = vmatprep.subr.bf16.mxu0 0
    %4726 = vmatpush2.bf16.msra.mxu0 0
    %4727 = vmatprep.mubr.bf16.mxu0 0
    %4728 = vmatmul.mubr.bf16.gmra.mxu0 %v4694
    %v4729 = vpop.f32.mrf.mxu0
    %v4730 = vadd.f32 %v3527, %v4729
    %v4731 = vpop.f32.mrf.mxu0
    %v4732 = vpop.f32.mrf.mxu0
    %v4733 = vpop.f32.mrf.mxu0
    %4734 = vdwg.mxu0
    %v4735 = vsel %vm3616, %v4730, -inf
    %4736 = vmax.xlane.f32.xlu0 %v4735
    %v4737 = vpop.xlane.xlu0 %4736
    %v4738 = vsub.f32 %v4730, %v4737
    %v4739 = vmul.f32 %v4738, 1.442695
    %v4740 = vpow.pop %v4739
    %v4741 = vsel %vm3616, %v4740, 0.0
    %4742 = vadd.xlane.f32.xlu0 %v4741
    %v4743 = vpop.xlane.xlu0 %4742
    %v4744 = vrcp.pop %v4743
    %vm4745 = vcmp.ge.f32.partialorder %v4730, %v4737
    %v4746 = vsel %vm4745, %v198, 128
    %v4747 = vsel %vm3616, %v4746, 2147483647
    %v4748 = vand.u32 %v4747, 65535
    %v4749 = vshra.s32 %v4747, 16
    %v4750 = vcvt.s32.f32 %v4748
    %v4751 = vcvt.s32.f32 %v4749
    %4752 = vmin.xlane.f32.xlu0 %v4751
    %v4753 = vpop.xlane.xlu0 %4752
    %vm4754 = vcmp.eq.f32.partialorder %v4751, %v4753
    %v4755 = vsel %vm4754, %v4750, inf
    %4756 = vmin.xlane.f32.xlu0 %v4755
    %v4757 = vpop.xlane.xlu0 %4756
    %v4758 = vcvt.f32.s32 %v4757
    %v4759 = vcvt.f32.s32 %v4753
    %v4760 = vshll.u32 %v4759, 16
    %v4761 = vadd.s32 %v4760, %v4758
    %vm4762 = vcmp.eq.s32.totalorder %v198, 3
    %v4763 = vsel %vm4762, %v4761, %v4390
    %v4764 = vsel %vm4762, %v4744, %v4391
    %vm4765 = vcmp.eq.s32.totalorder %v198, %v4761
    %v4766 = vsel %vm4765, 1, 0
    %v4767 = vcvt.s32.f32 %v4766
    %v4768 = vpack.c.bf16 %v4767, %v4767
    %4769 = vmatprep.subr.bf16.mxu0 0
    %4770 = vmatpush1.bf16.msra.mxu0 %v3006
    %4771 = vmatprep.subr.bf16.mxu0 0
    %4772 = vmatpush1.bf16.msra.mxu0 %v3005
    %4773 = vmatprep.subr.bf16.mxu0 0
    %4774 = vmatpush1.bf16.msra.mxu0 %v3004
    %4775 = vmatprep.subr.bf16.mxu0 0
    %4776 = vmatpush1.bf16.msra.mxu0 %v3003
    %4777 = vmatprep.subr.bf16.mxu0 0
    %4778 = vmatpush1.bf16.msra.mxu0 %v3002
    %4779 = vmatprep.subr.bf16.mxu0 0
    %4780 = vmatpush1.bf16.msra.mxu0 %v3001
    %4781 = vmatprep.subr.bf16.mxu0 0
    %4782 = vmatpush1.bf16.msra.mxu0 %v3000
    %4783 = vmatprep.subr.bf16.mxu0 0
    %4784 = vmatpush1.bf16.msra.mxu0 %v2999
    %4785 = vmatprep.subr.bf16.mxu0 0
    %4786 = vmatpush2.bf16.msra.mxu0 0
    %4787 = vmatprep.subr.bf16.mxu0 0
    %4788 = vmatpush2.bf16.msra.mxu0 0
    %4789 = vmatprep.subr.bf16.mxu0 0
    %4790 = vmatpush2.bf16.msra.mxu0 0
    %4791 = vmatprep.subr.bf16.mxu0 0
    %4792 = vmatpush2.bf16.msra.mxu0 0
    %4793 = vmatprep.subr.bf16.mxu0 0
    %4794 = vmatpush2.bf16.msra.mxu0 0
    %4795 = vmatprep.subr.bf16.mxu0 0
    %4796 = vmatpush2.bf16.msra.mxu0 0
    %4797 = vmatprep.subr.bf16.mxu0 0
    %4798 = vmatpush2.bf16.msra.mxu0 0
    %4799 = vmatprep.subr.bf16.mxu0 0
    %4800 = vmatpush2.bf16.msra.mxu0 0
    %4801 = vmatprep.mubr.bf16.mxu0 0
    %4802 = vmatmul.mubr.bf16.gmra.mxu0 %v4768
    %v4803 = vpop.f32.mrf.mxu0
    %v4804 = vadd.f32 0.0, %v4803
    %v4805 = vpop.f32.mrf.mxu0
    %v4806 = vpop.f32.mrf.mxu0
    %v4807 = vpop.f32.mrf.mxu0
    %4808 = vdwg.mxu0
    %4809 = vmatprep.subr.bf16.mxu0 0
    %4810 = vmatpush1.bf16.msra.mxu0 %v3112
    %4811 = vmatprep.subr.bf16.mxu0 0
    %4812 = vmatpush1.bf16.msra.mxu0 %v3111
    %4813 = vmatprep.subr.bf16.mxu0 0
    %4814 = vmatpush1.bf16.msra.mxu0 %v3110
    %4815 = vmatprep.subr.bf16.mxu0 0
    %4816 = vmatpush1.bf16.msra.mxu0 %v3109
    %4817 = vmatprep.subr.bf16.mxu0 0
    %4818 = vmatpush1.bf16.msra.mxu0 %v3108
    %4819 = vmatprep.subr.bf16.mxu0 0
    %4820 = vmatpush1.bf16.msra.mxu0 %v3107
    %4821 = vmatprep.subr.bf16.mxu0 0
    %4822 = vmatpush1.bf16.msra.mxu0 %v3106
    %4823 = vmatprep.subr.bf16.mxu0 0
    %4824 = vmatpush1.bf16.msra.mxu0 %v3105
    %4825 = vmatprep.subr.bf16.mxu0 0
    %4826 = vmatpush2.bf16.msra.mxu0 0
    %4827 = vmatprep.subr.bf16.mxu0 0
    %4828 = vmatpush2.bf16.msra.mxu0 0
    %4829 = vmatprep.subr.bf16.mxu0 0
    %4830 = vmatpush2.bf16.msra.mxu0 0
    %4831 = vmatprep.subr.bf16.mxu0 0
    %4832 = vmatpush2.bf16.msra.mxu0 0
    %4833 = vmatprep.subr.bf16.mxu0 0
    %4834 = vmatpush2.bf16.msra.mxu0 0
    %4835 = vmatprep.subr.bf16.mxu0 0
    %4836 = vmatpush2.bf16.msra.mxu0 0
    %4837 = vmatprep.subr.bf16.mxu0 0
    %4838 = vmatpush2.bf16.msra.mxu0 0
    %4839 = vmatprep.subr.bf16.mxu0 0
    %4840 = vmatpush2.bf16.msra.mxu0 0
    %4841 = vmatprep.mubr.bf16.mxu0 0
    %4842 = vmatmul.mubr.bf16.gmra.mxu0 %v4651
    %v4843 = vpop.f32.mrf.mxu0
    %v4844 = vadd.f32 %v3072, %v4843
    %v4845 = vpop.f32.mrf.mxu0
    %v4846 = vpop.f32.mrf.mxu0
    %v4847 = vpop.f32.mrf.mxu0
    %4848 = vdwg.mxu0
    %v4849 = vadd.f32 %v4804, %v4844
    %v4850 = vxor.u32 %v4849, 2147483648
    %v4851 = vmul.f32 %v4850, 1.442695
    %v4852 = vpow.pop %v4851
    %v4853 = vadd.f32 %v4852, 1.0
    %v4854 = vrcp.pop %v4853
    %v4855 = vmul.f32 1.0, %v4854
    %4856 = vrot.lane.b32.xlu0 %v4855, 64
    %v4857 = vpop.permute.xlu0 %4856
    %v4858 = vmul.f32 %v4857, %v4844
    %v4859 = vadd.f32 %v4804, %v4858
    %v4860 = vtanh.pop %v4859
    %4861 = vrot.lane.b32.xlu0 %v4855, 96
    %v4862 = vpop.permute.xlu0 %4861
    %4863 = vrot.lane.b32.xlu0 %v4860, 64
    %v4864 = vpop.permute.xlu0 %4863
    %v4865 = vsub.f32 1.0, %v4862
    %v4866 = vmul.f32 %v4865, %v4864
    %v4867 = vmul.f32 %v4862, %v4496
    %v4868 = vadd.f32 %v4866, %v4867
    %v4869 = vmul.f32 %v4868, %v201
    %4870 = vmatprep.subr.mxu0 0.0
    %4871 = vmatpush1.xpose.msra.mxu0 0.0
    %4872 = vmatprep.subr.mxu0 0.0
    %4873 = vmatpush1.xpose.msra.mxu0 0.0
    %4874 = vmatprep.subr.mxu0 0.0
    %4875 = vmatpush1.xpose.msra.mxu0 0.0
    %4876 = vmatprep.subr.mxu0 0.0
    %4877 = vmatpush1.xpose.msra.mxu0 0.0
    %4878 = vmatprep.subr.mxu0 0.0
    %4879 = vmatpush1.xpose.msra.mxu0 0.0
    %4880 = vmatprep.subr.mxu0 0.0
    %4881 = vmatpush1.xpose.msra.mxu0 0.0
    %4882 = vmatprep.subr.mxu0 0.0
    %4883 = vmatpush1.xpose.msra.mxu0 0.0
    %4884 = vmatprep.subr.mxu0 0.0
    %4885 = vmatpush1.xpose.msra.mxu0 0.0
    %4886 = vmatprep.subr.mxu0 0.0
    %4887 = vmatpush1.xpose.msra.mxu0 0.0
    %4888 = vmatprep.subr.mxu0 0.0
    %4889 = vmatpush1.xpose.msra.mxu0 0.0
    %4890 = vmatprep.subr.mxu0 0.0
    %4891 = vmatpush1.xpose.msra.mxu0 0.0
    %4892 = vmatprep.subr.mxu0 0.0
    %4893 = vmatpush1.xpose.msra.mxu0 0.0
    %4894 = vmatprep.subr.mxu0 0.0
    %4895 = vmatpush1.xpose.msra.mxu0 0.0
    %4896 = vmatprep.subr.mxu0 0.0
    %4897 = vmatpush1.xpose.msra.mxu0 0.0
    %4898 = vmatprep.subr.mxu0 0.0
    %4899 = vmatpush1.xpose.msra.mxu0 0.0
    %4900 = vmatprep.subr.mxu0 0.0
    %4901 = vmatpush1.xpose.msra.mxu0 %v2674
    %4902 = vmatprep.subr.mxu0 0.0
    %4903 = vmatpush2.xpose.msra.mxu0 0.0
    %4904 = vmatprep.subr.mxu0 0.0
    %4905 = vmatpush2.xpose.msra.mxu0 0.0
    %4906 = vmatprep.subr.mxu0 0.0
    %4907 = vmatpush2.xpose.msra.mxu0 0.0
    %4908 = vmatprep.subr.mxu0 0.0
    %4909 = vmatpush2.xpose.msra.mxu0 0.0
    %4910 = vmatprep.subr.mxu0 0.0
    %4911 = vmatpush2.xpose.msra.mxu0 0.0
    %4912 = vmatprep.subr.mxu0 0.0
    %4913 = vmatpush2.xpose.msra.mxu0 0.0
    %4914 = vmatprep.subr.mxu0 0.0
    %4915 = vmatpush2.xpose.msra.mxu0 0.0
    %4916 = vmatprep.subr.mxu0 0.0
    %4917 = vmatpush2.xpose.msra.mxu0 0.0
    %4918 = vmatprep.subr.mxu0 0.0
    %4919 = vmatpush2.xpose.msra.mxu0 0.0
    %4920 = vmatprep.subr.mxu0 0.0
    %4921 = vmatpush2.xpose.msra.mxu0 0.0
    %4922 = vmatprep.subr.mxu0 0.0
    %4923 = vmatpush2.xpose.msra.mxu0 0.0
    %4924 = vmatprep.subr.mxu0 0.0
    %4925 = vmatpush2.xpose.msra.mxu0 0.0
    %4926 = vmatprep.subr.mxu0 0.0
    %4927 = vmatpush2.xpose.msra.mxu0 0.0
    %4928 = vmatprep.subr.mxu0 0.0
    %4929 = vmatpush2.xpose.msra.mxu0 0.0
    %4930 = vmatprep.subr.mxu0 0.0
    %4931 = vmatpush2.xpose.msra.mxu0 0.0
    %4932 = vmatprep.subr.mxu0 0.0
    %4933 = vmatpush2.xpose.msra.mxu0 0.0
    %4934 = vmatprep.mubr.f32.mxu0 0.0
    %4935 = vmatmul.mubr.f32.gmra.mxu0 %v4869
    %v4936 = vpop.f32.mrf.mxu0
    %v4937 = vadd.f32 0.0, %v4936
    %v4938 = vpop.f32.mrf.mxu0
    %4939 = vdwg.mxu0
    %v4940 = vsel %vm3252, %v4937, -inf
    %4941 = vmax.xlane.f32.xlu0 %v4940
    %v4942 = vpop.xlane.xlu0 %4941
    %v4943 = vsub.f32 %v4937, %v4942
    %v4944 = vmul.f32 %v4943, 1.442695
    %v4945 = vpow.pop %v4944
    %v4946 = vsel %vm3252, %v4945, 0.0
    %4947 = vadd.xlane.f32.xlu0 %v4946
    %v4948 = vpop.xlane.xlu0 %4947
    %v4949 = vrcp.pop %v4948
    %v4950 = vmul.f32 %v4945, %v4949
    %v4952 = vsel %vm3264, %v4950, 0
    %4954 = vmatprep.subr.mxu0 0.0
    %4955 = vmatpush1.msra.mxu0 0.0
    %4956 = vmatprep.subr.mxu0 0.0
    %4957 = vmatpush1.msra.mxu0 0.0
    %4958 = vmatprep.subr.mxu0 0.0
    %4959 = vmatpush1.msra.mxu0 0.0
    %4960 = vmatprep.subr.mxu0 0.0
    %4961 = vmatpush1.msra.mxu0 0.0
    %4962 = vmatprep.subr.mxu0 0.0
    %4963 = vmatpush1.msra.mxu0 0.0
    %4964 = vmatprep.subr.mxu0 0.0
    %4965 = vmatpush1.msra.mxu0 0.0
    %4966 = vmatprep.subr.mxu0 0.0
    %4967 = vmatpush1.msra.mxu0 0.0
    %4968 = vmatprep.subr.mxu0 0.0
    %4969 = vmatpush1.msra.mxu0 0.0
    %4970 = vmatprep.subr.mxu0 0.0
    %4971 = vmatpush1.msra.mxu0 0.0
    %4972 = vmatprep.subr.mxu0 0.0
    %4973 = vmatpush1.msra.mxu0 0.0
    %4974 = vmatprep.subr.mxu0 0.0
    %4975 = vmatpush1.msra.mxu0 0.0
    %4976 = vmatprep.subr.mxu0 0.0
    %4977 = vmatpush1.msra.mxu0 0.0
    %4978 = vmatprep.subr.mxu0 0.0
    %4979 = vmatpush1.msra.mxu0 0.0
    %4980 = vmatprep.subr.mxu0 0.0
    %4981 = vmatpush1.msra.mxu0 0.0
    %4982 = vmatprep.subr.mxu0 0.0
    %4983 = vmatpush1.msra.mxu0 0.0
    %4984 = vmatprep.subr.mxu0 0.0
    %4985 = vmatpush1.msra.mxu0 %v2674
    %4986 = vmatprep.subr.mxu0 0.0
    %4987 = vmatpush2.msra.mxu0 0.0
    %4988 = vmatprep.subr.mxu0 0.0
    %4989 = vmatpush2.msra.mxu0 0.0
    %4990 = vmatprep.subr.mxu0 0.0
    %4991 = vmatpush2.msra.mxu0 0.0
    %4992 = vmatprep.subr.mxu0 0.0
    %4993 = vmatpush2.msra.mxu0 0.0
    %4994 = vmatprep.subr.mxu0 0.0
    %4995 = vmatpush2.msra.mxu0 0.0
    %4996 = vmatprep.subr.mxu0 0.0
    %4997 = vmatpush2.msra.mxu0 0.0
    %4998 = vmatprep.subr.mxu0 0.0
    %4999 = vmatpush2.msra.mxu0 0.0
    %5000 = vmatprep.subr.mxu0 0.0
    %5001 = vmatpush2.msra.mxu0 0.0
    %5002 = vmatprep.subr.mxu0 0.0
    %5003 = vmatpush2.msra.mxu0 0.0
    %5004 = vmatprep.subr.mxu0 0.0
    %5005 = vmatpush2.msra.mxu0 0.0
    %5006 = vmatprep.subr.mxu0 0.0
    %5007 = vmatpush2.msra.mxu0 0.0
    %5008 = vmatprep.subr.mxu0 0.0
    %5009 = vmatpush2.msra.mxu0 0.0
    %5010 = vmatprep.subr.mxu0 0.0
    %5011 = vmatpush2.msra.mxu0 0.0
    %5012 = vmatprep.subr.mxu0 0.0
    %5013 = vmatpush2.msra.mxu0 0.0
    %5014 = vmatprep.subr.mxu0 0.0
    %5015 = vmatpush2.msra.mxu0 0.0
    %5016 = vmatprep.subr.mxu0 0.0
    %5017 = vmatpush2.msra.mxu0 0.0
    %5018 = vmatprep.mubr.f32.mxu0 0.0
    %5019 = vmatmul.mubr.f32.gmra.mxu0 %v4952
    %v5020 = vpop.f32.mrf.mxu0
    %v5021 = vadd.f32 0.0, %v5020
    %v5022 = vpop.f32.mrf.mxu0
    %5023 = vdwg.mxu0
    %v5024 = vpack.c.bf16 %v4869, %v4869
    %v5025 = vpack.c.bf16 %v5021, %v5021
    %5026 = vmatprep.subr.bf16.mxu0 0
    %5027 = vmatpush1.bf16.msra.mxu0 %v3444
    %5028 = vmatprep.subr.bf16.mxu0 0
    %5029 = vmatpush1.bf16.msra.mxu0 %v3443
    %5030 = vmatprep.subr.bf16.mxu0 0
    %5031 = vmatpush1.bf16.msra.mxu0 %v3442
    %5032 = vmatprep.subr.bf16.mxu0 0
    %5033 = vmatpush1.bf16.msra.mxu0 %v3441
    %5034 = vmatprep.subr.bf16.mxu0 0
    %5035 = vmatpush1.bf16.msra.mxu0 %v3440
    %5036 = vmatprep.subr.bf16.mxu0 0
    %5037 = vmatpush1.bf16.msra.mxu0 %v3439
    %5038 = vmatprep.subr.bf16.mxu0 0
    %5039 = vmatpush1.bf16.msra.mxu0 %v3438
    %5040 = vmatprep.subr.bf16.mxu0 0
    %5041 = vmatpush1.bf16.msra.mxu0 %v3437
    %5042 = vmatprep.subr.bf16.mxu0 0
    %5043 = vmatpush2.bf16.msra.mxu0 %v3452
    %5044 = vmatprep.subr.bf16.mxu0 0
    %5045 = vmatpush2.bf16.msra.mxu0 %v3451
    %5046 = vmatprep.subr.bf16.mxu0 0
    %5047 = vmatpush2.bf16.msra.mxu0 %v3450
    %5048 = vmatprep.subr.bf16.mxu0 0
    %5049 = vmatpush2.bf16.msra.mxu0 %v3449
    %5050 = vmatprep.subr.bf16.mxu0 0
    %5051 = vmatpush2.bf16.msra.mxu0 %v3448
    %5052 = vmatprep.subr.bf16.mxu0 0
    %5053 = vmatpush2.bf16.msra.mxu0 %v3447
    %5054 = vmatprep.subr.bf16.mxu0 0
    %5055 = vmatpush2.bf16.msra.mxu0 %v3446
    %5056 = vmatprep.subr.bf16.mxu0 0
    %5057 = vmatpush2.bf16.msra.mxu0 %v3445
    %5058 = vmatprep.mubr.bf16.mxu0 %v5025
    %5059 = vmatmul.mubr.bf16.gmra.mxu0 %v5024
    %v5060 = vpop.f32.mrf.mxu0
    %v5061 = vadd.f32 %v3372, %v5060
    %v5062 = vpop.f32.mrf.mxu0
    %v5063 = vpop.f32.mrf.mxu0
    %v5064 = vpop.f32.mrf.mxu0
    %5065 = vdwg.mxu0
    %v5066 = vtanh.pop %v5061
    %v5067 = vpack.c.bf16 %v5066, %v5066
    %5068 = vmatprep.subr.bf16.mxu0 0
    %5069 = vmatpush1.bf16.msra.mxu0 %v3567
    %5070 = vmatprep.subr.bf16.mxu0 0
    %5071 = vmatpush1.bf16.msra.mxu0 %v3566
    %5072 = vmatprep.subr.bf16.mxu0 0
    %5073 = vmatpush1.bf16.msra.mxu0 %v3565
    %5074 = vmatprep.subr.bf16.mxu0 0
    %5075 = vmatpush1.bf16.msra.mxu0 %v3564
    %5076 = vmatprep.subr.bf16.mxu0 0
    %5077 = vmatpush1.bf16.msra.mxu0 %v3563
    %5078 = vmatprep.subr.bf16.mxu0 0
    %5079 = vmatpush1.bf16.msra.mxu0 %v3562
    %5080 = vmatprep.subr.bf16.mxu0 0
    %5081 = vmatpush1.bf16.msra.mxu0 %v3561
    %5082 = vmatprep.subr.bf16.mxu0 0
    %5083 = vmatpush1.bf16.msra.mxu0 %v3560
    %5084 = vmatprep.subr.bf16.mxu0 0
    %5085 = vmatpush2.bf16.msra.mxu0 0
    %5086 = vmatprep.subr.bf16.mxu0 0
    %5087 = vmatpush2.bf16.msra.mxu0 0
    %5088 = vmatprep.subr.bf16.mxu0 0
    %5089 = vmatpush2.bf16.msra.mxu0 0
    %5090 = vmatprep.subr.bf16.mxu0 0
    %5091 = vmatpush2.bf16.msra.mxu0 0
    %5092 = vmatprep.subr.bf16.mxu0 0
    %5093 = vmatpush2.bf16.msra.mxu0 0
    %5094 = vmatprep.subr.bf16.mxu0 0
    %5095 = vmatpush2.bf16.msra.mxu0 0
    %5096 = vmatprep.subr.bf16.mxu0 0
    %5097 = vmatpush2.bf16.msra.mxu0 0
    %5098 = vmatprep.subr.bf16.mxu0 0
    %5099 = vmatpush2.bf16.msra.mxu0 0
    %5100 = vmatprep.mubr.bf16.mxu0 0
    %5101 = vmatmul.mubr.bf16.gmra.mxu0 %v5067
    %v5102 = vpop.f32.mrf.mxu0
    %v5103 = vadd.f32 %v3527, %v5102
    %v5104 = vpop.f32.mrf.mxu0
    %v5105 = vpop.f32.mrf.mxu0
    %v5106 = vpop.f32.mrf.mxu0
    %5107 = vdwg.mxu0
    %v5108 = vsel %vm3616, %v5103, -inf
    %5109 = vmax.xlane.f32.xlu0 %v5108
    %v5110 = vpop.xlane.xlu0 %5109
    %v5111 = vsub.f32 %v5103, %v5110
    %v5112 = vmul.f32 %v5111, 1.442695
    %v5113 = vpow.pop %v5112
    %v5114 = vsel %vm3616, %v5113, 0.0
    %5115 = vadd.xlane.f32.xlu0 %v5114
    %v5116 = vpop.xlane.xlu0 %5115
    %v5117 = vrcp.pop %v5116
    %vm5118 = vcmp.ge.f32.partialorder %v5103, %v5110
    %v5119 = vsel %vm5118, %v198, 128
    %v5120 = vsel %vm3616, %v5119, 2147483647
    %v5121 = vand.u32 %v5120, 65535
    %v5122 = vshra.s32 %v5120, 16
    %v5123 = vcvt.s32.f32 %v5121
    %v5124 = vcvt.s32.f32 %v5122
    %5125 = vmin.xlane.f32.xlu0 %v5124
    %v5126 = vpop.xlane.xlu0 %5125
    %vm5127 = vcmp.eq.f32.partialorder %v5124, %v5126
    %v5128 = vsel %vm5127, %v5123, inf
    %5129 = vmin.xlane.f32.xlu0 %v5128
    %v5130 = vpop.xlane.xlu0 %5129
    %v5131 = vcvt.f32.s32 %v5130
    %v5132 = vcvt.f32.s32 %v5126
    %v5133 = vshll.u32 %v5132, 16
    %v5134 = vadd.s32 %v5133, %v5131
    %vm5135 = vcmp.eq.s32.totalorder %v198, 4
    %v5136 = vsel %vm5135, %v5134, %v4763
    %v5137 = vsel %vm5135, %v5117, %v4764
    %vm5138 = vcmp.eq.s32.totalorder %v198, %v5134
    %v5139 = vsel %vm5138, 1, 0
    %v5140 = vcvt.s32.f32 %v5139
    %v5141 = vpack.c.bf16 %v5140, %v5140
    %5142 = vmatprep.subr.bf16.mxu0 0
    %5143 = vmatpush1.bf16.msra.mxu0 %v3006
    %5144 = vmatprep.subr.bf16.mxu0 0
    %5145 = vmatpush1.bf16.msra.mxu0 %v3005
    %5146 = vmatprep.subr.bf16.mxu0 0
    %5147 = vmatpush1.bf16.msra.mxu0 %v3004
    %5148 = vmatprep.subr.bf16.mxu0 0
    %5149 = vmatpush1.bf16.msra.mxu0 %v3003
    %5150 = vmatprep.subr.bf16.mxu0 0
    %5151 = vmatpush1.bf16.msra.mxu0 %v3002
    %5152 = vmatprep.subr.bf16.mxu0 0
    %5153 = vmatpush1.bf16.msra.mxu0 %v3001
    %5154 = vmatprep.subr.bf16.mxu0 0
    %5155 = vmatpush1.bf16.msra.mxu0 %v3000
    %5156 = vmatprep.subr.bf16.mxu0 0
    %5157 = vmatpush1.bf16.msra.mxu0 %v2999
    %5158 = vmatprep.subr.bf16.mxu0 0
    %5159 = vmatpush2.bf16.msra.mxu0 0
    %5160 = vmatprep.subr.bf16.mxu0 0
    %5161 = vmatpush2.bf16.msra.mxu0 0
    %5162 = vmatprep.subr.bf16.mxu0 0
    %5163 = vmatpush2.bf16.msra.mxu0 0
    %5164 = vmatprep.subr.bf16.mxu0 0
    %5165 = vmatpush2.bf16.msra.mxu0 0
    %5166 = vmatprep.subr.bf16.mxu0 0
    %5167 = vmatpush2.bf16.msra.mxu0 0
    %5168 = vmatprep.subr.bf16.mxu0 0
    %5169 = vmatpush2.bf16.msra.mxu0 0
    %5170 = vmatprep.subr.bf16.mxu0 0
    %5171 = vmatpush2.bf16.msra.mxu0 0
    %5172 = vmatprep.subr.bf16.mxu0 0
    %5173 = vmatpush2.bf16.msra.mxu0 0
    %5174 = vmatprep.mubr.bf16.mxu0 0
    %5175 = vmatmul.mubr.bf16.gmra.mxu0 %v5141
    %v5176 = vpop.f32.mrf.mxu0
    %v5177 = vadd.f32 0.0, %v5176
    %v5178 = vpop.f32.mrf.mxu0
    %v5179 = vpop.f32.mrf.mxu0
    %v5180 = vpop.f32.mrf.mxu0
    %5181 = vdwg.mxu0
    %5182 = vmatprep.subr.bf16.mxu0 0
    %5183 = vmatpush1.bf16.msra.mxu0 %v3112
    %5184 = vmatprep.subr.bf16.mxu0 0
    %5185 = vmatpush1.bf16.msra.mxu0 %v3111
    %5186 = vmatprep.subr.bf16.mxu0 0
    %5187 = vmatpush1.bf16.msra.mxu0 %v3110
    %5188 = vmatprep.subr.bf16.mxu0 0
    %5189 = vmatpush1.bf16.msra.mxu0 %v3109
    %5190 = vmatprep.subr.bf16.mxu0 0
    %5191 = vmatpush1.bf16.msra.mxu0 %v3108
    %5192 = vmatprep.subr.bf16.mxu0 0
    %5193 = vmatpush1.bf16.msra.mxu0 %v3107
    %5194 = vmatprep.subr.bf16.mxu0 0
    %5195 = vmatpush1.bf16.msra.mxu0 %v3106
    %5196 = vmatprep.subr.bf16.mxu0 0
    %5197 = vmatpush1.bf16.msra.mxu0 %v3105
    %5198 = vmatprep.subr.bf16.mxu0 0
    %5199 = vmatpush2.bf16.msra.mxu0 0
    %5200 = vmatprep.subr.bf16.mxu0 0
    %5201 = vmatpush2.bf16.msra.mxu0 0
    %5202 = vmatprep.subr.bf16.mxu0 0
    %5203 = vmatpush2.bf16.msra.mxu0 0
    %5204 = vmatprep.subr.bf16.mxu0 0
    %5205 = vmatpush2.bf16.msra.mxu0 0
    %5206 = vmatprep.subr.bf16.mxu0 0
    %5207 = vmatpush2.bf16.msra.mxu0 0
    %5208 = vmatprep.subr.bf16.mxu0 0
    %5209 = vmatpush2.bf16.msra.mxu0 0
    %5210 = vmatprep.subr.bf16.mxu0 0
    %5211 = vmatpush2.bf16.msra.mxu0 0
    %5212 = vmatprep.subr.bf16.mxu0 0
    %5213 = vmatpush2.bf16.msra.mxu0 0
    %5214 = vmatprep.mubr.bf16.mxu0 0
    %5215 = vmatmul.mubr.bf16.gmra.mxu0 %v5024
    %v5216 = vpop.f32.mrf.mxu0
    %v5217 = vadd.f32 %v3072, %v5216
    %v5218 = vpop.f32.mrf.mxu0
    %v5219 = vpop.f32.mrf.mxu0
    %v5220 = vpop.f32.mrf.mxu0
    %5221 = vdwg.mxu0
    %v5222 = vadd.f32 %v5177, %v5217
    %v5223 = vxor.u32 %v5222, 2147483648
    %v5224 = vmul.f32 %v5223, 1.442695
    %v5225 = vpow.pop %v5224
    %v5226 = vadd.f32 %v5225, 1.0
    %v5227 = vrcp.pop %v5226
    %v5228 = vmul.f32 1.0, %v5227
    %5229 = vrot.lane.b32.xlu0 %v5228, 64
    %v5230 = vpop.permute.xlu0 %5229
    %v5231 = vmul.f32 %v5230, %v5217
    %v5232 = vadd.f32 %v5177, %v5231
    %v5233 = vtanh.pop %v5232
    %5234 = vrot.lane.b32.xlu0 %v5228, 96
    %v5235 = vpop.permute.xlu0 %5234
    %5236 = vrot.lane.b32.xlu0 %v5233, 64
    %v5237 = vpop.permute.xlu0 %5236
    %v5238 = vsub.f32 1.0, %v5235
    %v5239 = vmul.f32 %v5238, %v5237
    %v5240 = vmul.f32 %v5235, %v4869
    %v5241 = vadd.f32 %v5239, %v5240
    %v5242 = vmul.f32 %v5241, %v201
    %5243 = vmatprep.subr.mxu0 0.0
    %5244 = vmatpush1.xpose.msra.mxu0 0.0
    %5245 = vmatprep.subr.mxu0 0.0
    %5246 = vmatpush1.xpose.msra.mxu0 0.0
    %5247 = vmatprep.subr.mxu0 0.0
    %5248 = vmatpush1.xpose.msra.mxu0 0.0
    %5249 = vmatprep.subr.mxu0 0.0
    %5250 = vmatpush1.xpose.msra.mxu0 0.0
    %5251 = vmatprep.subr.mxu0 0.0
    %5252 = vmatpush1.xpose.msra.mxu0 0.0
    %5253 = vmatprep.subr.mxu0 0.0
    %5254 = vmatpush1.xpose.msra.mxu0 0.0
    %5255 = vmatprep.subr.mxu0 0.0
    %5256 = vmatpush1.xpose.msra.mxu0 0.0
    %5257 = vmatprep.subr.mxu0 0.0
    %5258 = vmatpush1.xpose.msra.mxu0 0.0
    %5259 = vmatprep.subr.mxu0 0.0
    %5260 = vmatpush1.xpose.msra.mxu0 0.0
    %5261 = vmatprep.subr.mxu0 0.0
    %5262 = vmatpush1.xpose.msra.mxu0 0.0
    %5263 = vmatprep.subr.mxu0 0.0
    %5264 = vmatpush1.xpose.msra.mxu0 0.0
    %5265 = vmatprep.subr.mxu0 0.0
    %5266 = vmatpush1.xpose.msra.mxu0 0.0
    %5267 = vmatprep.subr.mxu0 0.0
    %5268 = vmatpush1.xpose.msra.mxu0 0.0
    %5269 = vmatprep.subr.mxu0 0.0
    %5270 = vmatpush1.xpose.msra.mxu0 0.0
    %5271 = vmatprep.subr.mxu0 0.0
    %5272 = vmatpush1.xpose.msra.mxu0 0.0
    %5273 = vmatprep.subr.mxu0 0.0
    %5274 = vmatpush1.xpose.msra.mxu0 %v2674
    %5275 = vmatprep.subr.mxu0 0.0
    %5276 = vmatpush2.xpose.msra.mxu0 0.0
    %5277 = vmatprep.subr.mxu0 0.0
    %5278 = vmatpush2.xpose.msra.mxu0 0.0
    %5279 = vmatprep.subr.mxu0 0.0
    %5280 = vmatpush2.xpose.msra.mxu0 0.0
    %5281 = vmatprep.subr.mxu0 0.0
    %5282 = vmatpush2.xpose.msra.mxu0 0.0
    %5283 = vmatprep.subr.mxu0 0.0
    %5284 = vmatpush2.xpose.msra.mxu0 0.0
    %5285 = vmatprep.subr.mxu0 0.0
    %5286 = vmatpush2.xpose.msra.mxu0 0.0
    %5287 = vmatprep.subr.mxu0 0.0
    %5288 = vmatpush2.xpose.msra.mxu0 0.0
    %5289 = vmatprep.subr.mxu0 0.0
    %5290 = vmatpush2.xpose.msra.mxu0 0.0
    %5291 = vmatprep.subr.mxu0 0.0
    %5292 = vmatpush2.xpose.msra.mxu0 0.0
    %5293 = vmatprep.subr.mxu0 0.0
    %5294 = vmatpush2.xpose.msra.mxu0 0.0
    %5295 = vmatprep.subr.mxu0 0.0
    %5296 = vmatpush2.xpose.msra.mxu0 0.0
    %5297 = vmatprep.subr.mxu0 0.0
    %5298 = vmatpush2.xpose.msra.mxu0 0.0
    %5299 = vmatprep.subr.mxu0 0.0
    %5300 = vmatpush2.xpose.msra.mxu0 0.0
    %5301 = vmatprep.subr.mxu0 0.0
    %5302 = vmatpush2.xpose.msra.mxu0 0.0
    %5303 = vmatprep.subr.mxu0 0.0
    %5304 = vmatpush2.xpose.msra.mxu0 0.0
    %5305 = vmatprep.subr.mxu0 0.0
    %5306 = vmatpush2.xpose.msra.mxu0 0.0
    %5307 = vmatprep.mubr.f32.mxu0 0.0
    %5308 = vmatmul.mubr.f32.gmra.mxu0 %v5242
    %v5309 = vpop.f32.mrf.mxu0
    %v5310 = vadd.f32 0.0, %v5309
    %v5311 = vpop.f32.mrf.mxu0
    %5312 = vdwg.mxu0
    %v5313 = vsel %vm3252, %v5310, -inf
    %5314 = vmax.xlane.f32.xlu0 %v5313
    %v5315 = vpop.xlane.xlu0 %5314
    %v5316 = vsub.f32 %v5310, %v5315
    %v5317 = vmul.f32 %v5316, 1.442695
    %v5318 = vpow.pop %v5317
    %v5319 = vsel %vm3252, %v5318, 0.0
    %5320 = vadd.xlane.f32.xlu0 %v5319
    %v5321 = vpop.xlane.xlu0 %5320
    %v5322 = vrcp.pop %v5321
    %v5323 = vmul.f32 %v5318, %v5322
    %v5325 = vsel %vm3264, %v5323, 0
    %5327 = vmatprep.subr.mxu0 0.0
    %5328 = vmatpush1.msra.mxu0 0.0
    %5329 = vmatprep.subr.mxu0 0.0
    %5330 = vmatpush1.msra.mxu0 0.0
    %5331 = vmatprep.subr.mxu0 0.0
    %5332 = vmatpush1.msra.mxu0 0.0
    %5333 = vmatprep.subr.mxu0 0.0
    %5334 = vmatpush1.msra.mxu0 0.0
    %5335 = vmatprep.subr.mxu0 0.0
    %5336 = vmatpush1.msra.mxu0 0.0
    %5337 = vmatprep.subr.mxu0 0.0
    %5338 = vmatpush1.msra.mxu0 0.0
    %5339 = vmatprep.subr.mxu0 0.0
    %5340 = vmatpush1.msra.mxu0 0.0
    %5341 = vmatprep.subr.mxu0 0.0
    %5342 = vmatpush1.msra.mxu0 0.0
    %5343 = vmatprep.subr.mxu0 0.0
    %5344 = vmatpush1.msra.mxu0 0.0
    %5345 = vmatprep.subr.mxu0 0.0
    %5346 = vmatpush1.msra.mxu0 0.0
    %5347 = vmatprep.subr.mxu0 0.0
    %5348 = vmatpush1.msra.mxu0 0.0
    %5349 = vmatprep.subr.mxu0 0.0
    %5350 = vmatpush1.msra.mxu0 0.0
    %5351 = vmatprep.subr.mxu0 0.0
    %5352 = vmatpush1.msra.mxu0 0.0
    %5353 = vmatprep.subr.mxu0 0.0
    %5354 = vmatpush1.msra.mxu0 0.0
    %5355 = vmatprep.subr.mxu0 0.0
    %5356 = vmatpush1.msra.mxu0 0.0
    %5357 = vmatprep.subr.mxu0 0.0
    %5358 = vmatpush1.msra.mxu0 %v2674
    %5359 = vmatprep.subr.mxu0 0.0
    %5360 = vmatpush2.msra.mxu0 0.0
    %5361 = vmatprep.subr.mxu0 0.0
    %5362 = vmatpush2.msra.mxu0 0.0
    %5363 = vmatprep.subr.mxu0 0.0
    %5364 = vmatpush2.msra.mxu0 0.0
    %5365 = vmatprep.subr.mxu0 0.0
    %5366 = vmatpush2.msra.mxu0 0.0
    %5367 = vmatprep.subr.mxu0 0.0
    %5368 = vmatpush2.msra.mxu0 0.0
    %5369 = vmatprep.subr.mxu0 0.0
    %5370 = vmatpush2.msra.mxu0 0.0
    %5371 = vmatprep.subr.mxu0 0.0
    %5372 = vmatpush2.msra.mxu0 0.0
    %5373 = vmatprep.subr.mxu0 0.0
    %5374 = vmatpush2.msra.mxu0 0.0
    %5375 = vmatprep.subr.mxu0 0.0
    %5376 = vmatpush2.msra.mxu0 0.0
    %5377 = vmatprep.subr.mxu0 0.0
    %5378 = vmatpush2.msra.mxu0 0.0
    %5379 = vmatprep.subr.mxu0 0.0
    %5380 = vmatpush2.msra.mxu0 0.0
    %5381 = vmatprep.subr.mxu0 0.0
    %5382 = vmatpush2.msra.mxu0 0.0
    %5383 = vmatprep.subr.mxu0 0.0
    %5384 = vmatpush2.msra.mxu0 0.0
    %5385 = vmatprep.subr.mxu0 0.0
    %5386 = vmatpush2.msra.mxu0 0.0
    %5387 = vmatprep.subr.mxu0 0.0
    %5388 = vmatpush2.msra.mxu0 0.0
    %5389 = vmatprep.subr.mxu0 0.0
    %5390 = vmatpush2.msra.mxu0 0.0
    %5391 = vmatprep.mubr.f32.mxu0 0.0
    %5392 = vmatmul.mubr.f32.gmra.mxu0 %v5325
    %v5393 = vpop.f32.mrf.mxu0
    %v5394 = vadd.f32 0.0, %v5393
    %v5395 = vpop.f32.mrf.mxu0
    %5396 = vdwg.mxu0
    %v5397 = vpack.c.bf16 %v5242, %v5242
    %v5398 = vpack.c.bf16 %v5394, %v5394
    %5399 = vmatprep.subr.bf16.mxu0 0
    %5400 = vmatpush1.bf16.msra.mxu0 %v3444
    %5401 = vmatprep.subr.bf16.mxu0 0
    %5402 = vmatpush1.bf16.msra.mxu0 %v3443
    %5403 = vmatprep.subr.bf16.mxu0 0
    %5404 = vmatpush1.bf16.msra.mxu0 %v3442
    %5405 = vmatprep.subr.bf16.mxu0 0
    %5406 = vmatpush1.bf16.msra.mxu0 %v3441
    %5407 = vmatprep.subr.bf16.mxu0 0
    %5408 = vmatpush1.bf16.msra.mxu0 %v3440
    %5409 = vmatprep.subr.bf16.mxu0 0
    %5410 = vmatpush1.bf16.msra.mxu0 %v3439
    %5411 = vmatprep.subr.bf16.mxu0 0
    %5412 = vmatpush1.bf16.msra.mxu0 %v3438
    %5413 = vmatprep.subr.bf16.mxu0 0
    %5414 = vmatpush1.bf16.msra.mxu0 %v3437
    %5415 = vmatprep.subr.bf16.mxu0 0
    %5416 = vmatpush2.bf16.msra.mxu0 %v3452
    %5417 = vmatprep.subr.bf16.mxu0 0
    %5418 = vmatpush2.bf16.msra.mxu0 %v3451
    %5419 = vmatprep.subr.bf16.mxu0 0
    %5420 = vmatpush2.bf16.msra.mxu0 %v3450
    %5421 = vmatprep.subr.bf16.mxu0 0
    %5422 = vmatpush2.bf16.msra.mxu0 %v3449
    %5423 = vmatprep.subr.bf16.mxu0 0
    %5424 = vmatpush2.bf16.msra.mxu0 %v3448
    %5425 = vmatprep.subr.bf16.mxu0 0
    %5426 = vmatpush2.bf16.msra.mxu0 %v3447
    %5427 = vmatprep.subr.bf16.mxu0 0
    %5428 = vmatpush2.bf16.msra.mxu0 %v3446
    %5429 = vmatprep.subr.bf16.mxu0 0
    %5430 = vmatpush2.bf16.msra.mxu0 %v3445
    %5431 = vmatprep.mubr.bf16.mxu0 %v5398
    %5432 = vmatmul.mubr.bf16.gmra.mxu0 %v5397
    %v5433 = vpop.f32.mrf.mxu0
    %v5434 = vadd.f32 %v3372, %v5433
    %v5435 = vpop.f32.mrf.mxu0
    %v5436 = vpop.f32.mrf.mxu0
    %v5437 = vpop.f32.mrf.mxu0
    %5438 = vdwg.mxu0
    %v5439 = vtanh.pop %v5434
    %v5440 = vpack.c.bf16 %v5439, %v5439
    %5441 = vmatprep.subr.bf16.mxu0 0
    %5442 = vmatpush1.bf16.msra.mxu0 %v3567
    %5443 = vmatprep.subr.bf16.mxu0 0
    %5444 = vmatpush1.bf16.msra.mxu0 %v3566
    %5445 = vmatprep.subr.bf16.mxu0 0
    %5446 = vmatpush1.bf16.msra.mxu0 %v3565
    %5447 = vmatprep.subr.bf16.mxu0 0
    %5448 = vmatpush1.bf16.msra.mxu0 %v3564
    %5449 = vmatprep.subr.bf16.mxu0 0
    %5450 = vmatpush1.bf16.msra.mxu0 %v3563
    %5451 = vmatprep.subr.bf16.mxu0 0
    %5452 = vmatpush1.bf16.msra.mxu0 %v3562
    %5453 = vmatprep.subr.bf16.mxu0 0
    %5454 = vmatpush1.bf16.msra.mxu0 %v3561
    %5455 = vmatprep.subr.bf16.mxu0 0
    %5456 = vmatpush1.bf16.msra.mxu0 %v3560
    %5457 = vmatprep.subr.bf16.mxu0 0
    %5458 = vmatpush2.bf16.msra.mxu0 0
    %5459 = vmatprep.subr.bf16.mxu0 0
    %5460 = vmatpush2.bf16.msra.mxu0 0
    %5461 = vmatprep.subr.bf16.mxu0 0
    %5462 = vmatpush2.bf16.msra.mxu0 0
    %5463 = vmatprep.subr.bf16.mxu0 0
    %5464 = vmatpush2.bf16.msra.mxu0 0
    %5465 = vmatprep.subr.bf16.mxu0 0
    %5466 = vmatpush2.bf16.msra.mxu0 0
    %5467 = vmatprep.subr.bf16.mxu0 0
    %5468 = vmatpush2.bf16.msra.mxu0 0
    %5469 = vmatprep.subr.bf16.mxu0 0
    %5470 = vmatpush2.bf16.msra.mxu0 0
    %5471 = vmatprep.subr.bf16.mxu0 0
    %5472 = vmatpush2.bf16.msra.mxu0 0
    %5473 = vmatprep.mubr.bf16.mxu0 0
    %5474 = vmatmul.mubr.bf16.gmra.mxu0 %v5440
    %v5475 = vpop.f32.mrf.mxu0
    %v5476 = vadd.f32 %v3527, %v5475
    %v5477 = vpop.f32.mrf.mxu0
    %v5478 = vpop.f32.mrf.mxu0
    %v5479 = vpop.f32.mrf.mxu0
    %5480 = vdwg.mxu0
    %v5481 = vsel %vm3616, %v5476, -inf
    %5482 = vmax.xlane.f32.xlu0 %v5481
    %v5483 = vpop.xlane.xlu0 %5482
    %v5484 = vsub.f32 %v5476, %v5483
    %v5485 = vmul.f32 %v5484, 1.442695
    %v5486 = vpow.pop %v5485
    %v5487 = vsel %vm3616, %v5486, 0.0
    %5488 = vadd.xlane.f32.xlu0 %v5487
    %v5489 = vpop.xlane.xlu0 %5488
    %v5490 = vrcp.pop %v5489
    %vm5491 = vcmp.ge.f32.partialorder %v5476, %v5483
    %v5492 = vsel %vm5491, %v198, 128
    %v5493 = vsel %vm3616, %v5492, 2147483647
    %v5494 = vand.u32 %v5493, 65535
    %v5495 = vshra.s32 %v5493, 16
    %v5496 = vcvt.s32.f32 %v5494
    %v5497 = vcvt.s32.f32 %v5495
    %5498 = vmin.xlane.f32.xlu0 %v5497
    %v5499 = vpop.xlane.xlu0 %5498
    %vm5500 = vcmp.eq.f32.partialorder %v5497, %v5499
    %v5501 = vsel %vm5500, %v5496, inf
    %5502 = vmin.xlane.f32.xlu0 %v5501
    %v5503 = vpop.xlane.xlu0 %5502
    %v5504 = vcvt.f32.s32 %v5503
    %v5505 = vcvt.f32.s32 %v5499
    %v5506 = vshll.u32 %v5505, 16
    %v5507 = vadd.s32 %v5506, %v5504
    %vm5508 = vcmp.eq.s32.totalorder %v198, 5
    %v5509 = vsel %vm5508, %v5507, %v5136
    %v5510 = vsel %vm5508, %v5490, %v5137
    %5511 = vst [vmem:[#allocation23] sm:$0x1] %v5509
    %5512 = vst [vmem:[#allocation24] sm:$0x1] %v5510
    // Predicated region
    $region114: #{tpu_custom_call.1} parent=1 // pred_check
      _
    $region115: #{tpu_custom_call.1} parent=1 // pred_check_branch
      %5514 = sbr.rel (0) target = $region117
    $region116: #{tpu_custom_call.1} parent=1 // pred_region
      %s5516 = ssub.s32 16, 16
      %5517 = vsyncadd [#allocation8], %s5516
      %s5519 = sshll.u32 [#allocation23], 4
      %s5520 = int_to_ptr.vmem [resolvable:$true] %s5519
      %5522 = dma.vmem_to_hbm [thread:$0]  %s5520, 16, %s18, [#allocation8]
    $region117: #{tpu_custom_call.1} parent=1 // pred_fallthru
      _
    // Predicated region
    $region118: #{tpu_custom_call.1} parent=1 // pred_check
      _
    $region119: #{tpu_custom_call.1} parent=1 // pred_check_branch
      %5524 = sbr.rel (0) target = $region121
    $region120: #{tpu_custom_call.1} parent=1 // pred_region
      %s5526 = ssub.s32 16, 16
      %5527 = vsyncadd [#allocation25], %s5526
      %s5529 = sshll.u32 [#allocation24], 4
      %s5530 = int_to_ptr.vmem [resolvable:$true] %s5529
      %5532 = dma.vmem_to_hbm [thread:$0]  %s5530, 16, %s19, [#allocation25]
    $region121: #{tpu_custom_call.1} parent=1 // pred_fallthru
      _
    // Predicated region
    $region122: #{tpu_custom_call.1} parent=1 // pred_check
      _
    $region123: #{tpu_custom_call.1} parent=1 // pred_check_branch
      %5534 = sbr.rel (0) target = $region125
    $region124: #{tpu_custom_call.1} parent=1 // pred_region
      %5535 = dma.done [#allocation8], 16
    $region125: #{tpu_custom_call.1} parent=1 // pred_fallthru
      _
    // Predicated region
    $region126: #{tpu_custom_call.1} parent=1 // pred_check
      _
    $region127: #{tpu_custom_call.1} parent=1 // pred_check_branch
      %5537 = sbr.rel (0) target = $region129
    $region128: #{tpu_custom_call.1} parent=1 // pred_region
      %5538 = dma.done [#allocation25], 16
    $region129: #{tpu_custom_call.1} parent=1 // pred_fallthru
      _
    %5539 = vsyncpa [#allocation7], 1
    %5540 = vsyncpa [#allocation12], 1
    %5541 = vsyncpa [#allocation15], 1
    %5542 = vsyncpa [#allocation18], 1
    %5543 = vsyncpa [#allocation21], 1
    %5544 = vsyncpa [#allocation8], 1
    %5545 = vsyncpa [#allocation25], 1
    %5546 = vsyncpa [#allocation9], 1

</llo_original>
